<compile_context>
chip_gen: v5e
topology: v5e:2x2
jax: 0.10.0
libtpu: 0.0.40
codegen_flags: <defaults>
</compile_context>

<pallas_src>
import jax
import jax.numpy as jnp
from jax.experimental import pallas as pl
from jax.experimental.pallas import tpu as pltpu

IN_EPS = 1e-5  # nn.InstanceNorm2d default eps


def _reflect_pad_hw(a):
    """Reflection-pad by 1 on the first two (H, W) axes of an [H, W, C] array."""
    H, W, _ = a.shape
    a = jnp.concatenate([a[1:2], a, a[H - 2:H - 1]], axis=0)
    a = jnp.concatenate([a[:, 1:2], a, a[:, W - 2:W - 1]], axis=1)
    return a  # [H+2, W+2, C]


def _conv3x3_into(acc_ref, a_pad_bf16, w_ref, b_ref, H, W, C):
    """3x3 'VALID' conv on a reflect-padded bf16 [H+2, W+2, C] slab.

    Accumulates in f32 on the MXU into acc_ref [H*W, C]; the bias is folded into
    the accumulator init.  Returns the accumulated value.
    """
    acc_ref[...] = jnp.broadcast_to(b_ref[...].astype(jnp.float32), (H * W, C))
    for dx in range(3):
        # One W-shifted slab per dx (3 copies total instead of 9 patch copies).
        slab = a_pad_bf16[:, dx:dx + W, :]                       # [H+2, W, C]
        for dy in range(3):
            # Major-dim slice; reshape is layout-preserving for sublane-aligned W.
            patch = slab[dy:dy + H].reshape(H * W, C)
            acc_ref[...] += jnp.dot(patch, w_ref[dy, dx],
                                    preferred_element_type=jnp.float32)
    return acc_ref[...]


def _instance_norm(h, n_rows):
    """Per-channel normalization over rows (H*W of one sample), biased variance."""
    inv_n = 1.0 / n_rows
    s = jnp.sum(h, axis=0, keepdims=True)
    ss = jnp.sum(h * h, axis=0, keepdims=True)
    mu = s * inv_n
    var = jnp.maximum(ss * inv_n - mu * mu, 0.0)
    return (h - mu) * jax.lax.rsqrt(var + IN_EPS)


def resnet_block_kernel(x_ref, w1_ref, b1_ref, w2_ref, b2_ref, o_ref, acc_ref):
    # x_ref block: [1, H, W, C]  (one sample, NHWC, channels on lanes)
    _, H, W, C = x_ref.shape
    x = x_ref[0]                                                 # [H, W, C] f32

    # conv1 (reflect pad, bf16 MXU, f32 acc) + InstanceNorm + ReLU
    h = _conv3x3_into(acc_ref, _reflect_pad_hw(x).astype(jnp.bfloat16),
                      w1_ref, b1_ref, H, W, C)
    h = jnp.maximum(_instance_norm(h, H * W), 0.0)               # [H*W, C] f32

    # conv2 (reflect pad, bf16 MXU, f32 acc) + InstanceNorm
    h_pad = _reflect_pad_hw(h.astype(jnp.bfloat16).reshape(H, W, C))
    h = _conv3x3_into(acc_ref, h_pad, w2_ref, b2_ref, H, W, C)
    h = _instance_norm(h, H * W)                                 # [H*W, C] f32

    # residual add against the original (f32) input
    out = x.reshape(H * W, C) + h
    o_ref[0] = out.reshape(H, W, C).astype(o_ref.dtype)


def resnet_block(x_nhwc, params):
    """Fused ResnetBlock forward. x_nhwc: [N, H, W, C] float32 -> [N, H, W, C]."""
    w1, b1, w2, b2 = params
    N, H, W, C = x_nhwc.shape

    # bf16 operands for the MXU (f32 accumulation inside the kernel).
    w1_bf = w1.astype(jnp.bfloat16)
    w2_bf = w2.astype(jnp.bfloat16)

    w_const = lambda n: (0, 0, 0, 0)
    b_const = lambda n: (0, 0)
    grid_spec = pltpu.PrefetchScalarGridSpec(
        num_scalar_prefetch=0,
        grid=(N,),
        in_specs=[
            pl.BlockSpec((1, H, W, C), lambda n: (n, 0, 0, 0)),                 # x: one sample/tile
            pl.BlockSpec((3, 3, C, C), w_const, pipeline_mode=pl.Buffered(1)),  # w1 (VMEM-resident)
            pl.BlockSpec((1, C), b_const, pipeline_mode=pl.Buffered(1)),        # b1
            pl.BlockSpec((3, 3, C, C), w_const, pipeline_mode=pl.Buffered(1)),  # w2
            pl.BlockSpec((1, C), b_const, pipeline_mode=pl.Buffered(1)),        # b2
        ],
        out_specs=pl.BlockSpec((1, H, W, C), lambda n: (n, 0, 0, 0)),
        scratch_shapes=[pltpu.VMEM((H * W, C), jnp.float32)],                   # conv accumulator
    )

    flops = 2 * 2 * 9 * N * H * W * C * C                        # two 3x3 convs
    bytes_accessed = (4 * 2 * N * H * W * C                      # x in + y out (f32)
                      + 2 * 2 * 9 * C * C                        # two bf16 weight tensors
                      + 4 * 2 * C)                               # two f32 biases

    return pl.pallas_call(
        resnet_block_kernel,
        out_shape=jax.ShapeDtypeStruct((N, H, W, C), x_nhwc.dtype),
        grid_spec=grid_spec,
        compiler_params=pltpu.CompilerParams(
            dimension_semantics=("parallel",),                   # megacore shards samples
            vmem_limit_bytes=48 * 1024 * 1024),
        cost_estimate=pl.CostEstimate(
            flops=flops, transcendentals=2 * N * C, bytes_accessed=bytes_accessed),
    )(x_nhwc, w1_bf, b1, w2_bf, b2)


def resnet_block_nchw(x_nchw, params):
    """Drop-in NCHW wrapper. Prefer keeping activations NHWC end-to-end and
    calling resnet_block() directly (avoids 4 extra full-tensor HBM passes)."""
    y = resnet_block(jnp.transpose(x_nchw, (0, 2, 3, 1)), params)
    return jnp.transpose(y, (0, 3, 1, 2))


def init_params(key, dim):
    k1, k2, k3, k4 = jax.random.split(key, 4)
    # Conv weights stored HWIO: [3, 3, C_in, C_out]; biases [1, C].
    w1 = 0.1 * jax.random.normal(k1, (3, 3, dim, dim), jnp.float32)
    b1 = 0.1 * jax.random.normal(k2, (1, dim), jnp.float32)
    w2 = 0.1 * jax.random.normal(k3, (3, 3, dim, dim), jnp.float32)
    b2 = 0.1 * jax.random.normal(k4, (1, dim), jnp.float32)
    return (w1, b1, w2, b2)


def _reference(x_nhwc, params):
    """Pure-JAX (f32) reference of the same forward pass, NHWC."""
    w1, b1, w2, b2 = params

    def conv(a, w, b):
        ap = jnp.pad(a, ((0, 0), (1, 1), (1, 1), (0, 0)), mode="reflect")
        y = jax.lax.conv_general_dilated(
            ap, w, window_strides=(1, 1), padding="VALID",
            dimension_numbers=("NHWC", "HWIO", "NHWC"),
            precision=jax.lax.Precision.HIGHEST)
        return y + b.reshape(1, 1, 1, -1)

    def inorm(a):
        mu = jnp.mean(a, axis=(1, 2), keepdims=True)
        var = jnp.mean((a - mu) ** 2, axis=(1, 2), keepdims=True)
        return (a - mu) * jax.lax.rsqrt(var + IN_EPS)

    h = jax.nn.relu(inorm(conv(x_nhwc, w1, b1)))
    h = inorm(conv(h, w2, b2))
    return x_nhwc + h


if __name__ == "__main__":
    key = jax.random.PRNGKey(0)
    kx, kp = jax.random.split(key)

    # NHWC [2, 16, 16, 32]  (layout-equivalent to the module's NCHW [2, 32, 16, 16])
    N, dim, H, W = 2, 32, 16, 16
    x = jax.random.normal(kx, (N, H, W, dim), jnp.float32)
    params = init_params(kp, dim)

    out = jax.block_until_ready(resnet_block(x, params))
    assert out.shape == (N, H, W, dim), out.shape

    ref = jax.block_until_ready(_reference(x, params))
    max_err = float(jnp.max(jnp.abs(out - ref)))
    # bf16 MXU operands (f32 accumulation) => small drift vs the f32 HIGHEST reference.
    assert max_err < 1e-1, f"mismatch vs pure-JAX reference: {max_err}"

    print("KERNEL_OK")
</pallas_src>

<mosaic_0001>
module attributes {stable_mosaic.version = 11 : i64} {
  func.func @resnet_block_kernel(%arg0: i32, %arg1: memref<1x16x16x32xf32, #tpu.memory_space<vmem>>, %arg2: memref<3x3x32x32xbf16, #tpu.memory_space<vmem>>, %arg3: memref<1x32xf32, #tpu.memory_space<vmem>>, %arg4: memref<3x3x32x32xbf16, #tpu.memory_space<vmem>>, %arg5: memref<1x32xf32, #tpu.memory_space<vmem>>, %arg6: memref<1x16x16x32xf32, #tpu.memory_space<vmem>>, %arg7: memref<256x32xf32, #tpu.memory_space<vmem>>) attributes {dimension_semantics = [#tpu.dimension_semantics<parallel>], iteration_bounds = array<i64: 2>, scalar_prefetch = 0 : i64, scratch_operands = 1 : i64, tpu.core_type = #tpu.core_type<tc>, window_params = [{transform_indices = @transform_0, window_bounds = array<i64: 1, 16, 16, 32>}, {pipeline_mode = #tpu.pipeline_mode<synchronous>, transform_indices = @transform_1, window_bounds = array<i64: 3, 3, 32, 32>}, {pipeline_mode = #tpu.pipeline_mode<synchronous>, transform_indices = @transform_2, window_bounds = array<i64: 1, 32>}, {pipeline_mode = #tpu.pipeline_mode<synchronous>, transform_indices = @transform_3, window_bounds = array<i64: 3, 3, 32, 32>}, {pipeline_mode = #tpu.pipeline_mode<synchronous>, transform_indices = @transform_4, window_bounds = array<i64: 1, 32>}, {transform_indices = @transform_5, window_bounds = array<i64: 1, 16, 16, 32>}]} {
    %c0 = arith.constant 0 : index
    %c0_0 = arith.constant 0 : index
    %c0_1 = arith.constant 0 : index
    %c0_2 = arith.constant 0 : index
    %0 = vector.load %arg1[%c0, %c0_0, %c0_1, %c0_2] : memref<1x16x16x32xf32, #tpu.memory_space<vmem>>, vector<1x16x16x32xf32>
    %1 = vector.shape_cast %0 : vector<1x16x16x32xf32> to vector<16x16x32xf32>
    %2 = vector.extract_strided_slice %1 {offsets = [1, 0, 0], sizes = [1, 16, 32], strides = [1, 1, 1]} : vector<16x16x32xf32> to vector<1x16x32xf32>
    %3 = vector.extract_strided_slice %1 {offsets = [14, 0, 0], sizes = [1, 16, 32], strides = [1, 1, 1]} : vector<16x16x32xf32> to vector<1x16x32xf32>
    %4 = tpu.concatenate %2, %1, %3 in 0 : vector<1x16x32xf32>, vector<16x16x32xf32>, vector<1x16x32xf32> -> vector<18x16x32xf32>
    %5 = vector.extract_strided_slice %4 {offsets = [0, 1, 0], sizes = [18, 1, 32], strides = [1, 1, 1]} : vector<18x16x32xf32> to vector<18x1x32xf32>
    %6 = vector.extract_strided_slice %4 {offsets = [0, 14, 0], sizes = [18, 1, 32], strides = [1, 1, 1]} : vector<18x16x32xf32> to vector<18x1x32xf32>
    %7 = tpu.concatenate %5, %4, %6 in 1 : vector<18x1x32xf32>, vector<18x16x32xf32>, vector<18x1x32xf32> -> vector<18x18x32xf32>
    %8 = arith.truncf %7 : vector<18x18x32xf32> to vector<18x18x32xbf16>
    %c0_3 = arith.constant 0 : index
    %c0_4 = arith.constant 0 : index
    %9 = vector.load %arg3[%c0_3, %c0_4] : memref<1x32xf32, #tpu.memory_space<vmem>>, vector<1x32xf32>
    %10 = vector.shape_cast %9 : vector<1x32xf32> to vector<1x32xf32>
    %11 = vector.broadcast %10 : vector<1x32xf32> to vector<256x32xf32>
    %c0_5 = arith.constant 0 : index
    %c0_6 = arith.constant 0 : index
    %12 = vector.load %arg7[%c0_5, %c0_6] : memref<256x32xf32, #tpu.memory_space<vmem>>, vector<256x32xf32>
    tpu.vector_store %arg7[%c0_5, %c0_6], %11 {strides = array<i32>} : memref<256x32xf32, #tpu.memory_space<vmem>>, vector<256x32xf32>,
    %13 = vector.extract_strided_slice %8 {offsets = [0, 0, 0], sizes = [18, 16, 32], strides = [1, 1, 1]} : vector<18x18x32xbf16> to vector<18x16x32xbf16>
    %14 = vector.extract_strided_slice %13 {offsets = [0, 0, 0], sizes = [16, 16, 32], strides = [1, 1, 1]} : vector<18x16x32xbf16> to vector<16x16x32xbf16>
    %15 = vector.shape_cast %14 : vector<16x16x32xbf16> to vector<256x32xbf16>
    %c0_7 = arith.constant 0 : index
    %c0_8 = arith.constant 0 : index
    %16 = vector.load %arg7[%c0_7, %c0_8] : memref<256x32xf32, #tpu.memory_space<vmem>>, vector<256x32xf32>
    %c0_9 = arith.constant 0 : index
    %c0_10 = arith.constant 0 : index
    %c0_11 = arith.constant 0 : index
    %c0_12 = arith.constant 0 : index
    %17 = vector.load %arg2[%c0_9, %c0_10, %c0_11, %c0_12] : memref<3x3x32x32xbf16, #tpu.memory_space<vmem>>, vector<1x1x32x32xbf16>
    %18 = vector.shape_cast %17 : vector<1x1x32x32xbf16> to vector<32x32xbf16>
    %cst = arith.constant dense<0.000000e+00> : vector<256x32xf32>
    %19 = tpu.matmul %15, %18, %cst {dimension_numbers = #tpu.dot_dimension_numbers<[1], [0], [0], [1], [0, 0, 1, 1], [], []>} : vector<256x32xbf16>, vector<32x32xbf16>, vector<256x32xf32> -> vector<256x32xf32>
    %20 = arith.addf %16, %19 : vector<256x32xf32>
    %c0_13 = arith.constant 0 : index
    %c0_14 = arith.constant 0 : index
    %21 = vector.load %arg7[%c0_13, %c0_14] : memref<256x32xf32, #tpu.memory_space<vmem>>, vector<256x32xf32>
    tpu.vector_store %arg7[%c0_13, %c0_14], %20 {strides = array<i32>} : memref<256x32xf32, #tpu.memory_space<vmem>>, vector<256x32xf32>,
    %22 = vector.extract_strided_slice %13 {offsets = [1, 0, 0], sizes = [16, 16, 32], strides = [1, 1, 1]} : vector<18x16x32xbf16> to vector<16x16x32xbf16>
    %23 = vector.shape_cast %22 : vector<16x16x32xbf16> to vector<256x32xbf16>
    %c0_15 = arith.constant 0 : index
    %c0_16 = arith.constant 0 : index
    %24 = vector.load %arg7[%c0_15, %c0_16] : memref<256x32xf32, #tpu.memory_space<vmem>>, vector<256x32xf32>
    %c1 = arith.constant 1 : index
    %c0_17 = arith.constant 0 : index
    %c0_18 = arith.constant 0 : index
    %c0_19 = arith.constant 0 : index
    %25 = vector.load %arg2[%c1, %c0_17, %c0_18, %c0_19] : memref<3x3x32x32xbf16, #tpu.memory_space<vmem>>, vector<1x1x32x32xbf16>
    %26 = vector.shape_cast %25 : vector<1x1x32x32xbf16> to vector<32x32xbf16>
    %cst_20 = arith.constant dense<0.000000e+00> : vector<256x32xf32>
    %27 = tpu.matmul %23, %26, %cst_20 {dimension_numbers = #tpu.dot_dimension_numbers<[1], [0], [0], [1], [0, 0, 1, 1], [], []>} : vector<256x32xbf16>, vector<32x32xbf16>, vector<256x32xf32> -> vector<256x32xf32>
    %28 = arith.addf %24, %27 : vector<256x32xf32>
    %c0_21 = arith.constant 0 : index
    %c0_22 = arith.constant 0 : index
    %29 = vector.load %arg7[%c0_21, %c0_22] : memref<256x32xf32, #tpu.memory_space<vmem>>, vector<256x32xf32>
    tpu.vector_store %arg7[%c0_21, %c0_22], %28 {strides = array<i32>} : memref<256x32xf32, #tpu.memory_space<vmem>>, vector<256x32xf32>,
    %30 = vector.extract_strided_slice %13 {offsets = [2, 0, 0], sizes = [16, 16, 32], strides = [1, 1, 1]} : vector<18x16x32xbf16> to vector<16x16x32xbf16>
    %31 = vector.shape_cast %30 : vector<16x16x32xbf16> to vector<256x32xbf16>
    %c0_23 = arith.constant 0 : index
    %c0_24 = arith.constant 0 : index
    %32 = vector.load %arg7[%c0_23, %c0_24] : memref<256x32xf32, #tpu.memory_space<vmem>>, vector<256x32xf32>
    %c2 = arith.constant 2 : index
    %c0_25 = arith.constant 0 : index
    %c0_26 = arith.constant 0 : index
    %c0_27 = arith.constant 0 : index
    %33 = vector.load %arg2[%c2, %c0_25, %c0_26, %c0_27] : memref<3x3x32x32xbf16, #tpu.memory_space<vmem>>, vector<1x1x32x32xbf16>
    %34 = vector.shape_cast %33 : vector<1x1x32x32xbf16> to vector<32x32xbf16>
    %cst_28 = arith.constant dense<0.000000e+00> : vector<256x32xf32>
    %35 = tpu.matmul %31, %34, %cst_28 {dimension_numbers = #tpu.dot_dimension_numbers<[1], [0], [0], [1], [0, 0, 1, 1], [], []>} : vector<256x32xbf16>, vector<32x32xbf16>, vector<256x32xf32> -> vector<256x32xf32>
    %36 = arith.addf %32, %35 : vector<256x32xf32>
    %c0_29 = arith.constant 0 : index
    %c0_30 = arith.constant 0 : index
    %37 = vector.load %arg7[%c0_29, %c0_30] : memref<256x32xf32, #tpu.memory_space<vmem>>, vector<256x32xf32>
    tpu.vector_store %arg7[%c0_29, %c0_30], %36 {strides = array<i32>} : memref<256x32xf32, #tpu.memory_space<vmem>>, vector<256x32xf32>,
    %38 = vector.extract_strided_slice %8 {offsets = [0, 1, 0], sizes = [18, 16, 32], strides = [1, 1, 1]} : vector<18x18x32xbf16> to vector<18x16x32xbf16>
    %39 = vector.extract_strided_slice %38 {offsets = [0, 0, 0], sizes = [16, 16, 32], strides = [1, 1, 1]} : vector<18x16x32xbf16> to vector<16x16x32xbf16>
    %40 = vector.shape_cast %39 : vector<16x16x32xbf16> to vector<256x32xbf16>
    %c0_31 = arith.constant 0 : index
    %c0_32 = arith.constant 0 : index
    %41 = vector.load %arg7[%c0_31, %c0_32] : memref<256x32xf32, #tpu.memory_space<vmem>>, vector<256x32xf32>
    %c0_33 = arith.constant 0 : index
    %c1_34 = arith.constant 1 : index
    %c0_35 = arith.constant 0 : index
    %c0_36 = arith.constant 0 : index
    %42 = vector.load %arg2[%c0_33, %c1_34, %c0_35, %c0_36] : memref<3x3x32x32xbf16, #tpu.memory_space<vmem>>, vector<1x1x32x32xbf16>
    %43 = vector.shape_cast %42 : vector<1x1x32x32xbf16> to vector<32x32xbf16>
    %cst_37 = arith.constant dense<0.000000e+00> : vector<256x32xf32>
    %44 = tpu.matmul %40, %43, %cst_37 {dimension_numbers = #tpu.dot_dimension_numbers<[1], [0], [0], [1], [0, 0, 1, 1], [], []>} : vector<256x32xbf16>, vector<32x32xbf16>, vector<256x32xf32> -> vector<256x32xf32>
    %45 = arith.addf %41, %44 : vector<256x32xf32>
    %c0_38 = arith.constant 0 : index
    %c0_39 = arith.constant 0 : index
    %46 = vector.load %arg7[%c0_38, %c0_39] : memref<256x32xf32, #tpu.memory_space<vmem>>, vector<256x32xf32>
    tpu.vector_store %arg7[%c0_38, %c0_39], %45 {strides = array<i32>} : memref<256x32xf32, #tpu.memory_space<vmem>>, vector<256x32xf32>,
    %47 = vector.extract_strided_slice %38 {offsets = [1, 0, 0], sizes = [16, 16, 32], strides = [1, 1, 1]} : vector<18x16x32xbf16> to vector<16x16x32xbf16>
    %48 = vector.shape_cast %47 : vector<16x16x32xbf16> to vector<256x32xbf16>
    %c0_40 = arith.constant 0 : index
    %c0_41 = arith.constant 0 : index
    %49 = vector.load %arg7[%c0_40, %c0_41] : memref<256x32xf32, #tpu.memory_space<vmem>>, vector<256x32xf32>
    %c1_42 = arith.constant 1 : index
    %c1_43 = arith.constant 1 : index
    %c0_44 = arith.constant 0 : index
    %c0_45 = arith.constant 0 : index
    %50 = vector.load %arg2[%c1_42, %c1_43, %c0_44, %c0_45] : memref<3x3x32x32xbf16, #tpu.memory_space<vmem>>, vector<1x1x32x32xbf16>
    %51 = vector.shape_cast %50 : vector<1x1x32x32xbf16> to vector<32x32xbf16>
    %cst_46 = arith.constant dense<0.000000e+00> : vector<256x32xf32>
    %52 = tpu.matmul %48, %51, %cst_46 {dimension_numbers = #tpu.dot_dimension_numbers<[1], [0], [0], [1], [0, 0, 1, 1], [], []>} : vector<256x32xbf16>, vector<32x32xbf16>, vector<256x32xf32> -> vector<256x32xf32>
    %53 = arith.addf %49, %52 : vector<256x32xf32>
    %c0_47 = arith.constant 0 : index
    %c0_48 = arith.constant 0 : index
    %54 = vector.load %arg7[%c0_47, %c0_48] : memref<256x32xf32, #tpu.memory_space<vmem>>, vector<256x32xf32>
    tpu.vector_store %arg7[%c0_47, %c0_48], %53 {strides = array<i32>} : memref<256x32xf32, #tpu.memory_space<vmem>>, vector<256x32xf32>,
    %55 = vector.extract_strided_slice %38 {offsets = [2, 0, 0], sizes = [16, 16, 32], strides = [1, 1, 1]} : vector<18x16x32xbf16> to vector<16x16x32xbf16>
    %56 = vector.shape_cast %55 : vector<16x16x32xbf16> to vector<256x32xbf16>
    %c0_49 = arith.constant 0 : index
    %c0_50 = arith.constant 0 : index
    %57 = vector.load %arg7[%c0_49, %c0_50] : memref<256x32xf32, #tpu.memory_space<vmem>>, vector<256x32xf32>
    %c2_51 = arith.constant 2 : index
    %c1_52 = arith.constant 1 : index
    %c0_53 = arith.constant 0 : index
    %c0_54 = arith.constant 0 : index
    %58 = vector.load %arg2[%c2_51, %c1_52, %c0_53, %c0_54] : memref<3x3x32x32xbf16, #tpu.memory_space<vmem>>, vector<1x1x32x32xbf16>
    %59 = vector.shape_cast %58 : vector<1x1x32x32xbf16> to vector<32x32xbf16>
    %cst_55 = arith.constant dense<0.000000e+00> : vector<256x32xf32>
    %60 = tpu.matmul %56, %59, %cst_55 {dimension_numbers = #tpu.dot_dimension_numbers<[1], [0], [0], [1], [0, 0, 1, 1], [], []>} : vector<256x32xbf16>, vector<32x32xbf16>, vector<256x32xf32> -> vector<256x32xf32>
    %61 = arith.addf %57, %60 : vector<256x32xf32>
    %c0_56 = arith.constant 0 : index
    %c0_57 = arith.constant 0 : index
    %62 = vector.load %arg7[%c0_56, %c0_57] : memref<256x32xf32, #tpu.memory_space<vmem>>, vector<256x32xf32>
    tpu.vector_store %arg7[%c0_56, %c0_57], %61 {strides = array<i32>} : memref<256x32xf32, #tpu.memory_space<vmem>>, vector<256x32xf32>,
    %63 = vector.extract_strided_slice %8 {offsets = [0, 2, 0], sizes = [18, 16, 32], strides = [1, 1, 1]} : vector<18x18x32xbf16> to vector<18x16x32xbf16>
    %64 = vector.extract_strided_slice %63 {offsets = [0, 0, 0], sizes = [16, 16, 32], strides = [1, 1, 1]} : vector<18x16x32xbf16> to vector<16x16x32xbf16>
    %65 = vector.shape_cast %64 : vector<16x16x32xbf16> to vector<256x32xbf16>
    %c0_58 = arith.constant 0 : index
    %c0_59 = arith.constant 0 : index
    %66 = vector.load %arg7[%c0_58, %c0_59] : memref<256x32xf32, #tpu.memory_space<vmem>>, vector<256x32xf32>
    %c0_60 = arith.constant 0 : index
    %c2_61 = arith.constant 2 : index
    %c0_62 = arith.constant 0 : index
    %c0_63 = arith.constant 0 : index
    %67 = vector.load %arg2[%c0_60, %c2_61, %c0_62, %c0_63] : memref<3x3x32x32xbf16, #tpu.memory_space<vmem>>, vector<1x1x32x32xbf16>
    %68 = vector.shape_cast %67 : vector<1x1x32x32xbf16> to vector<32x32xbf16>
    %cst_64 = arith.constant dense<0.000000e+00> : vector<256x32xf32>
    %69 = tpu.matmul %65, %68, %cst_64 {dimension_numbers = #tpu.dot_dimension_numbers<[1], [0], [0], [1], [0, 0, 1, 1], [], []>} : vector<256x32xbf16>, vector<32x32xbf16>, vector<256x32xf32> -> vector<256x32xf32>
    %70 = arith.addf %66, %69 : vector<256x32xf32>
    %c0_65 = arith.constant 0 : index
    %c0_66 = arith.constant 0 : index
    %71 = vector.load %arg7[%c0_65, %c0_66] : memref<256x32xf32, #tpu.memory_space<vmem>>, vector<256x32xf32>
    tpu.vector_store %arg7[%c0_65, %c0_66], %70 {strides = array<i32>} : memref<256x32xf32, #tpu.memory_space<vmem>>, vector<256x32xf32>,
    %72 = vector.extract_strided_slice %63 {offsets = [1, 0, 0], sizes = [16, 16, 32], strides = [1, 1, 1]} : vector<18x16x32xbf16> to vector<16x16x32xbf16>
    %73 = vector.shape_cast %72 : vector<16x16x32xbf16> to vector<256x32xbf16>
    %c0_67 = arith.constant 0 : index
    %c0_68 = arith.constant 0 : index
    %74 = vector.load %arg7[%c0_67, %c0_68] : memref<256x32xf32, #tpu.memory_space<vmem>>, vector<256x32xf32>
    %c1_69 = arith.constant 1 : index
    %c2_70 = arith.constant 2 : index
    %c0_71 = arith.constant 0 : index
    %c0_72 = arith.constant 0 : index
    %75 = vector.load %arg2[%c1_69, %c2_70, %c0_71, %c0_72] : memref<3x3x32x32xbf16, #tpu.memory_space<vmem>>, vector<1x1x32x32xbf16>
    %76 = vector.shape_cast %75 : vector<1x1x32x32xbf16> to vector<32x32xbf16>
    %cst_73 = arith.constant dense<0.000000e+00> : vector<256x32xf32>
    %77 = tpu.matmul %73, %76, %cst_73 {dimension_numbers = #tpu.dot_dimension_numbers<[1], [0], [0], [1], [0, 0, 1, 1], [], []>} : vector<256x32xbf16>, vector<32x32xbf16>, vector<256x32xf32> -> vector<256x32xf32>
    %78 = arith.addf %74, %77 : vector<256x32xf32>
    %c0_74 = arith.constant 0 : index
    %c0_75 = arith.constant 0 : index
    %79 = vector.load %arg7[%c0_74, %c0_75] : memref<256x32xf32, #tpu.memory_space<vmem>>, vector<256x32xf32>
    tpu.vector_store %arg7[%c0_74, %c0_75], %78 {strides = array<i32>} : memref<256x32xf32, #tpu.memory_space<vmem>>, vector<256x32xf32>,
    %80 = vector.extract_strided_slice %63 {offsets = [2, 0, 0], sizes = [16, 16, 32], strides = [1, 1, 1]} : vector<18x16x32xbf16> to vector<16x16x32xbf16>
    %81 = vector.shape_cast %80 : vector<16x16x32xbf16> to vector<256x32xbf16>
    %c0_76 = arith.constant 0 : index
    %c0_77 = arith.constant 0 : index
    %82 = vector.load %arg7[%c0_76, %c0_77] : memref<256x32xf32, #tpu.memory_space<vmem>>, vector<256x32xf32>
    %c2_78 = arith.constant 2 : index
    %c2_79 = arith.constant 2 : index
    %c0_80 = arith.constant 0 : index
    %c0_81 = arith.constant 0 : index
    %83 = vector.load %arg2[%c2_78, %c2_79, %c0_80, %c0_81] : memref<3x3x32x32xbf16, #tpu.memory_space<vmem>>, vector<1x1x32x32xbf16>
    %84 = vector.shape_cast %83 : vector<1x1x32x32xbf16> to vector<32x32xbf16>
    %cst_82 = arith.constant dense<0.000000e+00> : vector<256x32xf32>
    %85 = tpu.matmul %81, %84, %cst_82 {dimension_numbers = #tpu.dot_dimension_numbers<[1], [0], [0], [1], [0, 0, 1, 1], [], []>} : vector<256x32xbf16>, vector<32x32xbf16>, vector<256x32xf32> -> vector<256x32xf32>
    %86 = arith.addf %82, %85 : vector<256x32xf32>
    %c0_83 = arith.constant 0 : index
    %c0_84 = arith.constant 0 : index
    %87 = vector.load %arg7[%c0_83, %c0_84] : memref<256x32xf32, #tpu.memory_space<vmem>>, vector<256x32xf32>
    tpu.vector_store %arg7[%c0_83, %c0_84], %86 {strides = array<i32>} : memref<256x32xf32, #tpu.memory_space<vmem>>, vector<256x32xf32>,
    %c0_85 = arith.constant 0 : index
    %c0_86 = arith.constant 0 : index
    %88 = vector.load %arg7[%c0_85, %c0_86] : memref<256x32xf32, #tpu.memory_space<vmem>>, vector<256x32xf32>
    %cst_87 = arith.constant dense<0.000000e+00> : vector<32xf32>
    %89 = vector.multi_reduction <add>, %88, %cst_87 [0] : vector<256x32xf32> to vector<32xf32>
    %90 = vector.shape_cast %89 : vector<32xf32> to vector<1x32xf32>
    %91 = arith.mulf %88, %88 : vector<256x32xf32>
    %cst_88 = arith.constant dense<0.000000e+00> : vector<32xf32>
    %92 = vector.multi_reduction <add>, %91, %cst_88 [0] : vector<256x32xf32> to vector<32xf32>
    %93 = vector.shape_cast %92 : vector<32xf32> to vector<1x32xf32>
    %cst_89 = arith.constant 3.906250e-03 : f32
    %94 = vector.broadcast %cst_89 : f32 to vector<1x32xf32>
    %95 = arith.mulf %90, %94 : vector<1x32xf32>
    %cst_90 = arith.constant 3.906250e-03 : f32
    %96 = vector.broadcast %cst_90 : f32 to vector<1x32xf32>
    %97 = arith.mulf %93, %96 : vector<1x32xf32>
    %98 = arith.mulf %95, %95 : vector<1x32xf32>
    %99 = arith.subf %97, %98 : vector<1x32xf32>
    %cst_91 = arith.constant 0.000000e+00 : f32
    %100 = vector.broadcast %cst_91 : f32 to vector<1x32xf32>
    %101 = arith.maximumf %99, %100 : vector<1x32xf32>
    %102 = vector.broadcast %95 : vector<1x32xf32> to vector<256x32xf32>
    %103 = arith.subf %88, %102 : vector<256x32xf32>
    %cst_92 = arith.constant 9.99999974E-6 : f32
    %104 = vector.broadcast %cst_92 : f32 to vector<1x32xf32>
    %105 = arith.addf %101, %104 : vector<1x32xf32>
    %106 = math.rsqrt %105 : vector<1x32xf32>
    %107 = vector.broadcast %106 : vector<1x32xf32> to vector<256x32xf32>
    %108 = arith.mulf %103, %107 : vector<256x32xf32>
    %cst_93 = arith.constant 0.000000e+00 : f32
    %109 = vector.broadcast %cst_93 : f32 to vector<256x32xf32>
    %110 = arith.maximumf %108, %109 : vector<256x32xf32>
    %111 = arith.truncf %110 : vector<256x32xf32> to vector<256x32xbf16>
    %112 = vector.shape_cast %111 : vector<256x32xbf16> to vector<16x16x32xbf16>
    %113 = vector.extract_strided_slice %112 {offsets = [1, 0, 0], sizes = [1, 16, 32], strides = [1, 1, 1]} : vector<16x16x32xbf16> to vector<1x16x32xbf16>
    %114 = vector.extract_strided_slice %112 {offsets = [14, 0, 0], sizes = [1, 16, 32], strides = [1, 1, 1]} : vector<16x16x32xbf16> to vector<1x16x32xbf16>
    %115 = tpu.concatenate %113, %112, %114 in 0 : vector<1x16x32xbf16>, vector<16x16x32xbf16>, vector<1x16x32xbf16> -> vector<18x16x32xbf16>
    %116 = vector.extract_strided_slice %115 {offsets = [0, 1, 0], sizes = [18, 1, 32], strides = [1, 1, 1]} : vector<18x16x32xbf16> to vector<18x1x32xbf16>
    %117 = vector.extract_strided_slice %115 {offsets = [0, 14, 0], sizes = [18, 1, 32], strides = [1, 1, 1]} : vector<18x16x32xbf16> to vector<18x1x32xbf16>
    %118 = tpu.concatenate %116, %115, %117 in 1 : vector<18x1x32xbf16>, vector<18x16x32xbf16>, vector<18x1x32xbf16> -> vector<18x18x32xbf16>
    %c0_94 = arith.constant 0 : index
    %c0_95 = arith.constant 0 : index
    %119 = vector.load %arg5[%c0_94, %c0_95] : memref<1x32xf32, #tpu.memory_space<vmem>>, vector<1x32xf32>
    %120 = vector.shape_cast %119 : vector<1x32xf32> to vector<1x32xf32>
    %121 = vector.broadcast %120 : vector<1x32xf32> to vector<256x32xf32>
    %c0_96 = arith.constant 0 : index
    %c0_97 = arith.constant 0 : index
    %122 = vector.load %arg7[%c0_96, %c0_97] : memref<256x32xf32, #tpu.memory_space<vmem>>, vector<256x32xf32>
    tpu.vector_store %arg7[%c0_96, %c0_97], %121 {strides = array<i32>} : memref<256x32xf32, #tpu.memory_space<vmem>>, vector<256x32xf32>,
    %123 = vector.extract_strided_slice %118 {offsets = [0, 0, 0], sizes = [18, 16, 32], strides = [1, 1, 1]} : vector<18x18x32xbf16> to vector<18x16x32xbf16>
    %124 = vector.extract_strided_slice %123 {offsets = [0, 0, 0], sizes = [16, 16, 32], strides = [1, 1, 1]} : vector<18x16x32xbf16> to vector<16x16x32xbf16>
    %125 = vector.shape_cast %124 : vector<16x16x32xbf16> to vector<256x32xbf16>
    %c0_98 = arith.constant 0 : index
    %c0_99 = arith.constant 0 : index
    %126 = vector.load %arg7[%c0_98, %c0_99] : memref<256x32xf32, #tpu.memory_space<vmem>>, vector<256x32xf32>
    %c0_100 = arith.constant 0 : index
    %c0_101 = arith.constant 0 : index
    %c0_102 = arith.constant 0 : index
    %c0_103 = arith.constant 0 : index
    %127 = vector.load %arg4[%c0_100, %c0_101, %c0_102, %c0_103] : memref<3x3x32x32xbf16, #tpu.memory_space<vmem>>, vector<1x1x32x32xbf16>
    %128 = vector.shape_cast %127 : vector<1x1x32x32xbf16> to vector<32x32xbf16>
    %cst_104 = arith.constant dense<0.000000e+00> : vector<256x32xf32>
    %129 = tpu.matmul %125, %128, %cst_104 {dimension_numbers = #tpu.dot_dimension_numbers<[1], [0], [0], [1], [0, 0, 1, 1], [], []>} : vector<256x32xbf16>, vector<32x32xbf16>, vector<256x32xf32> -> vector<256x32xf32>
    %130 = arith.addf %126, %129 : vector<256x32xf32>
    %c0_105 = arith.constant 0 : index
    %c0_106 = arith.constant 0 : index
    %131 = vector.load %arg7[%c0_105, %c0_106] : memref<256x32xf32, #tpu.memory_space<vmem>>, vector<256x32xf32>
    tpu.vector_store %arg7[%c0_105, %c0_106], %130 {strides = array<i32>} : memref<256x32xf32, #tpu.memory_space<vmem>>, vector<256x32xf32>,
    %132 = vector.extract_strided_slice %123 {offsets = [1, 0, 0], sizes = [16, 16, 32], strides = [1, 1, 1]} : vector<18x16x32xbf16> to vector<16x16x32xbf16>
    %133 = vector.shape_cast %132 : vector<16x16x32xbf16> to vector<256x32xbf16>
    %c0_107 = arith.constant 0 : index
    %c0_108 = arith.constant 0 : index
    %134 = vector.load %arg7[%c0_107, %c0_108] : memref<256x32xf32, #tpu.memory_space<vmem>>, vector<256x32xf32>
    %c1_109 = arith.constant 1 : index
    %c0_110 = arith.constant 0 : index
    %c0_111 = arith.constant 0 : index
    %c0_112 = arith.constant 0 : index
    %135 = vector.load %arg4[%c1_109, %c0_110, %c0_111, %c0_112] : memref<3x3x32x32xbf16, #tpu.memory_space<vmem>>, vector<1x1x32x32xbf16>
    %136 = vector.shape_cast %135 : vector<1x1x32x32xbf16> to vector<32x32xbf16>
    %cst_113 = arith.constant dense<0.000000e+00> : vector<256x32xf32>
    %137 = tpu.matmul %133, %136, %cst_113 {dimension_numbers = #tpu.dot_dimension_numbers<[1], [0], [0], [1], [0, 0, 1, 1], [], []>} : vector<256x32xbf16>, vector<32x32xbf16>, vector<256x32xf32> -> vector<256x32xf32>
    %138 = arith.addf %134, %137 : vector<256x32xf32>
    %c0_114 = arith.constant 0 : index
    %c0_115 = arith.constant 0 : index
    %139 = vector.load %arg7[%c0_114, %c0_115] : memref<256x32xf32, #tpu.memory_space<vmem>>, vector<256x32xf32>
    tpu.vector_store %arg7[%c0_114, %c0_115], %138 {strides = array<i32>} : memref<256x32xf32, #tpu.memory_space<vmem>>, vector<256x32xf32>,
    %140 = vector.extract_strided_slice %123 {offsets = [2, 0, 0], sizes = [16, 16, 32], strides = [1, 1, 1]} : vector<18x16x32xbf16> to vector<16x16x32xbf16>
    %141 = vector.shape_cast %140 : vector<16x16x32xbf16> to vector<256x32xbf16>
    %c0_116 = arith.constant 0 : index
    %c0_117 = arith.constant 0 : index
    %142 = vector.load %arg7[%c0_116, %c0_117] : memref<256x32xf32, #tpu.memory_space<vmem>>, vector<256x32xf32>
    %c2_118 = arith.constant 2 : index
    %c0_119 = arith.constant 0 : index
    %c0_120 = arith.constant 0 : index
    %c0_121 = arith.constant 0 : index
    %143 = vector.load %arg4[%c2_118, %c0_119, %c0_120, %c0_121] : memref<3x3x32x32xbf16, #tpu.memory_space<vmem>>, vector<1x1x32x32xbf16>
    %144 = vector.shape_cast %143 : vector<1x1x32x32xbf16> to vector<32x32xbf16>
    %cst_122 = arith.constant dense<0.000000e+00> : vector<256x32xf32>
    %145 = tpu.matmul %141, %144, %cst_122 {dimension_numbers = #tpu.dot_dimension_numbers<[1], [0], [0], [1], [0, 0, 1, 1], [], []>} : vector<256x32xbf16>, vector<32x32xbf16>, vector<256x32xf32> -> vector<256x32xf32>
    %146 = arith.addf %142, %145 : vector<256x32xf32>
    %c0_123 = arith.constant 0 : index
    %c0_124 = arith.constant 0 : index
    %147 = vector.load %arg7[%c0_123, %c0_124] : memref<256x32xf32, #tpu.memory_space<vmem>>, vector<256x32xf32>
    tpu.vector_store %arg7[%c0_123, %c0_124], %146 {strides = array<i32>} : memref<256x32xf32, #tpu.memory_space<vmem>>, vector<256x32xf32>,
    %148 = vector.extract_strided_slice %118 {offsets = [0, 1, 0], sizes = [18, 16, 32], strides = [1, 1, 1]} : vector<18x18x32xbf16> to vector<18x16x32xbf16>
    %149 = vector.extract_strided_slice %148 {offsets = [0, 0, 0], sizes = [16, 16, 32], strides = [1, 1, 1]} : vector<18x16x32xbf16> to vector<16x16x32xbf16>
    %150 = vector.shape_cast %149 : vector<16x16x32xbf16> to vector<256x32xbf16>
    %c0_125 = arith.constant 0 : index
    %c0_126 = arith.constant 0 : index
    %151 = vector.load %arg7[%c0_125, %c0_126] : memref<256x32xf32, #tpu.memory_space<vmem>>, vector<256x32xf32>
    %c0_127 = arith.constant 0 : index
    %c1_128 = arith.constant 1 : index
    %c0_129 = arith.constant 0 : index
    %c0_130 = arith.constant 0 : index
    %152 = vector.load %arg4[%c0_127, %c1_128, %c0_129, %c0_130] : memref<3x3x32x32xbf16, #tpu.memory_space<vmem>>, vector<1x1x32x32xbf16>
    %153 = vector.shape_cast %152 : vector<1x1x32x32xbf16> to vector<32x32xbf16>
    %cst_131 = arith.constant dense<0.000000e+00> : vector<256x32xf32>
    %154 = tpu.matmul %150, %153, %cst_131 {dimension_numbers = #tpu.dot_dimension_numbers<[1], [0], [0], [1], [0, 0, 1, 1], [], []>} : vector<256x32xbf16>, vector<32x32xbf16>, vector<256x32xf32> -> vector<256x32xf32>
    %155 = arith.addf %151, %154 : vector<256x32xf32>
    %c0_132 = arith.constant 0 : index
    %c0_133 = arith.constant 0 : index
    %156 = vector.load %arg7[%c0_132, %c0_133] : memref<256x32xf32, #tpu.memory_space<vmem>>, vector<256x32xf32>
    tpu.vector_store %arg7[%c0_132, %c0_133], %155 {strides = array<i32>} : memref<256x32xf32, #tpu.memory_space<vmem>>, vector<256x32xf32>,
    %157 = vector.extract_strided_slice %148 {offsets = [1, 0, 0], sizes = [16, 16, 32], strides = [1, 1, 1]} : vector<18x16x32xbf16> to vector<16x16x32xbf16>
    %158 = vector.shape_cast %157 : vector<16x16x32xbf16> to vector<256x32xbf16>
    %c0_134 = arith.constant 0 : index
    %c0_135 = arith.constant 0 : index
    %159 = vector.load %arg7[%c0_134, %c0_135] : memref<256x32xf32, #tpu.memory_space<vmem>>, vector<256x32xf32>
    %c1_136 = arith.constant 1 : index
    %c1_137 = arith.constant 1 : index
    %c0_138 = arith.constant 0 : index
    %c0_139 = arith.constant 0 : index
    %160 = vector.load %arg4[%c1_136, %c1_137, %c0_138, %c0_139] : memref<3x3x32x32xbf16, #tpu.memory_space<vmem>>, vector<1x1x32x32xbf16>
    %161 = vector.shape_cast %160 : vector<1x1x32x32xbf16> to vector<32x32xbf16>
    %cst_140 = arith.constant dense<0.000000e+00> : vector<256x32xf32>
    %162 = tpu.matmul %158, %161, %cst_140 {dimension_numbers = #tpu.dot_dimension_numbers<[1], [0], [0], [1], [0, 0, 1, 1], [], []>} : vector<256x32xbf16>, vector<32x32xbf16>, vector<256x32xf32> -> vector<256x32xf32>
    %163 = arith.addf %159, %162 : vector<256x32xf32>
    %c0_141 = arith.constant 0 : index
    %c0_142 = arith.constant 0 : index
    %164 = vector.load %arg7[%c0_141, %c0_142] : memref<256x32xf32, #tpu.memory_space<vmem>>, vector<256x32xf32>
    tpu.vector_store %arg7[%c0_141, %c0_142], %163 {strides = array<i32>} : memref<256x32xf32, #tpu.memory_space<vmem>>, vector<256x32xf32>,
    %165 = vector.extract_strided_slice %148 {offsets = [2, 0, 0], sizes = [16, 16, 32], strides = [1, 1, 1]} : vector<18x16x32xbf16> to vector<16x16x32xbf16>
    %166 = vector.shape_cast %165 : vector<16x16x32xbf16> to vector<256x32xbf16>
    %c0_143 = arith.constant 0 : index
    %c0_144 = arith.constant 0 : index
    %167 = vector.load %arg7[%c0_143, %c0_144] : memref<256x32xf32, #tpu.memory_space<vmem>>, vector<256x32xf32>
    %c2_145 = arith.constant 2 : index
    %c1_146 = arith.constant 1 : index
    %c0_147 = arith.constant 0 : index
    %c0_148 = arith.constant 0 : index
    %168 = vector.load %arg4[%c2_145, %c1_146, %c0_147, %c0_148] : memref<3x3x32x32xbf16, #tpu.memory_space<vmem>>, vector<1x1x32x32xbf16>
    %169 = vector.shape_cast %168 : vector<1x1x32x32xbf16> to vector<32x32xbf16>
    %cst_149 = arith.constant dense<0.000000e+00> : vector<256x32xf32>
    %170 = tpu.matmul %166, %169, %cst_149 {dimension_numbers = #tpu.dot_dimension_numbers<[1], [0], [0], [1], [0, 0, 1, 1], [], []>} : vector<256x32xbf16>, vector<32x32xbf16>, vector<256x32xf32> -> vector<256x32xf32>
    %171 = arith.addf %167, %170 : vector<256x32xf32>
    %c0_150 = arith.constant 0 : index
    %c0_151 = arith.constant 0 : index
    %172 = vector.load %arg7[%c0_150, %c0_151] : memref<256x32xf32, #tpu.memory_space<vmem>>, vector<256x32xf32>
    tpu.vector_store %arg7[%c0_150, %c0_151], %171 {strides = array<i32>} : memref<256x32xf32, #tpu.memory_space<vmem>>, vector<256x32xf32>,
    %173 = vector.extract_strided_slice %118 {offsets = [0, 2, 0], sizes = [18, 16, 32], strides = [1, 1, 1]} : vector<18x18x32xbf16> to vector<18x16x32xbf16>
    %174 = vector.extract_strided_slice %173 {offsets = [0, 0, 0], sizes = [16, 16, 32], strides = [1, 1, 1]} : vector<18x16x32xbf16> to vector<16x16x32xbf16>
    %175 = vector.shape_cast %174 : vector<16x16x32xbf16> to vector<256x32xbf16>
    %c0_152 = arith.constant 0 : index
    %c0_153 = arith.constant 0 : index
    %176 = vector.load %arg7[%c0_152, %c0_153] : memref<256x32xf32, #tpu.memory_space<vmem>>, vector<256x32xf32>
    %c0_154 = arith.constant 0 : index
    %c2_155 = arith.constant 2 : index
    %c0_156 = arith.constant 0 : index
    %c0_157 = arith.constant 0 : index
    %177 = vector.load %arg4[%c0_154, %c2_155, %c0_156, %c0_157] : memref<3x3x32x32xbf16, #tpu.memory_space<vmem>>, vector<1x1x32x32xbf16>
    %178 = vector.shape_cast %177 : vector<1x1x32x32xbf16> to vector<32x32xbf16>
    %cst_158 = arith.constant dense<0.000000e+00> : vector<256x32xf32>
    %179 = tpu.matmul %175, %178, %cst_158 {dimension_numbers = #tpu.dot_dimension_numbers<[1], [0], [0], [1], [0, 0, 1, 1], [], []>} : vector<256x32xbf16>, vector<32x32xbf16>, vector<256x32xf32> -> vector<256x32xf32>
    %180 = arith.addf %176, %179 : vector<256x32xf32>
    %c0_159 = arith.constant 0 : index
    %c0_160 = arith.constant 0 : index
    %181 = vector.load %arg7[%c0_159, %c0_160] : memref<256x32xf32, #tpu.memory_space<vmem>>, vector<256x32xf32>
    tpu.vector_store %arg7[%c0_159, %c0_160], %180 {strides = array<i32>} : memref<256x32xf32, #tpu.memory_space<vmem>>, vector<256x32xf32>,
    %182 = vector.extract_strided_slice %173 {offsets = [1, 0, 0], sizes = [16, 16, 32], strides = [1, 1, 1]} : vector<18x16x32xbf16> to vector<16x16x32xbf16>
    %183 = vector.shape_cast %182 : vector<16x16x32xbf16> to vector<256x32xbf16>
    %c0_161 = arith.constant 0 : index
    %c0_162 = arith.constant 0 : index
    %184 = vector.load %arg7[%c0_161, %c0_162] : memref<256x32xf32, #tpu.memory_space<vmem>>, vector<256x32xf32>
    %c1_163 = arith.constant 1 : index
    %c2_164 = arith.constant 2 : index
    %c0_165 = arith.constant 0 : index
    %c0_166 = arith.constant 0 : index
    %185 = vector.load %arg4[%c1_163, %c2_164, %c0_165, %c0_166] : memref<3x3x32x32xbf16, #tpu.memory_space<vmem>>, vector<1x1x32x32xbf16>
    %186 = vector.shape_cast %185 : vector<1x1x32x32xbf16> to vector<32x32xbf16>
    %cst_167 = arith.constant dense<0.000000e+00> : vector<256x32xf32>
    %187 = tpu.matmul %183, %186, %cst_167 {dimension_numbers = #tpu.dot_dimension_numbers<[1], [0], [0], [1], [0, 0, 1, 1], [], []>} : vector<256x32xbf16>, vector<32x32xbf16>, vector<256x32xf32> -> vector<256x32xf32>
    %188 = arith.addf %184, %187 : vector<256x32xf32>
    %c0_168 = arith.constant 0 : index
    %c0_169 = arith.constant 0 : index
    %189 = vector.load %arg7[%c0_168, %c0_169] : memref<256x32xf32, #tpu.memory_space<vmem>>, vector<256x32xf32>
    tpu.vector_store %arg7[%c0_168, %c0_169], %188 {strides = array<i32>} : memref<256x32xf32, #tpu.memory_space<vmem>>, vector<256x32xf32>,
    %190 = vector.extract_strided_slice %173 {offsets = [2, 0, 0], sizes = [16, 16, 32], strides = [1, 1, 1]} : vector<18x16x32xbf16> to vector<16x16x32xbf16>
    %191 = vector.shape_cast %190 : vector<16x16x32xbf16> to vector<256x32xbf16>
    %c0_170 = arith.constant 0 : index
    %c0_171 = arith.constant 0 : index
    %192 = vector.load %arg7[%c0_170, %c0_171] : memref<256x32xf32, #tpu.memory_space<vmem>>, vector<256x32xf32>
    %c2_172 = arith.constant 2 : index
    %c2_173 = arith.constant 2 : index
    %c0_174 = arith.constant 0 : index
    %c0_175 = arith.constant 0 : index
    %193 = vector.load %arg4[%c2_172, %c2_173, %c0_174, %c0_175] : memref<3x3x32x32xbf16, #tpu.memory_space<vmem>>, vector<1x1x32x32xbf16>
    %194 = vector.shape_cast %193 : vector<1x1x32x32xbf16> to vector<32x32xbf16>
    %cst_176 = arith.constant dense<0.000000e+00> : vector<256x32xf32>
    %195 = tpu.matmul %191, %194, %cst_176 {dimension_numbers = #tpu.dot_dimension_numbers<[1], [0], [0], [1], [0, 0, 1, 1], [], []>} : vector<256x32xbf16>, vector<32x32xbf16>, vector<256x32xf32> -> vector<256x32xf32>
    %196 = arith.addf %192, %195 : vector<256x32xf32>
    %c0_177 = arith.constant 0 : index
    %c0_178 = arith.constant 0 : index
    %197 = vector.load %arg7[%c0_177, %c0_178] : memref<256x32xf32, #tpu.memory_space<vmem>>, vector<256x32xf32>
    tpu.vector_store %arg7[%c0_177, %c0_178], %196 {strides = array<i32>} : memref<256x32xf32, #tpu.memory_space<vmem>>, vector<256x32xf32>,
    %c0_179 = arith.constant 0 : index
    %c0_180 = arith.constant 0 : index
    %198 = vector.load %arg7[%c0_179, %c0_180] : memref<256x32xf32, #tpu.memory_space<vmem>>, vector<256x32xf32>
    %cst_181 = arith.constant dense<0.000000e+00> : vector<32xf32>
    %199 = vector.multi_reduction <add>, %198, %cst_181 [0] : vector<256x32xf32> to vector<32xf32>
    %200 = vector.shape_cast %199 : vector<32xf32> to vector<1x32xf32>
    %201 = arith.mulf %198, %198 : vector<256x32xf32>
    %cst_182 = arith.constant dense<0.000000e+00> : vector<32xf32>
    %202 = vector.multi_reduction <add>, %201, %cst_182 [0] : vector<256x32xf32> to vector<32xf32>
    %203 = vector.shape_cast %202 : vector<32xf32> to vector<1x32xf32>
    %cst_183 = arith.constant 3.906250e-03 : f32
    %204 = vector.broadcast %cst_183 : f32 to vector<1x32xf32>
    %205 = arith.mulf %200, %204 : vector<1x32xf32>
    %cst_184 = arith.constant 3.906250e-03 : f32
    %206 = vector.broadcast %cst_184 : f32 to vector<1x32xf32>
    %207 = arith.mulf %203, %206 : vector<1x32xf32>
    %208 = arith.mulf %205, %205 : vector<1x32xf32>
    %209 = arith.subf %207, %208 : vector<1x32xf32>
    %cst_185 = arith.constant 0.000000e+00 : f32
    %210 = vector.broadcast %cst_185 : f32 to vector<1x32xf32>
    %211 = arith.maximumf %209, %210 : vector<1x32xf32>
    %212 = vector.broadcast %205 : vector<1x32xf32> to vector<256x32xf32>
    %213 = arith.subf %198, %212 : vector<256x32xf32>
    %cst_186 = arith.constant 9.99999974E-6 : f32
    %214 = vector.broadcast %cst_186 : f32 to vector<1x32xf32>
    %215 = arith.addf %211, %214 : vector<1x32xf32>
    %216 = math.rsqrt %215 : vector<1x32xf32>
    %217 = vector.broadcast %216 : vector<1x32xf32> to vector<256x32xf32>
    %218 = arith.mulf %213, %217 : vector<256x32xf32>
    %219 = vector.shape_cast %1 : vector<16x16x32xf32> to vector<256x32xf32>
    %220 = arith.addf %219, %218 : vector<256x32xf32>
    %221 = vector.shape_cast %220 : vector<256x32xf32> to vector<16x16x32xf32>
    %c0_187 = arith.constant 0 : index
    %c0_188 = arith.constant 0 : index
    %c0_189 = arith.constant 0 : index
    %c0_190 = arith.constant 0 : index
    %222 = vector.load %arg6[%c0_187, %c0_188, %c0_189, %c0_190] : memref<1x16x16x32xf32, #tpu.memory_space<vmem>>, vector<1x16x16x32xf32>
    %223 = vector.shape_cast %222 : vector<1x16x16x32xf32> to vector<16x16x32xf32>
    %224 = vector.shape_cast %221 : vector<16x16x32xf32> to vector<1x16x16x32xf32>
    tpu.vector_store %arg6[%c0_187, %c0_188, %c0_189, %c0_190], %224 {strides = array<i32>} : memref<1x16x16x32xf32, #tpu.memory_space<vmem>>, vector<1x16x16x32xf32>,
    return
  }
  func.func @transform_0(%arg0: i32) -> (i32, i32, i32, i32) {
    %c0_i32 = arith.constant 0 : i32
    %c0_i32_0 = arith.constant 0 : i32
    %c0_i32_1 = arith.constant 0 : i32
    %c0_i32_2 = arith.constant 0 : i32
    return %arg0, %c0_i32, %c0_i32_0, %c0_i32_1 : i32, i32, i32, i32
  }
  func.func @transform_1(%arg0: i32) -> (i32, i32, i32, i32) {
    %c0_i32 = arith.constant 0 : i32
    %c0_i32_0 = arith.constant 0 : i32
    %c0_i32_1 = arith.constant 0 : i32
    %c0_i32_2 = arith.constant 0 : i32
    %c0_i32_3 = arith.constant 0 : i32
    return %c0_i32, %c0_i32_0, %c0_i32_1, %c0_i32_2 : i32, i32, i32, i32
  }
  func.func @transform_2(%arg0: i32) -> (i32, i32) {
    %c0_i32 = arith.constant 0 : i32
    %c0_i32_0 = arith.constant 0 : i32
    %c0_i32_1 = arith.constant 0 : i32
    return %c0_i32, %c0_i32_0 : i32, i32
  }
  func.func @transform_3(%arg0: i32) -> (i32, i32, i32, i32) {
    %c0_i32 = arith.constant 0 : i32
    %c0_i32_0 = arith.constant 0 : i32
    %c0_i32_1 = arith.constant 0 : i32
    %c0_i32_2 = arith.constant 0 : i32
    %c0_i32_3 = arith.constant 0 : i32
    return %c0_i32, %c0_i32_0, %c0_i32_1, %c0_i32_2 : i32, i32, i32, i32
  }
  func.func @transform_4(%arg0: i32) -> (i32, i32) {
    %c0_i32 = arith.constant 0 : i32
    %c0_i32_0 = arith.constant 0 : i32
    %c0_i32_1 = arith.constant 0 : i32
    return %c0_i32, %c0_i32_0 : i32, i32
  }
  func.func @transform_5(%arg0: i32) -> (i32, i32, i32, i32) {
    %c0_i32 = arith.constant 0 : i32
    %c0_i32_0 = arith.constant 0 : i32
    %c0_i32_1 = arith.constant 0 : i32
    %c0_i32_2 = arith.constant 0 : i32
    return %arg0, %c0_i32, %c0_i32_0, %c0_i32_1 : i32, i32, i32, i32
  }
}

</mosaic_0001>

<llo_original>
// kernel: tpu_custom_call.1
$region0: #{tpu_custom_call.1}
  #allocation0 [shape = 'u32[]', space=smem, size = 0x4, offset = 0x4, fixed_abs, tag = 'smem constant byte address 0x4 - core index']
  #allocation1 [shape = 'u32[72,128]{1,0:T(1,128)}', space=vmem, size = 0x9000, scoped, tag = 'internal scratch']
  #allocation2 [shape = 'f32[256,32]{1,0:T(8,128)}', space=vmem, size = 0x20000, scoped, tag = 'scratch operand']
  %s0 = inlined_call_operand.hbm [shape: f32[2,16,16,32], index: 0, kind: input, shape index: {}]
  %s1 = inlined_call_operand.hbm [shape: bf16[3,3,32,32], index: 1, kind: input, shape index: {}]
  %s2 = inlined_call_operand.vmem [shape: f32[1,32], index: 2, kind: input, shape index: {}]
  %s3 = inlined_call_operand.hbm [shape: bf16[3,3,32,32], index: 3, kind: input, shape index: {}]
  %s4 = inlined_call_operand.vmem [shape: f32[1,32], index: 4, kind: input, shape index: {}]
  %s5 = inlined_call_operand.hbm [shape: f32[2,16,16,32], index: 5, kind: output, shape index: {}]
  %s6 = sld [smem:[#allocation0]]
  $region65: #{tpu_custom_call.1} parent=0
    _
  %s8 = ssub.s32 1, %s6
  %s9 = scalar_select 0, %s8, %s6
  $region1: #{tpu_custom_call.1} parent=0
    #allocation3 [shape = 'u8[262144]{0}', space=vmem, size = 0x40000, scoped, tag = 'input window, operand 0']
    #allocation4 [shape = 's32[2]{0}', space=sflag, size = 0x8, scoped, tag = 'scoped memory for tpu_custom_call.1']
    #allocation5 [shape = 's32[2]{0}', space=sflag, size = 0x8, scoped, tag = 'scoped memory for tpu_custom_call.1']
    #allocation6 [shape = 'u8[73728]{0}', space=vmem, size = 0x12000, scoped, tag = 'input window, operand 1, single buffered']
    #allocation7 [shape = 's32[1]{0}', space=sflag, size = 0x4, scoped, tag = 'scoped memory for tpu_custom_call.1']
    #allocation8 [shape = 'u8[73728]{0}', space=vmem, size = 0x12000, scoped, tag = 'input window, operand 3, single buffered']
    #allocation9 [shape = 'u8[262144]{0}', space=vmem, size = 0x40000, scoped, tag = 'output window, operand 0']
    %10 = vsyncpa [#allocation4], 0
    %s11 = scalar_lea.sflag [#allocation4], 1
    %12 = vsyncpa %s11, 0
    %13 = vsyncpa [#allocation7], 0
    %14 = vsyncpa [#allocation5], 0
    %s15 = scalar_lea.sflag [#allocation5], 1
    %16 = vsyncpa %s15, 0
    loop: start=0, step=1, limit=4
    $region2: #{tpu_custom_call.1} parent=1 // loop_pre_header
      _
    $region3: #{tpu_custom_call.1} parent=1 // loop_header
      %s18 = sphi 0, %s22
      %p19 = scmp.ge.s32.totalorder %s18, 4
      %s28 = sphi 0, %s30
      %s31 = sphi 0, %s28
      %s32 = sphi 0, %s31
      %s48 = sphi 0, %s32
      %s52 = sphi 0, %s52
      %s54 = sphi 0, %s52
      %s55 = sphi 0, %s54
      %s69 = sphi 0, %s55
      %s73 = sphi 0, %s73
      %s75 = sphi 0, %s73
      %s76 = sphi 0, %s75
      %s90 = sphi 0, %s76
      %s94 = sphi 0, %s94
      %s96 = sphi 0, %s94
      %s97 = sphi 0, %s96
      %s111 = sphi 0, %s97
      %s115 = sphi 0, %s115
      %s117 = sphi 0, %s115
      %s118 = sphi 0, %s117
      %s132 = sphi 0, %s118
      %s138 = sphi 0, %s140
      %s141 = sphi 0, %s138
      %s142 = sphi 0, %s141
      %s158 = sphi 0, %s142
    $region4: #{tpu_custom_call.1} parent=1 // loop_header_branch
      %21 = sbr.rel (%p19) target = $region8
    $region5: #{tpu_custom_call.1} parent=1 // loop_body
      %s23 = ssub.s32 %s18, 1
      %s24 = ssub.s32 %s18, 2
      %s25 = sadd.s32 %s18, 1
      %s26 = ssub.s32 %s18, %s25
      %p27 = scmp.eq.s32.totalorder %s26, 0
      %s29 = sadd.s32 %s28, 1
      %s30 = scalar_select %p27, %s28, %s29
      %p33 = pneg %p27
      %p34 = scmp.eq.s32.totalorder %s18, 1
      %p35 = por %p33, %p34
      %p36 = scmp.ne.s32.totalorder %s28, %s31
      %p37 = scmp.eq.s32.totalorder %s18, 0
      %p38 = por %p36, %p37
      %p39 = scmp.ne.s32.totalorder %s28, %s31
      %p40 = scmp.eq.s32.totalorder %s23, 1
      %p41 = por %p39, %p40
      %p42 = scmp.ne.s32.totalorder %s31, %s32
      %p43 = scmp.eq.s32.totalorder %s23, 0
      %p44 = por %p42, %p43
      %p45 = scmp.ne.s32.totalorder %s31, %s32
      %p46 = scmp.eq.s32.totalorder %s24, 1
      %p47 = por %p45, %p46
      %p49 = scmp.ne.s32.totalorder %s32, %s48
      %p50 = scmp.eq.s32.totalorder %s24, 0
      %p51 = por %p49, %p50
      %s53 = sadd.s32 %s52, 1
      %p56 = scmp.eq.s32.totalorder %s18, 1
      %p57 = scmp.ne.s32.totalorder %s52, %s54
      %p58 = scmp.eq.s32.totalorder %s18, 0
      %p59 = por %p57, %p58
      %p60 = scmp.ne.s32.totalorder %s52, %s54
      %p61 = scmp.eq.s32.totalorder %s23, 1
      %p62 = por %p60, %p61
      %p63 = scmp.ne.s32.totalorder %s54, %s55
      %p64 = scmp.eq.s32.totalorder %s23, 0
      %p65 = por %p63, %p64
      %p66 = scmp.ne.s32.totalorder %s54, %s55
      %p67 = scmp.eq.s32.totalorder %s24, 1
      %p68 = por %p66, %p67
      %p70 = scmp.ne.s32.totalorder %s55, %s69
      %p71 = scmp.eq.s32.totalorder %s24, 0
      %p72 = por %p70, %p71
      %s74 = sadd.s32 %s73, 1
      %p77 = scmp.eq.s32.totalorder %s18, 1
      %p78 = scmp.ne.s32.totalorder %s73, %s75
      %p79 = scmp.eq.s32.totalorder %s18, 0
      %p80 = por %p78, %p79
      %p81 = scmp.ne.s32.totalorder %s73, %s75
      %p82 = scmp.eq.s32.totalorder %s23, 1
      %p83 = por %p81, %p82
      %p84 = scmp.ne.s32.totalorder %s75, %s76
      %p85 = scmp.eq.s32.totalorder %s23, 0
      %p86 = por %p84, %p85
      %p87 = scmp.ne.s32.totalorder %s75, %s76
      %p88 = scmp.eq.s32.totalorder %s24, 1
      %p89 = por %p87, %p88
      %p91 = scmp.ne.s32.totalorder %s76, %s90
      %p92 = scmp.eq.s32.totalorder %s24, 0
      %p93 = por %p91, %p92
      %s95 = sadd.s32 %s94, 1
      %p98 = scmp.eq.s32.totalorder %s18, 1
      %p99 = scmp.ne.s32.totalorder %s94, %s96
      %p100 = scmp.eq.s32.totalorder %s18, 0
      %p101 = por %p99, %p100
      %p102 = scmp.ne.s32.totalorder %s94, %s96
      %p103 = scmp.eq.s32.totalorder %s23, 1
      %p104 = por %p102, %p103
      %p105 = scmp.ne.s32.totalorder %s96, %s97
      %p106 = scmp.eq.s32.totalorder %s23, 0
      %p107 = por %p105, %p106
      %p108 = scmp.ne.s32.totalorder %s96, %s97
      %p109 = scmp.eq.s32.totalorder %s24, 1
      %p110 = por %p108, %p109
      %p112 = scmp.ne.s32.totalorder %s97, %s111
      %p113 = scmp.eq.s32.totalorder %s24, 0
      %p114 = por %p112, %p113
      %s116 = sadd.s32 %s115, 1
      %p119 = scmp.eq.s32.totalorder %s18, 1
      %p120 = scmp.ne.s32.totalorder %s115, %s117
      %p121 = scmp.eq.s32.totalorder %s18, 0
      %p122 = por %p120, %p121
      %p123 = scmp.ne.s32.totalorder %s115, %s117
      %p124 = scmp.eq.s32.totalorder %s23, 1
      %p125 = por %p123, %p124
      %p126 = scmp.ne.s32.totalorder %s117, %s118
      %p127 = scmp.eq.s32.totalorder %s23, 0
      %p128 = por %p126, %p127
      %p129 = scmp.ne.s32.totalorder %s117, %s118
      %p130 = scmp.eq.s32.totalorder %s24, 1
      %p131 = por %p129, %p130
      %p133 = scmp.ne.s32.totalorder %s118, %s132
      %p134 = scmp.eq.s32.totalorder %s24, 0
      %p135 = por %p133, %p134
      %s136 = ssub.s32 %s18, %s25
      %p137 = scmp.eq.s32.totalorder %s136, 0
      %s139 = sadd.s32 %s138, 1
      %s140 = scalar_select %p137, %s138, %s139
      %p143 = pneg %p137
      %p144 = scmp.eq.s32.totalorder %s18, 1
      %p145 = por %p143, %p144
      %p146 = scmp.ne.s32.totalorder %s138, %s141
      %p147 = scmp.eq.s32.totalorder %s18, 0
      %p148 = por %p146, %p147
      %p149 = scmp.ne.s32.totalorder %s138, %s141
      %p150 = scmp.eq.s32.totalorder %s23, 1
      %p151 = por %p149, %p150
      %p152 = scmp.ne.s32.totalorder %s141, %s142
      %p153 = scmp.eq.s32.totalorder %s23, 0
      %p154 = por %p152, %p153
      %p155 = scmp.ne.s32.totalorder %s141, %s142
      %p156 = scmp.eq.s32.totalorder %s24, 1
      %p157 = por %p155, %p156
      %p159 = scmp.ne.s32.totalorder %s142, %s158
      %p160 = scmp.eq.s32.totalorder %s24, 0
      %p161 = por %p159, %p160
      %p162 = scmp.le.s32.totalorder 1, %s18
      %p163 = scmp.lt.s32.totalorder %s18, 3
      %p164 = pnand %p162, %p163
      %p165 = pneg %p164
      // Predicated region
      $region9: #{tpu_custom_call.1} parent=5 // pred_check
        _
      $region10: #{tpu_custom_call.1} parent=5 // pred_check_branch
        %167 = sbr.rel (%p164) target = $region12
      $region11: #{tpu_custom_call.1} parent=5 // pred_region
        %s168 = ssub.s32 %s18, 1
        // Predicated region
        $region13: #{tpu_custom_call.1} parent=11 // pred_check
          %p169 = pneg %p65
        $region14: #{tpu_custom_call.1} parent=11 // pred_check_branch
          %171 = sbr.rel (%p169) target = $region16
        $region15: #{tpu_custom_call.1} parent=11 // pred_region
          %173 = vsyncadd [#allocation7], 0
          %s174 = sshll.u32 %s1, 4
          %s175 = int_to_ptr.hbm [resolvable:$true] %s174
          %s176 = sshll.u32 [#allocation6], 4
          %s177 = int_to_ptr.vmem [resolvable:$true] %s176
          %182 = dma.hbm_to_vmem [thread:$0]  %s175, 2304, %s177, [#allocation7], 64, 64, 4
        $region16: #{tpu_custom_call.1} parent=11 // pred_fallthru
          _
        // Predicated region
        $region17: #{tpu_custom_call.1} parent=11 // pred_check
          %p183 = pneg %p86
        $region18: #{tpu_custom_call.1} parent=11 // pred_check_branch
          %185 = sbr.rel (%p183) target = $region20
        $region19: #{tpu_custom_call.1} parent=11 // pred_region
          _
        $region20: #{tpu_custom_call.1} parent=11 // pred_fallthru
          _
        // Predicated region
        $region21: #{tpu_custom_call.1} parent=11 // pred_check
          %p186 = pneg %p107
        $region22: #{tpu_custom_call.1} parent=11 // pred_check_branch
          %188 = sbr.rel (%p186) target = $region24
        $region23: #{tpu_custom_call.1} parent=11 // pred_region
          %190 = vsyncadd [#allocation7], 0
          %s191 = sshll.u32 %s3, 4
          %s192 = int_to_ptr.hbm [resolvable:$true] %s191
          %s193 = sshll.u32 [#allocation8], 4
          %s194 = int_to_ptr.vmem [resolvable:$true] %s193
          %199 = dma.hbm_to_vmem [thread:$0]  %s192, 2304, %s194, [#allocation7], 64, 64, 4
        $region24: #{tpu_custom_call.1} parent=11 // pred_fallthru
          _
        // Predicated region
        $region25: #{tpu_custom_call.1} parent=11 // pred_check
          %p200 = pneg %p128
        $region26: #{tpu_custom_call.1} parent=11 // pred_check_branch
          %202 = sbr.rel (%p200) target = $region28
        $region27: #{tpu_custom_call.1} parent=11 // pred_region
          _
        $region28: #{tpu_custom_call.1} parent=11 // pred_fallthru
          _
      $region12: #{tpu_custom_call.1} parent=5 // pred_fallthru
        _
      %p203 = scmp.lt.s32.totalorder %s18, 2
      // Predicated region
      $region29: #{tpu_custom_call.1} parent=5 // pred_check
        %p204 = pneg %p203
      $region30: #{tpu_custom_call.1} parent=5 // pred_check_branch
        %206 = sbr.rel (%p204) target = $region32
      $region31: #{tpu_custom_call.1} parent=5 // pred_region
        // Predicated region
        $region33: #{tpu_custom_call.1} parent=31 // pred_check
          %p207 = pneg %p38
        $region34: #{tpu_custom_call.1} parent=31 // pred_check_branch
          %209 = sbr.rel (%p207) target = $region36
        $region35: #{tpu_custom_call.1} parent=31 // pred_region
          %s210 = sand.u32 %s28, 1
          %s211 = scalar_lea.sflag [#allocation4], %s210
          %s212 = sand.u32 %s28, 1
          %s213 = smul.addr %s212, 256
          %s214 = scalar_lea.vmem [#allocation3], %s213
          %216 = vsyncadd %s211, 0
          %s217 = smul.addr %s18, 32
          %s218 = smul.addr %s217, 8
          %s219 = scalar_lea.hbm %s0, %s218
          %s220 = sshll.u32 %s219, 4
          %s221 = int_to_ptr.hbm [resolvable:$true] %s220
          %s222 = sshll.u32 %s214, 4
          %s223 = int_to_ptr.vmem [resolvable:$true] %s222
          %228 = dma.hbm_to_vmem [thread:$0]  %s221, 4096, %s223, %s211, 128, 128, 8
        $region36: #{tpu_custom_call.1} parent=31 // pred_fallthru
          _
      $region32: #{tpu_custom_call.1} parent=5 // pred_fallthru
        _
      %p229 = scmp.le.s32.totalorder 1, %s18
      %p230 = scmp.lt.s32.totalorder %s18, 3
      %p231 = pnand %p229, %p230
      %p232 = pneg %p231
      // Predicated region
      $region37: #{tpu_custom_call.1} parent=5 // pred_check
        _
      $region38: #{tpu_custom_call.1} parent=5 // pred_check_branch
        %234 = sbr.rel (%p231) target = $region40
      $region39: #{tpu_custom_call.1} parent=5 // pred_region
        %s235 = ssub.s32 %s18, 1
        %s236 = sand.u32 %s31, 1
        %s237 = scalar_lea.sflag [#allocation4], %s236
        %s238 = sand.u32 %s31, 1
        %s239 = smul.addr %s238, 256
        %s240 = scalar_lea.vmem [#allocation3], %s239
        // Predicated region
        $region41: #{tpu_custom_call.1} parent=39 // pred_check
          %p241 = pneg %p44
        $region42: #{tpu_custom_call.1} parent=39 // pred_check_branch
          %243 = sbr.rel (%p241) target = $region44
        $region43: #{tpu_custom_call.1} parent=39 // pred_region
          %245 = dma.done %s237, 4096
        $region44: #{tpu_custom_call.1} parent=39 // pred_fallthru
          _
        // Predicated region
        $region45: #{tpu_custom_call.1} parent=39 // pred_check
          %p246 = pneg %p65
        $region46: #{tpu_custom_call.1} parent=39 // pred_check_branch
          %248 = sbr.rel (%p246) target = $region48
        $region47: #{tpu_custom_call.1} parent=39 // pred_region
          %250 = dma.done [#allocation7], 2304
        $region48: #{tpu_custom_call.1} parent=39 // pred_fallthru
          _
        // Predicated region
        $region49: #{tpu_custom_call.1} parent=39 // pred_check
          %p251 = pneg %p107
        $region50: #{tpu_custom_call.1} parent=39 // pred_check_branch
          %253 = sbr.rel (%p251) target = $region52
        $region51: #{tpu_custom_call.1} parent=39 // pred_region
          %255 = dma.done [#allocation7], 2304
        $region52: #{tpu_custom_call.1} parent=39 // pred_fallthru
          _
        %s256 = sand.u32 %s31, 1
        %s257 = scalar_lea.sflag [#allocation4], %s256
        %s258 = sand.u32 %s31, 1
        %s259 = smul.addr %s258, 256
        %s260 = scalar_lea.vmem [#allocation3], %s259
        %p261 = pneg %p44
        %p262 = pneg %p41
        %p263 = pneg %p65
        %p264 = pneg %p62
        %p265 = pneg %p86
        %p266 = pneg %p83
        %p267 = pneg %p107
        %p268 = pneg %p104
        %p269 = pneg %p128
        %p270 = pneg %p125
        %p271 = pneg %p154
        %p272 = pneg %p151
        %s273 = sand.u32 %s141, 1
        %s274 = scalar_lea.sflag [#allocation5], %s273
        %s275 = sand.u32 %s141, 1
        %s276 = smul.addr %s275, 256
        %s277 = scalar_lea.vmem [#allocation9], %s276
        %v279 = vld [vmem:[%s240] sm:$0xff]
        %v280 = vld [vmem:[%s240 + $0x8] sm:$0xff]
        %v281 = vld [vmem:[%s240 + $0x10] sm:$0xff]
        %v282 = vld [vmem:[%s240 + $0x18] sm:$0xff]
        %v283 = vld [vmem:[%s240 + $0x20] sm:$0xff]
        %v284 = vld [vmem:[%s240 + $0x28] sm:$0xff]
        %v285 = vld [vmem:[%s240 + $0x30] sm:$0xff]
        %v286 = vld [vmem:[%s240 + $0x38] sm:$0xff]
        %v287 = vld [vmem:[%s240 + $0x40] sm:$0xff]
        %v288 = vld [vmem:[%s240 + $0x48] sm:$0xff]
        %v289 = vld [vmem:[%s240 + $0x50] sm:$0xff]
        %v290 = vld [vmem:[%s240 + $0x58] sm:$0xff]
        %v291 = vld [vmem:[%s240 + $0x60] sm:$0xff]
        %v292 = vld [vmem:[%s240 + $0x68] sm:$0xff]
        %v293 = vld [vmem:[%s240 + $0x70] sm:$0xff]
        %v294 = vld [vmem:[%s240 + $0x78] sm:$0xff]
        %v295 = vld [vmem:[%s240 + $0x80] sm:$0xff]
        %v296 = vld [vmem:[%s240 + $0x88] sm:$0xff]
        %v297 = vld [vmem:[%s240 + $0x90] sm:$0xff]
        %v298 = vld [vmem:[%s240 + $0x98] sm:$0xff]
        %v299 = vld [vmem:[%s240 + $0xa0] sm:$0xff]
        %v300 = vld [vmem:[%s240 + $0xa8] sm:$0xff]
        %v301 = vld [vmem:[%s240 + $0xb0] sm:$0xff]
        %v302 = vld [vmem:[%s240 + $0xb8] sm:$0xff]
        %v303 = vld [vmem:[%s240 + $0xc0] sm:$0xff]
        %v304 = vld [vmem:[%s240 + $0xc8] sm:$0xff]
        %v305 = vld [vmem:[%s240 + $0xd0] sm:$0xff]
        %v306 = vld [vmem:[%s240 + $0xd8] sm:$0xff]
        %v307 = vld [vmem:[%s240 + $0xe0] sm:$0xff]
        %v308 = vld [vmem:[%s240 + $0xe8] sm:$0xff]
        %v309 = vld [vmem:[%s240 + $0xf0] sm:$0xff]
        %v310 = vld [vmem:[%s240 + $0xf8] sm:$0xff]
        %v327 = vrot.slane %v281, 1
        %v328 = vrot.slane %v279, 1
        %v329 = vrot.slane %v283, 1
        %v330 = vrot.slane %v285, 1
        %v331 = vrot.slane %v287, 1
        %v332 = vrot.slane %v289, 1
        %v333 = vrot.slane %v291, 1
        %v334 = vrot.slane %v293, 1
        %v335 = vrot.slane %v295, 1
        %v336 = vrot.slane %v297, 1
        %v337 = vrot.slane %v299, 1
        %v338 = vrot.slane %v301, 1
        %v339 = vrot.slane %v303, 1
        %v340 = vrot.slane %v305, 1
        %v341 = vrot.slane %v307, 1
        %v342 = vrot.slane %v309, 1
        %vm375 = vcmask 1040384
        %v376 = vrot.slane %v281, 7
        %v377 = vrot.slane %v282, 7
        %v378 = vsel %vm375, %v376, %v377
        %v379 = vrot.slane %v279, 7
        %v380 = vrot.slane %v280, 7
        %v381 = vsel %vm375, %v379, %v380
        %v382 = vrot.slane %v283, 7
        %v383 = vrot.slane %v284, 7
        %v384 = vsel %vm375, %v382, %v383
        %v385 = vrot.slane %v285, 7
        %v386 = vrot.slane %v286, 7
        %v387 = vsel %vm375, %v385, %v386
        %v388 = vrot.slane %v287, 7
        %v389 = vrot.slane %v288, 7
        %v390 = vsel %vm375, %v388, %v389
        %v391 = vrot.slane %v289, 7
        %v392 = vrot.slane %v290, 7
        %v393 = vsel %vm375, %v391, %v392
        %v394 = vrot.slane %v291, 7
        %v395 = vrot.slane %v292, 7
        %v396 = vsel %vm375, %v394, %v395
        %v397 = vrot.slane %v293, 7
        %v398 = vrot.slane %v294, 7
        %v399 = vsel %vm375, %v397, %v398
        %v400 = vrot.slane %v295, 7
        %v401 = vrot.slane %v296, 7
        %v402 = vsel %vm375, %v400, %v401
        %v403 = vrot.slane %v297, 7
        %v404 = vrot.slane %v298, 7
        %v405 = vsel %vm375, %v403, %v404
        %v406 = vrot.slane %v299, 7
        %v407 = vrot.slane %v300, 7
        %v408 = vsel %vm375, %v406, %v407
        %v409 = vrot.slane %v301, 7
        %v410 = vrot.slane %v302, 7
        %v411 = vsel %vm375, %v409, %v410
        %v412 = vrot.slane %v303, 7
        %v413 = vrot.slane %v304, 7
        %v414 = vsel %vm375, %v412, %v413
        %v415 = vrot.slane %v305, 7
        %v416 = vrot.slane %v306, 7
        %v417 = vsel %vm375, %v415, %v416
        %v418 = vrot.slane %v307, 7
        %v419 = vrot.slane %v308, 7
        %v420 = vsel %vm375, %v418, %v419
        %v421 = vrot.slane %v309, 7
        %v422 = vrot.slane %v310, 7
        %v423 = vsel %vm375, %v421, %v422
        %v472 = vrot.slane %v282, 5
        %v473 = vrot.slane %v280, 5
        %v474 = vrot.slane %v284, 5
        %v475 = vrot.slane %v286, 5
        %v476 = vrot.slane %v288, 5
        %v477 = vrot.slane %v290, 5
        %v478 = vrot.slane %v292, 5
        %v479 = vrot.slane %v294, 5
        %v480 = vrot.slane %v296, 5
        %v481 = vrot.slane %v298, 5
        %v482 = vrot.slane %v300, 5
        %v483 = vrot.slane %v302, 5
        %v484 = vrot.slane %v304, 5
        %v485 = vrot.slane %v306, 5
        %v486 = vrot.slane %v308, 5
        %v487 = vrot.slane %v310, 5
        %v504 = vsel %vm375, %v327, %v376
        %v505 = vsel %vm375, %v328, %v379
        %v506 = vsel %vm375, %v329, %v382
        %v507 = vsel %vm375, %v330, %v385
        %v508 = vsel %vm375, %v331, %v388
        %v509 = vsel %vm375, %v332, %v391
        %v510 = vsel %vm375, %v333, %v394
        %v511 = vsel %vm375, %v334, %v397
        %v512 = vsel %vm375, %v335, %v400
        %v513 = vsel %vm375, %v336, %v403
        %v514 = vsel %vm375, %v337, %v406
        %v515 = vsel %vm375, %v338, %v409
        %v516 = vsel %vm375, %v339, %v412
        %v517 = vsel %vm375, %v340, %v415
        %v518 = vsel %vm375, %v341, %v418
        %v519 = vsel %vm375, %v342, %v421
        %v520 = vsel %vm375, %v377, %v472
        %v521 = vsel %vm375, %v380, %v473
        %v522 = vsel %vm375, %v383, %v474
        %v523 = vsel %vm375, %v386, %v475
        %v524 = vsel %vm375, %v389, %v476
        %v525 = vsel %vm375, %v392, %v477
        %v526 = vsel %vm375, %v395, %v478
        %v527 = vsel %vm375, %v398, %v479
        %v528 = vsel %vm375, %v401, %v480
        %v529 = vsel %vm375, %v404, %v481
        %v530 = vsel %vm375, %v407, %v482
        %v531 = vsel %vm375, %v410, %v483
        %v532 = vsel %vm375, %v413, %v484
        %v533 = vsel %vm375, %v416, %v485
        %v534 = vsel %vm375, %v419, %v486
        %v535 = vsel %vm375, %v422, %v487
        %v536 = vpack.c.bf16 %v504, %v504
        %v537 = vpack.c.bf16 %v378, %v378
        %v538 = vpack.c.bf16 %v520, %v520
        %v539 = vpack.c.bf16 %v505, %v505
        %v540 = vpack.c.bf16 %v381, %v381
        %v541 = vpack.c.bf16 %v521, %v521
        %v542 = vpack.c.bf16 %v506, %v506
        %v543 = vpack.c.bf16 %v384, %v384
        %v544 = vpack.c.bf16 %v522, %v522
        %v545 = vpack.c.bf16 %v507, %v507
        %v546 = vpack.c.bf16 %v387, %v387
        %v547 = vpack.c.bf16 %v523, %v523
        %v548 = vpack.c.bf16 %v508, %v508
        %v549 = vpack.c.bf16 %v390, %v390
        %v550 = vpack.c.bf16 %v524, %v524
        %v551 = vpack.c.bf16 %v509, %v509
        %v552 = vpack.c.bf16 %v393, %v393
        %v553 = vpack.c.bf16 %v525, %v525
        %v554 = vpack.c.bf16 %v510, %v510
        %v555 = vpack.c.bf16 %v396, %v396
        %v556 = vpack.c.bf16 %v526, %v526
        %v557 = vpack.c.bf16 %v511, %v511
        %v558 = vpack.c.bf16 %v399, %v399
        %v559 = vpack.c.bf16 %v527, %v527
        %v560 = vpack.c.bf16 %v512, %v512
        %v561 = vpack.c.bf16 %v402, %v402
        %v562 = vpack.c.bf16 %v528, %v528
        %v563 = vpack.c.bf16 %v513, %v513
        %v564 = vpack.c.bf16 %v405, %v405
        %v565 = vpack.c.bf16 %v529, %v529
        %v566 = vpack.c.bf16 %v514, %v514
        %v567 = vpack.c.bf16 %v408, %v408
        %v568 = vpack.c.bf16 %v530, %v530
        %v569 = vpack.c.bf16 %v515, %v515
        %v570 = vpack.c.bf16 %v411, %v411
        %v571 = vpack.c.bf16 %v531, %v531
        %v572 = vpack.c.bf16 %v516, %v516
        %v573 = vpack.c.bf16 %v414, %v414
        %v574 = vpack.c.bf16 %v532, %v532
        %v575 = vpack.c.bf16 %v517, %v517
        %v576 = vpack.c.bf16 %v417, %v417
        %v577 = vpack.c.bf16 %v533, %v533
        %v578 = vpack.c.bf16 %v518, %v518
        %v579 = vpack.c.bf16 %v420, %v420
        %v580 = vpack.c.bf16 %v534, %v534
        %v581 = vpack.c.bf16 %v519, %v519
        %v582 = vpack.c.bf16 %v423, %v423
        %v583 = vpack.c.bf16 %v535, %v535
        %v584 = vld [vmem:[%s2] sm:$0x1]
        %v586 = vperm.slane %v584, 0
        %vm588 = vcmask 261120
        %589 = vst.msk [vmem:[#allocation2] sm:$0xff] %vm588, %v586
        %590 = vst.msk [vmem:[#allocation2 + $0x8] sm:$0xff] %vm588, %v586
        %591 = vst.msk [vmem:[#allocation2 + $0x10] sm:$0xff] %vm588, %v586
        %592 = vst.msk [vmem:[#allocation2 + $0x18] sm:$0xff] %vm588, %v586
        %593 = vst.msk [vmem:[#allocation2 + $0x20] sm:$0xff] %vm588, %v586
        %594 = vst.msk [vmem:[#allocation2 + $0x28] sm:$0xff] %vm588, %v586
        %595 = vst.msk [vmem:[#allocation2 + $0x30] sm:$0xff] %vm588, %v586
        %596 = vst.msk [vmem:[#allocation2 + $0x38] sm:$0xff] %vm588, %v586
        %597 = vst.msk [vmem:[#allocation2 + $0x40] sm:$0xff] %vm588, %v586
        %598 = vst.msk [vmem:[#allocation2 + $0x48] sm:$0xff] %vm588, %v586
        %599 = vst.msk [vmem:[#allocation2 + $0x50] sm:$0xff] %vm588, %v586
        %600 = vst.msk [vmem:[#allocation2 + $0x58] sm:$0xff] %vm588, %v586
        %601 = vst.msk [vmem:[#allocation2 + $0x60] sm:$0xff] %vm588, %v586
        %602 = vst.msk [vmem:[#allocation2 + $0x68] sm:$0xff] %vm588, %v586
        %603 = vst.msk [vmem:[#allocation2 + $0x70] sm:$0xff] %vm588, %v586
        %604 = vst.msk [vmem:[#allocation2 + $0x78] sm:$0xff] %vm588, %v586
        %605 = vst.msk [vmem:[#allocation2 + $0x80] sm:$0xff] %vm588, %v586
        %606 = vst.msk [vmem:[#allocation2 + $0x88] sm:$0xff] %vm588, %v586
        %607 = vst.msk [vmem:[#allocation2 + $0x90] sm:$0xff] %vm588, %v586
        %608 = vst.msk [vmem:[#allocation2 + $0x98] sm:$0xff] %vm588, %v586
        %609 = vst.msk [vmem:[#allocation2 + $0xa0] sm:$0xff] %vm588, %v586
        %610 = vst.msk [vmem:[#allocation2 + $0xa8] sm:$0xff] %vm588, %v586
        %611 = vst.msk [vmem:[#allocation2 + $0xb0] sm:$0xff] %vm588, %v586
        %612 = vst.msk [vmem:[#allocation2 + $0xb8] sm:$0xff] %vm588, %v586
        %613 = vst.msk [vmem:[#allocation2 + $0xc0] sm:$0xff] %vm588, %v586
        %614 = vst.msk [vmem:[#allocation2 + $0xc8] sm:$0xff] %vm588, %v586
        %615 = vst.msk [vmem:[#allocation2 + $0xd0] sm:$0xff] %vm588, %v586
        %616 = vst.msk [vmem:[#allocation2 + $0xd8] sm:$0xff] %vm588, %v586
        %617 = vst.msk [vmem:[#allocation2 + $0xe0] sm:$0xff] %vm588, %v586
        %618 = vst.msk [vmem:[#allocation2 + $0xe8] sm:$0xff] %vm588, %v586
        %619 = vst.msk [vmem:[#allocation2 + $0xf0] sm:$0xff] %vm588, %v586
        %620 = vst.msk [vmem:[#allocation2 + $0xf8] sm:$0xff] %vm588, %v586
        %v621 = vld [vmem:[#allocation2] sm:$0xff]
        %v622 = vld [vmem:[#allocation2 + $0x8] sm:$0xff]
        %v623 = vld [vmem:[#allocation2 + $0x10] sm:$0xff]
        %v624 = vld [vmem:[#allocation2 + $0x18] sm:$0xff]
        %v625 = vld [vmem:[#allocation2 + $0x20] sm:$0xff]
        %v626 = vld [vmem:[#allocation2 + $0x28] sm:$0xff]
        %v627 = vld [vmem:[#allocation2 + $0x30] sm:$0xff]
        %v628 = vld [vmem:[#allocation2 + $0x38] sm:$0xff]
        %v629 = vld [vmem:[#allocation2 + $0x40] sm:$0xff]
        %v630 = vld [vmem:[#allocation2 + $0x48] sm:$0xff]
        %v631 = vld [vmem:[#allocation2 + $0x50] sm:$0xff]
        %v632 = vld [vmem:[#allocation2 + $0x58] sm:$0xff]
        %v633 = vld [vmem:[#allocation2 + $0x60] sm:$0xff]
        %v634 = vld [vmem:[#allocation2 + $0x68] sm:$0xff]
        %v635 = vld [vmem:[#allocation2 + $0x70] sm:$0xff]
        %v636 = vld [vmem:[#allocation2 + $0x78] sm:$0xff]
        %v637 = vld [vmem:[#allocation2 + $0x80] sm:$0xff]
        %v638 = vld [vmem:[#allocation2 + $0x88] sm:$0xff]
        %v639 = vld [vmem:[#allocation2 + $0x90] sm:$0xff]
        %v640 = vld [vmem:[#allocation2 + $0x98] sm:$0xff]
        %v641 = vld [vmem:[#allocation2 + $0xa0] sm:$0xff]
        %v642 = vld [vmem:[#allocation2 + $0xa8] sm:$0xff]
        %v643 = vld [vmem:[#allocation2 + $0xb0] sm:$0xff]
        %v644 = vld [vmem:[#allocation2 + $0xb8] sm:$0xff]
        %v645 = vld [vmem:[#allocation2 + $0xc0] sm:$0xff]
        %v646 = vld [vmem:[#allocation2 + $0xc8] sm:$0xff]
        %v647 = vld [vmem:[#allocation2 + $0xd0] sm:$0xff]
        %v648 = vld [vmem:[#allocation2 + $0xd8] sm:$0xff]
        %v649 = vld [vmem:[#allocation2 + $0xe0] sm:$0xff]
        %v650 = vld [vmem:[#allocation2 + $0xe8] sm:$0xff]
        %v651 = vld [vmem:[#allocation2 + $0xf0] sm:$0xff]
        %v652 = vld [vmem:[#allocation2 + $0xf8] sm:$0xff]
        %v653 = vld [vmem:[#allocation6] sm:$0xf]
        %v654 = vld [vmem:[#allocation6 + $0x4] sm:$0xf]
        %v655 = vld [vmem:[#allocation6 + $0x8] sm:$0xf]
        %v656 = vld [vmem:[#allocation6 + $0xc] sm:$0xf]
        %v687 = vunpack.c.l.b16 %v536
        %v688 = vunpack.c.l.b16 %v537
        %v689 = vunpack.c.l.b16 %v539
        %v690 = vunpack.c.l.b16 %v540
        %v691 = vunpack.c.l.b16 %v542
        %v692 = vunpack.c.l.b16 %v543
        %v693 = vunpack.c.l.b16 %v545
        %v694 = vunpack.c.l.b16 %v546
        %v695 = vunpack.c.l.b16 %v548
        %v696 = vunpack.c.l.b16 %v549
        %v697 = vunpack.c.l.b16 %v551
        %v698 = vunpack.c.l.b16 %v552
        %v699 = vunpack.c.l.b16 %v554
        %v700 = vunpack.c.l.b16 %v555
        %v701 = vunpack.c.l.b16 %v557
        %v702 = vunpack.c.l.b16 %v558
        %v703 = vunpack.c.l.b16 %v560
        %v704 = vunpack.c.l.b16 %v561
        %v705 = vunpack.c.l.b16 %v563
        %v706 = vunpack.c.l.b16 %v564
        %v707 = vunpack.c.l.b16 %v566
        %v708 = vunpack.c.l.b16 %v567
        %v709 = vunpack.c.l.b16 %v569
        %v710 = vunpack.c.l.b16 %v570
        %v711 = vunpack.c.l.b16 %v572
        %v712 = vunpack.c.l.b16 %v573
        %v713 = vunpack.c.l.b16 %v575
        %v714 = vunpack.c.l.b16 %v576
        %v715 = vunpack.c.l.b16 %v578
        %v716 = vunpack.c.l.b16 %v579
        %v717 = vpack.c.b16 %v688, %v687
        %v718 = vpack.c.b16 %v690, %v689
        %v719 = vpack.c.b16 %v692, %v691
        %v720 = vpack.c.b16 %v694, %v693
        %v721 = vpack.c.b16 %v696, %v695
        %v722 = vpack.c.b16 %v698, %v697
        %v723 = vpack.c.b16 %v700, %v699
        %v724 = vpack.c.b16 %v702, %v701
        %v725 = vpack.c.b16 %v704, %v703
        %v726 = vpack.c.b16 %v706, %v705
        %v727 = vpack.c.b16 %v708, %v707
        %v728 = vpack.c.b16 %v710, %v709
        %v729 = vpack.c.b16 %v712, %v711
        %v730 = vpack.c.b16 %v714, %v713
        %v731 = vpack.c.b16 %v716, %v715
        %v736 = vunpack.c.l.b16 %v653
        %v737 = vunpack.c.l.b16 %v654
        %v738 = vunpack.c.l.b16 %v655
        %v739 = vunpack.c.l.b16 %v656
        %v740 = vpack.c.b16 %v737, %v736
        %v741 = vpack.c.b16 %v739, %v738
        %v745 = vsel %vm588, %v717, 0
        %v748 = vsel %vm588, %v718, 0
        %v751 = vsel %vm588, %v719, 0
        %v754 = vsel %vm588, %v720, 0
        %v757 = vsel %vm588, %v721, 0
        %v760 = vsel %vm588, %v722, 0
        %v763 = vsel %vm588, %v723, 0
        %v766 = vsel %vm588, %v724, 0
        %v769 = vsel %vm588, %v725, 0
        %v772 = vsel %vm588, %v726, 0
        %v775 = vsel %vm588, %v727, 0
        %v778 = vsel %vm588, %v728, 0
        %v781 = vsel %vm588, %v729, 0
        %v784 = vsel %vm588, %v730, 0
        %v787 = vsel %vm588, %v731, 0
        %789 = vmatpush.bf16.msra.mxu0 0
        %790 = vmatpush.bf16.msra.mxu0 0
        %791 = vmatpush.bf16.msra.mxu0 0
        %792 = vmatpush.bf16.msra.mxu0 0
        %793 = vmatpush.bf16.msra.mxu0 0
        %794 = vmatpush.bf16.msra.mxu0 0
        %795 = vmatpush.bf16.msra.mxu0 %v741
        %796 = vmatpush.bf16.msra.mxu0 %v740
        %797 = vmatmul.bf16.gmra.mxu0 %v745
        %v798 = vpop.f32.mrf.mxu0
        %v799 = vadd.f32 0.0, %v798
        %v800 = vpop.f32.mrf.mxu0
        %v801 = vadd.f32 0.0, %v800
        %802 = vmatmul.bf16.gmra.mxu0 %v748
        %v803 = vpop.f32.mrf.mxu0
        %v804 = vadd.f32 0.0, %v803
        %v805 = vpop.f32.mrf.mxu0
        %v806 = vadd.f32 0.0, %v805
        %807 = vmatmul.bf16.gmra.mxu0 %v745
        %v808 = vpop.f32.mrf.mxu0
        %v809 = vadd.f32 0.0, %v808
        %v810 = vpop.f32.mrf.mxu0
        %v811 = vadd.f32 0.0, %v810
        %812 = vmatmul.bf16.gmra.mxu0 %v751
        %v813 = vpop.f32.mrf.mxu0
        %v814 = vadd.f32 0.0, %v813
        %v815 = vpop.f32.mrf.mxu0
        %v816 = vadd.f32 0.0, %v815
        %817 = vmatmul.bf16.gmra.mxu0 %v754
        %v818 = vpop.f32.mrf.mxu0
        %v819 = vadd.f32 0.0, %v818
        %v820 = vpop.f32.mrf.mxu0
        %v821 = vadd.f32 0.0, %v820
        %822 = vmatmul.bf16.gmra.mxu0 %v757
        %v823 = vpop.f32.mrf.mxu0
        %v824 = vadd.f32 0.0, %v823
        %v825 = vpop.f32.mrf.mxu0
        %v826 = vadd.f32 0.0, %v825
        %827 = vmatmul.bf16.gmra.mxu0 %v760
        %v828 = vpop.f32.mrf.mxu0
        %v829 = vadd.f32 0.0, %v828
        %v830 = vpop.f32.mrf.mxu0
        %v831 = vadd.f32 0.0, %v830
        %832 = vmatmul.bf16.gmra.mxu0 %v763
        %v833 = vpop.f32.mrf.mxu0
        %v834 = vadd.f32 0.0, %v833
        %v835 = vpop.f32.mrf.mxu0
        %v836 = vadd.f32 0.0, %v835
        %837 = vmatmul.bf16.gmra.mxu0 %v766
        %v838 = vpop.f32.mrf.mxu0
        %v839 = vadd.f32 0.0, %v838
        %v840 = vpop.f32.mrf.mxu0
        %v841 = vadd.f32 0.0, %v840
        %842 = vmatmul.bf16.gmra.mxu0 %v769
        %v843 = vpop.f32.mrf.mxu0
        %v844 = vadd.f32 0.0, %v843
        %v845 = vpop.f32.mrf.mxu0
        %v846 = vadd.f32 0.0, %v845
        %847 = vmatmul.bf16.gmra.mxu0 %v772
        %v848 = vpop.f32.mrf.mxu0
        %v849 = vadd.f32 0.0, %v848
        %v850 = vpop.f32.mrf.mxu0
        %v851 = vadd.f32 0.0, %v850
        %852 = vmatmul.bf16.gmra.mxu0 %v775
        %v853 = vpop.f32.mrf.mxu0
        %v854 = vadd.f32 0.0, %v853
        %v855 = vpop.f32.mrf.mxu0
        %v856 = vadd.f32 0.0, %v855
        %857 = vmatmul.bf16.gmra.mxu0 %v778
        %v858 = vpop.f32.mrf.mxu0
        %v859 = vadd.f32 0.0, %v858
        %v860 = vpop.f32.mrf.mxu0
        %v861 = vadd.f32 0.0, %v860
        %862 = vmatmul.bf16.gmra.mxu0 %v781
        %v863 = vpop.f32.mrf.mxu0
        %v864 = vadd.f32 0.0, %v863
        %v865 = vpop.f32.mrf.mxu0
        %v866 = vadd.f32 0.0, %v865
        %867 = vmatmul.bf16.gmra.mxu0 %v784
        %v868 = vpop.f32.mrf.mxu0
        %v869 = vadd.f32 0.0, %v868
        %v870 = vpop.f32.mrf.mxu0
        %v871 = vadd.f32 0.0, %v870
        %872 = vmatmul.bf16.gmra.mxu0 %v787
        %v873 = vpop.f32.mrf.mxu0
        %v874 = vadd.f32 0.0, %v873
        %v875 = vpop.f32.mrf.mxu0
        %v876 = vadd.f32 0.0, %v875
        %877 = vdwg.mxu0
        %v878 = vadd.f32 %v621, %v799
        %v879 = vadd.f32 %v622, %v801
        %v880 = vadd.f32 %v623, %v804
        %v881 = vadd.f32 %v624, %v806
        %v882 = vadd.f32 %v625, %v809
        %v883 = vadd.f32 %v626, %v811
        %v884 = vadd.f32 %v627, %v814
        %v885 = vadd.f32 %v628, %v816
        %v886 = vadd.f32 %v629, %v819
        %v887 = vadd.f32 %v630, %v821
        %v888 = vadd.f32 %v631, %v824
        %v889 = vadd.f32 %v632, %v826
        %v890 = vadd.f32 %v633, %v829
        %v891 = vadd.f32 %v634, %v831
        %v892 = vadd.f32 %v635, %v834
        %v893 = vadd.f32 %v636, %v836
        %v894 = vadd.f32 %v637, %v839
        %v895 = vadd.f32 %v638, %v841
        %v896 = vadd.f32 %v639, %v844
        %v897 = vadd.f32 %v640, %v846
        %v898 = vadd.f32 %v641, %v849
        %v899 = vadd.f32 %v642, %v851
        %v900 = vadd.f32 %v643, %v854
        %v901 = vadd.f32 %v644, %v856
        %v902 = vadd.f32 %v645, %v859
        %v903 = vadd.f32 %v646, %v861
        %v904 = vadd.f32 %v647, %v864
        %v905 = vadd.f32 %v648, %v866
        %v906 = vadd.f32 %v649, %v869
        %v907 = vadd.f32 %v650, %v871
        %v908 = vadd.f32 %v651, %v874
        %v909 = vadd.f32 %v652, %v876
        %910 = vst.msk [vmem:[#allocation2] sm:$0xff] %vm588, %v878
        %911 = vst.msk [vmem:[#allocation2 + $0x8] sm:$0xff] %vm588, %v879
        %912 = vst.msk [vmem:[#allocation2 + $0x10] sm:$0xff] %vm588, %v880
        %913 = vst.msk [vmem:[#allocation2 + $0x18] sm:$0xff] %vm588, %v881
        %914 = vst.msk [vmem:[#allocation2 + $0x20] sm:$0xff] %vm588, %v882
        %915 = vst.msk [vmem:[#allocation2 + $0x28] sm:$0xff] %vm588, %v883
        %916 = vst.msk [vmem:[#allocation2 + $0x30] sm:$0xff] %vm588, %v884
        %917 = vst.msk [vmem:[#allocation2 + $0x38] sm:$0xff] %vm588, %v885
        %918 = vst.msk [vmem:[#allocation2 + $0x40] sm:$0xff] %vm588, %v886
        %919 = vst.msk [vmem:[#allocation2 + $0x48] sm:$0xff] %vm588, %v887
        %920 = vst.msk [vmem:[#allocation2 + $0x50] sm:$0xff] %vm588, %v888
        %921 = vst.msk [vmem:[#allocation2 + $0x58] sm:$0xff] %vm588, %v889
        %922 = vst.msk [vmem:[#allocation2 + $0x60] sm:$0xff] %vm588, %v890
        %923 = vst.msk [vmem:[#allocation2 + $0x68] sm:$0xff] %vm588, %v891
        %924 = vst.msk [vmem:[#allocation2 + $0x70] sm:$0xff] %vm588, %v892
        %925 = vst.msk [vmem:[#allocation2 + $0x78] sm:$0xff] %vm588, %v893
        %926 = vst.msk [vmem:[#allocation2 + $0x80] sm:$0xff] %vm588, %v894
        %927 = vst.msk [vmem:[#allocation2 + $0x88] sm:$0xff] %vm588, %v895
        %928 = vst.msk [vmem:[#allocation2 + $0x90] sm:$0xff] %vm588, %v896
        %929 = vst.msk [vmem:[#allocation2 + $0x98] sm:$0xff] %vm588, %v897
        %930 = vst.msk [vmem:[#allocation2 + $0xa0] sm:$0xff] %vm588, %v898
        %931 = vst.msk [vmem:[#allocation2 + $0xa8] sm:$0xff] %vm588, %v899
        %932 = vst.msk [vmem:[#allocation2 + $0xb0] sm:$0xff] %vm588, %v900
        %933 = vst.msk [vmem:[#allocation2 + $0xb8] sm:$0xff] %vm588, %v901
        %934 = vst.msk [vmem:[#allocation2 + $0xc0] sm:$0xff] %vm588, %v902
        %935 = vst.msk [vmem:[#allocation2 + $0xc8] sm:$0xff] %vm588, %v903
        %936 = vst.msk [vmem:[#allocation2 + $0xd0] sm:$0xff] %vm588, %v904
        %937 = vst.msk [vmem:[#allocation2 + $0xd8] sm:$0xff] %vm588, %v905
        %938 = vst.msk [vmem:[#allocation2 + $0xe0] sm:$0xff] %vm588, %v906
        %939 = vst.msk [vmem:[#allocation2 + $0xe8] sm:$0xff] %vm588, %v907
        %940 = vst.msk [vmem:[#allocation2 + $0xf0] sm:$0xff] %vm588, %v908
        %941 = vst.msk [vmem:[#allocation2 + $0xf8] sm:$0xff] %vm588, %v909
        %v942 = vld [vmem:[#allocation2] sm:$0xff]
        %v943 = vld [vmem:[#allocation2 + $0x8] sm:$0xff]
        %v944 = vld [vmem:[#allocation2 + $0x10] sm:$0xff]
        %v945 = vld [vmem:[#allocation2 + $0x18] sm:$0xff]
        %v946 = vld [vmem:[#allocation2 + $0x20] sm:$0xff]
        %v947 = vld [vmem:[#allocation2 + $0x28] sm:$0xff]
        %v948 = vld [vmem:[#allocation2 + $0x30] sm:$0xff]
        %v949 = vld [vmem:[#allocation2 + $0x38] sm:$0xff]
        %v950 = vld [vmem:[#allocation2 + $0x40] sm:$0xff]
        %v951 = vld [vmem:[#allocation2 + $0x48] sm:$0xff]
        %v952 = vld [vmem:[#allocation2 + $0x50] sm:$0xff]
        %v953 = vld [vmem:[#allocation2 + $0x58] sm:$0xff]
        %v954 = vld [vmem:[#allocation2 + $0x60] sm:$0xff]
        %v955 = vld [vmem:[#allocation2 + $0x68] sm:$0xff]
        %v956 = vld [vmem:[#allocation2 + $0x70] sm:$0xff]
        %v957 = vld [vmem:[#allocation2 + $0x78] sm:$0xff]
        %v958 = vld [vmem:[#allocation2 + $0x80] sm:$0xff]
        %v959 = vld [vmem:[#allocation2 + $0x88] sm:$0xff]
        %v960 = vld [vmem:[#allocation2 + $0x90] sm:$0xff]
        %v961 = vld [vmem:[#allocation2 + $0x98] sm:$0xff]
        %v962 = vld [vmem:[#allocation2 + $0xa0] sm:$0xff]
        %v963 = vld [vmem:[#allocation2 + $0xa8] sm:$0xff]
        %v964 = vld [vmem:[#allocation2 + $0xb0] sm:$0xff]
        %v965 = vld [vmem:[#allocation2 + $0xb8] sm:$0xff]
        %v966 = vld [vmem:[#allocation2 + $0xc0] sm:$0xff]
        %v967 = vld [vmem:[#allocation2 + $0xc8] sm:$0xff]
        %v968 = vld [vmem:[#allocation2 + $0xd0] sm:$0xff]
        %v969 = vld [vmem:[#allocation2 + $0xd8] sm:$0xff]
        %v970 = vld [vmem:[#allocation2 + $0xe0] sm:$0xff]
        %v971 = vld [vmem:[#allocation2 + $0xe8] sm:$0xff]
        %v972 = vld [vmem:[#allocation2 + $0xf0] sm:$0xff]
        %v973 = vld [vmem:[#allocation2 + $0xf8] sm:$0xff]
        %s974 = scalar_lea.vmem [#allocation6], 48
        %v975 = vld [vmem:[%s974] sm:$0xf]
        %v976 = vld [vmem:[%s974 + $0x4] sm:$0xf]
        %v977 = vld [vmem:[%s974 + $0x8] sm:$0xf]
        %v978 = vld [vmem:[%s974 + $0xc] sm:$0xf]
        %v981 = vunpack.c.l.b16 %v581
        %v982 = vunpack.c.l.b16 %v582
        %v983 = vpack.c.b16 %v982, %v981
        %v988 = vunpack.c.l.b16 %v975
        %v989 = vunpack.c.l.b16 %v976
        %v990 = vunpack.c.l.b16 %v977
        %v991 = vunpack.c.l.b16 %v978
        %v992 = vpack.c.b16 %v989, %v988
        %v993 = vpack.c.b16 %v991, %v990
        %v997 = vsel %vm588, %v983, 0
        %999 = vmatpush.bf16.msra.mxu0 0
        %1000 = vmatpush.bf16.msra.mxu0 0
        %1001 = vmatpush.bf16.msra.mxu0 0
        %1002 = vmatpush.bf16.msra.mxu0 0
        %1003 = vmatpush.bf16.msra.mxu0 0
        %1004 = vmatpush.bf16.msra.mxu0 0
        %1005 = vmatpush.bf16.msra.mxu0 %v993
        %1006 = vmatpush.bf16.msra.mxu0 %v992
        %1007 = vmatmul.bf16.gmra.mxu0 %v748
        %v1008 = vpop.f32.mrf.mxu0
        %v1009 = vadd.f32 0.0, %v1008
        %v1010 = vpop.f32.mrf.mxu0
        %v1011 = vadd.f32 0.0, %v1010
        %1012 = vmatmul.bf16.gmra.mxu0 %v745
        %v1013 = vpop.f32.mrf.mxu0
        %v1014 = vadd.f32 0.0, %v1013
        %v1015 = vpop.f32.mrf.mxu0
        %v1016 = vadd.f32 0.0, %v1015
        %1017 = vmatmul.bf16.gmra.mxu0 %v751
        %v1018 = vpop.f32.mrf.mxu0
        %v1019 = vadd.f32 0.0, %v1018
        %v1020 = vpop.f32.mrf.mxu0
        %v1021 = vadd.f32 0.0, %v1020
        %1022 = vmatmul.bf16.gmra.mxu0 %v754
        %v1023 = vpop.f32.mrf.mxu0
        %v1024 = vadd.f32 0.0, %v1023
        %v1025 = vpop.f32.mrf.mxu0
        %v1026 = vadd.f32 0.0, %v1025
        %1027 = vmatmul.bf16.gmra.mxu0 %v757
        %v1028 = vpop.f32.mrf.mxu0
        %v1029 = vadd.f32 0.0, %v1028
        %v1030 = vpop.f32.mrf.mxu0
        %v1031 = vadd.f32 0.0, %v1030
        %1032 = vmatmul.bf16.gmra.mxu0 %v760
        %v1033 = vpop.f32.mrf.mxu0
        %v1034 = vadd.f32 0.0, %v1033
        %v1035 = vpop.f32.mrf.mxu0
        %v1036 = vadd.f32 0.0, %v1035
        %1037 = vmatmul.bf16.gmra.mxu0 %v763
        %v1038 = vpop.f32.mrf.mxu0
        %v1039 = vadd.f32 0.0, %v1038
        %v1040 = vpop.f32.mrf.mxu0
        %v1041 = vadd.f32 0.0, %v1040
        %1042 = vmatmul.bf16.gmra.mxu0 %v766
        %v1043 = vpop.f32.mrf.mxu0
        %v1044 = vadd.f32 0.0, %v1043
        %v1045 = vpop.f32.mrf.mxu0
        %v1046 = vadd.f32 0.0, %v1045
        %1047 = vmatmul.bf16.gmra.mxu0 %v769
        %v1048 = vpop.f32.mrf.mxu0
        %v1049 = vadd.f32 0.0, %v1048
        %v1050 = vpop.f32.mrf.mxu0
        %v1051 = vadd.f32 0.0, %v1050
        %1052 = vmatmul.bf16.gmra.mxu0 %v772
        %v1053 = vpop.f32.mrf.mxu0
        %v1054 = vadd.f32 0.0, %v1053
        %v1055 = vpop.f32.mrf.mxu0
        %v1056 = vadd.f32 0.0, %v1055
        %1057 = vmatmul.bf16.gmra.mxu0 %v775
        %v1058 = vpop.f32.mrf.mxu0
        %v1059 = vadd.f32 0.0, %v1058
        %v1060 = vpop.f32.mrf.mxu0
        %v1061 = vadd.f32 0.0, %v1060
        %1062 = vmatmul.bf16.gmra.mxu0 %v778
        %v1063 = vpop.f32.mrf.mxu0
        %v1064 = vadd.f32 0.0, %v1063
        %v1065 = vpop.f32.mrf.mxu0
        %v1066 = vadd.f32 0.0, %v1065
        %1067 = vmatmul.bf16.gmra.mxu0 %v781
        %v1068 = vpop.f32.mrf.mxu0
        %v1069 = vadd.f32 0.0, %v1068
        %v1070 = vpop.f32.mrf.mxu0
        %v1071 = vadd.f32 0.0, %v1070
        %1072 = vmatmul.bf16.gmra.mxu0 %v784
        %v1073 = vpop.f32.mrf.mxu0
        %v1074 = vadd.f32 0.0, %v1073
        %v1075 = vpop.f32.mrf.mxu0
        %v1076 = vadd.f32 0.0, %v1075
        %1077 = vmatmul.bf16.gmra.mxu0 %v787
        %v1078 = vpop.f32.mrf.mxu0
        %v1079 = vadd.f32 0.0, %v1078
        %v1080 = vpop.f32.mrf.mxu0
        %v1081 = vadd.f32 0.0, %v1080
        %1082 = vmatmul.bf16.gmra.mxu0 %v997
        %v1083 = vpop.f32.mrf.mxu0
        %v1084 = vadd.f32 0.0, %v1083
        %v1085 = vpop.f32.mrf.mxu0
        %v1086 = vadd.f32 0.0, %v1085
        %1087 = vdwg.mxu0
        %v1088 = vadd.f32 %v942, %v1009
        %v1089 = vadd.f32 %v943, %v1011
        %v1090 = vadd.f32 %v944, %v1014
        %v1091 = vadd.f32 %v945, %v1016
        %v1092 = vadd.f32 %v946, %v1019
        %v1093 = vadd.f32 %v947, %v1021
        %v1094 = vadd.f32 %v948, %v1024
        %v1095 = vadd.f32 %v949, %v1026
        %v1096 = vadd.f32 %v950, %v1029
        %v1097 = vadd.f32 %v951, %v1031
        %v1098 = vadd.f32 %v952, %v1034
        %v1099 = vadd.f32 %v953, %v1036
        %v1100 = vadd.f32 %v954, %v1039
        %v1101 = vadd.f32 %v955, %v1041
        %v1102 = vadd.f32 %v956, %v1044
        %v1103 = vadd.f32 %v957, %v1046
        %v1104 = vadd.f32 %v958, %v1049
        %v1105 = vadd.f32 %v959, %v1051
        %v1106 = vadd.f32 %v960, %v1054
        %v1107 = vadd.f32 %v961, %v1056
        %v1108 = vadd.f32 %v962, %v1059
        %v1109 = vadd.f32 %v963, %v1061
        %v1110 = vadd.f32 %v964, %v1064
        %v1111 = vadd.f32 %v965, %v1066
        %v1112 = vadd.f32 %v966, %v1069
        %v1113 = vadd.f32 %v967, %v1071
        %v1114 = vadd.f32 %v968, %v1074
        %v1115 = vadd.f32 %v969, %v1076
        %v1116 = vadd.f32 %v970, %v1079
        %v1117 = vadd.f32 %v971, %v1081
        %v1118 = vadd.f32 %v972, %v1084
        %v1119 = vadd.f32 %v973, %v1086
        %1120 = vst.msk [vmem:[#allocation2] sm:$0xff] %vm588, %v1088
        %1121 = vst.msk [vmem:[#allocation2 + $0x8] sm:$0xff] %vm588, %v1089
        %1122 = vst.msk [vmem:[#allocation2 + $0x10] sm:$0xff] %vm588, %v1090
        %1123 = vst.msk [vmem:[#allocation2 + $0x18] sm:$0xff] %vm588, %v1091
        %1124 = vst.msk [vmem:[#allocation2 + $0x20] sm:$0xff] %vm588, %v1092
        %1125 = vst.msk [vmem:[#allocation2 + $0x28] sm:$0xff] %vm588, %v1093
        %1126 = vst.msk [vmem:[#allocation2 + $0x30] sm:$0xff] %vm588, %v1094
        %1127 = vst.msk [vmem:[#allocation2 + $0x38] sm:$0xff] %vm588, %v1095
        %1128 = vst.msk [vmem:[#allocation2 + $0x40] sm:$0xff] %vm588, %v1096
        %1129 = vst.msk [vmem:[#allocation2 + $0x48] sm:$0xff] %vm588, %v1097
        %1130 = vst.msk [vmem:[#allocation2 + $0x50] sm:$0xff] %vm588, %v1098
        %1131 = vst.msk [vmem:[#allocation2 + $0x58] sm:$0xff] %vm588, %v1099
        %1132 = vst.msk [vmem:[#allocation2 + $0x60] sm:$0xff] %vm588, %v1100
        %1133 = vst.msk [vmem:[#allocation2 + $0x68] sm:$0xff] %vm588, %v1101
        %1134 = vst.msk [vmem:[#allocation2 + $0x70] sm:$0xff] %vm588, %v1102
        %1135 = vst.msk [vmem:[#allocation2 + $0x78] sm:$0xff] %vm588, %v1103
        %1136 = vst.msk [vmem:[#allocation2 + $0x80] sm:$0xff] %vm588, %v1104
        %1137 = vst.msk [vmem:[#allocation2 + $0x88] sm:$0xff] %vm588, %v1105
        %1138 = vst.msk [vmem:[#allocation2 + $0x90] sm:$0xff] %vm588, %v1106
        %1139 = vst.msk [vmem:[#allocation2 + $0x98] sm:$0xff] %vm588, %v1107
        %1140 = vst.msk [vmem:[#allocation2 + $0xa0] sm:$0xff] %vm588, %v1108
        %1141 = vst.msk [vmem:[#allocation2 + $0xa8] sm:$0xff] %vm588, %v1109
        %1142 = vst.msk [vmem:[#allocation2 + $0xb0] sm:$0xff] %vm588, %v1110
        %1143 = vst.msk [vmem:[#allocation2 + $0xb8] sm:$0xff] %vm588, %v1111
        %1144 = vst.msk [vmem:[#allocation2 + $0xc0] sm:$0xff] %vm588, %v1112
        %1145 = vst.msk [vmem:[#allocation2 + $0xc8] sm:$0xff] %vm588, %v1113
        %1146 = vst.msk [vmem:[#allocation2 + $0xd0] sm:$0xff] %vm588, %v1114
        %1147 = vst.msk [vmem:[#allocation2 + $0xd8] sm:$0xff] %vm588, %v1115
        %1148 = vst.msk [vmem:[#allocation2 + $0xe0] sm:$0xff] %vm588, %v1116
        %1149 = vst.msk [vmem:[#allocation2 + $0xe8] sm:$0xff] %vm588, %v1117
        %1150 = vst.msk [vmem:[#allocation2 + $0xf0] sm:$0xff] %vm588, %v1118
        %1151 = vst.msk [vmem:[#allocation2 + $0xf8] sm:$0xff] %vm588, %v1119
        %v1152 = vld [vmem:[#allocation2] sm:$0xff]
        %v1153 = vld [vmem:[#allocation2 + $0x8] sm:$0xff]
        %v1154 = vld [vmem:[#allocation2 + $0x10] sm:$0xff]
        %v1155 = vld [vmem:[#allocation2 + $0x18] sm:$0xff]
        %v1156 = vld [vmem:[#allocation2 + $0x20] sm:$0xff]
        %v1157 = vld [vmem:[#allocation2 + $0x28] sm:$0xff]
        %v1158 = vld [vmem:[#allocation2 + $0x30] sm:$0xff]
        %v1159 = vld [vmem:[#allocation2 + $0x38] sm:$0xff]
        %v1160 = vld [vmem:[#allocation2 + $0x40] sm:$0xff]
        %v1161 = vld [vmem:[#allocation2 + $0x48] sm:$0xff]
        %v1162 = vld [vmem:[#allocation2 + $0x50] sm:$0xff]
        %v1163 = vld [vmem:[#allocation2 + $0x58] sm:$0xff]
        %v1164 = vld [vmem:[#allocation2 + $0x60] sm:$0xff]
        %v1165 = vld [vmem:[#allocation2 + $0x68] sm:$0xff]
        %v1166 = vld [vmem:[#allocation2 + $0x70] sm:$0xff]
        %v1167 = vld [vmem:[#allocation2 + $0x78] sm:$0xff]
        %v1168 = vld [vmem:[#allocation2 + $0x80] sm:$0xff]
        %v1169 = vld [vmem:[#allocation2 + $0x88] sm:$0xff]
        %v1170 = vld [vmem:[#allocation2 + $0x90] sm:$0xff]
        %v1171 = vld [vmem:[#allocation2 + $0x98] sm:$0xff]
        %v1172 = vld [vmem:[#allocation2 + $0xa0] sm:$0xff]
        %v1173 = vld [vmem:[#allocation2 + $0xa8] sm:$0xff]
        %v1174 = vld [vmem:[#allocation2 + $0xb0] sm:$0xff]
        %v1175 = vld [vmem:[#allocation2 + $0xb8] sm:$0xff]
        %v1176 = vld [vmem:[#allocation2 + $0xc0] sm:$0xff]
        %v1177 = vld [vmem:[#allocation2 + $0xc8] sm:$0xff]
        %v1178 = vld [vmem:[#allocation2 + $0xd0] sm:$0xff]
        %v1179 = vld [vmem:[#allocation2 + $0xd8] sm:$0xff]
        %v1180 = vld [vmem:[#allocation2 + $0xe0] sm:$0xff]
        %v1181 = vld [vmem:[#allocation2 + $0xe8] sm:$0xff]
        %v1182 = vld [vmem:[#allocation2 + $0xf0] sm:$0xff]
        %v1183 = vld [vmem:[#allocation2 + $0xf8] sm:$0xff]
        %s1184 = scalar_lea.vmem [#allocation6], 96
        %v1185 = vld [vmem:[%s1184] sm:$0xf]
        %v1186 = vld [vmem:[%s1184 + $0x4] sm:$0xf]
        %v1187 = vld [vmem:[%s1184 + $0x8] sm:$0xf]
        %v1188 = vld [vmem:[%s1184 + $0xc] sm:$0xf]
        %v1193 = vunpack.c.l.b16 %v1185
        %v1194 = vunpack.c.l.b16 %v1186
        %v1195 = vunpack.c.l.b16 %v1187
        %v1196 = vunpack.c.l.b16 %v1188
        %v1197 = vpack.c.b16 %v1194, %v1193
        %v1198 = vpack.c.b16 %v1196, %v1195
        %1201 = vmatpush.bf16.msra.mxu0 0
        %1202 = vmatpush.bf16.msra.mxu0 0
        %1203 = vmatpush.bf16.msra.mxu0 0
        %1204 = vmatpush.bf16.msra.mxu0 0
        %1205 = vmatpush.bf16.msra.mxu0 0
        %1206 = vmatpush.bf16.msra.mxu0 0
        %1207 = vmatpush.bf16.msra.mxu0 %v1198
        %1208 = vmatpush.bf16.msra.mxu0 %v1197
        %1209 = vmatmul.bf16.gmra.mxu0 %v745
        %v1210 = vpop.f32.mrf.mxu0
        %v1211 = vadd.f32 0.0, %v1210
        %v1212 = vpop.f32.mrf.mxu0
        %v1213 = vadd.f32 0.0, %v1212
        %1214 = vmatmul.bf16.gmra.mxu0 %v751
        %v1215 = vpop.f32.mrf.mxu0
        %v1216 = vadd.f32 0.0, %v1215
        %v1217 = vpop.f32.mrf.mxu0
        %v1218 = vadd.f32 0.0, %v1217
        %1219 = vmatmul.bf16.gmra.mxu0 %v754
        %v1220 = vpop.f32.mrf.mxu0
        %v1221 = vadd.f32 0.0, %v1220
        %v1222 = vpop.f32.mrf.mxu0
        %v1223 = vadd.f32 0.0, %v1222
        %1224 = vmatmul.bf16.gmra.mxu0 %v757
        %v1225 = vpop.f32.mrf.mxu0
        %v1226 = vadd.f32 0.0, %v1225
        %v1227 = vpop.f32.mrf.mxu0
        %v1228 = vadd.f32 0.0, %v1227
        %1229 = vmatmul.bf16.gmra.mxu0 %v760
        %v1230 = vpop.f32.mrf.mxu0
        %v1231 = vadd.f32 0.0, %v1230
        %v1232 = vpop.f32.mrf.mxu0
        %v1233 = vadd.f32 0.0, %v1232
        %1234 = vmatmul.bf16.gmra.mxu0 %v763
        %v1235 = vpop.f32.mrf.mxu0
        %v1236 = vadd.f32 0.0, %v1235
        %v1237 = vpop.f32.mrf.mxu0
        %v1238 = vadd.f32 0.0, %v1237
        %1239 = vmatmul.bf16.gmra.mxu0 %v766
        %v1240 = vpop.f32.mrf.mxu0
        %v1241 = vadd.f32 0.0, %v1240
        %v1242 = vpop.f32.mrf.mxu0
        %v1243 = vadd.f32 0.0, %v1242
        %1244 = vmatmul.bf16.gmra.mxu0 %v769
        %v1245 = vpop.f32.mrf.mxu0
        %v1246 = vadd.f32 0.0, %v1245
        %v1247 = vpop.f32.mrf.mxu0
        %v1248 = vadd.f32 0.0, %v1247
        %1249 = vmatmul.bf16.gmra.mxu0 %v772
        %v1250 = vpop.f32.mrf.mxu0
        %v1251 = vadd.f32 0.0, %v1250
        %v1252 = vpop.f32.mrf.mxu0
        %v1253 = vadd.f32 0.0, %v1252
        %1254 = vmatmul.bf16.gmra.mxu0 %v775
        %v1255 = vpop.f32.mrf.mxu0
        %v1256 = vadd.f32 0.0, %v1255
        %v1257 = vpop.f32.mrf.mxu0
        %v1258 = vadd.f32 0.0, %v1257
        %1259 = vmatmul.bf16.gmra.mxu0 %v778
        %v1260 = vpop.f32.mrf.mxu0
        %v1261 = vadd.f32 0.0, %v1260
        %v1262 = vpop.f32.mrf.mxu0
        %v1263 = vadd.f32 0.0, %v1262
        %1264 = vmatmul.bf16.gmra.mxu0 %v781
        %v1265 = vpop.f32.mrf.mxu0
        %v1266 = vadd.f32 0.0, %v1265
        %v1267 = vpop.f32.mrf.mxu0
        %v1268 = vadd.f32 0.0, %v1267
        %1269 = vmatmul.bf16.gmra.mxu0 %v784
        %v1270 = vpop.f32.mrf.mxu0
        %v1271 = vadd.f32 0.0, %v1270
        %v1272 = vpop.f32.mrf.mxu0
        %v1273 = vadd.f32 0.0, %v1272
        %1274 = vmatmul.bf16.gmra.mxu0 %v787
        %v1275 = vpop.f32.mrf.mxu0
        %v1276 = vadd.f32 0.0, %v1275
        %v1277 = vpop.f32.mrf.mxu0
        %v1278 = vadd.f32 0.0, %v1277
        %1279 = vmatmul.bf16.gmra.mxu0 %v997
        %v1280 = vpop.f32.mrf.mxu0
        %v1281 = vadd.f32 0.0, %v1280
        %v1282 = vpop.f32.mrf.mxu0
        %v1283 = vadd.f32 0.0, %v1282
        %1284 = vmatmul.bf16.gmra.mxu0 %v787
        %v1285 = vpop.f32.mrf.mxu0
        %v1286 = vadd.f32 0.0, %v1285
        %v1287 = vpop.f32.mrf.mxu0
        %v1288 = vadd.f32 0.0, %v1287
        %1289 = vdwg.mxu0
        %v1290 = vadd.f32 %v1152, %v1211
        %v1291 = vadd.f32 %v1153, %v1213
        %v1292 = vadd.f32 %v1154, %v1216
        %v1293 = vadd.f32 %v1155, %v1218
        %v1294 = vadd.f32 %v1156, %v1221
        %v1295 = vadd.f32 %v1157, %v1223
        %v1296 = vadd.f32 %v1158, %v1226
        %v1297 = vadd.f32 %v1159, %v1228
        %v1298 = vadd.f32 %v1160, %v1231
        %v1299 = vadd.f32 %v1161, %v1233
        %v1300 = vadd.f32 %v1162, %v1236
        %v1301 = vadd.f32 %v1163, %v1238
        %v1302 = vadd.f32 %v1164, %v1241
        %v1303 = vadd.f32 %v1165, %v1243
        %v1304 = vadd.f32 %v1166, %v1246
        %v1305 = vadd.f32 %v1167, %v1248
        %v1306 = vadd.f32 %v1168, %v1251
        %v1307 = vadd.f32 %v1169, %v1253
        %v1308 = vadd.f32 %v1170, %v1256
        %v1309 = vadd.f32 %v1171, %v1258
        %v1310 = vadd.f32 %v1172, %v1261
        %v1311 = vadd.f32 %v1173, %v1263
        %v1312 = vadd.f32 %v1174, %v1266
        %v1313 = vadd.f32 %v1175, %v1268
        %v1314 = vadd.f32 %v1176, %v1271
        %v1315 = vadd.f32 %v1177, %v1273
        %v1316 = vadd.f32 %v1178, %v1276
        %v1317 = vadd.f32 %v1179, %v1278
        %v1318 = vadd.f32 %v1180, %v1281
        %v1319 = vadd.f32 %v1181, %v1283
        %v1320 = vadd.f32 %v1182, %v1286
        %v1321 = vadd.f32 %v1183, %v1288
        %1322 = vst.msk [vmem:[#allocation2] sm:$0xff] %vm588, %v1290
        %1323 = vst.msk [vmem:[#allocation2 + $0x8] sm:$0xff] %vm588, %v1291
        %1324 = vst.msk [vmem:[#allocation2 + $0x10] sm:$0xff] %vm588, %v1292
        %1325 = vst.msk [vmem:[#allocation2 + $0x18] sm:$0xff] %vm588, %v1293
        %1326 = vst.msk [vmem:[#allocation2 + $0x20] sm:$0xff] %vm588, %v1294
        %1327 = vst.msk [vmem:[#allocation2 + $0x28] sm:$0xff] %vm588, %v1295
        %1328 = vst.msk [vmem:[#allocation2 + $0x30] sm:$0xff] %vm588, %v1296
        %1329 = vst.msk [vmem:[#allocation2 + $0x38] sm:$0xff] %vm588, %v1297
        %1330 = vst.msk [vmem:[#allocation2 + $0x40] sm:$0xff] %vm588, %v1298
        %1331 = vst.msk [vmem:[#allocation2 + $0x48] sm:$0xff] %vm588, %v1299
        %1332 = vst.msk [vmem:[#allocation2 + $0x50] sm:$0xff] %vm588, %v1300
        %1333 = vst.msk [vmem:[#allocation2 + $0x58] sm:$0xff] %vm588, %v1301
        %1334 = vst.msk [vmem:[#allocation2 + $0x60] sm:$0xff] %vm588, %v1302
        %1335 = vst.msk [vmem:[#allocation2 + $0x68] sm:$0xff] %vm588, %v1303
        %1336 = vst.msk [vmem:[#allocation2 + $0x70] sm:$0xff] %vm588, %v1304
        %1337 = vst.msk [vmem:[#allocation2 + $0x78] sm:$0xff] %vm588, %v1305
        %1338 = vst.msk [vmem:[#allocation2 + $0x80] sm:$0xff] %vm588, %v1306
        %1339 = vst.msk [vmem:[#allocation2 + $0x88] sm:$0xff] %vm588, %v1307
        %1340 = vst.msk [vmem:[#allocation2 + $0x90] sm:$0xff] %vm588, %v1308
        %1341 = vst.msk [vmem:[#allocation2 + $0x98] sm:$0xff] %vm588, %v1309
        %1342 = vst.msk [vmem:[#allocation2 + $0xa0] sm:$0xff] %vm588, %v1310
        %1343 = vst.msk [vmem:[#allocation2 + $0xa8] sm:$0xff] %vm588, %v1311
        %1344 = vst.msk [vmem:[#allocation2 + $0xb0] sm:$0xff] %vm588, %v1312
        %1345 = vst.msk [vmem:[#allocation2 + $0xb8] sm:$0xff] %vm588, %v1313
        %1346 = vst.msk [vmem:[#allocation2 + $0xc0] sm:$0xff] %vm588, %v1314
        %1347 = vst.msk [vmem:[#allocation2 + $0xc8] sm:$0xff] %vm588, %v1315
        %1348 = vst.msk [vmem:[#allocation2 + $0xd0] sm:$0xff] %vm588, %v1316
        %1349 = vst.msk [vmem:[#allocation2 + $0xd8] sm:$0xff] %vm588, %v1317
        %1350 = vst.msk [vmem:[#allocation2 + $0xe0] sm:$0xff] %vm588, %v1318
        %1351 = vst.msk [vmem:[#allocation2 + $0xe8] sm:$0xff] %vm588, %v1319
        %1352 = vst.msk [vmem:[#allocation2 + $0xf0] sm:$0xff] %vm588, %v1320
        %1353 = vst.msk [vmem:[#allocation2 + $0xf8] sm:$0xff] %vm588, %v1321
        %vm1354 = vsmask.f32 3328
        %vm1355 = vsmask.f32 7440
        %vm1356 = vmor %vm1354, %vm1355
        %v1358 = vshrl.u32 %v536, 16
        %v1360 = vrot.slane %v1358, 4
        %v1361 = vshll.u32 %v536, 16
        %v1363 = vrot.slane %v1361, 5
        %v1364 = vor.u32 %v1360, %v1363
        %v1365 = vrot.slane %v1364, 4
        %v1367 = vshll.u32 %v537, 16
        %v1369 = vrot.slane %v1367, 5
        %v1370 = vsel %vm1356, %v1365, %v1369
        %v1371 = vshrl.u32 %v537, 16
        %v1373 = vrot.slane %v1371, 4
        %v1374 = vor.u32 %v1373, %v1369
        %v1375 = vrot.slane %v1374, 4
        %v1377 = vshll.u32 %v538, 16
        %v1379 = vrot.slane %v1377, 5
        %v1380 = vsel %vm1356, %v1375, %v1379
        %v1382 = vshrl.u32 %v539, 16
        %v1384 = vrot.slane %v1382, 4
        %v1385 = vshll.u32 %v539, 16
        %v1387 = vrot.slane %v1385, 5
        %v1388 = vor.u32 %v1384, %v1387
        %v1389 = vrot.slane %v1388, 4
        %v1391 = vshll.u32 %v540, 16
        %v1393 = vrot.slane %v1391, 5
        %v1394 = vsel %vm1356, %v1389, %v1393
        %v1395 = vshrl.u32 %v540, 16
        %v1397 = vrot.slane %v1395, 4
        %v1398 = vor.u32 %v1397, %v1393
        %v1399 = vrot.slane %v1398, 4
        %v1401 = vshll.u32 %v541, 16
        %v1403 = vrot.slane %v1401, 5
        %v1404 = vsel %vm1356, %v1399, %v1403
        %v1406 = vshrl.u32 %v542, 16
        %v1408 = vrot.slane %v1406, 4
        %v1409 = vshll.u32 %v542, 16
        %v1411 = vrot.slane %v1409, 5
        %v1412 = vor.u32 %v1408, %v1411
        %v1413 = vrot.slane %v1412, 4
        %v1415 = vshll.u32 %v543, 16
        %v1417 = vrot.slane %v1415, 5
        %v1418 = vsel %vm1356, %v1413, %v1417
        %v1419 = vshrl.u32 %v543, 16
        %v1421 = vrot.slane %v1419, 4
        %v1422 = vor.u32 %v1421, %v1417
        %v1423 = vrot.slane %v1422, 4
        %v1425 = vshll.u32 %v544, 16
        %v1427 = vrot.slane %v1425, 5
        %v1428 = vsel %vm1356, %v1423, %v1427
        %v1430 = vshrl.u32 %v545, 16
        %v1432 = vrot.slane %v1430, 4
        %v1433 = vshll.u32 %v545, 16
        %v1435 = vrot.slane %v1433, 5
        %v1436 = vor.u32 %v1432, %v1435
        %v1437 = vrot.slane %v1436, 4
        %v1439 = vshll.u32 %v546, 16
        %v1441 = vrot.slane %v1439, 5
        %v1442 = vsel %vm1356, %v1437, %v1441
        %v1443 = vshrl.u32 %v546, 16
        %v1445 = vrot.slane %v1443, 4
        %v1446 = vor.u32 %v1445, %v1441
        %v1447 = vrot.slane %v1446, 4
        %v1449 = vshll.u32 %v547, 16
        %v1451 = vrot.slane %v1449, 5
        %v1452 = vsel %vm1356, %v1447, %v1451
        %v1454 = vshrl.u32 %v548, 16
        %v1456 = vrot.slane %v1454, 4
        %v1457 = vshll.u32 %v548, 16
        %v1459 = vrot.slane %v1457, 5
        %v1460 = vor.u32 %v1456, %v1459
        %v1461 = vrot.slane %v1460, 4
        %v1463 = vshll.u32 %v549, 16
        %v1465 = vrot.slane %v1463, 5
        %v1466 = vsel %vm1356, %v1461, %v1465
        %v1467 = vshrl.u32 %v549, 16
        %v1469 = vrot.slane %v1467, 4
        %v1470 = vor.u32 %v1469, %v1465
        %v1471 = vrot.slane %v1470, 4
        %v1473 = vshll.u32 %v550, 16
        %v1475 = vrot.slane %v1473, 5
        %v1476 = vsel %vm1356, %v1471, %v1475
        %v1478 = vshrl.u32 %v551, 16
        %v1480 = vrot.slane %v1478, 4
        %v1481 = vshll.u32 %v551, 16
        %v1483 = vrot.slane %v1481, 5
        %v1484 = vor.u32 %v1480, %v1483
        %v1485 = vrot.slane %v1484, 4
        %v1487 = vshll.u32 %v552, 16
        %v1489 = vrot.slane %v1487, 5
        %v1490 = vsel %vm1356, %v1485, %v1489
        %v1491 = vshrl.u32 %v552, 16
        %v1493 = vrot.slane %v1491, 4
        %v1494 = vor.u32 %v1493, %v1489
        %v1495 = vrot.slane %v1494, 4
        %v1497 = vshll.u32 %v553, 16
        %v1499 = vrot.slane %v1497, 5
        %v1500 = vsel %vm1356, %v1495, %v1499
        %v1502 = vshrl.u32 %v554, 16
        %v1504 = vrot.slane %v1502, 4
        %v1505 = vshll.u32 %v554, 16
        %v1507 = vrot.slane %v1505, 5
        %v1508 = vor.u32 %v1504, %v1507
        %v1509 = vrot.slane %v1508, 4
        %v1511 = vshll.u32 %v555, 16
        %v1513 = vrot.slane %v1511, 5
        %v1514 = vsel %vm1356, %v1509, %v1513
        %v1515 = vshrl.u32 %v555, 16
        %v1517 = vrot.slane %v1515, 4
        %v1518 = vor.u32 %v1517, %v1513
        %v1519 = vrot.slane %v1518, 4
        %v1521 = vshll.u32 %v556, 16
        %v1523 = vrot.slane %v1521, 5
        %v1524 = vsel %vm1356, %v1519, %v1523
        %v1526 = vshrl.u32 %v557, 16
        %v1528 = vrot.slane %v1526, 4
        %v1529 = vshll.u32 %v557, 16
        %v1531 = vrot.slane %v1529, 5
        %v1532 = vor.u32 %v1528, %v1531
        %v1533 = vrot.slane %v1532, 4
        %v1535 = vshll.u32 %v558, 16
        %v1537 = vrot.slane %v1535, 5
        %v1538 = vsel %vm1356, %v1533, %v1537
        %v1539 = vshrl.u32 %v558, 16
        %v1541 = vrot.slane %v1539, 4
        %v1542 = vor.u32 %v1541, %v1537
        %v1543 = vrot.slane %v1542, 4
        %v1545 = vshll.u32 %v559, 16
        %v1547 = vrot.slane %v1545, 5
        %v1548 = vsel %vm1356, %v1543, %v1547
        %v1550 = vshrl.u32 %v560, 16
        %v1552 = vrot.slane %v1550, 4
        %v1553 = vshll.u32 %v560, 16
        %v1555 = vrot.slane %v1553, 5
        %v1556 = vor.u32 %v1552, %v1555
        %v1557 = vrot.slane %v1556, 4
        %v1559 = vshll.u32 %v561, 16
        %v1561 = vrot.slane %v1559, 5
        %v1562 = vsel %vm1356, %v1557, %v1561
        %v1563 = vshrl.u32 %v561, 16
        %v1565 = vrot.slane %v1563, 4
        %v1566 = vor.u32 %v1565, %v1561
        %v1567 = vrot.slane %v1566, 4
        %v1569 = vshll.u32 %v562, 16
        %v1571 = vrot.slane %v1569, 5
        %v1572 = vsel %vm1356, %v1567, %v1571
        %v1574 = vshrl.u32 %v563, 16
        %v1576 = vrot.slane %v1574, 4
        %v1577 = vshll.u32 %v563, 16
        %v1579 = vrot.slane %v1577, 5
        %v1580 = vor.u32 %v1576, %v1579
        %v1581 = vrot.slane %v1580, 4
        %v1583 = vshll.u32 %v564, 16
        %v1585 = vrot.slane %v1583, 5
        %v1586 = vsel %vm1356, %v1581, %v1585
        %v1587 = vshrl.u32 %v564, 16
        %v1589 = vrot.slane %v1587, 4
        %v1590 = vor.u32 %v1589, %v1585
        %v1591 = vrot.slane %v1590, 4
        %v1593 = vshll.u32 %v565, 16
        %v1595 = vrot.slane %v1593, 5
        %v1596 = vsel %vm1356, %v1591, %v1595
        %v1598 = vshrl.u32 %v566, 16
        %v1600 = vrot.slane %v1598, 4
        %v1601 = vshll.u32 %v566, 16
        %v1603 = vrot.slane %v1601, 5
        %v1604 = vor.u32 %v1600, %v1603
        %v1605 = vrot.slane %v1604, 4
        %v1607 = vshll.u32 %v567, 16
        %v1609 = vrot.slane %v1607, 5
        %v1610 = vsel %vm1356, %v1605, %v1609
        %v1611 = vshrl.u32 %v567, 16
        %v1613 = vrot.slane %v1611, 4
        %v1614 = vor.u32 %v1613, %v1609
        %v1615 = vrot.slane %v1614, 4
        %v1617 = vshll.u32 %v568, 16
        %v1619 = vrot.slane %v1617, 5
        %v1620 = vsel %vm1356, %v1615, %v1619
        %v1622 = vshrl.u32 %v569, 16
        %v1624 = vrot.slane %v1622, 4
        %v1625 = vshll.u32 %v569, 16
        %v1627 = vrot.slane %v1625, 5
        %v1628 = vor.u32 %v1624, %v1627
        %v1629 = vrot.slane %v1628, 4
        %v1631 = vshll.u32 %v570, 16
        %v1633 = vrot.slane %v1631, 5
        %v1634 = vsel %vm1356, %v1629, %v1633
        %v1635 = vshrl.u32 %v570, 16
        %v1637 = vrot.slane %v1635, 4
        %v1638 = vor.u32 %v1637, %v1633
        %v1639 = vrot.slane %v1638, 4
        %v1641 = vshll.u32 %v571, 16
        %v1643 = vrot.slane %v1641, 5
        %v1644 = vsel %vm1356, %v1639, %v1643
        %v1646 = vshrl.u32 %v572, 16
        %v1648 = vrot.slane %v1646, 4
        %v1649 = vshll.u32 %v572, 16
        %v1651 = vrot.slane %v1649, 5
        %v1652 = vor.u32 %v1648, %v1651
        %v1653 = vrot.slane %v1652, 4
        %v1655 = vshll.u32 %v573, 16
        %v1657 = vrot.slane %v1655, 5
        %v1658 = vsel %vm1356, %v1653, %v1657
        %v1659 = vshrl.u32 %v573, 16
        %v1661 = vrot.slane %v1659, 4
        %v1662 = vor.u32 %v1661, %v1657
        %v1663 = vrot.slane %v1662, 4
        %v1665 = vshll.u32 %v574, 16
        %v1667 = vrot.slane %v1665, 5
        %v1668 = vsel %vm1356, %v1663, %v1667
        %v1670 = vshrl.u32 %v575, 16
        %v1672 = vrot.slane %v1670, 4
        %v1673 = vshll.u32 %v575, 16
        %v1675 = vrot.slane %v1673, 5
        %v1676 = vor.u32 %v1672, %v1675
        %v1677 = vrot.slane %v1676, 4
        %v1679 = vshll.u32 %v576, 16
        %v1681 = vrot.slane %v1679, 5
        %v1682 = vsel %vm1356, %v1677, %v1681
        %v1683 = vshrl.u32 %v576, 16
        %v1685 = vrot.slane %v1683, 4
        %v1686 = vor.u32 %v1685, %v1681
        %v1687 = vrot.slane %v1686, 4
        %v1689 = vshll.u32 %v577, 16
        %v1691 = vrot.slane %v1689, 5
        %v1692 = vsel %vm1356, %v1687, %v1691
        %v1694 = vshrl.u32 %v578, 16
        %v1696 = vrot.slane %v1694, 4
        %v1697 = vshll.u32 %v578, 16
        %v1699 = vrot.slane %v1697, 5
        %v1700 = vor.u32 %v1696, %v1699
        %v1701 = vrot.slane %v1700, 4
        %v1703 = vshll.u32 %v579, 16
        %v1705 = vrot.slane %v1703, 5
        %v1706 = vsel %vm1356, %v1701, %v1705
        %v1707 = vshrl.u32 %v579, 16
        %v1709 = vrot.slane %v1707, 4
        %v1710 = vor.u32 %v1709, %v1705
        %v1711 = vrot.slane %v1710, 4
        %v1713 = vshll.u32 %v580, 16
        %v1715 = vrot.slane %v1713, 5
        %v1716 = vsel %vm1356, %v1711, %v1715
        %v1717 = vld [vmem:[#allocation2] sm:$0xff]
        %v1718 = vld [vmem:[#allocation2 + $0x8] sm:$0xff]
        %v1719 = vld [vmem:[#allocation2 + $0x10] sm:$0xff]
        %v1720 = vld [vmem:[#allocation2 + $0x18] sm:$0xff]
        %v1721 = vld [vmem:[#allocation2 + $0x20] sm:$0xff]
        %v1722 = vld [vmem:[#allocation2 + $0x28] sm:$0xff]
        %v1723 = vld [vmem:[#allocation2 + $0x30] sm:$0xff]
        %v1724 = vld [vmem:[#allocation2 + $0x38] sm:$0xff]
        %v1725 = vld [vmem:[#allocation2 + $0x40] sm:$0xff]
        %v1726 = vld [vmem:[#allocation2 + $0x48] sm:$0xff]
        %v1727 = vld [vmem:[#allocation2 + $0x50] sm:$0xff]
        %v1728 = vld [vmem:[#allocation2 + $0x58] sm:$0xff]
        %v1729 = vld [vmem:[#allocation2 + $0x60] sm:$0xff]
        %v1730 = vld [vmem:[#allocation2 + $0x68] sm:$0xff]
        %v1731 = vld [vmem:[#allocation2 + $0x70] sm:$0xff]
        %v1732 = vld [vmem:[#allocation2 + $0x78] sm:$0xff]
        %v1733 = vld [vmem:[#allocation2 + $0x80] sm:$0xff]
        %v1734 = vld [vmem:[#allocation2 + $0x88] sm:$0xff]
        %v1735 = vld [vmem:[#allocation2 + $0x90] sm:$0xff]
        %v1736 = vld [vmem:[#allocation2 + $0x98] sm:$0xff]
        %v1737 = vld [vmem:[#allocation2 + $0xa0] sm:$0xff]
        %v1738 = vld [vmem:[#allocation2 + $0xa8] sm:$0xff]
        %v1739 = vld [vmem:[#allocation2 + $0xb0] sm:$0xff]
        %v1740 = vld [vmem:[#allocation2 + $0xb8] sm:$0xff]
        %v1741 = vld [vmem:[#allocation2 + $0xc0] sm:$0xff]
        %v1742 = vld [vmem:[#allocation2 + $0xc8] sm:$0xff]
        %v1743 = vld [vmem:[#allocation2 + $0xd0] sm:$0xff]
        %v1744 = vld [vmem:[#allocation2 + $0xd8] sm:$0xff]
        %v1745 = vld [vmem:[#allocation2 + $0xe0] sm:$0xff]
        %v1746 = vld [vmem:[#allocation2 + $0xe8] sm:$0xff]
        %v1747 = vld [vmem:[#allocation2 + $0xf0] sm:$0xff]
        %v1748 = vld [vmem:[#allocation2 + $0xf8] sm:$0xff]
        %s1749 = scalar_lea.vmem [#allocation6], 16
        %v1750 = vld [vmem:[%s1749] sm:$0xf]
        %v1751 = vld [vmem:[%s1749 + $0x4] sm:$0xf]
        %v1752 = vld [vmem:[%s1749 + $0x8] sm:$0xf]
        %v1753 = vld [vmem:[%s1749 + $0xc] sm:$0xf]
        %v1754 = vunpack.c.l.b16 %v1370
        %v1755 = vunpack.c.l.b16 %v1380
        %v1756 = vunpack.c.l.b16 %v1394
        %v1757 = vunpack.c.l.b16 %v1404
        %v1758 = vunpack.c.l.b16 %v1418
        %v1759 = vunpack.c.l.b16 %v1428
        %v1760 = vunpack.c.l.b16 %v1442
        %v1761 = vunpack.c.l.b16 %v1452
        %v1762 = vunpack.c.l.b16 %v1466
        %v1763 = vunpack.c.l.b16 %v1476
        %v1764 = vunpack.c.l.b16 %v1490
        %v1765 = vunpack.c.l.b16 %v1500
        %v1766 = vunpack.c.l.b16 %v1514
        %v1767 = vunpack.c.l.b16 %v1524
        %v1768 = vunpack.c.l.b16 %v1538
        %v1769 = vunpack.c.l.b16 %v1548
        %v1770 = vunpack.c.l.b16 %v1562
        %v1771 = vunpack.c.l.b16 %v1572
        %v1772 = vunpack.c.l.b16 %v1586
        %v1773 = vunpack.c.l.b16 %v1596
        %v1774 = vunpack.c.l.b16 %v1610
        %v1775 = vunpack.c.l.b16 %v1620
        %v1776 = vunpack.c.l.b16 %v1634
        %v1777 = vunpack.c.l.b16 %v1644
        %v1778 = vunpack.c.l.b16 %v1658
        %v1779 = vunpack.c.l.b16 %v1668
        %v1780 = vunpack.c.l.b16 %v1682
        %v1781 = vunpack.c.l.b16 %v1692
        %v1782 = vunpack.c.l.b16 %v1706
        %v1783 = vunpack.c.l.b16 %v1716
        %v1784 = vpack.c.b16 %v1755, %v1754
        %v1785 = vpack.c.b16 %v1757, %v1756
        %v1786 = vpack.c.b16 %v1759, %v1758
        %v1787 = vpack.c.b16 %v1761, %v1760
        %v1788 = vpack.c.b16 %v1763, %v1762
        %v1789 = vpack.c.b16 %v1765, %v1764
        %v1790 = vpack.c.b16 %v1767, %v1766
        %v1791 = vpack.c.b16 %v1769, %v1768
        %v1792 = vpack.c.b16 %v1771, %v1770
        %v1793 = vpack.c.b16 %v1773, %v1772
        %v1794 = vpack.c.b16 %v1775, %v1774
        %v1795 = vpack.c.b16 %v1777, %v1776
        %v1796 = vpack.c.b16 %v1779, %v1778
        %v1797 = vpack.c.b16 %v1781, %v1780
        %v1798 = vpack.c.b16 %v1783, %v1782
        %v1803 = vunpack.c.l.b16 %v1750
        %v1804 = vunpack.c.l.b16 %v1751
        %v1805 = vunpack.c.l.b16 %v1752
        %v1806 = vunpack.c.l.b16 %v1753
        %v1807 = vpack.c.b16 %v1804, %v1803
        %v1808 = vpack.c.b16 %v1806, %v1805
        %v1812 = vsel %vm588, %v1784, 0
        %v1815 = vsel %vm588, %v1785, 0
        %v1818 = vsel %vm588, %v1786, 0
        %v1821 = vsel %vm588, %v1787, 0
        %v1824 = vsel %vm588, %v1788, 0
        %v1827 = vsel %vm588, %v1789, 0
        %v1830 = vsel %vm588, %v1790, 0
        %v1833 = vsel %vm588, %v1791, 0
        %v1836 = vsel %vm588, %v1792, 0
        %v1839 = vsel %vm588, %v1793, 0
        %v1842 = vsel %vm588, %v1794, 0
        %v1845 = vsel %vm588, %v1795, 0
        %v1848 = vsel %vm588, %v1796, 0
        %v1851 = vsel %vm588, %v1797, 0
        %v1854 = vsel %vm588, %v1798, 0
        %1856 = vmatpush.bf16.msra.mxu0 0
        %1857 = vmatpush.bf16.msra.mxu0 0
        %1858 = vmatpush.bf16.msra.mxu0 0
        %1859 = vmatpush.bf16.msra.mxu0 0
        %1860 = vmatpush.bf16.msra.mxu0 0
        %1861 = vmatpush.bf16.msra.mxu0 0
        %1862 = vmatpush.bf16.msra.mxu0 %v1808
        %1863 = vmatpush.bf16.msra.mxu0 %v1807
        %1864 = vmatmul.bf16.gmra.mxu0 %v1812
        %v1865 = vpop.f32.mrf.mxu0
        %v1866 = vadd.f32 0.0, %v1865
        %v1867 = vpop.f32.mrf.mxu0
        %v1868 = vadd.f32 0.0, %v1867
        %1869 = vmatmul.bf16.gmra.mxu0 %v1815
        %v1870 = vpop.f32.mrf.mxu0
        %v1871 = vadd.f32 0.0, %v1870
        %v1872 = vpop.f32.mrf.mxu0
        %v1873 = vadd.f32 0.0, %v1872
        %1874 = vmatmul.bf16.gmra.mxu0 %v1812
        %v1875 = vpop.f32.mrf.mxu0
        %v1876 = vadd.f32 0.0, %v1875
        %v1877 = vpop.f32.mrf.mxu0
        %v1878 = vadd.f32 0.0, %v1877
        %1879 = vmatmul.bf16.gmra.mxu0 %v1818
        %v1880 = vpop.f32.mrf.mxu0
        %v1881 = vadd.f32 0.0, %v1880
        %v1882 = vpop.f32.mrf.mxu0
        %v1883 = vadd.f32 0.0, %v1882
        %1884 = vmatmul.bf16.gmra.mxu0 %v1821
        %v1885 = vpop.f32.mrf.mxu0
        %v1886 = vadd.f32 0.0, %v1885
        %v1887 = vpop.f32.mrf.mxu0
        %v1888 = vadd.f32 0.0, %v1887
        %1889 = vmatmul.bf16.gmra.mxu0 %v1824
        %v1890 = vpop.f32.mrf.mxu0
        %v1891 = vadd.f32 0.0, %v1890
        %v1892 = vpop.f32.mrf.mxu0
        %v1893 = vadd.f32 0.0, %v1892
        %1894 = vmatmul.bf16.gmra.mxu0 %v1827
        %v1895 = vpop.f32.mrf.mxu0
        %v1896 = vadd.f32 0.0, %v1895
        %v1897 = vpop.f32.mrf.mxu0
        %v1898 = vadd.f32 0.0, %v1897
        %1899 = vmatmul.bf16.gmra.mxu0 %v1830
        %v1900 = vpop.f32.mrf.mxu0
        %v1901 = vadd.f32 0.0, %v1900
        %v1902 = vpop.f32.mrf.mxu0
        %v1903 = vadd.f32 0.0, %v1902
        %1904 = vmatmul.bf16.gmra.mxu0 %v1833
        %v1905 = vpop.f32.mrf.mxu0
        %v1906 = vadd.f32 0.0, %v1905
        %v1907 = vpop.f32.mrf.mxu0
        %v1908 = vadd.f32 0.0, %v1907
        %1909 = vmatmul.bf16.gmra.mxu0 %v1836
        %v1910 = vpop.f32.mrf.mxu0
        %v1911 = vadd.f32 0.0, %v1910
        %v1912 = vpop.f32.mrf.mxu0
        %v1913 = vadd.f32 0.0, %v1912
        %1914 = vmatmul.bf16.gmra.mxu0 %v1839
        %v1915 = vpop.f32.mrf.mxu0
        %v1916 = vadd.f32 0.0, %v1915
        %v1917 = vpop.f32.mrf.mxu0
        %v1918 = vadd.f32 0.0, %v1917
        %1919 = vmatmul.bf16.gmra.mxu0 %v1842
        %v1920 = vpop.f32.mrf.mxu0
        %v1921 = vadd.f32 0.0, %v1920
        %v1922 = vpop.f32.mrf.mxu0
        %v1923 = vadd.f32 0.0, %v1922
        %1924 = vmatmul.bf16.gmra.mxu0 %v1845
        %v1925 = vpop.f32.mrf.mxu0
        %v1926 = vadd.f32 0.0, %v1925
        %v1927 = vpop.f32.mrf.mxu0
        %v1928 = vadd.f32 0.0, %v1927
        %1929 = vmatmul.bf16.gmra.mxu0 %v1848
        %v1930 = vpop.f32.mrf.mxu0
        %v1931 = vadd.f32 0.0, %v1930
        %v1932 = vpop.f32.mrf.mxu0
        %v1933 = vadd.f32 0.0, %v1932
        %1934 = vmatmul.bf16.gmra.mxu0 %v1851
        %v1935 = vpop.f32.mrf.mxu0
        %v1936 = vadd.f32 0.0, %v1935
        %v1937 = vpop.f32.mrf.mxu0
        %v1938 = vadd.f32 0.0, %v1937
        %1939 = vmatmul.bf16.gmra.mxu0 %v1854
        %v1940 = vpop.f32.mrf.mxu0
        %v1941 = vadd.f32 0.0, %v1940
        %v1942 = vpop.f32.mrf.mxu0
        %v1943 = vadd.f32 0.0, %v1942
        %1944 = vdwg.mxu0
        %v1945 = vadd.f32 %v1717, %v1866
        %v1946 = vadd.f32 %v1718, %v1868
        %v1947 = vadd.f32 %v1719, %v1871
        %v1948 = vadd.f32 %v1720, %v1873
        %v1949 = vadd.f32 %v1721, %v1876
        %v1950 = vadd.f32 %v1722, %v1878
        %v1951 = vadd.f32 %v1723, %v1881
        %v1952 = vadd.f32 %v1724, %v1883
        %v1953 = vadd.f32 %v1725, %v1886
        %v1954 = vadd.f32 %v1726, %v1888
        %v1955 = vadd.f32 %v1727, %v1891
        %v1956 = vadd.f32 %v1728, %v1893
        %v1957 = vadd.f32 %v1729, %v1896
        %v1958 = vadd.f32 %v1730, %v1898
        %v1959 = vadd.f32 %v1731, %v1901
        %v1960 = vadd.f32 %v1732, %v1903
        %v1961 = vadd.f32 %v1733, %v1906
        %v1962 = vadd.f32 %v1734, %v1908
        %v1963 = vadd.f32 %v1735, %v1911
        %v1964 = vadd.f32 %v1736, %v1913
        %v1965 = vadd.f32 %v1737, %v1916
        %v1966 = vadd.f32 %v1738, %v1918
        %v1967 = vadd.f32 %v1739, %v1921
        %v1968 = vadd.f32 %v1740, %v1923
        %v1969 = vadd.f32 %v1741, %v1926
        %v1970 = vadd.f32 %v1742, %v1928
        %v1971 = vadd.f32 %v1743, %v1931
        %v1972 = vadd.f32 %v1744, %v1933
        %v1973 = vadd.f32 %v1745, %v1936
        %v1974 = vadd.f32 %v1746, %v1938
        %v1975 = vadd.f32 %v1747, %v1941
        %v1976 = vadd.f32 %v1748, %v1943
        %1977 = vst.msk [vmem:[#allocation2] sm:$0xff] %vm588, %v1945
        %1978 = vst.msk [vmem:[#allocation2 + $0x8] sm:$0xff] %vm588, %v1946
        %1979 = vst.msk [vmem:[#allocation2 + $0x10] sm:$0xff] %vm588, %v1947
        %1980 = vst.msk [vmem:[#allocation2 + $0x18] sm:$0xff] %vm588, %v1948
        %1981 = vst.msk [vmem:[#allocation2 + $0x20] sm:$0xff] %vm588, %v1949
        %1982 = vst.msk [vmem:[#allocation2 + $0x28] sm:$0xff] %vm588, %v1950
        %1983 = vst.msk [vmem:[#allocation2 + $0x30] sm:$0xff] %vm588, %v1951
        %1984 = vst.msk [vmem:[#allocation2 + $0x38] sm:$0xff] %vm588, %v1952
        %1985 = vst.msk [vmem:[#allocation2 + $0x40] sm:$0xff] %vm588, %v1953
        %1986 = vst.msk [vmem:[#allocation2 + $0x48] sm:$0xff] %vm588, %v1954
        %1987 = vst.msk [vmem:[#allocation2 + $0x50] sm:$0xff] %vm588, %v1955
        %1988 = vst.msk [vmem:[#allocation2 + $0x58] sm:$0xff] %vm588, %v1956
        %1989 = vst.msk [vmem:[#allocation2 + $0x60] sm:$0xff] %vm588, %v1957
        %1990 = vst.msk [vmem:[#allocation2 + $0x68] sm:$0xff] %vm588, %v1958
        %1991 = vst.msk [vmem:[#allocation2 + $0x70] sm:$0xff] %vm588, %v1959
        %1992 = vst.msk [vmem:[#allocation2 + $0x78] sm:$0xff] %vm588, %v1960
        %1993 = vst.msk [vmem:[#allocation2 + $0x80] sm:$0xff] %vm588, %v1961
        %1994 = vst.msk [vmem:[#allocation2 + $0x88] sm:$0xff] %vm588, %v1962
        %1995 = vst.msk [vmem:[#allocation2 + $0x90] sm:$0xff] %vm588, %v1963
        %1996 = vst.msk [vmem:[#allocation2 + $0x98] sm:$0xff] %vm588, %v1964
        %1997 = vst.msk [vmem:[#allocation2 + $0xa0] sm:$0xff] %vm588, %v1965
        %1998 = vst.msk [vmem:[#allocation2 + $0xa8] sm:$0xff] %vm588, %v1966
        %1999 = vst.msk [vmem:[#allocation2 + $0xb0] sm:$0xff] %vm588, %v1967
        %2000 = vst.msk [vmem:[#allocation2 + $0xb8] sm:$0xff] %vm588, %v1968
        %2001 = vst.msk [vmem:[#allocation2 + $0xc0] sm:$0xff] %vm588, %v1969
        %2002 = vst.msk [vmem:[#allocation2 + $0xc8] sm:$0xff] %vm588, %v1970
        %2003 = vst.msk [vmem:[#allocation2 + $0xd0] sm:$0xff] %vm588, %v1971
        %2004 = vst.msk [vmem:[#allocation2 + $0xd8] sm:$0xff] %vm588, %v1972
        %2005 = vst.msk [vmem:[#allocation2 + $0xe0] sm:$0xff] %vm588, %v1973
        %2006 = vst.msk [vmem:[#allocation2 + $0xe8] sm:$0xff] %vm588, %v1974
        %2007 = vst.msk [vmem:[#allocation2 + $0xf0] sm:$0xff] %vm588, %v1975
        %2008 = vst.msk [vmem:[#allocation2 + $0xf8] sm:$0xff] %vm588, %v1976
        %v2010 = vshrl.u32 %v581, 16
        %v2012 = vrot.slane %v2010, 4
        %v2013 = vshll.u32 %v581, 16
        %v2015 = vrot.slane %v2013, 5
        %v2016 = vor.u32 %v2012, %v2015
        %v2017 = vrot.slane %v2016, 4
        %v2019 = vshll.u32 %v582, 16
        %v2021 = vrot.slane %v2019, 5
        %v2022 = vsel %vm1356, %v2017, %v2021
        %v2023 = vshrl.u32 %v582, 16
        %v2025 = vrot.slane %v2023, 4
        %v2026 = vor.u32 %v2025, %v2021
        %v2027 = vrot.slane %v2026, 4
        %v2029 = vshll.u32 %v583, 16
        %v2031 = vrot.slane %v2029, 5
        %v2032 = vsel %vm1356, %v2027, %v2031
        %v2033 = vld [vmem:[#allocation2] sm:$0xff]
        %v2034 = vld [vmem:[#allocation2 + $0x8] sm:$0xff]
        %v2035 = vld [vmem:[#allocation2 + $0x10] sm:$0xff]
        %v2036 = vld [vmem:[#allocation2 + $0x18] sm:$0xff]
        %v2037 = vld [vmem:[#allocation2 + $0x20] sm:$0xff]
        %v2038 = vld [vmem:[#allocation2 + $0x28] sm:$0xff]
        %v2039 = vld [vmem:[#allocation2 + $0x30] sm:$0xff]
        %v2040 = vld [vmem:[#allocation2 + $0x38] sm:$0xff]
        %v2041 = vld [vmem:[#allocation2 + $0x40] sm:$0xff]
        %v2042 = vld [vmem:[#allocation2 + $0x48] sm:$0xff]
        %v2043 = vld [vmem:[#allocation2 + $0x50] sm:$0xff]
        %v2044 = vld [vmem:[#allocation2 + $0x58] sm:$0xff]
        %v2045 = vld [vmem:[#allocation2 + $0x60] sm:$0xff]
        %v2046 = vld [vmem:[#allocation2 + $0x68] sm:$0xff]
        %v2047 = vld [vmem:[#allocation2 + $0x70] sm:$0xff]
        %v2048 = vld [vmem:[#allocation2 + $0x78] sm:$0xff]
        %v2049 = vld [vmem:[#allocation2 + $0x80] sm:$0xff]
        %v2050 = vld [vmem:[#allocation2 + $0x88] sm:$0xff]
        %v2051 = vld [vmem:[#allocation2 + $0x90] sm:$0xff]
        %v2052 = vld [vmem:[#allocation2 + $0x98] sm:$0xff]
        %v2053 = vld [vmem:[#allocation2 + $0xa0] sm:$0xff]
        %v2054 = vld [vmem:[#allocation2 + $0xa8] sm:$0xff]
        %v2055 = vld [vmem:[#allocation2 + $0xb0] sm:$0xff]
        %v2056 = vld [vmem:[#allocation2 + $0xb8] sm:$0xff]
        %v2057 = vld [vmem:[#allocation2 + $0xc0] sm:$0xff]
        %v2058 = vld [vmem:[#allocation2 + $0xc8] sm:$0xff]
        %v2059 = vld [vmem:[#allocation2 + $0xd0] sm:$0xff]
        %v2060 = vld [vmem:[#allocation2 + $0xd8] sm:$0xff]
        %v2061 = vld [vmem:[#allocation2 + $0xe0] sm:$0xff]
        %v2062 = vld [vmem:[#allocation2 + $0xe8] sm:$0xff]
        %v2063 = vld [vmem:[#allocation2 + $0xf0] sm:$0xff]
        %v2064 = vld [vmem:[#allocation2 + $0xf8] sm:$0xff]
        %s2065 = scalar_lea.vmem [#allocation6], 64
        %v2066 = vld [vmem:[%s2065] sm:$0xf]
        %v2067 = vld [vmem:[%s2065 + $0x4] sm:$0xf]
        %v2068 = vld [vmem:[%s2065 + $0x8] sm:$0xf]
        %v2069 = vld [vmem:[%s2065 + $0xc] sm:$0xf]
        %v2070 = vunpack.c.l.b16 %v2022
        %v2071 = vunpack.c.l.b16 %v2032
        %v2072 = vpack.c.b16 %v2071, %v2070
        %v2077 = vunpack.c.l.b16 %v2066
        %v2078 = vunpack.c.l.b16 %v2067
        %v2079 = vunpack.c.l.b16 %v2068
        %v2080 = vunpack.c.l.b16 %v2069
        %v2081 = vpack.c.b16 %v2078, %v2077
        %v2082 = vpack.c.b16 %v2080, %v2079
        %v2086 = vsel %vm588, %v2072, 0
        %2088 = vmatpush.bf16.msra.mxu0 0
        %2089 = vmatpush.bf16.msra.mxu0 0
        %2090 = vmatpush.bf16.msra.mxu0 0
        %2091 = vmatpush.bf16.msra.mxu0 0
        %2092 = vmatpush.bf16.msra.mxu0 0
        %2093 = vmatpush.bf16.msra.mxu0 0
        %2094 = vmatpush.bf16.msra.mxu0 %v2082
        %2095 = vmatpush.bf16.msra.mxu0 %v2081
        %2096 = vmatmul.bf16.gmra.mxu0 %v1815
        %v2097 = vpop.f32.mrf.mxu0
        %v2098 = vadd.f32 0.0, %v2097
        %v2099 = vpop.f32.mrf.mxu0
        %v2100 = vadd.f32 0.0, %v2099
        %2101 = vmatmul.bf16.gmra.mxu0 %v1812
        %v2102 = vpop.f32.mrf.mxu0
        %v2103 = vadd.f32 0.0, %v2102
        %v2104 = vpop.f32.mrf.mxu0
        %v2105 = vadd.f32 0.0, %v2104
        %2106 = vmatmul.bf16.gmra.mxu0 %v1818
        %v2107 = vpop.f32.mrf.mxu0
        %v2108 = vadd.f32 0.0, %v2107
        %v2109 = vpop.f32.mrf.mxu0
        %v2110 = vadd.f32 0.0, %v2109
        %2111 = vmatmul.bf16.gmra.mxu0 %v1821
        %v2112 = vpop.f32.mrf.mxu0
        %v2113 = vadd.f32 0.0, %v2112
        %v2114 = vpop.f32.mrf.mxu0
        %v2115 = vadd.f32 0.0, %v2114
        %2116 = vmatmul.bf16.gmra.mxu0 %v1824
        %v2117 = vpop.f32.mrf.mxu0
        %v2118 = vadd.f32 0.0, %v2117
        %v2119 = vpop.f32.mrf.mxu0
        %v2120 = vadd.f32 0.0, %v2119
        %2121 = vmatmul.bf16.gmra.mxu0 %v1827
        %v2122 = vpop.f32.mrf.mxu0
        %v2123 = vadd.f32 0.0, %v2122
        %v2124 = vpop.f32.mrf.mxu0
        %v2125 = vadd.f32 0.0, %v2124
        %2126 = vmatmul.bf16.gmra.mxu0 %v1830
        %v2127 = vpop.f32.mrf.mxu0
        %v2128 = vadd.f32 0.0, %v2127
        %v2129 = vpop.f32.mrf.mxu0
        %v2130 = vadd.f32 0.0, %v2129
        %2131 = vmatmul.bf16.gmra.mxu0 %v1833
        %v2132 = vpop.f32.mrf.mxu0
        %v2133 = vadd.f32 0.0, %v2132
        %v2134 = vpop.f32.mrf.mxu0
        %v2135 = vadd.f32 0.0, %v2134
        %2136 = vmatmul.bf16.gmra.mxu0 %v1836
        %v2137 = vpop.f32.mrf.mxu0
        %v2138 = vadd.f32 0.0, %v2137
        %v2139 = vpop.f32.mrf.mxu0
        %v2140 = vadd.f32 0.0, %v2139
        %2141 = vmatmul.bf16.gmra.mxu0 %v1839
        %v2142 = vpop.f32.mrf.mxu0
        %v2143 = vadd.f32 0.0, %v2142
        %v2144 = vpop.f32.mrf.mxu0
        %v2145 = vadd.f32 0.0, %v2144
        %2146 = vmatmul.bf16.gmra.mxu0 %v1842
        %v2147 = vpop.f32.mrf.mxu0
        %v2148 = vadd.f32 0.0, %v2147
        %v2149 = vpop.f32.mrf.mxu0
        %v2150 = vadd.f32 0.0, %v2149
        %2151 = vmatmul.bf16.gmra.mxu0 %v1845
        %v2152 = vpop.f32.mrf.mxu0
        %v2153 = vadd.f32 0.0, %v2152
        %v2154 = vpop.f32.mrf.mxu0
        %v2155 = vadd.f32 0.0, %v2154
        %2156 = vmatmul.bf16.gmra.mxu0 %v1848
        %v2157 = vpop.f32.mrf.mxu0
        %v2158 = vadd.f32 0.0, %v2157
        %v2159 = vpop.f32.mrf.mxu0
        %v2160 = vadd.f32 0.0, %v2159
        %2161 = vmatmul.bf16.gmra.mxu0 %v1851
        %v2162 = vpop.f32.mrf.mxu0
        %v2163 = vadd.f32 0.0, %v2162
        %v2164 = vpop.f32.mrf.mxu0
        %v2165 = vadd.f32 0.0, %v2164
        %2166 = vmatmul.bf16.gmra.mxu0 %v1854
        %v2167 = vpop.f32.mrf.mxu0
        %v2168 = vadd.f32 0.0, %v2167
        %v2169 = vpop.f32.mrf.mxu0
        %v2170 = vadd.f32 0.0, %v2169
        %2171 = vmatmul.bf16.gmra.mxu0 %v2086
        %v2172 = vpop.f32.mrf.mxu0
        %v2173 = vadd.f32 0.0, %v2172
        %v2174 = vpop.f32.mrf.mxu0
        %v2175 = vadd.f32 0.0, %v2174
        %2176 = vdwg.mxu0
        %v2177 = vadd.f32 %v2033, %v2098
        %v2178 = vadd.f32 %v2034, %v2100
        %v2179 = vadd.f32 %v2035, %v2103
        %v2180 = vadd.f32 %v2036, %v2105
        %v2181 = vadd.f32 %v2037, %v2108
        %v2182 = vadd.f32 %v2038, %v2110
        %v2183 = vadd.f32 %v2039, %v2113
        %v2184 = vadd.f32 %v2040, %v2115
        %v2185 = vadd.f32 %v2041, %v2118
        %v2186 = vadd.f32 %v2042, %v2120
        %v2187 = vadd.f32 %v2043, %v2123
        %v2188 = vadd.f32 %v2044, %v2125
        %v2189 = vadd.f32 %v2045, %v2128
        %v2190 = vadd.f32 %v2046, %v2130
        %v2191 = vadd.f32 %v2047, %v2133
        %v2192 = vadd.f32 %v2048, %v2135
        %v2193 = vadd.f32 %v2049, %v2138
        %v2194 = vadd.f32 %v2050, %v2140
        %v2195 = vadd.f32 %v2051, %v2143
        %v2196 = vadd.f32 %v2052, %v2145
        %v2197 = vadd.f32 %v2053, %v2148
        %v2198 = vadd.f32 %v2054, %v2150
        %v2199 = vadd.f32 %v2055, %v2153
        %v2200 = vadd.f32 %v2056, %v2155
        %v2201 = vadd.f32 %v2057, %v2158
        %v2202 = vadd.f32 %v2058, %v2160
        %v2203 = vadd.f32 %v2059, %v2163
        %v2204 = vadd.f32 %v2060, %v2165
        %v2205 = vadd.f32 %v2061, %v2168
        %v2206 = vadd.f32 %v2062, %v2170
        %v2207 = vadd.f32 %v2063, %v2173
        %v2208 = vadd.f32 %v2064, %v2175
        %2209 = vst.msk [vmem:[#allocation2] sm:$0xff] %vm588, %v2177
        %2210 = vst.msk [vmem:[#allocation2 + $0x8] sm:$0xff] %vm588, %v2178
        %2211 = vst.msk [vmem:[#allocation2 + $0x10] sm:$0xff] %vm588, %v2179
        %2212 = vst.msk [vmem:[#allocation2 + $0x18] sm:$0xff] %vm588, %v2180
        %2213 = vst.msk [vmem:[#allocation2 + $0x20] sm:$0xff] %vm588, %v2181
        %2214 = vst.msk [vmem:[#allocation2 + $0x28] sm:$0xff] %vm588, %v2182
        %2215 = vst.msk [vmem:[#allocation2 + $0x30] sm:$0xff] %vm588, %v2183
        %2216 = vst.msk [vmem:[#allocation2 + $0x38] sm:$0xff] %vm588, %v2184
        %2217 = vst.msk [vmem:[#allocation2 + $0x40] sm:$0xff] %vm588, %v2185
        %2218 = vst.msk [vmem:[#allocation2 + $0x48] sm:$0xff] %vm588, %v2186
        %2219 = vst.msk [vmem:[#allocation2 + $0x50] sm:$0xff] %vm588, %v2187
        %2220 = vst.msk [vmem:[#allocation2 + $0x58] sm:$0xff] %vm588, %v2188
        %2221 = vst.msk [vmem:[#allocation2 + $0x60] sm:$0xff] %vm588, %v2189
        %2222 = vst.msk [vmem:[#allocation2 + $0x68] sm:$0xff] %vm588, %v2190
        %2223 = vst.msk [vmem:[#allocation2 + $0x70] sm:$0xff] %vm588, %v2191
        %2224 = vst.msk [vmem:[#allocation2 + $0x78] sm:$0xff] %vm588, %v2192
        %2225 = vst.msk [vmem:[#allocation2 + $0x80] sm:$0xff] %vm588, %v2193
        %2226 = vst.msk [vmem:[#allocation2 + $0x88] sm:$0xff] %vm588, %v2194
        %2227 = vst.msk [vmem:[#allocation2 + $0x90] sm:$0xff] %vm588, %v2195
        %2228 = vst.msk [vmem:[#allocation2 + $0x98] sm:$0xff] %vm588, %v2196
        %2229 = vst.msk [vmem:[#allocation2 + $0xa0] sm:$0xff] %vm588, %v2197
        %2230 = vst.msk [vmem:[#allocation2 + $0xa8] sm:$0xff] %vm588, %v2198
        %2231 = vst.msk [vmem:[#allocation2 + $0xb0] sm:$0xff] %vm588, %v2199
        %2232 = vst.msk [vmem:[#allocation2 + $0xb8] sm:$0xff] %vm588, %v2200
        %2233 = vst.msk [vmem:[#allocation2 + $0xc0] sm:$0xff] %vm588, %v2201
        %2234 = vst.msk [vmem:[#allocation2 + $0xc8] sm:$0xff] %vm588, %v2202
        %2235 = vst.msk [vmem:[#allocation2 + $0xd0] sm:$0xff] %vm588, %v2203
        %2236 = vst.msk [vmem:[#allocation2 + $0xd8] sm:$0xff] %vm588, %v2204
        %2237 = vst.msk [vmem:[#allocation2 + $0xe0] sm:$0xff] %vm588, %v2205
        %2238 = vst.msk [vmem:[#allocation2 + $0xe8] sm:$0xff] %vm588, %v2206
        %2239 = vst.msk [vmem:[#allocation2 + $0xf0] sm:$0xff] %vm588, %v2207
        %2240 = vst.msk [vmem:[#allocation2 + $0xf8] sm:$0xff] %vm588, %v2208
        %v2241 = vld [vmem:[#allocation2] sm:$0xff]
        %v2242 = vld [vmem:[#allocation2 + $0x8] sm:$0xff]
        %v2243 = vld [vmem:[#allocation2 + $0x10] sm:$0xff]
        %v2244 = vld [vmem:[#allocation2 + $0x18] sm:$0xff]
        %v2245 = vld [vmem:[#allocation2 + $0x20] sm:$0xff]
        %v2246 = vld [vmem:[#allocation2 + $0x28] sm:$0xff]
        %v2247 = vld [vmem:[#allocation2 + $0x30] sm:$0xff]
        %v2248 = vld [vmem:[#allocation2 + $0x38] sm:$0xff]
        %v2249 = vld [vmem:[#allocation2 + $0x40] sm:$0xff]
        %v2250 = vld [vmem:[#allocation2 + $0x48] sm:$0xff]
        %v2251 = vld [vmem:[#allocation2 + $0x50] sm:$0xff]
        %v2252 = vld [vmem:[#allocation2 + $0x58] sm:$0xff]
        %v2253 = vld [vmem:[#allocation2 + $0x60] sm:$0xff]
        %v2254 = vld [vmem:[#allocation2 + $0x68] sm:$0xff]
        %v2255 = vld [vmem:[#allocation2 + $0x70] sm:$0xff]
        %v2256 = vld [vmem:[#allocation2 + $0x78] sm:$0xff]
        %v2257 = vld [vmem:[#allocation2 + $0x80] sm:$0xff]
        %v2258 = vld [vmem:[#allocation2 + $0x88] sm:$0xff]
        %v2259 = vld [vmem:[#allocation2 + $0x90] sm:$0xff]
        %v2260 = vld [vmem:[#allocation2 + $0x98] sm:$0xff]
        %v2261 = vld [vmem:[#allocation2 + $0xa0] sm:$0xff]
        %v2262 = vld [vmem:[#allocation2 + $0xa8] sm:$0xff]
        %v2263 = vld [vmem:[#allocation2 + $0xb0] sm:$0xff]
        %v2264 = vld [vmem:[#allocation2 + $0xb8] sm:$0xff]
        %v2265 = vld [vmem:[#allocation2 + $0xc0] sm:$0xff]
        %v2266 = vld [vmem:[#allocation2 + $0xc8] sm:$0xff]
        %v2267 = vld [vmem:[#allocation2 + $0xd0] sm:$0xff]
        %v2268 = vld [vmem:[#allocation2 + $0xd8] sm:$0xff]
        %v2269 = vld [vmem:[#allocation2 + $0xe0] sm:$0xff]
        %v2270 = vld [vmem:[#allocation2 + $0xe8] sm:$0xff]
        %v2271 = vld [vmem:[#allocation2 + $0xf0] sm:$0xff]
        %v2272 = vld [vmem:[#allocation2 + $0xf8] sm:$0xff]
        %s2273 = scalar_lea.vmem [#allocation6], 112
        %v2274 = vld [vmem:[%s2273] sm:$0xf]
        %v2275 = vld [vmem:[%s2273 + $0x4] sm:$0xf]
        %v2276 = vld [vmem:[%s2273 + $0x8] sm:$0xf]
        %v2277 = vld [vmem:[%s2273 + $0xc] sm:$0xf]
        %v2282 = vunpack.c.l.b16 %v2274
        %v2283 = vunpack.c.l.b16 %v2275
        %v2284 = vunpack.c.l.b16 %v2276
        %v2285 = vunpack.c.l.b16 %v2277
        %v2286 = vpack.c.b16 %v2283, %v2282
        %v2287 = vpack.c.b16 %v2285, %v2284
        %2290 = vmatpush.bf16.msra.mxu0 0
        %2291 = vmatpush.bf16.msra.mxu0 0
        %2292 = vmatpush.bf16.msra.mxu0 0
        %2293 = vmatpush.bf16.msra.mxu0 0
        %2294 = vmatpush.bf16.msra.mxu0 0
        %2295 = vmatpush.bf16.msra.mxu0 0
        %2296 = vmatpush.bf16.msra.mxu0 %v2287
        %2297 = vmatpush.bf16.msra.mxu0 %v2286
        %2298 = vmatmul.bf16.gmra.mxu0 %v1812
        %v2299 = vpop.f32.mrf.mxu0
        %v2300 = vadd.f32 0.0, %v2299
        %v2301 = vpop.f32.mrf.mxu0
        %v2302 = vadd.f32 0.0, %v2301
        %2303 = vmatmul.bf16.gmra.mxu0 %v1818
        %v2304 = vpop.f32.mrf.mxu0
        %v2305 = vadd.f32 0.0, %v2304
        %v2306 = vpop.f32.mrf.mxu0
        %v2307 = vadd.f32 0.0, %v2306
        %2308 = vmatmul.bf16.gmra.mxu0 %v1821
        %v2309 = vpop.f32.mrf.mxu0
        %v2310 = vadd.f32 0.0, %v2309
        %v2311 = vpop.f32.mrf.mxu0
        %v2312 = vadd.f32 0.0, %v2311
        %2313 = vmatmul.bf16.gmra.mxu0 %v1824
        %v2314 = vpop.f32.mrf.mxu0
        %v2315 = vadd.f32 0.0, %v2314
        %v2316 = vpop.f32.mrf.mxu0
        %v2317 = vadd.f32 0.0, %v2316
        %2318 = vmatmul.bf16.gmra.mxu0 %v1827
        %v2319 = vpop.f32.mrf.mxu0
        %v2320 = vadd.f32 0.0, %v2319
        %v2321 = vpop.f32.mrf.mxu0
        %v2322 = vadd.f32 0.0, %v2321
        %2323 = vmatmul.bf16.gmra.mxu0 %v1830
        %v2324 = vpop.f32.mrf.mxu0
        %v2325 = vadd.f32 0.0, %v2324
        %v2326 = vpop.f32.mrf.mxu0
        %v2327 = vadd.f32 0.0, %v2326
        %2328 = vmatmul.bf16.gmra.mxu0 %v1833
        %v2329 = vpop.f32.mrf.mxu0
        %v2330 = vadd.f32 0.0, %v2329
        %v2331 = vpop.f32.mrf.mxu0
        %v2332 = vadd.f32 0.0, %v2331
        %2333 = vmatmul.bf16.gmra.mxu0 %v1836
        %v2334 = vpop.f32.mrf.mxu0
        %v2335 = vadd.f32 0.0, %v2334
        %v2336 = vpop.f32.mrf.mxu0
        %v2337 = vadd.f32 0.0, %v2336
        %2338 = vmatmul.bf16.gmra.mxu0 %v1839
        %v2339 = vpop.f32.mrf.mxu0
        %v2340 = vadd.f32 0.0, %v2339
        %v2341 = vpop.f32.mrf.mxu0
        %v2342 = vadd.f32 0.0, %v2341
        %2343 = vmatmul.bf16.gmra.mxu0 %v1842
        %v2344 = vpop.f32.mrf.mxu0
        %v2345 = vadd.f32 0.0, %v2344
        %v2346 = vpop.f32.mrf.mxu0
        %v2347 = vadd.f32 0.0, %v2346
        %2348 = vmatmul.bf16.gmra.mxu0 %v1845
        %v2349 = vpop.f32.mrf.mxu0
        %v2350 = vadd.f32 0.0, %v2349
        %v2351 = vpop.f32.mrf.mxu0
        %v2352 = vadd.f32 0.0, %v2351
        %2353 = vmatmul.bf16.gmra.mxu0 %v1848
        %v2354 = vpop.f32.mrf.mxu0
        %v2355 = vadd.f32 0.0, %v2354
        %v2356 = vpop.f32.mrf.mxu0
        %v2357 = vadd.f32 0.0, %v2356
        %2358 = vmatmul.bf16.gmra.mxu0 %v1851
        %v2359 = vpop.f32.mrf.mxu0
        %v2360 = vadd.f32 0.0, %v2359
        %v2361 = vpop.f32.mrf.mxu0
        %v2362 = vadd.f32 0.0, %v2361
        %2363 = vmatmul.bf16.gmra.mxu0 %v1854
        %v2364 = vpop.f32.mrf.mxu0
        %v2365 = vadd.f32 0.0, %v2364
        %v2366 = vpop.f32.mrf.mxu0
        %v2367 = vadd.f32 0.0, %v2366
        %2368 = vmatmul.bf16.gmra.mxu0 %v2086
        %v2369 = vpop.f32.mrf.mxu0
        %v2370 = vadd.f32 0.0, %v2369
        %v2371 = vpop.f32.mrf.mxu0
        %v2372 = vadd.f32 0.0, %v2371
        %2373 = vmatmul.bf16.gmra.mxu0 %v1854
        %v2374 = vpop.f32.mrf.mxu0
        %v2375 = vadd.f32 0.0, %v2374
        %v2376 = vpop.f32.mrf.mxu0
        %v2377 = vadd.f32 0.0, %v2376
        %2378 = vdwg.mxu0
        %v2379 = vadd.f32 %v2241, %v2300
        %v2380 = vadd.f32 %v2242, %v2302
        %v2381 = vadd.f32 %v2243, %v2305
        %v2382 = vadd.f32 %v2244, %v2307
        %v2383 = vadd.f32 %v2245, %v2310
        %v2384 = vadd.f32 %v2246, %v2312
        %v2385 = vadd.f32 %v2247, %v2315
        %v2386 = vadd.f32 %v2248, %v2317
        %v2387 = vadd.f32 %v2249, %v2320
        %v2388 = vadd.f32 %v2250, %v2322
        %v2389 = vadd.f32 %v2251, %v2325
        %v2390 = vadd.f32 %v2252, %v2327
        %v2391 = vadd.f32 %v2253, %v2330
        %v2392 = vadd.f32 %v2254, %v2332
        %v2393 = vadd.f32 %v2255, %v2335
        %v2394 = vadd.f32 %v2256, %v2337
        %v2395 = vadd.f32 %v2257, %v2340
        %v2396 = vadd.f32 %v2258, %v2342
        %v2397 = vadd.f32 %v2259, %v2345
        %v2398 = vadd.f32 %v2260, %v2347
        %v2399 = vadd.f32 %v2261, %v2350
        %v2400 = vadd.f32 %v2262, %v2352
        %v2401 = vadd.f32 %v2263, %v2355
        %v2402 = vadd.f32 %v2264, %v2357
        %v2403 = vadd.f32 %v2265, %v2360
        %v2404 = vadd.f32 %v2266, %v2362
        %v2405 = vadd.f32 %v2267, %v2365
        %v2406 = vadd.f32 %v2268, %v2367
        %v2407 = vadd.f32 %v2269, %v2370
        %v2408 = vadd.f32 %v2270, %v2372
        %v2409 = vadd.f32 %v2271, %v2375
        %v2410 = vadd.f32 %v2272, %v2377
        %2411 = vst.msk [vmem:[#allocation2] sm:$0xff] %vm588, %v2379
        %2412 = vst.msk [vmem:[#allocation2 + $0x8] sm:$0xff] %vm588, %v2380
        %2413 = vst.msk [vmem:[#allocation2 + $0x10] sm:$0xff] %vm588, %v2381
        %2414 = vst.msk [vmem:[#allocation2 + $0x18] sm:$0xff] %vm588, %v2382
        %2415 = vst.msk [vmem:[#allocation2 + $0x20] sm:$0xff] %vm588, %v2383
        %2416 = vst.msk [vmem:[#allocation2 + $0x28] sm:$0xff] %vm588, %v2384
        %2417 = vst.msk [vmem:[#allocation2 + $0x30] sm:$0xff] %vm588, %v2385
        %2418 = vst.msk [vmem:[#allocation2 + $0x38] sm:$0xff] %vm588, %v2386
        %2419 = vst.msk [vmem:[#allocation2 + $0x40] sm:$0xff] %vm588, %v2387
        %2420 = vst.msk [vmem:[#allocation2 + $0x48] sm:$0xff] %vm588, %v2388
        %2421 = vst.msk [vmem:[#allocation2 + $0x50] sm:$0xff] %vm588, %v2389
        %2422 = vst.msk [vmem:[#allocation2 + $0x58] sm:$0xff] %vm588, %v2390
        %2423 = vst.msk [vmem:[#allocation2 + $0x60] sm:$0xff] %vm588, %v2391
        %2424 = vst.msk [vmem:[#allocation2 + $0x68] sm:$0xff] %vm588, %v2392
        %2425 = vst.msk [vmem:[#allocation2 + $0x70] sm:$0xff] %vm588, %v2393
        %2426 = vst.msk [vmem:[#allocation2 + $0x78] sm:$0xff] %vm588, %v2394
        %2427 = vst.msk [vmem:[#allocation2 + $0x80] sm:$0xff] %vm588, %v2395
        %2428 = vst.msk [vmem:[#allocation2 + $0x88] sm:$0xff] %vm588, %v2396
        %2429 = vst.msk [vmem:[#allocation2 + $0x90] sm:$0xff] %vm588, %v2397
        %2430 = vst.msk [vmem:[#allocation2 + $0x98] sm:$0xff] %vm588, %v2398
        %2431 = vst.msk [vmem:[#allocation2 + $0xa0] sm:$0xff] %vm588, %v2399
        %2432 = vst.msk [vmem:[#allocation2 + $0xa8] sm:$0xff] %vm588, %v2400
        %2433 = vst.msk [vmem:[#allocation2 + $0xb0] sm:$0xff] %vm588, %v2401
        %2434 = vst.msk [vmem:[#allocation2 + $0xb8] sm:$0xff] %vm588, %v2402
        %2435 = vst.msk [vmem:[#allocation2 + $0xc0] sm:$0xff] %vm588, %v2403
        %2436 = vst.msk [vmem:[#allocation2 + $0xc8] sm:$0xff] %vm588, %v2404
        %2437 = vst.msk [vmem:[#allocation2 + $0xd0] sm:$0xff] %vm588, %v2405
        %2438 = vst.msk [vmem:[#allocation2 + $0xd8] sm:$0xff] %vm588, %v2406
        %2439 = vst.msk [vmem:[#allocation2 + $0xe0] sm:$0xff] %vm588, %v2407
        %2440 = vst.msk [vmem:[#allocation2 + $0xe8] sm:$0xff] %vm588, %v2408
        %2441 = vst.msk [vmem:[#allocation2 + $0xf0] sm:$0xff] %vm588, %v2409
        %2442 = vst.msk [vmem:[#allocation2 + $0xf8] sm:$0xff] %vm588, %v2410
        %vm2458 = vcmask 1042432
        %vm2459 = vcmask 1046532
        %vm2460 = vmor %vm2458, %vm2459
        %v2461 = vrot.slane %v536, 5
        %v2462 = vrot.slane %v2461, 4
        %v2463 = vrot.slane %v537, 5
        %v2464 = vsel %vm2460, %v2462, %v2463
        %v2465 = vrot.slane %v2463, 4
        %v2466 = vrot.slane %v538, 5
        %v2467 = vsel %vm2460, %v2465, %v2466
        %v2468 = vrot.slane %v539, 5
        %v2469 = vrot.slane %v2468, 4
        %v2470 = vrot.slane %v540, 5
        %v2471 = vsel %vm2460, %v2469, %v2470
        %v2472 = vrot.slane %v2470, 4
        %v2473 = vrot.slane %v541, 5
        %v2474 = vsel %vm2460, %v2472, %v2473
        %v2475 = vrot.slane %v542, 5
        %v2476 = vrot.slane %v2475, 4
        %v2477 = vrot.slane %v543, 5
        %v2478 = vsel %vm2460, %v2476, %v2477
        %v2479 = vrot.slane %v2477, 4
        %v2480 = vrot.slane %v544, 5
        %v2481 = vsel %vm2460, %v2479, %v2480
        %v2482 = vrot.slane %v545, 5
        %v2483 = vrot.slane %v2482, 4
        %v2484 = vrot.slane %v546, 5
        %v2485 = vsel %vm2460, %v2483, %v2484
        %v2486 = vrot.slane %v2484, 4
        %v2487 = vrot.slane %v547, 5
        %v2488 = vsel %vm2460, %v2486, %v2487
        %v2489 = vrot.slane %v548, 5
        %v2490 = vrot.slane %v2489, 4
        %v2491 = vrot.slane %v549, 5
        %v2492 = vsel %vm2460, %v2490, %v2491
        %v2493 = vrot.slane %v2491, 4
        %v2494 = vrot.slane %v550, 5
        %v2495 = vsel %vm2460, %v2493, %v2494
        %v2496 = vrot.slane %v551, 5
        %v2497 = vrot.slane %v2496, 4
        %v2498 = vrot.slane %v552, 5
        %v2499 = vsel %vm2460, %v2497, %v2498
        %v2500 = vrot.slane %v2498, 4
        %v2501 = vrot.slane %v553, 5
        %v2502 = vsel %vm2460, %v2500, %v2501
        %v2503 = vrot.slane %v554, 5
        %v2504 = vrot.slane %v2503, 4
        %v2505 = vrot.slane %v555, 5
        %v2506 = vsel %vm2460, %v2504, %v2505
        %v2507 = vrot.slane %v2505, 4
        %v2508 = vrot.slane %v556, 5
        %v2509 = vsel %vm2460, %v2507, %v2508
        %v2510 = vrot.slane %v557, 5
        %v2511 = vrot.slane %v2510, 4
        %v2512 = vrot.slane %v558, 5
        %v2513 = vsel %vm2460, %v2511, %v2512
        %v2514 = vrot.slane %v2512, 4
        %v2515 = vrot.slane %v559, 5
        %v2516 = vsel %vm2460, %v2514, %v2515
        %v2517 = vrot.slane %v560, 5
        %v2518 = vrot.slane %v2517, 4
        %v2519 = vrot.slane %v561, 5
        %v2520 = vsel %vm2460, %v2518, %v2519
        %v2521 = vrot.slane %v2519, 4
        %v2522 = vrot.slane %v562, 5
        %v2523 = vsel %vm2460, %v2521, %v2522
        %v2524 = vrot.slane %v563, 5
        %v2525 = vrot.slane %v2524, 4
        %v2526 = vrot.slane %v564, 5
        %v2527 = vsel %vm2460, %v2525, %v2526
        %v2528 = vrot.slane %v2526, 4
        %v2529 = vrot.slane %v565, 5
        %v2530 = vsel %vm2460, %v2528, %v2529
        %v2531 = vrot.slane %v566, 5
        %v2532 = vrot.slane %v2531, 4
        %v2533 = vrot.slane %v567, 5
        %v2534 = vsel %vm2460, %v2532, %v2533
        %v2535 = vrot.slane %v2533, 4
        %v2536 = vrot.slane %v568, 5
        %v2537 = vsel %vm2460, %v2535, %v2536
        %v2538 = vrot.slane %v569, 5
        %v2539 = vrot.slane %v2538, 4
        %v2540 = vrot.slane %v570, 5
        %v2541 = vsel %vm2460, %v2539, %v2540
        %v2542 = vrot.slane %v2540, 4
        %v2543 = vrot.slane %v571, 5
        %v2544 = vsel %vm2460, %v2542, %v2543
        %v2545 = vrot.slane %v572, 5
        %v2546 = vrot.slane %v2545, 4
        %v2547 = vrot.slane %v573, 5
        %v2548 = vsel %vm2460, %v2546, %v2547
        %v2549 = vrot.slane %v2547, 4
        %v2550 = vrot.slane %v574, 5
        %v2551 = vsel %vm2460, %v2549, %v2550
        %v2552 = vrot.slane %v575, 5
        %v2553 = vrot.slane %v2552, 4
        %v2554 = vrot.slane %v576, 5
        %v2555 = vsel %vm2460, %v2553, %v2554
        %v2556 = vrot.slane %v2554, 4
        %v2557 = vrot.slane %v577, 5
        %v2558 = vsel %vm2460, %v2556, %v2557
        %v2559 = vrot.slane %v578, 5
        %v2560 = vrot.slane %v2559, 4
        %v2561 = vrot.slane %v579, 5
        %v2562 = vsel %vm2460, %v2560, %v2561
        %v2563 = vrot.slane %v2561, 4
        %v2564 = vrot.slane %v580, 5
        %v2565 = vsel %vm2460, %v2563, %v2564
        %v2566 = vld [vmem:[#allocation2] sm:$0xff]
        %v2567 = vld [vmem:[#allocation2 + $0x8] sm:$0xff]
        %v2568 = vld [vmem:[#allocation2 + $0x10] sm:$0xff]
        %v2569 = vld [vmem:[#allocation2 + $0x18] sm:$0xff]
        %v2570 = vld [vmem:[#allocation2 + $0x20] sm:$0xff]
        %v2571 = vld [vmem:[#allocation2 + $0x28] sm:$0xff]
        %v2572 = vld [vmem:[#allocation2 + $0x30] sm:$0xff]
        %v2573 = vld [vmem:[#allocation2 + $0x38] sm:$0xff]
        %v2574 = vld [vmem:[#allocation2 + $0x40] sm:$0xff]
        %v2575 = vld [vmem:[#allocation2 + $0x48] sm:$0xff]
        %v2576 = vld [vmem:[#allocation2 + $0x50] sm:$0xff]
        %v2577 = vld [vmem:[#allocation2 + $0x58] sm:$0xff]
        %v2578 = vld [vmem:[#allocation2 + $0x60] sm:$0xff]
        %v2579 = vld [vmem:[#allocation2 + $0x68] sm:$0xff]
        %v2580 = vld [vmem:[#allocation2 + $0x70] sm:$0xff]
        %v2581 = vld [vmem:[#allocation2 + $0x78] sm:$0xff]
        %v2582 = vld [vmem:[#allocation2 + $0x80] sm:$0xff]
        %v2583 = vld [vmem:[#allocation2 + $0x88] sm:$0xff]
        %v2584 = vld [vmem:[#allocation2 + $0x90] sm:$0xff]
        %v2585 = vld [vmem:[#allocation2 + $0x98] sm:$0xff]
        %v2586 = vld [vmem:[#allocation2 + $0xa0] sm:$0xff]
        %v2587 = vld [vmem:[#allocation2 + $0xa8] sm:$0xff]
        %v2588 = vld [vmem:[#allocation2 + $0xb0] sm:$0xff]
        %v2589 = vld [vmem:[#allocation2 + $0xb8] sm:$0xff]
        %v2590 = vld [vmem:[#allocation2 + $0xc0] sm:$0xff]
        %v2591 = vld [vmem:[#allocation2 + $0xc8] sm:$0xff]
        %v2592 = vld [vmem:[#allocation2 + $0xd0] sm:$0xff]
        %v2593 = vld [vmem:[#allocation2 + $0xd8] sm:$0xff]
        %v2594 = vld [vmem:[#allocation2 + $0xe0] sm:$0xff]
        %v2595 = vld [vmem:[#allocation2 + $0xe8] sm:$0xff]
        %v2596 = vld [vmem:[#allocation2 + $0xf0] sm:$0xff]
        %v2597 = vld [vmem:[#allocation2 + $0xf8] sm:$0xff]
        %s2598 = scalar_lea.vmem [#allocation6], 32
        %v2599 = vld [vmem:[%s2598] sm:$0xf]
        %v2600 = vld [vmem:[%s2598 + $0x4] sm:$0xf]
        %v2601 = vld [vmem:[%s2598 + $0x8] sm:$0xf]
        %v2602 = vld [vmem:[%s2598 + $0xc] sm:$0xf]
        %v2603 = vunpack.c.l.b16 %v2464
        %v2604 = vunpack.c.l.b16 %v2467
        %v2605 = vunpack.c.l.b16 %v2471
        %v2606 = vunpack.c.l.b16 %v2474
        %v2607 = vunpack.c.l.b16 %v2478
        %v2608 = vunpack.c.l.b16 %v2481
        %v2609 = vunpack.c.l.b16 %v2485
        %v2610 = vunpack.c.l.b16 %v2488
        %v2611 = vunpack.c.l.b16 %v2492
        %v2612 = vunpack.c.l.b16 %v2495
        %v2613 = vunpack.c.l.b16 %v2499
        %v2614 = vunpack.c.l.b16 %v2502
        %v2615 = vunpack.c.l.b16 %v2506
        %v2616 = vunpack.c.l.b16 %v2509
        %v2617 = vunpack.c.l.b16 %v2513
        %v2618 = vunpack.c.l.b16 %v2516
        %v2619 = vunpack.c.l.b16 %v2520
        %v2620 = vunpack.c.l.b16 %v2523
        %v2621 = vunpack.c.l.b16 %v2527
        %v2622 = vunpack.c.l.b16 %v2530
        %v2623 = vunpack.c.l.b16 %v2534
        %v2624 = vunpack.c.l.b16 %v2537
        %v2625 = vunpack.c.l.b16 %v2541
        %v2626 = vunpack.c.l.b16 %v2544
        %v2627 = vunpack.c.l.b16 %v2548
        %v2628 = vunpack.c.l.b16 %v2551
        %v2629 = vunpack.c.l.b16 %v2555
        %v2630 = vunpack.c.l.b16 %v2558
        %v2631 = vunpack.c.l.b16 %v2562
        %v2632 = vunpack.c.l.b16 %v2565
        %v2633 = vpack.c.b16 %v2604, %v2603
        %v2634 = vpack.c.b16 %v2606, %v2605
        %v2635 = vpack.c.b16 %v2608, %v2607
        %v2636 = vpack.c.b16 %v2610, %v2609
        %v2637 = vpack.c.b16 %v2612, %v2611
        %v2638 = vpack.c.b16 %v2614, %v2613
        %v2639 = vpack.c.b16 %v2616, %v2615
        %v2640 = vpack.c.b16 %v2618, %v2617
        %v2641 = vpack.c.b16 %v2620, %v2619
        %v2642 = vpack.c.b16 %v2622, %v2621
        %v2643 = vpack.c.b16 %v2624, %v2623
        %v2644 = vpack.c.b16 %v2626, %v2625
        %v2645 = vpack.c.b16 %v2628, %v2627
        %v2646 = vpack.c.b16 %v2630, %v2629
        %v2647 = vpack.c.b16 %v2632, %v2631
        %v2652 = vunpack.c.l.b16 %v2599
        %v2653 = vunpack.c.l.b16 %v2600
        %v2654 = vunpack.c.l.b16 %v2601
        %v2655 = vunpack.c.l.b16 %v2602
        %v2656 = vpack.c.b16 %v2653, %v2652
        %v2657 = vpack.c.b16 %v2655, %v2654
        %v2661 = vsel %vm588, %v2633, 0
        %v2664 = vsel %vm588, %v2634, 0
        %v2667 = vsel %vm588, %v2635, 0
        %v2670 = vsel %vm588, %v2636, 0
        %v2673 = vsel %vm588, %v2637, 0
        %v2676 = vsel %vm588, %v2638, 0
        %v2679 = vsel %vm588, %v2639, 0
        %v2682 = vsel %vm588, %v2640, 0
        %v2685 = vsel %vm588, %v2641, 0
        %v2688 = vsel %vm588, %v2642, 0
        %v2691 = vsel %vm588, %v2643, 0
        %v2694 = vsel %vm588, %v2644, 0
        %v2697 = vsel %vm588, %v2645, 0
        %v2700 = vsel %vm588, %v2646, 0
        %v2703 = vsel %vm588, %v2647, 0
        %2705 = vmatpush.bf16.msra.mxu0 0
        %2706 = vmatpush.bf16.msra.mxu0 0
        %2707 = vmatpush.bf16.msra.mxu0 0
        %2708 = vmatpush.bf16.msra.mxu0 0
        %2709 = vmatpush.bf16.msra.mxu0 0
        %2710 = vmatpush.bf16.msra.mxu0 0
        %2711 = vmatpush.bf16.msra.mxu0 %v2657
        %2712 = vmatpush.bf16.msra.mxu0 %v2656
        %2713 = vmatmul.bf16.gmra.mxu0 %v2661
        %v2714 = vpop.f32.mrf.mxu0
        %v2715 = vadd.f32 0.0, %v2714
        %v2716 = vpop.f32.mrf.mxu0
        %v2717 = vadd.f32 0.0, %v2716
        %2718 = vmatmul.bf16.gmra.mxu0 %v2664
        %v2719 = vpop.f32.mrf.mxu0
        %v2720 = vadd.f32 0.0, %v2719
        %v2721 = vpop.f32.mrf.mxu0
        %v2722 = vadd.f32 0.0, %v2721
        %2723 = vmatmul.bf16.gmra.mxu0 %v2661
        %v2724 = vpop.f32.mrf.mxu0
        %v2725 = vadd.f32 0.0, %v2724
        %v2726 = vpop.f32.mrf.mxu0
        %v2727 = vadd.f32 0.0, %v2726
        %2728 = vmatmul.bf16.gmra.mxu0 %v2667
        %v2729 = vpop.f32.mrf.mxu0
        %v2730 = vadd.f32 0.0, %v2729
        %v2731 = vpop.f32.mrf.mxu0
        %v2732 = vadd.f32 0.0, %v2731
        %2733 = vmatmul.bf16.gmra.mxu0 %v2670
        %v2734 = vpop.f32.mrf.mxu0
        %v2735 = vadd.f32 0.0, %v2734
        %v2736 = vpop.f32.mrf.mxu0
        %v2737 = vadd.f32 0.0, %v2736
        %2738 = vmatmul.bf16.gmra.mxu0 %v2673
        %v2739 = vpop.f32.mrf.mxu0
        %v2740 = vadd.f32 0.0, %v2739
        %v2741 = vpop.f32.mrf.mxu0
        %v2742 = vadd.f32 0.0, %v2741
        %2743 = vmatmul.bf16.gmra.mxu0 %v2676
        %v2744 = vpop.f32.mrf.mxu0
        %v2745 = vadd.f32 0.0, %v2744
        %v2746 = vpop.f32.mrf.mxu0
        %v2747 = vadd.f32 0.0, %v2746
        %2748 = vmatmul.bf16.gmra.mxu0 %v2679
        %v2749 = vpop.f32.mrf.mxu0
        %v2750 = vadd.f32 0.0, %v2749
        %v2751 = vpop.f32.mrf.mxu0
        %v2752 = vadd.f32 0.0, %v2751
        %2753 = vmatmul.bf16.gmra.mxu0 %v2682
        %v2754 = vpop.f32.mrf.mxu0
        %v2755 = vadd.f32 0.0, %v2754
        %v2756 = vpop.f32.mrf.mxu0
        %v2757 = vadd.f32 0.0, %v2756
        %2758 = vmatmul.bf16.gmra.mxu0 %v2685
        %v2759 = vpop.f32.mrf.mxu0
        %v2760 = vadd.f32 0.0, %v2759
        %v2761 = vpop.f32.mrf.mxu0
        %v2762 = vadd.f32 0.0, %v2761
        %2763 = vmatmul.bf16.gmra.mxu0 %v2688
        %v2764 = vpop.f32.mrf.mxu0
        %v2765 = vadd.f32 0.0, %v2764
        %v2766 = vpop.f32.mrf.mxu0
        %v2767 = vadd.f32 0.0, %v2766
        %2768 = vmatmul.bf16.gmra.mxu0 %v2691
        %v2769 = vpop.f32.mrf.mxu0
        %v2770 = vadd.f32 0.0, %v2769
        %v2771 = vpop.f32.mrf.mxu0
        %v2772 = vadd.f32 0.0, %v2771
        %2773 = vmatmul.bf16.gmra.mxu0 %v2694
        %v2774 = vpop.f32.mrf.mxu0
        %v2775 = vadd.f32 0.0, %v2774
        %v2776 = vpop.f32.mrf.mxu0
        %v2777 = vadd.f32 0.0, %v2776
        %2778 = vmatmul.bf16.gmra.mxu0 %v2697
        %v2779 = vpop.f32.mrf.mxu0
        %v2780 = vadd.f32 0.0, %v2779
        %v2781 = vpop.f32.mrf.mxu0
        %v2782 = vadd.f32 0.0, %v2781
        %2783 = vmatmul.bf16.gmra.mxu0 %v2700
        %v2784 = vpop.f32.mrf.mxu0
        %v2785 = vadd.f32 0.0, %v2784
        %v2786 = vpop.f32.mrf.mxu0
        %v2787 = vadd.f32 0.0, %v2786
        %2788 = vmatmul.bf16.gmra.mxu0 %v2703
        %v2789 = vpop.f32.mrf.mxu0
        %v2790 = vadd.f32 0.0, %v2789
        %v2791 = vpop.f32.mrf.mxu0
        %v2792 = vadd.f32 0.0, %v2791
        %2793 = vdwg.mxu0
        %v2794 = vadd.f32 %v2566, %v2715
        %v2795 = vadd.f32 %v2567, %v2717
        %v2796 = vadd.f32 %v2568, %v2720
        %v2797 = vadd.f32 %v2569, %v2722
        %v2798 = vadd.f32 %v2570, %v2725
        %v2799 = vadd.f32 %v2571, %v2727
        %v2800 = vadd.f32 %v2572, %v2730
        %v2801 = vadd.f32 %v2573, %v2732
        %v2802 = vadd.f32 %v2574, %v2735
        %v2803 = vadd.f32 %v2575, %v2737
        %v2804 = vadd.f32 %v2576, %v2740
        %v2805 = vadd.f32 %v2577, %v2742
        %v2806 = vadd.f32 %v2578, %v2745
        %v2807 = vadd.f32 %v2579, %v2747
        %v2808 = vadd.f32 %v2580, %v2750
        %v2809 = vadd.f32 %v2581, %v2752
        %v2810 = vadd.f32 %v2582, %v2755
        %v2811 = vadd.f32 %v2583, %v2757
        %v2812 = vadd.f32 %v2584, %v2760
        %v2813 = vadd.f32 %v2585, %v2762
        %v2814 = vadd.f32 %v2586, %v2765
        %v2815 = vadd.f32 %v2587, %v2767
        %v2816 = vadd.f32 %v2588, %v2770
        %v2817 = vadd.f32 %v2589, %v2772
        %v2818 = vadd.f32 %v2590, %v2775
        %v2819 = vadd.f32 %v2591, %v2777
        %v2820 = vadd.f32 %v2592, %v2780
        %v2821 = vadd.f32 %v2593, %v2782
        %v2822 = vadd.f32 %v2594, %v2785
        %v2823 = vadd.f32 %v2595, %v2787
        %v2824 = vadd.f32 %v2596, %v2790
        %v2825 = vadd.f32 %v2597, %v2792
        %2826 = vst.msk [vmem:[#allocation2] sm:$0xff] %vm588, %v2794
        %2827 = vst.msk [vmem:[#allocation2 + $0x8] sm:$0xff] %vm588, %v2795
        %2828 = vst.msk [vmem:[#allocation2 + $0x10] sm:$0xff] %vm588, %v2796
        %2829 = vst.msk [vmem:[#allocation2 + $0x18] sm:$0xff] %vm588, %v2797
        %2830 = vst.msk [vmem:[#allocation2 + $0x20] sm:$0xff] %vm588, %v2798
        %2831 = vst.msk [vmem:[#allocation2 + $0x28] sm:$0xff] %vm588, %v2799
        %2832 = vst.msk [vmem:[#allocation2 + $0x30] sm:$0xff] %vm588, %v2800
        %2833 = vst.msk [vmem:[#allocation2 + $0x38] sm:$0xff] %vm588, %v2801
        %2834 = vst.msk [vmem:[#allocation2 + $0x40] sm:$0xff] %vm588, %v2802
        %2835 = vst.msk [vmem:[#allocation2 + $0x48] sm:$0xff] %vm588, %v2803
        %2836 = vst.msk [vmem:[#allocation2 + $0x50] sm:$0xff] %vm588, %v2804
        %2837 = vst.msk [vmem:[#allocation2 + $0x58] sm:$0xff] %vm588, %v2805
        %2838 = vst.msk [vmem:[#allocation2 + $0x60] sm:$0xff] %vm588, %v2806
        %2839 = vst.msk [vmem:[#allocation2 + $0x68] sm:$0xff] %vm588, %v2807
        %2840 = vst.msk [vmem:[#allocation2 + $0x70] sm:$0xff] %vm588, %v2808
        %2841 = vst.msk [vmem:[#allocation2 + $0x78] sm:$0xff] %vm588, %v2809
        %2842 = vst.msk [vmem:[#allocation2 + $0x80] sm:$0xff] %vm588, %v2810
        %2843 = vst.msk [vmem:[#allocation2 + $0x88] sm:$0xff] %vm588, %v2811
        %2844 = vst.msk [vmem:[#allocation2 + $0x90] sm:$0xff] %vm588, %v2812
        %2845 = vst.msk [vmem:[#allocation2 + $0x98] sm:$0xff] %vm588, %v2813
        %2846 = vst.msk [vmem:[#allocation2 + $0xa0] sm:$0xff] %vm588, %v2814
        %2847 = vst.msk [vmem:[#allocation2 + $0xa8] sm:$0xff] %vm588, %v2815
        %2848 = vst.msk [vmem:[#allocation2 + $0xb0] sm:$0xff] %vm588, %v2816
        %2849 = vst.msk [vmem:[#allocation2 + $0xb8] sm:$0xff] %vm588, %v2817
        %2850 = vst.msk [vmem:[#allocation2 + $0xc0] sm:$0xff] %vm588, %v2818
        %2851 = vst.msk [vmem:[#allocation2 + $0xc8] sm:$0xff] %vm588, %v2819
        %2852 = vst.msk [vmem:[#allocation2 + $0xd0] sm:$0xff] %vm588, %v2820
        %2853 = vst.msk [vmem:[#allocation2 + $0xd8] sm:$0xff] %vm588, %v2821
        %2854 = vst.msk [vmem:[#allocation2 + $0xe0] sm:$0xff] %vm588, %v2822
        %2855 = vst.msk [vmem:[#allocation2 + $0xe8] sm:$0xff] %vm588, %v2823
        %2856 = vst.msk [vmem:[#allocation2 + $0xf0] sm:$0xff] %vm588, %v2824
        %2857 = vst.msk [vmem:[#allocation2 + $0xf8] sm:$0xff] %vm588, %v2825
        %v2859 = vrot.slane %v581, 5
        %v2860 = vrot.slane %v2859, 4
        %v2861 = vrot.slane %v582, 5
        %v2862 = vsel %vm2460, %v2860, %v2861
        %v2863 = vrot.slane %v2861, 4
        %v2864 = vrot.slane %v583, 5
        %v2865 = vsel %vm2460, %v2863, %v2864
        %v2866 = vld [vmem:[#allocation2] sm:$0xff]
        %v2867 = vld [vmem:[#allocation2 + $0x8] sm:$0xff]
        %v2868 = vld [vmem:[#allocation2 + $0x10] sm:$0xff]
        %v2869 = vld [vmem:[#allocation2 + $0x18] sm:$0xff]
        %v2870 = vld [vmem:[#allocation2 + $0x20] sm:$0xff]
        %v2871 = vld [vmem:[#allocation2 + $0x28] sm:$0xff]
        %v2872 = vld [vmem:[#allocation2 + $0x30] sm:$0xff]
        %v2873 = vld [vmem:[#allocation2 + $0x38] sm:$0xff]
        %v2874 = vld [vmem:[#allocation2 + $0x40] sm:$0xff]
        %v2875 = vld [vmem:[#allocation2 + $0x48] sm:$0xff]
        %v2876 = vld [vmem:[#allocation2 + $0x50] sm:$0xff]
        %v2877 = vld [vmem:[#allocation2 + $0x58] sm:$0xff]
        %v2878 = vld [vmem:[#allocation2 + $0x60] sm:$0xff]
        %v2879 = vld [vmem:[#allocation2 + $0x68] sm:$0xff]
        %v2880 = vld [vmem:[#allocation2 + $0x70] sm:$0xff]
        %v2881 = vld [vmem:[#allocation2 + $0x78] sm:$0xff]
        %v2882 = vld [vmem:[#allocation2 + $0x80] sm:$0xff]
        %v2883 = vld [vmem:[#allocation2 + $0x88] sm:$0xff]
        %v2884 = vld [vmem:[#allocation2 + $0x90] sm:$0xff]
        %v2885 = vld [vmem:[#allocation2 + $0x98] sm:$0xff]
        %v2886 = vld [vmem:[#allocation2 + $0xa0] sm:$0xff]
        %v2887 = vld [vmem:[#allocation2 + $0xa8] sm:$0xff]
        %v2888 = vld [vmem:[#allocation2 + $0xb0] sm:$0xff]
        %v2889 = vld [vmem:[#allocation2 + $0xb8] sm:$0xff]
        %v2890 = vld [vmem:[#allocation2 + $0xc0] sm:$0xff]
        %v2891 = vld [vmem:[#allocation2 + $0xc8] sm:$0xff]
        %v2892 = vld [vmem:[#allocation2 + $0xd0] sm:$0xff]
        %v2893 = vld [vmem:[#allocation2 + $0xd8] sm:$0xff]
        %v2894 = vld [vmem:[#allocation2 + $0xe0] sm:$0xff]
        %v2895 = vld [vmem:[#allocation2 + $0xe8] sm:$0xff]
        %v2896 = vld [vmem:[#allocation2 + $0xf0] sm:$0xff]
        %v2897 = vld [vmem:[#allocation2 + $0xf8] sm:$0xff]
        %s2898 = scalar_lea.vmem [#allocation6], 80
        %v2899 = vld [vmem:[%s2898] sm:$0xf]
        %v2900 = vld [vmem:[%s2898 + $0x4] sm:$0xf]
        %v2901 = vld [vmem:[%s2898 + $0x8] sm:$0xf]
        %v2902 = vld [vmem:[%s2898 + $0xc] sm:$0xf]
        %v2903 = vunpack.c.l.b16 %v2862
        %v2904 = vunpack.c.l.b16 %v2865
        %v2905 = vpack.c.b16 %v2904, %v2903
        %v2910 = vunpack.c.l.b16 %v2899
        %v2911 = vunpack.c.l.b16 %v2900
        %v2912 = vunpack.c.l.b16 %v2901
        %v2913 = vunpack.c.l.b16 %v2902
        %v2914 = vpack.c.b16 %v2911, %v2910
        %v2915 = vpack.c.b16 %v2913, %v2912
        %v2919 = vsel %vm588, %v2905, 0
        %2921 = vmatpush.bf16.msra.mxu0 0
        %2922 = vmatpush.bf16.msra.mxu0 0
        %2923 = vmatpush.bf16.msra.mxu0 0
        %2924 = vmatpush.bf16.msra.mxu0 0
        %2925 = vmatpush.bf16.msra.mxu0 0
        %2926 = vmatpush.bf16.msra.mxu0 0
        %2927 = vmatpush.bf16.msra.mxu0 %v2915
        %2928 = vmatpush.bf16.msra.mxu0 %v2914
        %2929 = vmatmul.bf16.gmra.mxu0 %v2664
        %v2930 = vpop.f32.mrf.mxu0
        %v2931 = vadd.f32 0.0, %v2930
        %v2932 = vpop.f32.mrf.mxu0
        %v2933 = vadd.f32 0.0, %v2932
        %2934 = vmatmul.bf16.gmra.mxu0 %v2661
        %v2935 = vpop.f32.mrf.mxu0
        %v2936 = vadd.f32 0.0, %v2935
        %v2937 = vpop.f32.mrf.mxu0
        %v2938 = vadd.f32 0.0, %v2937
        %2939 = vmatmul.bf16.gmra.mxu0 %v2667
        %v2940 = vpop.f32.mrf.mxu0
        %v2941 = vadd.f32 0.0, %v2940
        %v2942 = vpop.f32.mrf.mxu0
        %v2943 = vadd.f32 0.0, %v2942
        %2944 = vmatmul.bf16.gmra.mxu0 %v2670
        %v2945 = vpop.f32.mrf.mxu0
        %v2946 = vadd.f32 0.0, %v2945
        %v2947 = vpop.f32.mrf.mxu0
        %v2948 = vadd.f32 0.0, %v2947
        %2949 = vmatmul.bf16.gmra.mxu0 %v2673
        %v2950 = vpop.f32.mrf.mxu0
        %v2951 = vadd.f32 0.0, %v2950
        %v2952 = vpop.f32.mrf.mxu0
        %v2953 = vadd.f32 0.0, %v2952
        %2954 = vmatmul.bf16.gmra.mxu0 %v2676
        %v2955 = vpop.f32.mrf.mxu0
        %v2956 = vadd.f32 0.0, %v2955
        %v2957 = vpop.f32.mrf.mxu0
        %v2958 = vadd.f32 0.0, %v2957
        %2959 = vmatmul.bf16.gmra.mxu0 %v2679
        %v2960 = vpop.f32.mrf.mxu0
        %v2961 = vadd.f32 0.0, %v2960
        %v2962 = vpop.f32.mrf.mxu0
        %v2963 = vadd.f32 0.0, %v2962
        %2964 = vmatmul.bf16.gmra.mxu0 %v2682
        %v2965 = vpop.f32.mrf.mxu0
        %v2966 = vadd.f32 0.0, %v2965
        %v2967 = vpop.f32.mrf.mxu0
        %v2968 = vadd.f32 0.0, %v2967
        %2969 = vmatmul.bf16.gmra.mxu0 %v2685
        %v2970 = vpop.f32.mrf.mxu0
        %v2971 = vadd.f32 0.0, %v2970
        %v2972 = vpop.f32.mrf.mxu0
        %v2973 = vadd.f32 0.0, %v2972
        %2974 = vmatmul.bf16.gmra.mxu0 %v2688
        %v2975 = vpop.f32.mrf.mxu0
        %v2976 = vadd.f32 0.0, %v2975
        %v2977 = vpop.f32.mrf.mxu0
        %v2978 = vadd.f32 0.0, %v2977
        %2979 = vmatmul.bf16.gmra.mxu0 %v2691
        %v2980 = vpop.f32.mrf.mxu0
        %v2981 = vadd.f32 0.0, %v2980
        %v2982 = vpop.f32.mrf.mxu0
        %v2983 = vadd.f32 0.0, %v2982
        %2984 = vmatmul.bf16.gmra.mxu0 %v2694
        %v2985 = vpop.f32.mrf.mxu0
        %v2986 = vadd.f32 0.0, %v2985
        %v2987 = vpop.f32.mrf.mxu0
        %v2988 = vadd.f32 0.0, %v2987
        %2989 = vmatmul.bf16.gmra.mxu0 %v2697
        %v2990 = vpop.f32.mrf.mxu0
        %v2991 = vadd.f32 0.0, %v2990
        %v2992 = vpop.f32.mrf.mxu0
        %v2993 = vadd.f32 0.0, %v2992
        %2994 = vmatmul.bf16.gmra.mxu0 %v2700
        %v2995 = vpop.f32.mrf.mxu0
        %v2996 = vadd.f32 0.0, %v2995
        %v2997 = vpop.f32.mrf.mxu0
        %v2998 = vadd.f32 0.0, %v2997
        %2999 = vmatmul.bf16.gmra.mxu0 %v2703
        %v3000 = vpop.f32.mrf.mxu0
        %v3001 = vadd.f32 0.0, %v3000
        %v3002 = vpop.f32.mrf.mxu0
        %v3003 = vadd.f32 0.0, %v3002
        %3004 = vmatmul.bf16.gmra.mxu0 %v2919
        %v3005 = vpop.f32.mrf.mxu0
        %v3006 = vadd.f32 0.0, %v3005
        %v3007 = vpop.f32.mrf.mxu0
        %v3008 = vadd.f32 0.0, %v3007
        %3009 = vdwg.mxu0
        %v3010 = vadd.f32 %v2866, %v2931
        %v3011 = vadd.f32 %v2867, %v2933
        %v3012 = vadd.f32 %v2868, %v2936
        %v3013 = vadd.f32 %v2869, %v2938
        %v3014 = vadd.f32 %v2870, %v2941
        %v3015 = vadd.f32 %v2871, %v2943
        %v3016 = vadd.f32 %v2872, %v2946
        %v3017 = vadd.f32 %v2873, %v2948
        %v3018 = vadd.f32 %v2874, %v2951
        %v3019 = vadd.f32 %v2875, %v2953
        %v3020 = vadd.f32 %v2876, %v2956
        %v3021 = vadd.f32 %v2877, %v2958
        %v3022 = vadd.f32 %v2878, %v2961
        %v3023 = vadd.f32 %v2879, %v2963
        %v3024 = vadd.f32 %v2880, %v2966
        %v3025 = vadd.f32 %v2881, %v2968
        %v3026 = vadd.f32 %v2882, %v2971
        %v3027 = vadd.f32 %v2883, %v2973
        %v3028 = vadd.f32 %v2884, %v2976
        %v3029 = vadd.f32 %v2885, %v2978
        %v3030 = vadd.f32 %v2886, %v2981
        %v3031 = vadd.f32 %v2887, %v2983
        %v3032 = vadd.f32 %v2888, %v2986
        %v3033 = vadd.f32 %v2889, %v2988
        %v3034 = vadd.f32 %v2890, %v2991
        %v3035 = vadd.f32 %v2891, %v2993
        %v3036 = vadd.f32 %v2892, %v2996
        %v3037 = vadd.f32 %v2893, %v2998
        %v3038 = vadd.f32 %v2894, %v3001
        %v3039 = vadd.f32 %v2895, %v3003
        %v3040 = vadd.f32 %v2896, %v3006
        %v3041 = vadd.f32 %v2897, %v3008
        %3042 = vst.msk [vmem:[#allocation2] sm:$0xff] %vm588, %v3010
        %3043 = vst.msk [vmem:[#allocation2 + $0x8] sm:$0xff] %vm588, %v3011
        %3044 = vst.msk [vmem:[#allocation2 + $0x10] sm:$0xff] %vm588, %v3012
        %3045 = vst.msk [vmem:[#allocation2 + $0x18] sm:$0xff] %vm588, %v3013
        %3046 = vst.msk [vmem:[#allocation2 + $0x20] sm:$0xff] %vm588, %v3014
        %3047 = vst.msk [vmem:[#allocation2 + $0x28] sm:$0xff] %vm588, %v3015
        %3048 = vst.msk [vmem:[#allocation2 + $0x30] sm:$0xff] %vm588, %v3016
        %3049 = vst.msk [vmem:[#allocation2 + $0x38] sm:$0xff] %vm588, %v3017
        %3050 = vst.msk [vmem:[#allocation2 + $0x40] sm:$0xff] %vm588, %v3018
        %3051 = vst.msk [vmem:[#allocation2 + $0x48] sm:$0xff] %vm588, %v3019
        %3052 = vst.msk [vmem:[#allocation2 + $0x50] sm:$0xff] %vm588, %v3020
        %3053 = vst.msk [vmem:[#allocation2 + $0x58] sm:$0xff] %vm588, %v3021
        %3054 = vst.msk [vmem:[#allocation2 + $0x60] sm:$0xff] %vm588, %v3022
        %3055 = vst.msk [vmem:[#allocation2 + $0x68] sm:$0xff] %vm588, %v3023
        %3056 = vst.msk [vmem:[#allocation2 + $0x70] sm:$0xff] %vm588, %v3024
        %3057 = vst.msk [vmem:[#allocation2 + $0x78] sm:$0xff] %vm588, %v3025
        %3058 = vst.msk [vmem:[#allocation2 + $0x80] sm:$0xff] %vm588, %v3026
        %3059 = vst.msk [vmem:[#allocation2 + $0x88] sm:$0xff] %vm588, %v3027
        %3060 = vst.msk [vmem:[#allocation2 + $0x90] sm:$0xff] %vm588, %v3028
        %3061 = vst.msk [vmem:[#allocation2 + $0x98] sm:$0xff] %vm588, %v3029
        %3062 = vst.msk [vmem:[#allocation2 + $0xa0] sm:$0xff] %vm588, %v3030
        %3063 = vst.msk [vmem:[#allocation2 + $0xa8] sm:$0xff] %vm588, %v3031
        %3064 = vst.msk [vmem:[#allocation2 + $0xb0] sm:$0xff] %vm588, %v3032
        %3065 = vst.msk [vmem:[#allocation2 + $0xb8] sm:$0xff] %vm588, %v3033
        %3066 = vst.msk [vmem:[#allocation2 + $0xc0] sm:$0xff] %vm588, %v3034
        %3067 = vst.msk [vmem:[#allocation2 + $0xc8] sm:$0xff] %vm588, %v3035
        %3068 = vst.msk [vmem:[#allocation2 + $0xd0] sm:$0xff] %vm588, %v3036
        %3069 = vst.msk [vmem:[#allocation2 + $0xd8] sm:$0xff] %vm588, %v3037
        %3070 = vst.msk [vmem:[#allocation2 + $0xe0] sm:$0xff] %vm588, %v3038
        %3071 = vst.msk [vmem:[#allocation2 + $0xe8] sm:$0xff] %vm588, %v3039
        %3072 = vst.msk [vmem:[#allocation2 + $0xf0] sm:$0xff] %vm588, %v3040
        %3073 = vst.msk [vmem:[#allocation2 + $0xf8] sm:$0xff] %vm588, %v3041
        %v3074 = vld [vmem:[#allocation2] sm:$0xff]
        %v3075 = vld [vmem:[#allocation2 + $0x8] sm:$0xff]
        %v3076 = vld [vmem:[#allocation2 + $0x10] sm:$0xff]
        %v3077 = vld [vmem:[#allocation2 + $0x18] sm:$0xff]
        %v3078 = vld [vmem:[#allocation2 + $0x20] sm:$0xff]
        %v3079 = vld [vmem:[#allocation2 + $0x28] sm:$0xff]
        %v3080 = vld [vmem:[#allocation2 + $0x30] sm:$0xff]
        %v3081 = vld [vmem:[#allocation2 + $0x38] sm:$0xff]
        %v3082 = vld [vmem:[#allocation2 + $0x40] sm:$0xff]
        %v3083 = vld [vmem:[#allocation2 + $0x48] sm:$0xff]
        %v3084 = vld [vmem:[#allocation2 + $0x50] sm:$0xff]
        %v3085 = vld [vmem:[#allocation2 + $0x58] sm:$0xff]
        %v3086 = vld [vmem:[#allocation2 + $0x60] sm:$0xff]
        %v3087 = vld [vmem:[#allocation2 + $0x68] sm:$0xff]
        %v3088 = vld [vmem:[#allocation2 + $0x70] sm:$0xff]
        %v3089 = vld [vmem:[#allocation2 + $0x78] sm:$0xff]
        %v3090 = vld [vmem:[#allocation2 + $0x80] sm:$0xff]
        %v3091 = vld [vmem:[#allocation2 + $0x88] sm:$0xff]
        %v3092 = vld [vmem:[#allocation2 + $0x90] sm:$0xff]
        %v3093 = vld [vmem:[#allocation2 + $0x98] sm:$0xff]
        %v3094 = vld [vmem:[#allocation2 + $0xa0] sm:$0xff]
        %v3095 = vld [vmem:[#allocation2 + $0xa8] sm:$0xff]
        %v3096 = vld [vmem:[#allocation2 + $0xb0] sm:$0xff]
        %v3097 = vld [vmem:[#allocation2 + $0xb8] sm:$0xff]
        %v3098 = vld [vmem:[#allocation2 + $0xc0] sm:$0xff]
        %v3099 = vld [vmem:[#allocation2 + $0xc8] sm:$0xff]
        %v3100 = vld [vmem:[#allocation2 + $0xd0] sm:$0xff]
        %v3101 = vld [vmem:[#allocation2 + $0xd8] sm:$0xff]
        %v3102 = vld [vmem:[#allocation2 + $0xe0] sm:$0xff]
        %v3103 = vld [vmem:[#allocation2 + $0xe8] sm:$0xff]
        %v3104 = vld [vmem:[#allocation2 + $0xf0] sm:$0xff]
        %v3105 = vld [vmem:[#allocation2 + $0xf8] sm:$0xff]
        %s3106 = scalar_lea.vmem [#allocation6], 128
        %v3107 = vld [vmem:[%s3106] sm:$0xf]
        %v3108 = vld [vmem:[%s3106 + $0x4] sm:$0xf]
        %v3109 = vld [vmem:[%s3106 + $0x8] sm:$0xf]
        %v3110 = vld [vmem:[%s3106 + $0xc] sm:$0xf]
        %v3115 = vunpack.c.l.b16 %v3107
        %v3116 = vunpack.c.l.b16 %v3108
        %v3117 = vunpack.c.l.b16 %v3109
        %v3118 = vunpack.c.l.b16 %v3110
        %v3119 = vpack.c.b16 %v3116, %v3115
        %v3120 = vpack.c.b16 %v3118, %v3117
        %3123 = vmatpush.bf16.msra.mxu0 0
        %3124 = vmatpush.bf16.msra.mxu0 0
        %3125 = vmatpush.bf16.msra.mxu0 0
        %3126 = vmatpush.bf16.msra.mxu0 0
        %3127 = vmatpush.bf16.msra.mxu0 0
        %3128 = vmatpush.bf16.msra.mxu0 0
        %3129 = vmatpush.bf16.msra.mxu0 %v3120
        %3130 = vmatpush.bf16.msra.mxu0 %v3119
        %3131 = vmatmul.bf16.gmra.mxu0 %v2661
        %v3132 = vpop.f32.mrf.mxu0
        %v3133 = vadd.f32 0.0, %v3132
        %v3134 = vpop.f32.mrf.mxu0
        %v3135 = vadd.f32 0.0, %v3134
        %3136 = vmatmul.bf16.gmra.mxu0 %v2667
        %v3137 = vpop.f32.mrf.mxu0
        %v3138 = vadd.f32 0.0, %v3137
        %v3139 = vpop.f32.mrf.mxu0
        %v3140 = vadd.f32 0.0, %v3139
        %3141 = vmatmul.bf16.gmra.mxu0 %v2670
        %v3142 = vpop.f32.mrf.mxu0
        %v3143 = vadd.f32 0.0, %v3142
        %v3144 = vpop.f32.mrf.mxu0
        %v3145 = vadd.f32 0.0, %v3144
        %3146 = vmatmul.bf16.gmra.mxu0 %v2673
        %v3147 = vpop.f32.mrf.mxu0
        %v3148 = vadd.f32 0.0, %v3147
        %v3149 = vpop.f32.mrf.mxu0
        %v3150 = vadd.f32 0.0, %v3149
        %3151 = vmatmul.bf16.gmra.mxu0 %v2676
        %v3152 = vpop.f32.mrf.mxu0
        %v3153 = vadd.f32 0.0, %v3152
        %v3154 = vpop.f32.mrf.mxu0
        %v3155 = vadd.f32 0.0, %v3154
        %3156 = vmatmul.bf16.gmra.mxu0 %v2679
        %v3157 = vpop.f32.mrf.mxu0
        %v3158 = vadd.f32 0.0, %v3157
        %v3159 = vpop.f32.mrf.mxu0
        %v3160 = vadd.f32 0.0, %v3159
        %3161 = vmatmul.bf16.gmra.mxu0 %v2682
        %v3162 = vpop.f32.mrf.mxu0
        %v3163 = vadd.f32 0.0, %v3162
        %v3164 = vpop.f32.mrf.mxu0
        %v3165 = vadd.f32 0.0, %v3164
        %3166 = vmatmul.bf16.gmra.mxu0 %v2685
        %v3167 = vpop.f32.mrf.mxu0
        %v3168 = vadd.f32 0.0, %v3167
        %v3169 = vpop.f32.mrf.mxu0
        %v3170 = vadd.f32 0.0, %v3169
        %3171 = vmatmul.bf16.gmra.mxu0 %v2688
        %v3172 = vpop.f32.mrf.mxu0
        %v3173 = vadd.f32 0.0, %v3172
        %v3174 = vpop.f32.mrf.mxu0
        %v3175 = vadd.f32 0.0, %v3174
        %3176 = vmatmul.bf16.gmra.mxu0 %v2691
        %v3177 = vpop.f32.mrf.mxu0
        %v3178 = vadd.f32 0.0, %v3177
        %v3179 = vpop.f32.mrf.mxu0
        %v3180 = vadd.f32 0.0, %v3179
        %3181 = vmatmul.bf16.gmra.mxu0 %v2694
        %v3182 = vpop.f32.mrf.mxu0
        %v3183 = vadd.f32 0.0, %v3182
        %v3184 = vpop.f32.mrf.mxu0
        %v3185 = vadd.f32 0.0, %v3184
        %3186 = vmatmul.bf16.gmra.mxu0 %v2697
        %v3187 = vpop.f32.mrf.mxu0
        %v3188 = vadd.f32 0.0, %v3187
        %v3189 = vpop.f32.mrf.mxu0
        %v3190 = vadd.f32 0.0, %v3189
        %3191 = vmatmul.bf16.gmra.mxu0 %v2700
        %v3192 = vpop.f32.mrf.mxu0
        %v3193 = vadd.f32 0.0, %v3192
        %v3194 = vpop.f32.mrf.mxu0
        %v3195 = vadd.f32 0.0, %v3194
        %3196 = vmatmul.bf16.gmra.mxu0 %v2703
        %v3197 = vpop.f32.mrf.mxu0
        %v3198 = vadd.f32 0.0, %v3197
        %v3199 = vpop.f32.mrf.mxu0
        %v3200 = vadd.f32 0.0, %v3199
        %3201 = vmatmul.bf16.gmra.mxu0 %v2919
        %v3202 = vpop.f32.mrf.mxu0
        %v3203 = vadd.f32 0.0, %v3202
        %v3204 = vpop.f32.mrf.mxu0
        %v3205 = vadd.f32 0.0, %v3204
        %3206 = vmatmul.bf16.gmra.mxu0 %v2703
        %v3207 = vpop.f32.mrf.mxu0
        %v3208 = vadd.f32 0.0, %v3207
        %v3209 = vpop.f32.mrf.mxu0
        %v3210 = vadd.f32 0.0, %v3209
        %3211 = vdwg.mxu0
        %v3212 = vadd.f32 %v3074, %v3133
        %v3213 = vadd.f32 %v3075, %v3135
        %v3214 = vadd.f32 %v3076, %v3138
        %v3215 = vadd.f32 %v3077, %v3140
        %v3216 = vadd.f32 %v3078, %v3143
        %v3217 = vadd.f32 %v3079, %v3145
        %v3218 = vadd.f32 %v3080, %v3148
        %v3219 = vadd.f32 %v3081, %v3150
        %v3220 = vadd.f32 %v3082, %v3153
        %v3221 = vadd.f32 %v3083, %v3155
        %v3222 = vadd.f32 %v3084, %v3158
        %v3223 = vadd.f32 %v3085, %v3160
        %v3224 = vadd.f32 %v3086, %v3163
        %v3225 = vadd.f32 %v3087, %v3165
        %v3226 = vadd.f32 %v3088, %v3168
        %v3227 = vadd.f32 %v3089, %v3170
        %v3228 = vadd.f32 %v3090, %v3173
        %v3229 = vadd.f32 %v3091, %v3175
        %v3230 = vadd.f32 %v3092, %v3178
        %v3231 = vadd.f32 %v3093, %v3180
        %v3232 = vadd.f32 %v3094, %v3183
        %v3233 = vadd.f32 %v3095, %v3185
        %v3234 = vadd.f32 %v3096, %v3188
        %v3235 = vadd.f32 %v3097, %v3190
        %v3236 = vadd.f32 %v3098, %v3193
        %v3237 = vadd.f32 %v3099, %v3195
        %v3238 = vadd.f32 %v3100, %v3198
        %v3239 = vadd.f32 %v3101, %v3200
        %v3240 = vadd.f32 %v3102, %v3203
        %v3241 = vadd.f32 %v3103, %v3205
        %v3242 = vadd.f32 %v3104, %v3208
        %v3243 = vadd.f32 %v3105, %v3210
        %3244 = vst.msk [vmem:[#allocation2] sm:$0xff] %vm588, %v3212
        %3245 = vst.msk [vmem:[#allocation2 + $0x8] sm:$0xff] %vm588, %v3213
        %3246 = vst.msk [vmem:[#allocation2 + $0x10] sm:$0xff] %vm588, %v3214
        %3247 = vst.msk [vmem:[#allocation2 + $0x18] sm:$0xff] %vm588, %v3215
        %3248 = vst.msk [vmem:[#allocation2 + $0x20] sm:$0xff] %vm588, %v3216
        %3249 = vst.msk [vmem:[#allocation2 + $0x28] sm:$0xff] %vm588, %v3217
        %3250 = vst.msk [vmem:[#allocation2 + $0x30] sm:$0xff] %vm588, %v3218
        %3251 = vst.msk [vmem:[#allocation2 + $0x38] sm:$0xff] %vm588, %v3219
        %3252 = vst.msk [vmem:[#allocation2 + $0x40] sm:$0xff] %vm588, %v3220
        %3253 = vst.msk [vmem:[#allocation2 + $0x48] sm:$0xff] %vm588, %v3221
        %3254 = vst.msk [vmem:[#allocation2 + $0x50] sm:$0xff] %vm588, %v3222
        %3255 = vst.msk [vmem:[#allocation2 + $0x58] sm:$0xff] %vm588, %v3223
        %3256 = vst.msk [vmem:[#allocation2 + $0x60] sm:$0xff] %vm588, %v3224
        %3257 = vst.msk [vmem:[#allocation2 + $0x68] sm:$0xff] %vm588, %v3225
        %3258 = vst.msk [vmem:[#allocation2 + $0x70] sm:$0xff] %vm588, %v3226
        %3259 = vst.msk [vmem:[#allocation2 + $0x78] sm:$0xff] %vm588, %v3227
        %3260 = vst.msk [vmem:[#allocation2 + $0x80] sm:$0xff] %vm588, %v3228
        %3261 = vst.msk [vmem:[#allocation2 + $0x88] sm:$0xff] %vm588, %v3229
        %3262 = vst.msk [vmem:[#allocation2 + $0x90] sm:$0xff] %vm588, %v3230
        %3263 = vst.msk [vmem:[#allocation2 + $0x98] sm:$0xff] %vm588, %v3231
        %3264 = vst.msk [vmem:[#allocation2 + $0xa0] sm:$0xff] %vm588, %v3232
        %3265 = vst.msk [vmem:[#allocation2 + $0xa8] sm:$0xff] %vm588, %v3233
        %3266 = vst.msk [vmem:[#allocation2 + $0xb0] sm:$0xff] %vm588, %v3234
        %3267 = vst.msk [vmem:[#allocation2 + $0xb8] sm:$0xff] %vm588, %v3235
        %3268 = vst.msk [vmem:[#allocation2 + $0xc0] sm:$0xff] %vm588, %v3236
        %3269 = vst.msk [vmem:[#allocation2 + $0xc8] sm:$0xff] %vm588, %v3237
        %3270 = vst.msk [vmem:[#allocation2 + $0xd0] sm:$0xff] %vm588, %v3238
        %3271 = vst.msk [vmem:[#allocation2 + $0xd8] sm:$0xff] %vm588, %v3239
        %3272 = vst.msk [vmem:[#allocation2 + $0xe0] sm:$0xff] %vm588, %v3240
        %3273 = vst.msk [vmem:[#allocation2 + $0xe8] sm:$0xff] %vm588, %v3241
        %3274 = vst.msk [vmem:[#allocation2 + $0xf0] sm:$0xff] %vm588, %v3242
        %3275 = vst.msk [vmem:[#allocation2 + $0xf8] sm:$0xff] %vm588, %v3243
        %v3276 = vld [vmem:[#allocation2] sm:$0xff]
        %v3277 = vld [vmem:[#allocation2 + $0x8] sm:$0xff]
        %v3278 = vld [vmem:[#allocation2 + $0x10] sm:$0xff]
        %v3279 = vld [vmem:[#allocation2 + $0x18] sm:$0xff]
        %v3280 = vld [vmem:[#allocation2 + $0x20] sm:$0xff]
        %v3281 = vld [vmem:[#allocation2 + $0x28] sm:$0xff]
        %v3282 = vld [vmem:[#allocation2 + $0x30] sm:$0xff]
        %v3283 = vld [vmem:[#allocation2 + $0x38] sm:$0xff]
        %v3284 = vld [vmem:[#allocation2 + $0x40] sm:$0xff]
        %v3285 = vld [vmem:[#allocation2 + $0x48] sm:$0xff]
        %v3286 = vld [vmem:[#allocation2 + $0x50] sm:$0xff]
        %v3287 = vld [vmem:[#allocation2 + $0x58] sm:$0xff]
        %v3288 = vld [vmem:[#allocation2 + $0x60] sm:$0xff]
        %v3289 = vld [vmem:[#allocation2 + $0x68] sm:$0xff]
        %v3290 = vld [vmem:[#allocation2 + $0x70] sm:$0xff]
        %v3291 = vld [vmem:[#allocation2 + $0x78] sm:$0xff]
        %v3292 = vld [vmem:[#allocation2 + $0x80] sm:$0xff]
        %v3293 = vld [vmem:[#allocation2 + $0x88] sm:$0xff]
        %v3294 = vld [vmem:[#allocation2 + $0x90] sm:$0xff]
        %v3295 = vld [vmem:[#allocation2 + $0x98] sm:$0xff]
        %v3296 = vld [vmem:[#allocation2 + $0xa0] sm:$0xff]
        %v3297 = vld [vmem:[#allocation2 + $0xa8] sm:$0xff]
        %v3298 = vld [vmem:[#allocation2 + $0xb0] sm:$0xff]
        %v3299 = vld [vmem:[#allocation2 + $0xb8] sm:$0xff]
        %v3300 = vld [vmem:[#allocation2 + $0xc0] sm:$0xff]
        %v3301 = vld [vmem:[#allocation2 + $0xc8] sm:$0xff]
        %v3302 = vld [vmem:[#allocation2 + $0xd0] sm:$0xff]
        %v3303 = vld [vmem:[#allocation2 + $0xd8] sm:$0xff]
        %v3304 = vld [vmem:[#allocation2 + $0xe0] sm:$0xff]
        %v3305 = vld [vmem:[#allocation2 + $0xe8] sm:$0xff]
        %v3306 = vld [vmem:[#allocation2 + $0xf0] sm:$0xff]
        %v3307 = vld [vmem:[#allocation2 + $0xf8] sm:$0xff]
        %v3308 = vsel %vm588, %v3276, 0.0
        %v3309 = vsel %vm588, %v3277, 0.0
        %v3310 = vadd.f32 %v3308, %v3309
        %v3311 = vsel %vm588, %v3278, 0.0
        %v3312 = vadd.f32 %v3310, %v3311
        %v3313 = vsel %vm588, %v3279, 0.0
        %v3314 = vadd.f32 %v3312, %v3313
        %v3315 = vsel %vm588, %v3280, 0.0
        %v3316 = vadd.f32 %v3314, %v3315
        %v3317 = vsel %vm588, %v3281, 0.0
        %v3318 = vadd.f32 %v3316, %v3317
        %v3319 = vsel %vm588, %v3282, 0.0
        %v3320 = vadd.f32 %v3318, %v3319
        %v3321 = vsel %vm588, %v3283, 0.0
        %v3322 = vadd.f32 %v3320, %v3321
        %v3323 = vsel %vm588, %v3284, 0.0
        %v3324 = vadd.f32 %v3322, %v3323
        %v3325 = vsel %vm588, %v3285, 0.0
        %v3326 = vadd.f32 %v3324, %v3325
        %v3327 = vsel %vm588, %v3286, 0.0
        %v3328 = vadd.f32 %v3326, %v3327
        %v3329 = vsel %vm588, %v3287, 0.0
        %v3330 = vadd.f32 %v3328, %v3329
        %v3331 = vsel %vm588, %v3288, 0.0
        %v3332 = vadd.f32 %v3330, %v3331
        %v3333 = vsel %vm588, %v3289, 0.0
        %v3334 = vadd.f32 %v3332, %v3333
        %v3335 = vsel %vm588, %v3290, 0.0
        %v3336 = vadd.f32 %v3334, %v3335
        %v3337 = vsel %vm588, %v3291, 0.0
        %v3338 = vadd.f32 %v3336, %v3337
        %v3339 = vsel %vm588, %v3292, 0.0
        %v3340 = vadd.f32 %v3338, %v3339
        %v3341 = vsel %vm588, %v3293, 0.0
        %v3342 = vadd.f32 %v3340, %v3341
        %v3343 = vsel %vm588, %v3294, 0.0
        %v3344 = vadd.f32 %v3342, %v3343
        %v3345 = vsel %vm588, %v3295, 0.0
        %v3346 = vadd.f32 %v3344, %v3345
        %v3347 = vsel %vm588, %v3296, 0.0
        %v3348 = vadd.f32 %v3346, %v3347
        %v3349 = vsel %vm588, %v3297, 0.0
        %v3350 = vadd.f32 %v3348, %v3349
        %v3351 = vsel %vm588, %v3298, 0.0
        %v3352 = vadd.f32 %v3350, %v3351
        %v3353 = vsel %vm588, %v3299, 0.0
        %v3354 = vadd.f32 %v3352, %v3353
        %v3355 = vsel %vm588, %v3300, 0.0
        %v3356 = vadd.f32 %v3354, %v3355
        %v3357 = vsel %vm588, %v3301, 0.0
        %v3358 = vadd.f32 %v3356, %v3357
        %v3359 = vsel %vm588, %v3302, 0.0
        %v3360 = vadd.f32 %v3358, %v3359
        %v3361 = vsel %vm588, %v3303, 0.0
        %v3362 = vadd.f32 %v3360, %v3361
        %v3363 = vsel %vm588, %v3304, 0.0
        %v3364 = vadd.f32 %v3362, %v3363
        %v3365 = vsel %vm588, %v3305, 0.0
        %v3366 = vadd.f32 %v3364, %v3365
        %v3367 = vsel %vm588, %v3306, 0.0
        %v3368 = vadd.f32 %v3366, %v3367
        %v3369 = vsel %vm588, %v3307, 0.0
        %v3370 = vadd.f32 %v3368, %v3369
        %v3371 = vrot.slane %v3370, 4
        %v3372 = vadd.f32 %v3370, %v3371
        %v3373 = vrot.slane %v3372, 2
        %v3374 = vadd.f32 %v3372, %v3373
        %v3375 = vrot.slane %v3374, 1
        %v3376 = vadd.f32 %v3374, %v3375
        %v3377 = vmul.f32 %v3276, %v3276
        %v3378 = vmul.f32 %v3277, %v3277
        %v3379 = vmul.f32 %v3278, %v3278
        %v3380 = vmul.f32 %v3279, %v3279
        %v3381 = vmul.f32 %v3280, %v3280
        %v3382 = vmul.f32 %v3281, %v3281
        %v3383 = vmul.f32 %v3282, %v3282
        %v3384 = vmul.f32 %v3283, %v3283
        %v3385 = vmul.f32 %v3284, %v3284
        %v3386 = vmul.f32 %v3285, %v3285
        %v3387 = vmul.f32 %v3286, %v3286
        %v3388 = vmul.f32 %v3287, %v3287
        %v3389 = vmul.f32 %v3288, %v3288
        %v3390 = vmul.f32 %v3289, %v3289
        %v3391 = vmul.f32 %v3290, %v3290
        %v3392 = vmul.f32 %v3291, %v3291
        %v3393 = vmul.f32 %v3292, %v3292
        %v3394 = vmul.f32 %v3293, %v3293
        %v3395 = vmul.f32 %v3294, %v3294
        %v3396 = vmul.f32 %v3295, %v3295
        %v3397 = vmul.f32 %v3296, %v3296
        %v3398 = vmul.f32 %v3297, %v3297
        %v3399 = vmul.f32 %v3298, %v3298
        %v3400 = vmul.f32 %v3299, %v3299
        %v3401 = vmul.f32 %v3300, %v3300
        %v3402 = vmul.f32 %v3301, %v3301
        %v3403 = vmul.f32 %v3302, %v3302
        %v3404 = vmul.f32 %v3303, %v3303
        %v3405 = vmul.f32 %v3304, %v3304
        %v3406 = vmul.f32 %v3305, %v3305
        %v3407 = vmul.f32 %v3306, %v3306
        %v3408 = vmul.f32 %v3307, %v3307
        %v3409 = vsel %vm588, %v3377, 0.0
        %v3410 = vsel %vm588, %v3378, 0.0
        %v3411 = vadd.f32 %v3409, %v3410
        %v3412 = vsel %vm588, %v3379, 0.0
        %v3413 = vadd.f32 %v3411, %v3412
        %v3414 = vsel %vm588, %v3380, 0.0
        %v3415 = vadd.f32 %v3413, %v3414
        %v3416 = vsel %vm588, %v3381, 0.0
        %v3417 = vadd.f32 %v3415, %v3416
        %v3418 = vsel %vm588, %v3382, 0.0
        %v3419 = vadd.f32 %v3417, %v3418
        %v3420 = vsel %vm588, %v3383, 0.0
        %v3421 = vadd.f32 %v3419, %v3420
        %v3422 = vsel %vm588, %v3384, 0.0
        %v3423 = vadd.f32 %v3421, %v3422
        %v3424 = vsel %vm588, %v3385, 0.0
        %v3425 = vadd.f32 %v3423, %v3424
        %v3426 = vsel %vm588, %v3386, 0.0
        %v3427 = vadd.f32 %v3425, %v3426
        %v3428 = vsel %vm588, %v3387, 0.0
        %v3429 = vadd.f32 %v3427, %v3428
        %v3430 = vsel %vm588, %v3388, 0.0
        %v3431 = vadd.f32 %v3429, %v3430
        %v3432 = vsel %vm588, %v3389, 0.0
        %v3433 = vadd.f32 %v3431, %v3432
        %v3434 = vsel %vm588, %v3390, 0.0
        %v3435 = vadd.f32 %v3433, %v3434
        %v3436 = vsel %vm588, %v3391, 0.0
        %v3437 = vadd.f32 %v3435, %v3436
        %v3438 = vsel %vm588, %v3392, 0.0
        %v3439 = vadd.f32 %v3437, %v3438
        %v3440 = vsel %vm588, %v3393, 0.0
        %v3441 = vadd.f32 %v3439, %v3440
        %v3442 = vsel %vm588, %v3394, 0.0
        %v3443 = vadd.f32 %v3441, %v3442
        %v3444 = vsel %vm588, %v3395, 0.0
        %v3445 = vadd.f32 %v3443, %v3444
        %v3446 = vsel %vm588, %v3396, 0.0
        %v3447 = vadd.f32 %v3445, %v3446
        %v3448 = vsel %vm588, %v3397, 0.0
        %v3449 = vadd.f32 %v3447, %v3448
        %v3450 = vsel %vm588, %v3398, 0.0
        %v3451 = vadd.f32 %v3449, %v3450
        %v3452 = vsel %vm588, %v3399, 0.0
        %v3453 = vadd.f32 %v3451, %v3452
        %v3454 = vsel %vm588, %v3400, 0.0
        %v3455 = vadd.f32 %v3453, %v3454
        %v3456 = vsel %vm588, %v3401, 0.0
        %v3457 = vadd.f32 %v3455, %v3456
        %v3458 = vsel %vm588, %v3402, 0.0
        %v3459 = vadd.f32 %v3457, %v3458
        %v3460 = vsel %vm588, %v3403, 0.0
        %v3461 = vadd.f32 %v3459, %v3460
        %v3462 = vsel %vm588, %v3404, 0.0
        %v3463 = vadd.f32 %v3461, %v3462
        %v3464 = vsel %vm588, %v3405, 0.0
        %v3465 = vadd.f32 %v3463, %v3464
        %v3466 = vsel %vm588, %v3406, 0.0
        %v3467 = vadd.f32 %v3465, %v3466
        %v3468 = vsel %vm588, %v3407, 0.0
        %v3469 = vadd.f32 %v3467, %v3468
        %v3470 = vsel %vm588, %v3408, 0.0
        %v3471 = vadd.f32 %v3469, %v3470
        %v3472 = vrot.slane %v3471, 4
        %v3473 = vadd.f32 %v3471, %v3472
        %v3474 = vrot.slane %v3473, 2
        %v3475 = vadd.f32 %v3473, %v3474
        %v3476 = vrot.slane %v3475, 1
        %v3477 = vadd.f32 %v3475, %v3476
        %v3478 = vmul.f32 %v3376, 0.00390625
        %v3479 = vmul.f32 %v3477, 0.00390625
        %v3480 = vmul.f32 %v3478, %v3478
        %v3481 = vsub.f32 %v3479, %v3480
        %v3482 = vmax.f32 %v3481, 0.0
        %v3483 = vsub.f32 %v3276, %v3478
        %v3484 = vsub.f32 %v3277, %v3478
        %v3485 = vsub.f32 %v3278, %v3478
        %v3486 = vsub.f32 %v3279, %v3478
        %v3487 = vsub.f32 %v3280, %v3478
        %v3488 = vsub.f32 %v3281, %v3478
        %v3489 = vsub.f32 %v3282, %v3478
        %v3490 = vsub.f32 %v3283, %v3478
        %v3491 = vsub.f32 %v3284, %v3478
        %v3492 = vsub.f32 %v3285, %v3478
        %v3493 = vsub.f32 %v3286, %v3478
        %v3494 = vsub.f32 %v3287, %v3478
        %v3495 = vsub.f32 %v3288, %v3478
        %v3496 = vsub.f32 %v3289, %v3478
        %v3497 = vsub.f32 %v3290, %v3478
        %v3498 = vsub.f32 %v3291, %v3478
        %v3499 = vsub.f32 %v3292, %v3478
        %v3500 = vsub.f32 %v3293, %v3478
        %v3501 = vsub.f32 %v3294, %v3478
        %v3502 = vsub.f32 %v3295, %v3478
        %v3503 = vsub.f32 %v3296, %v3478
        %v3504 = vsub.f32 %v3297, %v3478
        %v3505 = vsub.f32 %v3298, %v3478
        %v3506 = vsub.f32 %v3299, %v3478
        %v3507 = vsub.f32 %v3300, %v3478
        %v3508 = vsub.f32 %v3301, %v3478
        %v3509 = vsub.f32 %v3302, %v3478
        %v3510 = vsub.f32 %v3303, %v3478
        %v3511 = vsub.f32 %v3304, %v3478
        %v3512 = vsub.f32 %v3305, %v3478
        %v3513 = vsub.f32 %v3306, %v3478
        %v3514 = vsub.f32 %v3307, %v3478
        %v3515 = vadd.f32 %v3482, 1e-05
        %v3516 = vrsqrt.pop %v3515
        %v3517 = vmul.f32 %v3516, %v3515
        %v3518 = vmul.f32 %v3517, %v3516
        %v3519 = vmul.f32 0.5, %v3518
        %v3520 = vsub.f32 1.5, %v3519
        %v3521 = vmul.f32 %v3516, %v3520
        %vm3522 = vweird.f32 %v3515
        %vm3523 = vweird.f32 %v3516
        %vm3524 = vmor %vm3522, %vm3523
        %v3525 = vsel %vm3524, %v3516, %v3521
        %v3526 = vmul.f32 %v3483, %v3525
        %v3527 = vmul.f32 %v3484, %v3525
        %v3528 = vmul.f32 %v3485, %v3525
        %v3529 = vmul.f32 %v3486, %v3525
        %v3530 = vmul.f32 %v3487, %v3525
        %v3531 = vmul.f32 %v3488, %v3525
        %v3532 = vmul.f32 %v3489, %v3525
        %v3533 = vmul.f32 %v3490, %v3525
        %v3534 = vmul.f32 %v3491, %v3525
        %v3535 = vmul.f32 %v3492, %v3525
        %v3536 = vmul.f32 %v3493, %v3525
        %v3537 = vmul.f32 %v3494, %v3525
        %v3538 = vmul.f32 %v3495, %v3525
        %v3539 = vmul.f32 %v3496, %v3525
        %v3540 = vmul.f32 %v3497, %v3525
        %v3541 = vmul.f32 %v3498, %v3525
        %v3542 = vmul.f32 %v3499, %v3525
        %v3543 = vmul.f32 %v3500, %v3525
        %v3544 = vmul.f32 %v3501, %v3525
        %v3545 = vmul.f32 %v3502, %v3525
        %v3546 = vmul.f32 %v3503, %v3525
        %v3547 = vmul.f32 %v3504, %v3525
        %v3548 = vmul.f32 %v3505, %v3525
        %v3549 = vmul.f32 %v3506, %v3525
        %v3550 = vmul.f32 %v3507, %v3525
        %v3551 = vmul.f32 %v3508, %v3525
        %v3552 = vmul.f32 %v3509, %v3525
        %v3553 = vmul.f32 %v3510, %v3525
        %v3554 = vmul.f32 %v3511, %v3525
        %v3555 = vmul.f32 %v3512, %v3525
        %v3556 = vmul.f32 %v3513, %v3525
        %v3557 = vmul.f32 %v3514, %v3525
        %v3558 = vmax.f32 %v3526, 0.0
        %v3559 = vmax.f32 %v3527, 0.0
        %v3560 = vmax.f32 %v3528, 0.0
        %v3561 = vmax.f32 %v3529, 0.0
        %v3562 = vmax.f32 %v3530, 0.0
        %v3563 = vmax.f32 %v3531, 0.0
        %v3564 = vmax.f32 %v3532, 0.0
        %v3565 = vmax.f32 %v3533, 0.0
        %v3566 = vmax.f32 %v3534, 0.0
        %v3567 = vmax.f32 %v3535, 0.0
        %v3568 = vmax.f32 %v3536, 0.0
        %v3569 = vmax.f32 %v3537, 0.0
        %v3570 = vmax.f32 %v3538, 0.0
        %v3571 = vmax.f32 %v3539, 0.0
        %v3572 = vmax.f32 %v3540, 0.0
        %v3573 = vmax.f32 %v3541, 0.0
        %v3574 = vmax.f32 %v3542, 0.0
        %v3575 = vmax.f32 %v3543, 0.0
        %v3576 = vmax.f32 %v3544, 0.0
        %v3577 = vmax.f32 %v3545, 0.0
        %v3578 = vmax.f32 %v3546, 0.0
        %v3579 = vmax.f32 %v3547, 0.0
        %v3580 = vmax.f32 %v3548, 0.0
        %v3581 = vmax.f32 %v3549, 0.0
        %v3582 = vmax.f32 %v3550, 0.0
        %v3583 = vmax.f32 %v3551, 0.0
        %v3584 = vmax.f32 %v3552, 0.0
        %v3585 = vmax.f32 %v3553, 0.0
        %v3586 = vmax.f32 %v3554, 0.0
        %v3587 = vmax.f32 %v3555, 0.0
        %v3588 = vmax.f32 %v3556, 0.0
        %v3589 = vmax.f32 %v3557, 0.0
        %v3590 = vpack.c.bf16 %v3558, %v3558
        %v3591 = vpack.c.bf16 %v3559, %v3559
        %v3592 = vpack.c.bf16 %v3560, %v3560
        %v3593 = vpack.c.bf16 %v3561, %v3561
        %v3594 = vpack.c.bf16 %v3562, %v3562
        %v3595 = vpack.c.bf16 %v3563, %v3563
        %v3596 = vpack.c.bf16 %v3564, %v3564
        %v3597 = vpack.c.bf16 %v3565, %v3565
        %v3598 = vpack.c.bf16 %v3566, %v3566
        %v3599 = vpack.c.bf16 %v3567, %v3567
        %v3600 = vpack.c.bf16 %v3568, %v3568
        %v3601 = vpack.c.bf16 %v3569, %v3569
        %v3602 = vpack.c.bf16 %v3570, %v3570
        %v3603 = vpack.c.bf16 %v3571, %v3571
        %v3604 = vpack.c.bf16 %v3572, %v3572
        %v3605 = vpack.c.bf16 %v3573, %v3573
        %v3606 = vpack.c.bf16 %v3574, %v3574
        %v3607 = vpack.c.bf16 %v3575, %v3575
        %v3608 = vpack.c.bf16 %v3576, %v3576
        %v3609 = vpack.c.bf16 %v3577, %v3577
        %v3610 = vpack.c.bf16 %v3578, %v3578
        %v3611 = vpack.c.bf16 %v3579, %v3579
        %v3612 = vpack.c.bf16 %v3580, %v3580
        %v3613 = vpack.c.bf16 %v3581, %v3581
        %v3614 = vpack.c.bf16 %v3582, %v3582
        %v3615 = vpack.c.bf16 %v3583, %v3583
        %v3616 = vpack.c.bf16 %v3584, %v3584
        %v3617 = vpack.c.bf16 %v3585, %v3585
        %v3618 = vpack.c.bf16 %v3586, %v3586
        %v3619 = vpack.c.bf16 %v3587, %v3587
        %v3620 = vpack.c.bf16 %v3588, %v3588
        %v3621 = vpack.c.bf16 %v3589, %v3589
        %v3638 = vunpack.c.l.b16 %v3592
        %v3639 = vunpack.c.l.b16 %v3590
        %v3640 = vunpack.c.l.b16 %v3594
        %v3641 = vunpack.c.l.b16 %v3596
        %v3642 = vunpack.c.l.b16 %v3598
        %v3643 = vunpack.c.l.b16 %v3600
        %v3644 = vunpack.c.l.b16 %v3602
        %v3645 = vunpack.c.l.b16 %v3604
        %v3646 = vunpack.c.l.b16 %v3606
        %v3647 = vunpack.c.l.b16 %v3608
        %v3648 = vunpack.c.l.b16 %v3610
        %v3649 = vunpack.c.l.b16 %v3612
        %v3650 = vunpack.c.l.b16 %v3614
        %v3651 = vunpack.c.l.b16 %v3616
        %v3652 = vunpack.c.l.b16 %v3618
        %v3653 = vunpack.c.l.b16 %v3620
        %v3654 = vpack.c.b16 %v3638, %v3638
        %v3655 = vpack.c.b16 %v3639, %v3639
        %v3656 = vpack.c.b16 %v3640, %v3640
        %v3657 = vpack.c.b16 %v3641, %v3641
        %v3658 = vpack.c.b16 %v3642, %v3642
        %v3659 = vpack.c.b16 %v3643, %v3643
        %v3660 = vpack.c.b16 %v3644, %v3644
        %v3661 = vpack.c.b16 %v3645, %v3645
        %v3662 = vpack.c.b16 %v3646, %v3646
        %v3663 = vpack.c.b16 %v3647, %v3647
        %v3664 = vpack.c.b16 %v3648, %v3648
        %v3665 = vpack.c.b16 %v3649, %v3649
        %v3666 = vpack.c.b16 %v3650, %v3650
        %v3667 = vpack.c.b16 %v3651, %v3651
        %v3668 = vpack.c.b16 %v3652, %v3652
        %v3669 = vpack.c.b16 %v3653, %v3653
        %v3671 = vshrl.u32 %v3654, 16
        %v3674 = vshrl.u32 %v3655, 16
        %v3677 = vshrl.u32 %v3656, 16
        %v3680 = vshrl.u32 %v3657, 16
        %v3683 = vshrl.u32 %v3658, 16
        %v3686 = vshrl.u32 %v3659, 16
        %v3689 = vshrl.u32 %v3660, 16
        %v3692 = vshrl.u32 %v3661, 16
        %v3695 = vshrl.u32 %v3662, 16
        %v3698 = vshrl.u32 %v3663, 16
        %v3701 = vshrl.u32 %v3664, 16
        %v3704 = vshrl.u32 %v3665, 16
        %v3707 = vshrl.u32 %v3666, 16
        %v3710 = vshrl.u32 %v3667, 16
        %v3713 = vshrl.u32 %v3668, 16
        %v3716 = vshrl.u32 %v3669, 16
        %v3750 = vunpack.c.l.b16 %v3593
        %v3751 = vunpack.c.l.b16 %v3591
        %v3752 = vunpack.c.l.b16 %v3595
        %v3753 = vunpack.c.l.b16 %v3597
        %v3754 = vunpack.c.l.b16 %v3599
        %v3755 = vunpack.c.l.b16 %v3601
        %v3756 = vunpack.c.l.b16 %v3603
        %v3757 = vunpack.c.l.b16 %v3605
        %v3758 = vunpack.c.l.b16 %v3607
        %v3759 = vunpack.c.l.b16 %v3609
        %v3760 = vunpack.c.l.b16 %v3611
        %v3761 = vunpack.c.l.b16 %v3613
        %v3762 = vunpack.c.l.b16 %v3615
        %v3763 = vunpack.c.l.b16 %v3617
        %v3764 = vunpack.c.l.b16 %v3619
        %v3765 = vunpack.c.l.b16 %v3621
        %v3766 = vpack.c.b16 %v3750, %v3638
        %v3767 = vpack.c.b16 %v3751, %v3639
        %v3768 = vpack.c.b16 %v3752, %v3640
        %v3769 = vpack.c.b16 %v3753, %v3641
        %v3770 = vpack.c.b16 %v3754, %v3642
        %v3771 = vpack.c.b16 %v3755, %v3643
        %v3772 = vpack.c.b16 %v3756, %v3644
        %v3773 = vpack.c.b16 %v3757, %v3645
        %v3774 = vpack.c.b16 %v3758, %v3646
        %v3775 = vpack.c.b16 %v3759, %v3647
        %v3776 = vpack.c.b16 %v3760, %v3648
        %v3777 = vpack.c.b16 %v3761, %v3649
        %v3778 = vpack.c.b16 %v3762, %v3650
        %v3779 = vpack.c.b16 %v3763, %v3651
        %v3780 = vpack.c.b16 %v3764, %v3652
        %v3781 = vpack.c.b16 %v3765, %v3653
        %v3783 = vshrl.u32 %v3766, 16
        %v3785 = vrot.slane %v3783, 7
        %v3786 = vshll.u32 %v3766, 16
        %v3788 = vor.u32 %v3785, %v3786
        %v3790 = vshrl.u32 %v3767, 16
        %v3792 = vrot.slane %v3790, 7
        %v3793 = vshll.u32 %v3767, 16
        %v3795 = vor.u32 %v3792, %v3793
        %v3797 = vshrl.u32 %v3768, 16
        %v3799 = vrot.slane %v3797, 7
        %v3800 = vshll.u32 %v3768, 16
        %v3802 = vor.u32 %v3799, %v3800
        %v3804 = vshrl.u32 %v3769, 16
        %v3806 = vrot.slane %v3804, 7
        %v3807 = vshll.u32 %v3769, 16
        %v3809 = vor.u32 %v3806, %v3807
        %v3811 = vshrl.u32 %v3770, 16
        %v3813 = vrot.slane %v3811, 7
        %v3814 = vshll.u32 %v3770, 16
        %v3816 = vor.u32 %v3813, %v3814
        %v3818 = vshrl.u32 %v3771, 16
        %v3820 = vrot.slane %v3818, 7
        %v3821 = vshll.u32 %v3771, 16
        %v3823 = vor.u32 %v3820, %v3821
        %v3825 = vshrl.u32 %v3772, 16
        %v3827 = vrot.slane %v3825, 7
        %v3828 = vshll.u32 %v3772, 16
        %v3830 = vor.u32 %v3827, %v3828
        %v3832 = vshrl.u32 %v3773, 16
        %v3834 = vrot.slane %v3832, 7
        %v3835 = vshll.u32 %v3773, 16
        %v3837 = vor.u32 %v3834, %v3835
        %v3839 = vshrl.u32 %v3774, 16
        %v3841 = vrot.slane %v3839, 7
        %v3842 = vshll.u32 %v3774, 16
        %v3844 = vor.u32 %v3841, %v3842
        %v3846 = vshrl.u32 %v3775, 16
        %v3848 = vrot.slane %v3846, 7
        %v3849 = vshll.u32 %v3775, 16
        %v3851 = vor.u32 %v3848, %v3849
        %v3853 = vshrl.u32 %v3776, 16
        %v3855 = vrot.slane %v3853, 7
        %v3856 = vshll.u32 %v3776, 16
        %v3858 = vor.u32 %v3855, %v3856
        %v3860 = vshrl.u32 %v3777, 16
        %v3862 = vrot.slane %v3860, 7
        %v3863 = vshll.u32 %v3777, 16
        %v3865 = vor.u32 %v3862, %v3863
        %v3867 = vshrl.u32 %v3778, 16
        %v3869 = vrot.slane %v3867, 7
        %v3870 = vshll.u32 %v3778, 16
        %v3872 = vor.u32 %v3869, %v3870
        %v3874 = vshrl.u32 %v3779, 16
        %v3876 = vrot.slane %v3874, 7
        %v3877 = vshll.u32 %v3779, 16
        %v3879 = vor.u32 %v3876, %v3877
        %v3881 = vshrl.u32 %v3780, 16
        %v3883 = vrot.slane %v3881, 7
        %v3884 = vshll.u32 %v3780, 16
        %v3886 = vor.u32 %v3883, %v3884
        %v3888 = vshrl.u32 %v3781, 16
        %v3890 = vrot.slane %v3888, 7
        %v3891 = vshll.u32 %v3781, 16
        %v3893 = vor.u32 %v3890, %v3891
        %v3926 = vpack.c.b16 %v3750, %v3750
        %v3927 = vpack.c.b16 %v3751, %v3751
        %v3928 = vpack.c.b16 %v3752, %v3752
        %v3929 = vpack.c.b16 %v3753, %v3753
        %v3930 = vpack.c.b16 %v3754, %v3754
        %v3931 = vpack.c.b16 %v3755, %v3755
        %v3932 = vpack.c.b16 %v3756, %v3756
        %v3933 = vpack.c.b16 %v3757, %v3757
        %v3934 = vpack.c.b16 %v3758, %v3758
        %v3935 = vpack.c.b16 %v3759, %v3759
        %v3936 = vpack.c.b16 %v3760, %v3760
        %v3937 = vpack.c.b16 %v3761, %v3761
        %v3938 = vpack.c.b16 %v3762, %v3762
        %v3939 = vpack.c.b16 %v3763, %v3763
        %v3940 = vpack.c.b16 %v3764, %v3764
        %v3941 = vpack.c.b16 %v3765, %v3765
        %v3943 = vshll.u32 %v3926, 16
        %v3945 = vrot.slane %v3943, 3
        %v3947 = vshll.u32 %v3927, 16
        %v3949 = vrot.slane %v3947, 3
        %v3951 = vshll.u32 %v3928, 16
        %v3953 = vrot.slane %v3951, 3
        %v3955 = vshll.u32 %v3929, 16
        %v3957 = vrot.slane %v3955, 3
        %v3959 = vshll.u32 %v3930, 16
        %v3961 = vrot.slane %v3959, 3
        %v3963 = vshll.u32 %v3931, 16
        %v3965 = vrot.slane %v3963, 3
        %v3967 = vshll.u32 %v3932, 16
        %v3969 = vrot.slane %v3967, 3
        %v3971 = vshll.u32 %v3933, 16
        %v3973 = vrot.slane %v3971, 3
        %v3975 = vshll.u32 %v3934, 16
        %v3977 = vrot.slane %v3975, 3
        %v3979 = vshll.u32 %v3935, 16
        %v3981 = vrot.slane %v3979, 3
        %v3983 = vshll.u32 %v3936, 16
        %v3985 = vrot.slane %v3983, 3
        %v3987 = vshll.u32 %v3937, 16
        %v3989 = vrot.slane %v3987, 3
        %v3991 = vshll.u32 %v3938, 16
        %v3993 = vrot.slane %v3991, 3
        %v3995 = vshll.u32 %v3939, 16
        %v3997 = vrot.slane %v3995, 3
        %v3999 = vshll.u32 %v3940, 16
        %v4001 = vrot.slane %v3999, 3
        %v4003 = vshll.u32 %v3941, 16
        %v4005 = vrot.slane %v4003, 3
        %vm4022 = vcmask 1040384
        %vm4023 = vsmask.f32 256
        %vm4024 = vmand %vm4022, %vm4023
        %v4025 = vsel %vm4024, %v3671, %v3788
        %v4026 = vsel %vm4024, %v3674, %v3795
        %v4027 = vsel %vm4024, %v3677, %v3802
        %v4028 = vsel %vm4024, %v3680, %v3809
        %v4029 = vsel %vm4024, %v3683, %v3816
        %v4030 = vsel %vm4024, %v3686, %v3823
        %v4031 = vsel %vm4024, %v3689, %v3830
        %v4032 = vsel %vm4024, %v3692, %v3837
        %v4033 = vsel %vm4024, %v3695, %v3844
        %v4034 = vsel %vm4024, %v3698, %v3851
        %v4035 = vsel %vm4024, %v3701, %v3858
        %v4036 = vsel %vm4024, %v3704, %v3865
        %v4037 = vsel %vm4024, %v3707, %v3872
        %v4038 = vsel %vm4024, %v3710, %v3879
        %v4039 = vsel %vm4024, %v3713, %v3886
        %v4040 = vsel %vm4024, %v3716, %v3893
        %v4041 = vsel %vm4024, %v3785, %v3945
        %v4042 = vsel %vm4024, %v3792, %v3949
        %v4043 = vsel %vm4024, %v3799, %v3953
        %v4044 = vsel %vm4024, %v3806, %v3957
        %v4045 = vsel %vm4024, %v3813, %v3961
        %v4046 = vsel %vm4024, %v3820, %v3965
        %v4047 = vsel %vm4024, %v3827, %v3969
        %v4048 = vsel %vm4024, %v3834, %v3973
        %v4049 = vsel %vm4024, %v3841, %v3977
        %v4050 = vsel %vm4024, %v3848, %v3981
        %v4051 = vsel %vm4024, %v3855, %v3985
        %v4052 = vsel %vm4024, %v3862, %v3989
        %v4053 = vsel %vm4024, %v3869, %v3993
        %v4054 = vsel %vm4024, %v3876, %v3997
        %v4055 = vsel %vm4024, %v3883, %v4001
        %v4056 = vsel %vm4024, %v3890, %v4005
        %v4057 = vld [vmem:[%s4] sm:$0x1]
        %v4059 = vperm.slane %v4057, 0
        %4061 = vst.msk [vmem:[#allocation2] sm:$0xff] %vm588, %v4059
        %4062 = vst.msk [vmem:[#allocation2 + $0x8] sm:$0xff] %vm588, %v4059
        %4063 = vst.msk [vmem:[#allocation2 + $0x10] sm:$0xff] %vm588, %v4059
        %4064 = vst.msk [vmem:[#allocation2 + $0x18] sm:$0xff] %vm588, %v4059
        %4065 = vst.msk [vmem:[#allocation2 + $0x20] sm:$0xff] %vm588, %v4059
        %4066 = vst.msk [vmem:[#allocation2 + $0x28] sm:$0xff] %vm588, %v4059
        %4067 = vst.msk [vmem:[#allocation2 + $0x30] sm:$0xff] %vm588, %v4059
        %4068 = vst.msk [vmem:[#allocation2 + $0x38] sm:$0xff] %vm588, %v4059
        %4069 = vst.msk [vmem:[#allocation2 + $0x40] sm:$0xff] %vm588, %v4059
        %4070 = vst.msk [vmem:[#allocation2 + $0x48] sm:$0xff] %vm588, %v4059
        %4071 = vst.msk [vmem:[#allocation2 + $0x50] sm:$0xff] %vm588, %v4059
        %4072 = vst.msk [vmem:[#allocation2 + $0x58] sm:$0xff] %vm588, %v4059
        %4073 = vst.msk [vmem:[#allocation2 + $0x60] sm:$0xff] %vm588, %v4059
        %4074 = vst.msk [vmem:[#allocation2 + $0x68] sm:$0xff] %vm588, %v4059
        %4075 = vst.msk [vmem:[#allocation2 + $0x70] sm:$0xff] %vm588, %v4059
        %4076 = vst.msk [vmem:[#allocation2 + $0x78] sm:$0xff] %vm588, %v4059
        %4077 = vst.msk [vmem:[#allocation2 + $0x80] sm:$0xff] %vm588, %v4059
        %4078 = vst.msk [vmem:[#allocation2 + $0x88] sm:$0xff] %vm588, %v4059
        %4079 = vst.msk [vmem:[#allocation2 + $0x90] sm:$0xff] %vm588, %v4059
        %4080 = vst.msk [vmem:[#allocation2 + $0x98] sm:$0xff] %vm588, %v4059
        %4081 = vst.msk [vmem:[#allocation2 + $0xa0] sm:$0xff] %vm588, %v4059
        %4082 = vst.msk [vmem:[#allocation2 + $0xa8] sm:$0xff] %vm588, %v4059
        %4083 = vst.msk [vmem:[#allocation2 + $0xb0] sm:$0xff] %vm588, %v4059
        %4084 = vst.msk [vmem:[#allocation2 + $0xb8] sm:$0xff] %vm588, %v4059
        %4085 = vst.msk [vmem:[#allocation2 + $0xc0] sm:$0xff] %vm588, %v4059
        %4086 = vst.msk [vmem:[#allocation2 + $0xc8] sm:$0xff] %vm588, %v4059
        %4087 = vst.msk [vmem:[#allocation2 + $0xd0] sm:$0xff] %vm588, %v4059
        %4088 = vst.msk [vmem:[#allocation2 + $0xd8] sm:$0xff] %vm588, %v4059
        %4089 = vst.msk [vmem:[#allocation2 + $0xe0] sm:$0xff] %vm588, %v4059
        %4090 = vst.msk [vmem:[#allocation2 + $0xe8] sm:$0xff] %vm588, %v4059
        %4091 = vst.msk [vmem:[#allocation2 + $0xf0] sm:$0xff] %vm588, %v4059
        %4092 = vst.msk [vmem:[#allocation2 + $0xf8] sm:$0xff] %vm588, %v4059
        %v4093 = vld [vmem:[#allocation2] sm:$0xff]
        %v4094 = vld [vmem:[#allocation2 + $0x8] sm:$0xff]
        %v4095 = vld [vmem:[#allocation2 + $0x10] sm:$0xff]
        %v4096 = vld [vmem:[#allocation2 + $0x18] sm:$0xff]
        %v4097 = vld [vmem:[#allocation2 + $0x20] sm:$0xff]
        %v4098 = vld [vmem:[#allocation2 + $0x28] sm:$0xff]
        %v4099 = vld [vmem:[#allocation2 + $0x30] sm:$0xff]
        %v4100 = vld [vmem:[#allocation2 + $0x38] sm:$0xff]
        %v4101 = vld [vmem:[#allocation2 + $0x40] sm:$0xff]
        %v4102 = vld [vmem:[#allocation2 + $0x48] sm:$0xff]
        %v4103 = vld [vmem:[#allocation2 + $0x50] sm:$0xff]
        %v4104 = vld [vmem:[#allocation2 + $0x58] sm:$0xff]
        %v4105 = vld [vmem:[#allocation2 + $0x60] sm:$0xff]
        %v4106 = vld [vmem:[#allocation2 + $0x68] sm:$0xff]
        %v4107 = vld [vmem:[#allocation2 + $0x70] sm:$0xff]
        %v4108 = vld [vmem:[#allocation2 + $0x78] sm:$0xff]
        %v4109 = vld [vmem:[#allocation2 + $0x80] sm:$0xff]
        %v4110 = vld [vmem:[#allocation2 + $0x88] sm:$0xff]
        %v4111 = vld [vmem:[#allocation2 + $0x90] sm:$0xff]
        %v4112 = vld [vmem:[#allocation2 + $0x98] sm:$0xff]
        %v4113 = vld [vmem:[#allocation2 + $0xa0] sm:$0xff]
        %v4114 = vld [vmem:[#allocation2 + $0xa8] sm:$0xff]
        %v4115 = vld [vmem:[#allocation2 + $0xb0] sm:$0xff]
        %v4116 = vld [vmem:[#allocation2 + $0xb8] sm:$0xff]
        %v4117 = vld [vmem:[#allocation2 + $0xc0] sm:$0xff]
        %v4118 = vld [vmem:[#allocation2 + $0xc8] sm:$0xff]
        %v4119 = vld [vmem:[#allocation2 + $0xd0] sm:$0xff]
        %v4120 = vld [vmem:[#allocation2 + $0xd8] sm:$0xff]
        %v4121 = vld [vmem:[#allocation2 + $0xe0] sm:$0xff]
        %v4122 = vld [vmem:[#allocation2 + $0xe8] sm:$0xff]
        %v4123 = vld [vmem:[#allocation2 + $0xf0] sm:$0xff]
        %v4124 = vld [vmem:[#allocation2 + $0xf8] sm:$0xff]
        %v4125 = vld [vmem:[#allocation8] sm:$0xf]
        %v4126 = vld [vmem:[#allocation8 + $0x4] sm:$0xf]
        %v4127 = vld [vmem:[#allocation8 + $0x8] sm:$0xf]
        %v4128 = vld [vmem:[#allocation8 + $0xc] sm:$0xf]
        %v4133 = vunpack.c.l.b16 %v4125
        %v4134 = vunpack.c.l.b16 %v4126
        %v4135 = vunpack.c.l.b16 %v4127
        %v4136 = vunpack.c.l.b16 %v4128
        %v4137 = vpack.c.b16 %v4134, %v4133
        %v4138 = vpack.c.b16 %v4136, %v4135
        %v4142 = vsel %vm588, %v4025, 0
        %v4145 = vsel %vm588, %v4026, 0
        %v4148 = vsel %vm588, %v4027, 0
        %v4151 = vsel %vm588, %v4028, 0
        %v4154 = vsel %vm588, %v4029, 0
        %v4157 = vsel %vm588, %v4030, 0
        %v4160 = vsel %vm588, %v4031, 0
        %v4163 = vsel %vm588, %v4032, 0
        %v4166 = vsel %vm588, %v4033, 0
        %v4169 = vsel %vm588, %v4034, 0
        %v4172 = vsel %vm588, %v4035, 0
        %v4175 = vsel %vm588, %v4036, 0
        %v4178 = vsel %vm588, %v4037, 0
        %v4181 = vsel %vm588, %v4038, 0
        %v4184 = vsel %vm588, %v4039, 0
        %4186 = vmatpush.bf16.msra.mxu0 0
        %4187 = vmatpush.bf16.msra.mxu0 0
        %4188 = vmatpush.bf16.msra.mxu0 0
        %4189 = vmatpush.bf16.msra.mxu0 0
        %4190 = vmatpush.bf16.msra.mxu0 0
        %4191 = vmatpush.bf16.msra.mxu0 0
        %4192 = vmatpush.bf16.msra.mxu0 %v4138
        %4193 = vmatpush.bf16.msra.mxu0 %v4137
        %4194 = vmatmul.bf16.gmra.mxu0 %v4142
        %v4195 = vpop.f32.mrf.mxu0
        %v4196 = vadd.f32 0.0, %v4195
        %v4197 = vpop.f32.mrf.mxu0
        %v4198 = vadd.f32 0.0, %v4197
        %4199 = vmatmul.bf16.gmra.mxu0 %v4145
        %v4200 = vpop.f32.mrf.mxu0
        %v4201 = vadd.f32 0.0, %v4200
        %v4202 = vpop.f32.mrf.mxu0
        %v4203 = vadd.f32 0.0, %v4202
        %4204 = vmatmul.bf16.gmra.mxu0 %v4142
        %v4205 = vpop.f32.mrf.mxu0
        %v4206 = vadd.f32 0.0, %v4205
        %v4207 = vpop.f32.mrf.mxu0
        %v4208 = vadd.f32 0.0, %v4207
        %4209 = vmatmul.bf16.gmra.mxu0 %v4148
        %v4210 = vpop.f32.mrf.mxu0
        %v4211 = vadd.f32 0.0, %v4210
        %v4212 = vpop.f32.mrf.mxu0
        %v4213 = vadd.f32 0.0, %v4212
        %4214 = vmatmul.bf16.gmra.mxu0 %v4151
        %v4215 = vpop.f32.mrf.mxu0
        %v4216 = vadd.f32 0.0, %v4215
        %v4217 = vpop.f32.mrf.mxu0
        %v4218 = vadd.f32 0.0, %v4217
        %4219 = vmatmul.bf16.gmra.mxu0 %v4154
        %v4220 = vpop.f32.mrf.mxu0
        %v4221 = vadd.f32 0.0, %v4220
        %v4222 = vpop.f32.mrf.mxu0
        %v4223 = vadd.f32 0.0, %v4222
        %4224 = vmatmul.bf16.gmra.mxu0 %v4157
        %v4225 = vpop.f32.mrf.mxu0
        %v4226 = vadd.f32 0.0, %v4225
        %v4227 = vpop.f32.mrf.mxu0
        %v4228 = vadd.f32 0.0, %v4227
        %4229 = vmatmul.bf16.gmra.mxu0 %v4160
        %v4230 = vpop.f32.mrf.mxu0
        %v4231 = vadd.f32 0.0, %v4230
        %v4232 = vpop.f32.mrf.mxu0
        %v4233 = vadd.f32 0.0, %v4232
        %4234 = vmatmul.bf16.gmra.mxu0 %v4163
        %v4235 = vpop.f32.mrf.mxu0
        %v4236 = vadd.f32 0.0, %v4235
        %v4237 = vpop.f32.mrf.mxu0
        %v4238 = vadd.f32 0.0, %v4237
        %4239 = vmatmul.bf16.gmra.mxu0 %v4166
        %v4240 = vpop.f32.mrf.mxu0
        %v4241 = vadd.f32 0.0, %v4240
        %v4242 = vpop.f32.mrf.mxu0
        %v4243 = vadd.f32 0.0, %v4242
        %4244 = vmatmul.bf16.gmra.mxu0 %v4169
        %v4245 = vpop.f32.mrf.mxu0
        %v4246 = vadd.f32 0.0, %v4245
        %v4247 = vpop.f32.mrf.mxu0
        %v4248 = vadd.f32 0.0, %v4247
        %4249 = vmatmul.bf16.gmra.mxu0 %v4172
        %v4250 = vpop.f32.mrf.mxu0
        %v4251 = vadd.f32 0.0, %v4250
        %v4252 = vpop.f32.mrf.mxu0
        %v4253 = vadd.f32 0.0, %v4252
        %4254 = vmatmul.bf16.gmra.mxu0 %v4175
        %v4255 = vpop.f32.mrf.mxu0
        %v4256 = vadd.f32 0.0, %v4255
        %v4257 = vpop.f32.mrf.mxu0
        %v4258 = vadd.f32 0.0, %v4257
        %4259 = vmatmul.bf16.gmra.mxu0 %v4178
        %v4260 = vpop.f32.mrf.mxu0
        %v4261 = vadd.f32 0.0, %v4260
        %v4262 = vpop.f32.mrf.mxu0
        %v4263 = vadd.f32 0.0, %v4262
        %4264 = vmatmul.bf16.gmra.mxu0 %v4181
        %v4265 = vpop.f32.mrf.mxu0
        %v4266 = vadd.f32 0.0, %v4265
        %v4267 = vpop.f32.mrf.mxu0
        %v4268 = vadd.f32 0.0, %v4267
        %4269 = vmatmul.bf16.gmra.mxu0 %v4184
        %v4270 = vpop.f32.mrf.mxu0
        %v4271 = vadd.f32 0.0, %v4270
        %v4272 = vpop.f32.mrf.mxu0
        %v4273 = vadd.f32 0.0, %v4272
        %4274 = vdwg.mxu0
        %v4275 = vadd.f32 %v4093, %v4196
        %v4276 = vadd.f32 %v4094, %v4198
        %v4277 = vadd.f32 %v4095, %v4201
        %v4278 = vadd.f32 %v4096, %v4203
        %v4279 = vadd.f32 %v4097, %v4206
        %v4280 = vadd.f32 %v4098, %v4208
        %v4281 = vadd.f32 %v4099, %v4211
        %v4282 = vadd.f32 %v4100, %v4213
        %v4283 = vadd.f32 %v4101, %v4216
        %v4284 = vadd.f32 %v4102, %v4218
        %v4285 = vadd.f32 %v4103, %v4221
        %v4286 = vadd.f32 %v4104, %v4223
        %v4287 = vadd.f32 %v4105, %v4226
        %v4288 = vadd.f32 %v4106, %v4228
        %v4289 = vadd.f32 %v4107, %v4231
        %v4290 = vadd.f32 %v4108, %v4233
        %v4291 = vadd.f32 %v4109, %v4236
        %v4292 = vadd.f32 %v4110, %v4238
        %v4293 = vadd.f32 %v4111, %v4241
        %v4294 = vadd.f32 %v4112, %v4243
        %v4295 = vadd.f32 %v4113, %v4246
        %v4296 = vadd.f32 %v4114, %v4248
        %v4297 = vadd.f32 %v4115, %v4251
        %v4298 = vadd.f32 %v4116, %v4253
        %v4299 = vadd.f32 %v4117, %v4256
        %v4300 = vadd.f32 %v4118, %v4258
        %v4301 = vadd.f32 %v4119, %v4261
        %v4302 = vadd.f32 %v4120, %v4263
        %v4303 = vadd.f32 %v4121, %v4266
        %v4304 = vadd.f32 %v4122, %v4268
        %v4305 = vadd.f32 %v4123, %v4271
        %v4306 = vadd.f32 %v4124, %v4273
        %4307 = vst.msk [vmem:[#allocation2] sm:$0xff] %vm588, %v4275
        %4308 = vst.msk [vmem:[#allocation2 + $0x8] sm:$0xff] %vm588, %v4276
        %4309 = vst.msk [vmem:[#allocation2 + $0x10] sm:$0xff] %vm588, %v4277
        %4310 = vst.msk [vmem:[#allocation2 + $0x18] sm:$0xff] %vm588, %v4278
        %4311 = vst.msk [vmem:[#allocation2 + $0x20] sm:$0xff] %vm588, %v4279
        %4312 = vst.msk [vmem:[#allocation2 + $0x28] sm:$0xff] %vm588, %v4280
        %4313 = vst.msk [vmem:[#allocation2 + $0x30] sm:$0xff] %vm588, %v4281
        %4314 = vst.msk [vmem:[#allocation2 + $0x38] sm:$0xff] %vm588, %v4282
        %4315 = vst.msk [vmem:[#allocation2 + $0x40] sm:$0xff] %vm588, %v4283
        %4316 = vst.msk [vmem:[#allocation2 + $0x48] sm:$0xff] %vm588, %v4284
        %4317 = vst.msk [vmem:[#allocation2 + $0x50] sm:$0xff] %vm588, %v4285
        %4318 = vst.msk [vmem:[#allocation2 + $0x58] sm:$0xff] %vm588, %v4286
        %4319 = vst.msk [vmem:[#allocation2 + $0x60] sm:$0xff] %vm588, %v4287
        %4320 = vst.msk [vmem:[#allocation2 + $0x68] sm:$0xff] %vm588, %v4288
        %4321 = vst.msk [vmem:[#allocation2 + $0x70] sm:$0xff] %vm588, %v4289
        %4322 = vst.msk [vmem:[#allocation2 + $0x78] sm:$0xff] %vm588, %v4290
        %4323 = vst.msk [vmem:[#allocation2 + $0x80] sm:$0xff] %vm588, %v4291
        %4324 = vst.msk [vmem:[#allocation2 + $0x88] sm:$0xff] %vm588, %v4292
        %4325 = vst.msk [vmem:[#allocation2 + $0x90] sm:$0xff] %vm588, %v4293
        %4326 = vst.msk [vmem:[#allocation2 + $0x98] sm:$0xff] %vm588, %v4294
        %4327 = vst.msk [vmem:[#allocation2 + $0xa0] sm:$0xff] %vm588, %v4295
        %4328 = vst.msk [vmem:[#allocation2 + $0xa8] sm:$0xff] %vm588, %v4296
        %4329 = vst.msk [vmem:[#allocation2 + $0xb0] sm:$0xff] %vm588, %v4297
        %4330 = vst.msk [vmem:[#allocation2 + $0xb8] sm:$0xff] %vm588, %v4298
        %4331 = vst.msk [vmem:[#allocation2 + $0xc0] sm:$0xff] %vm588, %v4299
        %4332 = vst.msk [vmem:[#allocation2 + $0xc8] sm:$0xff] %vm588, %v4300
        %4333 = vst.msk [vmem:[#allocation2 + $0xd0] sm:$0xff] %vm588, %v4301
        %4334 = vst.msk [vmem:[#allocation2 + $0xd8] sm:$0xff] %vm588, %v4302
        %4335 = vst.msk [vmem:[#allocation2 + $0xe0] sm:$0xff] %vm588, %v4303
        %4336 = vst.msk [vmem:[#allocation2 + $0xe8] sm:$0xff] %vm588, %v4304
        %4337 = vst.msk [vmem:[#allocation2 + $0xf0] sm:$0xff] %vm588, %v4305
        %4338 = vst.msk [vmem:[#allocation2 + $0xf8] sm:$0xff] %vm588, %v4306
        %v4339 = vld [vmem:[#allocation2] sm:$0xff]
        %v4340 = vld [vmem:[#allocation2 + $0x8] sm:$0xff]
        %v4341 = vld [vmem:[#allocation2 + $0x10] sm:$0xff]
        %v4342 = vld [vmem:[#allocation2 + $0x18] sm:$0xff]
        %v4343 = vld [vmem:[#allocation2 + $0x20] sm:$0xff]
        %v4344 = vld [vmem:[#allocation2 + $0x28] sm:$0xff]
        %v4345 = vld [vmem:[#allocation2 + $0x30] sm:$0xff]
        %v4346 = vld [vmem:[#allocation2 + $0x38] sm:$0xff]
        %v4347 = vld [vmem:[#allocation2 + $0x40] sm:$0xff]
        %v4348 = vld [vmem:[#allocation2 + $0x48] sm:$0xff]
        %v4349 = vld [vmem:[#allocation2 + $0x50] sm:$0xff]
        %v4350 = vld [vmem:[#allocation2 + $0x58] sm:$0xff]
        %v4351 = vld [vmem:[#allocation2 + $0x60] sm:$0xff]
        %v4352 = vld [vmem:[#allocation2 + $0x68] sm:$0xff]
        %v4353 = vld [vmem:[#allocation2 + $0x70] sm:$0xff]
        %v4354 = vld [vmem:[#allocation2 + $0x78] sm:$0xff]
        %v4355 = vld [vmem:[#allocation2 + $0x80] sm:$0xff]
        %v4356 = vld [vmem:[#allocation2 + $0x88] sm:$0xff]
        %v4357 = vld [vmem:[#allocation2 + $0x90] sm:$0xff]
        %v4358 = vld [vmem:[#allocation2 + $0x98] sm:$0xff]
        %v4359 = vld [vmem:[#allocation2 + $0xa0] sm:$0xff]
        %v4360 = vld [vmem:[#allocation2 + $0xa8] sm:$0xff]
        %v4361 = vld [vmem:[#allocation2 + $0xb0] sm:$0xff]
        %v4362 = vld [vmem:[#allocation2 + $0xb8] sm:$0xff]
        %v4363 = vld [vmem:[#allocation2 + $0xc0] sm:$0xff]
        %v4364 = vld [vmem:[#allocation2 + $0xc8] sm:$0xff]
        %v4365 = vld [vmem:[#allocation2 + $0xd0] sm:$0xff]
        %v4366 = vld [vmem:[#allocation2 + $0xd8] sm:$0xff]
        %v4367 = vld [vmem:[#allocation2 + $0xe0] sm:$0xff]
        %v4368 = vld [vmem:[#allocation2 + $0xe8] sm:$0xff]
        %v4369 = vld [vmem:[#allocation2 + $0xf0] sm:$0xff]
        %v4370 = vld [vmem:[#allocation2 + $0xf8] sm:$0xff]
        %s4371 = scalar_lea.vmem [#allocation8], 48
        %v4372 = vld [vmem:[%s4371] sm:$0xf]
        %v4373 = vld [vmem:[%s4371 + $0x4] sm:$0xf]
        %v4374 = vld [vmem:[%s4371 + $0x8] sm:$0xf]
        %v4375 = vld [vmem:[%s4371 + $0xc] sm:$0xf]
        %v4380 = vunpack.c.l.b16 %v4372
        %v4381 = vunpack.c.l.b16 %v4373
        %v4382 = vunpack.c.l.b16 %v4374
        %v4383 = vunpack.c.l.b16 %v4375
        %v4384 = vpack.c.b16 %v4381, %v4380
        %v4385 = vpack.c.b16 %v4383, %v4382
        %v4389 = vsel %vm588, %v4040, 0
        %4391 = vmatpush.bf16.msra.mxu0 0
        %4392 = vmatpush.bf16.msra.mxu0 0
        %4393 = vmatpush.bf16.msra.mxu0 0
        %4394 = vmatpush.bf16.msra.mxu0 0
        %4395 = vmatpush.bf16.msra.mxu0 0
        %4396 = vmatpush.bf16.msra.mxu0 0
        %4397 = vmatpush.bf16.msra.mxu0 %v4385
        %4398 = vmatpush.bf16.msra.mxu0 %v4384
        %4399 = vmatmul.bf16.gmra.mxu0 %v4145
        %v4400 = vpop.f32.mrf.mxu0
        %v4401 = vadd.f32 0.0, %v4400
        %v4402 = vpop.f32.mrf.mxu0
        %v4403 = vadd.f32 0.0, %v4402
        %4404 = vmatmul.bf16.gmra.mxu0 %v4142
        %v4405 = vpop.f32.mrf.mxu0
        %v4406 = vadd.f32 0.0, %v4405
        %v4407 = vpop.f32.mrf.mxu0
        %v4408 = vadd.f32 0.0, %v4407
        %4409 = vmatmul.bf16.gmra.mxu0 %v4148
        %v4410 = vpop.f32.mrf.mxu0
        %v4411 = vadd.f32 0.0, %v4410
        %v4412 = vpop.f32.mrf.mxu0
        %v4413 = vadd.f32 0.0, %v4412
        %4414 = vmatmul.bf16.gmra.mxu0 %v4151
        %v4415 = vpop.f32.mrf.mxu0
        %v4416 = vadd.f32 0.0, %v4415
        %v4417 = vpop.f32.mrf.mxu0
        %v4418 = vadd.f32 0.0, %v4417
        %4419 = vmatmul.bf16.gmra.mxu0 %v4154
        %v4420 = vpop.f32.mrf.mxu0
        %v4421 = vadd.f32 0.0, %v4420
        %v4422 = vpop.f32.mrf.mxu0
        %v4423 = vadd.f32 0.0, %v4422
        %4424 = vmatmul.bf16.gmra.mxu0 %v4157
        %v4425 = vpop.f32.mrf.mxu0
        %v4426 = vadd.f32 0.0, %v4425
        %v4427 = vpop.f32.mrf.mxu0
        %v4428 = vadd.f32 0.0, %v4427
        %4429 = vmatmul.bf16.gmra.mxu0 %v4160
        %v4430 = vpop.f32.mrf.mxu0
        %v4431 = vadd.f32 0.0, %v4430
        %v4432 = vpop.f32.mrf.mxu0
        %v4433 = vadd.f32 0.0, %v4432
        %4434 = vmatmul.bf16.gmra.mxu0 %v4163
        %v4435 = vpop.f32.mrf.mxu0
        %v4436 = vadd.f32 0.0, %v4435
        %v4437 = vpop.f32.mrf.mxu0
        %v4438 = vadd.f32 0.0, %v4437
        %4439 = vmatmul.bf16.gmra.mxu0 %v4166
        %v4440 = vpop.f32.mrf.mxu0
        %v4441 = vadd.f32 0.0, %v4440
        %v4442 = vpop.f32.mrf.mxu0
        %v4443 = vadd.f32 0.0, %v4442
        %4444 = vmatmul.bf16.gmra.mxu0 %v4169
        %v4445 = vpop.f32.mrf.mxu0
        %v4446 = vadd.f32 0.0, %v4445
        %v4447 = vpop.f32.mrf.mxu0
        %v4448 = vadd.f32 0.0, %v4447
        %4449 = vmatmul.bf16.gmra.mxu0 %v4172
        %v4450 = vpop.f32.mrf.mxu0
        %v4451 = vadd.f32 0.0, %v4450
        %v4452 = vpop.f32.mrf.mxu0
        %v4453 = vadd.f32 0.0, %v4452
        %4454 = vmatmul.bf16.gmra.mxu0 %v4175
        %v4455 = vpop.f32.mrf.mxu0
        %v4456 = vadd.f32 0.0, %v4455
        %v4457 = vpop.f32.mrf.mxu0
        %v4458 = vadd.f32 0.0, %v4457
        %4459 = vmatmul.bf16.gmra.mxu0 %v4178
        %v4460 = vpop.f32.mrf.mxu0
        %v4461 = vadd.f32 0.0, %v4460
        %v4462 = vpop.f32.mrf.mxu0
        %v4463 = vadd.f32 0.0, %v4462
        %4464 = vmatmul.bf16.gmra.mxu0 %v4181
        %v4465 = vpop.f32.mrf.mxu0
        %v4466 = vadd.f32 0.0, %v4465
        %v4467 = vpop.f32.mrf.mxu0
        %v4468 = vadd.f32 0.0, %v4467
        %4469 = vmatmul.bf16.gmra.mxu0 %v4184
        %v4470 = vpop.f32.mrf.mxu0
        %v4471 = vadd.f32 0.0, %v4470
        %v4472 = vpop.f32.mrf.mxu0
        %v4473 = vadd.f32 0.0, %v4472
        %4474 = vmatmul.bf16.gmra.mxu0 %v4389
        %v4475 = vpop.f32.mrf.mxu0
        %v4476 = vadd.f32 0.0, %v4475
        %v4477 = vpop.f32.mrf.mxu0
        %v4478 = vadd.f32 0.0, %v4477
        %4479 = vdwg.mxu0
        %v4480 = vadd.f32 %v4339, %v4401
        %v4481 = vadd.f32 %v4340, %v4403
        %v4482 = vadd.f32 %v4341, %v4406
        %v4483 = vadd.f32 %v4342, %v4408
        %v4484 = vadd.f32 %v4343, %v4411
        %v4485 = vadd.f32 %v4344, %v4413
        %v4486 = vadd.f32 %v4345, %v4416
        %v4487 = vadd.f32 %v4346, %v4418
        %v4488 = vadd.f32 %v4347, %v4421
        %v4489 = vadd.f32 %v4348, %v4423
        %v4490 = vadd.f32 %v4349, %v4426
        %v4491 = vadd.f32 %v4350, %v4428
        %v4492 = vadd.f32 %v4351, %v4431
        %v4493 = vadd.f32 %v4352, %v4433
        %v4494 = vadd.f32 %v4353, %v4436
        %v4495 = vadd.f32 %v4354, %v4438
        %v4496 = vadd.f32 %v4355, %v4441
        %v4497 = vadd.f32 %v4356, %v4443
        %v4498 = vadd.f32 %v4357, %v4446
        %v4499 = vadd.f32 %v4358, %v4448
        %v4500 = vadd.f32 %v4359, %v4451
        %v4501 = vadd.f32 %v4360, %v4453
        %v4502 = vadd.f32 %v4361, %v4456
        %v4503 = vadd.f32 %v4362, %v4458
        %v4504 = vadd.f32 %v4363, %v4461
        %v4505 = vadd.f32 %v4364, %v4463
        %v4506 = vadd.f32 %v4365, %v4466
        %v4507 = vadd.f32 %v4366, %v4468
        %v4508 = vadd.f32 %v4367, %v4471
        %v4509 = vadd.f32 %v4368, %v4473
        %v4510 = vadd.f32 %v4369, %v4476
        %v4511 = vadd.f32 %v4370, %v4478
        %4512 = vst.msk [vmem:[#allocation2] sm:$0xff] %vm588, %v4480
        %4513 = vst.msk [vmem:[#allocation2 + $0x8] sm:$0xff] %vm588, %v4481
        %4514 = vst.msk [vmem:[#allocation2 + $0x10] sm:$0xff] %vm588, %v4482
        %4515 = vst.msk [vmem:[#allocation2 + $0x18] sm:$0xff] %vm588, %v4483
        %4516 = vst.msk [vmem:[#allocation2 + $0x20] sm:$0xff] %vm588, %v4484
        %4517 = vst.msk [vmem:[#allocation2 + $0x28] sm:$0xff] %vm588, %v4485
        %4518 = vst.msk [vmem:[#allocation2 + $0x30] sm:$0xff] %vm588, %v4486
        %4519 = vst.msk [vmem:[#allocation2 + $0x38] sm:$0xff] %vm588, %v4487
        %4520 = vst.msk [vmem:[#allocation2 + $0x40] sm:$0xff] %vm588, %v4488
        %4521 = vst.msk [vmem:[#allocation2 + $0x48] sm:$0xff] %vm588, %v4489
        %4522 = vst.msk [vmem:[#allocation2 + $0x50] sm:$0xff] %vm588, %v4490
        %4523 = vst.msk [vmem:[#allocation2 + $0x58] sm:$0xff] %vm588, %v4491
        %4524 = vst.msk [vmem:[#allocation2 + $0x60] sm:$0xff] %vm588, %v4492
        %4525 = vst.msk [vmem:[#allocation2 + $0x68] sm:$0xff] %vm588, %v4493
        %4526 = vst.msk [vmem:[#allocation2 + $0x70] sm:$0xff] %vm588, %v4494
        %4527 = vst.msk [vmem:[#allocation2 + $0x78] sm:$0xff] %vm588, %v4495
        %4528 = vst.msk [vmem:[#allocation2 + $0x80] sm:$0xff] %vm588, %v4496
        %4529 = vst.msk [vmem:[#allocation2 + $0x88] sm:$0xff] %vm588, %v4497
        %4530 = vst.msk [vmem:[#allocation2 + $0x90] sm:$0xff] %vm588, %v4498
        %4531 = vst.msk [vmem:[#allocation2 + $0x98] sm:$0xff] %vm588, %v4499
        %4532 = vst.msk [vmem:[#allocation2 + $0xa0] sm:$0xff] %vm588, %v4500
        %4533 = vst.msk [vmem:[#allocation2 + $0xa8] sm:$0xff] %vm588, %v4501
        %4534 = vst.msk [vmem:[#allocation2 + $0xb0] sm:$0xff] %vm588, %v4502
        %4535 = vst.msk [vmem:[#allocation2 + $0xb8] sm:$0xff] %vm588, %v4503
        %4536 = vst.msk [vmem:[#allocation2 + $0xc0] sm:$0xff] %vm588, %v4504
        %4537 = vst.msk [vmem:[#allocation2 + $0xc8] sm:$0xff] %vm588, %v4505
        %4538 = vst.msk [vmem:[#allocation2 + $0xd0] sm:$0xff] %vm588, %v4506
        %4539 = vst.msk [vmem:[#allocation2 + $0xd8] sm:$0xff] %vm588, %v4507
        %4540 = vst.msk [vmem:[#allocation2 + $0xe0] sm:$0xff] %vm588, %v4508
        %4541 = vst.msk [vmem:[#allocation2 + $0xe8] sm:$0xff] %vm588, %v4509
        %4542 = vst.msk [vmem:[#allocation2 + $0xf0] sm:$0xff] %vm588, %v4510
        %4543 = vst.msk [vmem:[#allocation2 + $0xf8] sm:$0xff] %vm588, %v4511
        %v4544 = vld [vmem:[#allocation2] sm:$0xff]
        %v4545 = vld [vmem:[#allocation2 + $0x8] sm:$0xff]
        %v4546 = vld [vmem:[#allocation2 + $0x10] sm:$0xff]
        %v4547 = vld [vmem:[#allocation2 + $0x18] sm:$0xff]
        %v4548 = vld [vmem:[#allocation2 + $0x20] sm:$0xff]
        %v4549 = vld [vmem:[#allocation2 + $0x28] sm:$0xff]
        %v4550 = vld [vmem:[#allocation2 + $0x30] sm:$0xff]
        %v4551 = vld [vmem:[#allocation2 + $0x38] sm:$0xff]
        %v4552 = vld [vmem:[#allocation2 + $0x40] sm:$0xff]
        %v4553 = vld [vmem:[#allocation2 + $0x48] sm:$0xff]
        %v4554 = vld [vmem:[#allocation2 + $0x50] sm:$0xff]
        %v4555 = vld [vmem:[#allocation2 + $0x58] sm:$0xff]
        %v4556 = vld [vmem:[#allocation2 + $0x60] sm:$0xff]
        %v4557 = vld [vmem:[#allocation2 + $0x68] sm:$0xff]
        %v4558 = vld [vmem:[#allocation2 + $0x70] sm:$0xff]
        %v4559 = vld [vmem:[#allocation2 + $0x78] sm:$0xff]
        %v4560 = vld [vmem:[#allocation2 + $0x80] sm:$0xff]
        %v4561 = vld [vmem:[#allocation2 + $0x88] sm:$0xff]
        %v4562 = vld [vmem:[#allocation2 + $0x90] sm:$0xff]
        %v4563 = vld [vmem:[#allocation2 + $0x98] sm:$0xff]
        %v4564 = vld [vmem:[#allocation2 + $0xa0] sm:$0xff]
        %v4565 = vld [vmem:[#allocation2 + $0xa8] sm:$0xff]
        %v4566 = vld [vmem:[#allocation2 + $0xb0] sm:$0xff]
        %v4567 = vld [vmem:[#allocation2 + $0xb8] sm:$0xff]
        %v4568 = vld [vmem:[#allocation2 + $0xc0] sm:$0xff]
        %v4569 = vld [vmem:[#allocation2 + $0xc8] sm:$0xff]
        %v4570 = vld [vmem:[#allocation2 + $0xd0] sm:$0xff]
        %v4571 = vld [vmem:[#allocation2 + $0xd8] sm:$0xff]
        %v4572 = vld [vmem:[#allocation2 + $0xe0] sm:$0xff]
        %v4573 = vld [vmem:[#allocation2 + $0xe8] sm:$0xff]
        %v4574 = vld [vmem:[#allocation2 + $0xf0] sm:$0xff]
        %v4575 = vld [vmem:[#allocation2 + $0xf8] sm:$0xff]
        %s4576 = scalar_lea.vmem [#allocation8], 96
        %v4577 = vld [vmem:[%s4576] sm:$0xf]
        %v4578 = vld [vmem:[%s4576 + $0x4] sm:$0xf]
        %v4579 = vld [vmem:[%s4576 + $0x8] sm:$0xf]
        %v4580 = vld [vmem:[%s4576 + $0xc] sm:$0xf]
        %v4585 = vunpack.c.l.b16 %v4577
        %v4586 = vunpack.c.l.b16 %v4578
        %v4587 = vunpack.c.l.b16 %v4579
        %v4588 = vunpack.c.l.b16 %v4580
        %v4589 = vpack.c.b16 %v4586, %v4585
        %v4590 = vpack.c.b16 %v4588, %v4587
        %4593 = vmatpush.bf16.msra.mxu0 0
        %4594 = vmatpush.bf16.msra.mxu0 0
        %4595 = vmatpush.bf16.msra.mxu0 0
        %4596 = vmatpush.bf16.msra.mxu0 0
        %4597 = vmatpush.bf16.msra.mxu0 0
        %4598 = vmatpush.bf16.msra.mxu0 0
        %4599 = vmatpush.bf16.msra.mxu0 %v4590
        %4600 = vmatpush.bf16.msra.mxu0 %v4589
        %4601 = vmatmul.bf16.gmra.mxu0 %v4142
        %v4602 = vpop.f32.mrf.mxu0
        %v4603 = vadd.f32 0.0, %v4602
        %v4604 = vpop.f32.mrf.mxu0
        %v4605 = vadd.f32 0.0, %v4604
        %4606 = vmatmul.bf16.gmra.mxu0 %v4148
        %v4607 = vpop.f32.mrf.mxu0
        %v4608 = vadd.f32 0.0, %v4607
        %v4609 = vpop.f32.mrf.mxu0
        %v4610 = vadd.f32 0.0, %v4609
        %4611 = vmatmul.bf16.gmra.mxu0 %v4151
        %v4612 = vpop.f32.mrf.mxu0
        %v4613 = vadd.f32 0.0, %v4612
        %v4614 = vpop.f32.mrf.mxu0
        %v4615 = vadd.f32 0.0, %v4614
        %4616 = vmatmul.bf16.gmra.mxu0 %v4154
        %v4617 = vpop.f32.mrf.mxu0
        %v4618 = vadd.f32 0.0, %v4617
        %v4619 = vpop.f32.mrf.mxu0
        %v4620 = vadd.f32 0.0, %v4619
        %4621 = vmatmul.bf16.gmra.mxu0 %v4157
        %v4622 = vpop.f32.mrf.mxu0
        %v4623 = vadd.f32 0.0, %v4622
        %v4624 = vpop.f32.mrf.mxu0
        %v4625 = vadd.f32 0.0, %v4624
        %4626 = vmatmul.bf16.gmra.mxu0 %v4160
        %v4627 = vpop.f32.mrf.mxu0
        %v4628 = vadd.f32 0.0, %v4627
        %v4629 = vpop.f32.mrf.mxu0
        %v4630 = vadd.f32 0.0, %v4629
        %4631 = vmatmul.bf16.gmra.mxu0 %v4163
        %v4632 = vpop.f32.mrf.mxu0
        %v4633 = vadd.f32 0.0, %v4632
        %v4634 = vpop.f32.mrf.mxu0
        %v4635 = vadd.f32 0.0, %v4634
        %4636 = vmatmul.bf16.gmra.mxu0 %v4166
        %v4637 = vpop.f32.mrf.mxu0
        %v4638 = vadd.f32 0.0, %v4637
        %v4639 = vpop.f32.mrf.mxu0
        %v4640 = vadd.f32 0.0, %v4639
        %4641 = vmatmul.bf16.gmra.mxu0 %v4169
        %v4642 = vpop.f32.mrf.mxu0
        %v4643 = vadd.f32 0.0, %v4642
        %v4644 = vpop.f32.mrf.mxu0
        %v4645 = vadd.f32 0.0, %v4644
        %4646 = vmatmul.bf16.gmra.mxu0 %v4172
        %v4647 = vpop.f32.mrf.mxu0
        %v4648 = vadd.f32 0.0, %v4647
        %v4649 = vpop.f32.mrf.mxu0
        %v4650 = vadd.f32 0.0, %v4649
        %4651 = vmatmul.bf16.gmra.mxu0 %v4175
        %v4652 = vpop.f32.mrf.mxu0
        %v4653 = vadd.f32 0.0, %v4652
        %v4654 = vpop.f32.mrf.mxu0
        %v4655 = vadd.f32 0.0, %v4654
        %4656 = vmatmul.bf16.gmra.mxu0 %v4178
        %v4657 = vpop.f32.mrf.mxu0
        %v4658 = vadd.f32 0.0, %v4657
        %v4659 = vpop.f32.mrf.mxu0
        %v4660 = vadd.f32 0.0, %v4659
        %4661 = vmatmul.bf16.gmra.mxu0 %v4181
        %v4662 = vpop.f32.mrf.mxu0
        %v4663 = vadd.f32 0.0, %v4662
        %v4664 = vpop.f32.mrf.mxu0
        %v4665 = vadd.f32 0.0, %v4664
        %4666 = vmatmul.bf16.gmra.mxu0 %v4184
        %v4667 = vpop.f32.mrf.mxu0
        %v4668 = vadd.f32 0.0, %v4667
        %v4669 = vpop.f32.mrf.mxu0
        %v4670 = vadd.f32 0.0, %v4669
        %4671 = vmatmul.bf16.gmra.mxu0 %v4389
        %v4672 = vpop.f32.mrf.mxu0
        %v4673 = vadd.f32 0.0, %v4672
        %v4674 = vpop.f32.mrf.mxu0
        %v4675 = vadd.f32 0.0, %v4674
        %4676 = vmatmul.bf16.gmra.mxu0 %v4184
        %v4677 = vpop.f32.mrf.mxu0
        %v4678 = vadd.f32 0.0, %v4677
        %v4679 = vpop.f32.mrf.mxu0
        %v4680 = vadd.f32 0.0, %v4679
        %4681 = vdwg.mxu0
        %v4682 = vadd.f32 %v4544, %v4603
        %v4683 = vadd.f32 %v4545, %v4605
        %v4684 = vadd.f32 %v4546, %v4608
        %v4685 = vadd.f32 %v4547, %v4610
        %v4686 = vadd.f32 %v4548, %v4613
        %v4687 = vadd.f32 %v4549, %v4615
        %v4688 = vadd.f32 %v4550, %v4618
        %v4689 = vadd.f32 %v4551, %v4620
        %v4690 = vadd.f32 %v4552, %v4623
        %v4691 = vadd.f32 %v4553, %v4625
        %v4692 = vadd.f32 %v4554, %v4628
        %v4693 = vadd.f32 %v4555, %v4630
        %v4694 = vadd.f32 %v4556, %v4633
        %v4695 = vadd.f32 %v4557, %v4635
        %v4696 = vadd.f32 %v4558, %v4638
        %v4697 = vadd.f32 %v4559, %v4640
        %v4698 = vadd.f32 %v4560, %v4643
        %v4699 = vadd.f32 %v4561, %v4645
        %v4700 = vadd.f32 %v4562, %v4648
        %v4701 = vadd.f32 %v4563, %v4650
        %v4702 = vadd.f32 %v4564, %v4653
        %v4703 = vadd.f32 %v4565, %v4655
        %v4704 = vadd.f32 %v4566, %v4658
        %v4705 = vadd.f32 %v4567, %v4660
        %v4706 = vadd.f32 %v4568, %v4663
        %v4707 = vadd.f32 %v4569, %v4665
        %v4708 = vadd.f32 %v4570, %v4668
        %v4709 = vadd.f32 %v4571, %v4670
        %v4710 = vadd.f32 %v4572, %v4673
        %v4711 = vadd.f32 %v4573, %v4675
        %v4712 = vadd.f32 %v4574, %v4678
        %v4713 = vadd.f32 %v4575, %v4680
        %4714 = vst.msk [vmem:[#allocation2] sm:$0xff] %vm588, %v4682
        %4715 = vst.msk [vmem:[#allocation2 + $0x8] sm:$0xff] %vm588, %v4683
        %4716 = vst.msk [vmem:[#allocation2 + $0x10] sm:$0xff] %vm588, %v4684
        %4717 = vst.msk [vmem:[#allocation2 + $0x18] sm:$0xff] %vm588, %v4685
        %4718 = vst.msk [vmem:[#allocation2 + $0x20] sm:$0xff] %vm588, %v4686
        %4719 = vst.msk [vmem:[#allocation2 + $0x28] sm:$0xff] %vm588, %v4687
        %4720 = vst.msk [vmem:[#allocation2 + $0x30] sm:$0xff] %vm588, %v4688
        %4721 = vst.msk [vmem:[#allocation2 + $0x38] sm:$0xff] %vm588, %v4689
        %4722 = vst.msk [vmem:[#allocation2 + $0x40] sm:$0xff] %vm588, %v4690
        %4723 = vst.msk [vmem:[#allocation2 + $0x48] sm:$0xff] %vm588, %v4691
        %4724 = vst.msk [vmem:[#allocation2 + $0x50] sm:$0xff] %vm588, %v4692
        %4725 = vst.msk [vmem:[#allocation2 + $0x58] sm:$0xff] %vm588, %v4693
        %4726 = vst.msk [vmem:[#allocation2 + $0x60] sm:$0xff] %vm588, %v4694
        %4727 = vst.msk [vmem:[#allocation2 + $0x68] sm:$0xff] %vm588, %v4695
        %4728 = vst.msk [vmem:[#allocation2 + $0x70] sm:$0xff] %vm588, %v4696
        %4729 = vst.msk [vmem:[#allocation2 + $0x78] sm:$0xff] %vm588, %v4697
        %4730 = vst.msk [vmem:[#allocation2 + $0x80] sm:$0xff] %vm588, %v4698
        %4731 = vst.msk [vmem:[#allocation2 + $0x88] sm:$0xff] %vm588, %v4699
        %4732 = vst.msk [vmem:[#allocation2 + $0x90] sm:$0xff] %vm588, %v4700
        %4733 = vst.msk [vmem:[#allocation2 + $0x98] sm:$0xff] %vm588, %v4701
        %4734 = vst.msk [vmem:[#allocation2 + $0xa0] sm:$0xff] %vm588, %v4702
        %4735 = vst.msk [vmem:[#allocation2 + $0xa8] sm:$0xff] %vm588, %v4703
        %4736 = vst.msk [vmem:[#allocation2 + $0xb0] sm:$0xff] %vm588, %v4704
        %4737 = vst.msk [vmem:[#allocation2 + $0xb8] sm:$0xff] %vm588, %v4705
        %4738 = vst.msk [vmem:[#allocation2 + $0xc0] sm:$0xff] %vm588, %v4706
        %4739 = vst.msk [vmem:[#allocation2 + $0xc8] sm:$0xff] %vm588, %v4707
        %4740 = vst.msk [vmem:[#allocation2 + $0xd0] sm:$0xff] %vm588, %v4708
        %4741 = vst.msk [vmem:[#allocation2 + $0xd8] sm:$0xff] %vm588, %v4709
        %4742 = vst.msk [vmem:[#allocation2 + $0xe0] sm:$0xff] %vm588, %v4710
        %4743 = vst.msk [vmem:[#allocation2 + $0xe8] sm:$0xff] %vm588, %v4711
        %4744 = vst.msk [vmem:[#allocation2 + $0xf0] sm:$0xff] %vm588, %v4712
        %4745 = vst.msk [vmem:[#allocation2 + $0xf8] sm:$0xff] %vm588, %v4713
        %vm4746 = vsmask.f32 7424
        %v4747 = vshrl.u32 %v4025, 16
        %v4749 = vshll.u32 %v4025, 16
        %v4751 = vrot.slane %v4749, 1
        %v4752 = vor.u32 %v4747, %v4751
        %v4754 = vshll.u32 %v4041, 16
        %v4756 = vrot.slane %v4754, 1
        %v4757 = vsel %vm4746, %v4752, %v4756
        %v4758 = vshrl.u32 %v4026, 16
        %v4760 = vshll.u32 %v4026, 16
        %v4762 = vrot.slane %v4760, 1
        %v4763 = vor.u32 %v4758, %v4762
        %v4765 = vshll.u32 %v4042, 16
        %v4767 = vrot.slane %v4765, 1
        %v4768 = vsel %vm4746, %v4763, %v4767
        %v4769 = vshrl.u32 %v4027, 16
        %v4771 = vshll.u32 %v4027, 16
        %v4773 = vrot.slane %v4771, 1
        %v4774 = vor.u32 %v4769, %v4773
        %v4776 = vshll.u32 %v4043, 16
        %v4778 = vrot.slane %v4776, 1
        %v4779 = vsel %vm4746, %v4774, %v4778
        %v4780 = vshrl.u32 %v4028, 16
        %v4782 = vshll.u32 %v4028, 16
        %v4784 = vrot.slane %v4782, 1
        %v4785 = vor.u32 %v4780, %v4784
        %v4787 = vshll.u32 %v4044, 16
        %v4789 = vrot.slane %v4787, 1
        %v4790 = vsel %vm4746, %v4785, %v4789
        %v4791 = vshrl.u32 %v4029, 16
        %v4793 = vshll.u32 %v4029, 16
        %v4795 = vrot.slane %v4793, 1
        %v4796 = vor.u32 %v4791, %v4795
        %v4798 = vshll.u32 %v4045, 16
        %v4800 = vrot.slane %v4798, 1
        %v4801 = vsel %vm4746, %v4796, %v4800
        %v4802 = vshrl.u32 %v4030, 16
        %v4804 = vshll.u32 %v4030, 16
        %v4806 = vrot.slane %v4804, 1
        %v4807 = vor.u32 %v4802, %v4806
        %v4809 = vshll.u32 %v4046, 16
        %v4811 = vrot.slane %v4809, 1
        %v4812 = vsel %vm4746, %v4807, %v4811
        %v4813 = vshrl.u32 %v4031, 16
        %v4815 = vshll.u32 %v4031, 16
        %v4817 = vrot.slane %v4815, 1
        %v4818 = vor.u32 %v4813, %v4817
        %v4820 = vshll.u32 %v4047, 16
        %v4822 = vrot.slane %v4820, 1
        %v4823 = vsel %vm4746, %v4818, %v4822
        %v4824 = vshrl.u32 %v4032, 16
        %v4826 = vshll.u32 %v4032, 16
        %v4828 = vrot.slane %v4826, 1
        %v4829 = vor.u32 %v4824, %v4828
        %v4831 = vshll.u32 %v4048, 16
        %v4833 = vrot.slane %v4831, 1
        %v4834 = vsel %vm4746, %v4829, %v4833
        %v4835 = vshrl.u32 %v4033, 16
        %v4837 = vshll.u32 %v4033, 16
        %v4839 = vrot.slane %v4837, 1
        %v4840 = vor.u32 %v4835, %v4839
        %v4842 = vshll.u32 %v4049, 16
        %v4844 = vrot.slane %v4842, 1
        %v4845 = vsel %vm4746, %v4840, %v4844
        %v4846 = vshrl.u32 %v4034, 16
        %v4848 = vshll.u32 %v4034, 16
        %v4850 = vrot.slane %v4848, 1
        %v4851 = vor.u32 %v4846, %v4850
        %v4853 = vshll.u32 %v4050, 16
        %v4855 = vrot.slane %v4853, 1
        %v4856 = vsel %vm4746, %v4851, %v4855
        %v4857 = vshrl.u32 %v4035, 16
        %v4859 = vshll.u32 %v4035, 16
        %v4861 = vrot.slane %v4859, 1
        %v4862 = vor.u32 %v4857, %v4861
        %v4864 = vshll.u32 %v4051, 16
        %v4866 = vrot.slane %v4864, 1
        %v4867 = vsel %vm4746, %v4862, %v4866
        %v4868 = vshrl.u32 %v4036, 16
        %v4870 = vshll.u32 %v4036, 16
        %v4872 = vrot.slane %v4870, 1
        %v4873 = vor.u32 %v4868, %v4872
        %v4875 = vshll.u32 %v4052, 16
        %v4877 = vrot.slane %v4875, 1
        %v4878 = vsel %vm4746, %v4873, %v4877
        %v4879 = vshrl.u32 %v4037, 16
        %v4881 = vshll.u32 %v4037, 16
        %v4883 = vrot.slane %v4881, 1
        %v4884 = vor.u32 %v4879, %v4883
        %v4886 = vshll.u32 %v4053, 16
        %v4888 = vrot.slane %v4886, 1
        %v4889 = vsel %vm4746, %v4884, %v4888
        %v4890 = vshrl.u32 %v4038, 16
        %v4892 = vshll.u32 %v4038, 16
        %v4894 = vrot.slane %v4892, 1
        %v4895 = vor.u32 %v4890, %v4894
        %v4897 = vshll.u32 %v4054, 16
        %v4899 = vrot.slane %v4897, 1
        %v4900 = vsel %vm4746, %v4895, %v4899
        %v4901 = vshrl.u32 %v4039, 16
        %v4903 = vshll.u32 %v4039, 16
        %v4905 = vrot.slane %v4903, 1
        %v4906 = vor.u32 %v4901, %v4905
        %v4908 = vshll.u32 %v4055, 16
        %v4910 = vrot.slane %v4908, 1
        %v4911 = vsel %vm4746, %v4906, %v4910
        %v4912 = vld [vmem:[#allocation2] sm:$0xff]
        %v4913 = vld [vmem:[#allocation2 + $0x8] sm:$0xff]
        %v4914 = vld [vmem:[#allocation2 + $0x10] sm:$0xff]
        %v4915 = vld [vmem:[#allocation2 + $0x18] sm:$0xff]
        %v4916 = vld [vmem:[#allocation2 + $0x20] sm:$0xff]
        %v4917 = vld [vmem:[#allocation2 + $0x28] sm:$0xff]
        %v4918 = vld [vmem:[#allocation2 + $0x30] sm:$0xff]
        %v4919 = vld [vmem:[#allocation2 + $0x38] sm:$0xff]
        %v4920 = vld [vmem:[#allocation2 + $0x40] sm:$0xff]
        %v4921 = vld [vmem:[#allocation2 + $0x48] sm:$0xff]
        %v4922 = vld [vmem:[#allocation2 + $0x50] sm:$0xff]
        %v4923 = vld [vmem:[#allocation2 + $0x58] sm:$0xff]
        %v4924 = vld [vmem:[#allocation2 + $0x60] sm:$0xff]
        %v4925 = vld [vmem:[#allocation2 + $0x68] sm:$0xff]
        %v4926 = vld [vmem:[#allocation2 + $0x70] sm:$0xff]
        %v4927 = vld [vmem:[#allocation2 + $0x78] sm:$0xff]
        %v4928 = vld [vmem:[#allocation2 + $0x80] sm:$0xff]
        %v4929 = vld [vmem:[#allocation2 + $0x88] sm:$0xff]
        %v4930 = vld [vmem:[#allocation2 + $0x90] sm:$0xff]
        %v4931 = vld [vmem:[#allocation2 + $0x98] sm:$0xff]
        %v4932 = vld [vmem:[#allocation2 + $0xa0] sm:$0xff]
        %v4933 = vld [vmem:[#allocation2 + $0xa8] sm:$0xff]
        %v4934 = vld [vmem:[#allocation2 + $0xb0] sm:$0xff]
        %v4935 = vld [vmem:[#allocation2 + $0xb8] sm:$0xff]
        %v4936 = vld [vmem:[#allocation2 + $0xc0] sm:$0xff]
        %v4937 = vld [vmem:[#allocation2 + $0xc8] sm:$0xff]
        %v4938 = vld [vmem:[#allocation2 + $0xd0] sm:$0xff]
        %v4939 = vld [vmem:[#allocation2 + $0xd8] sm:$0xff]
        %v4940 = vld [vmem:[#allocation2 + $0xe0] sm:$0xff]
        %v4941 = vld [vmem:[#allocation2 + $0xe8] sm:$0xff]
        %v4942 = vld [vmem:[#allocation2 + $0xf0] sm:$0xff]
        %v4943 = vld [vmem:[#allocation2 + $0xf8] sm:$0xff]
        %s4944 = scalar_lea.vmem [#allocation8], 16
        %v4945 = vld [vmem:[%s4944] sm:$0xf]
        %v4946 = vld [vmem:[%s4944 + $0x4] sm:$0xf]
        %v4947 = vld [vmem:[%s4944 + $0x8] sm:$0xf]
        %v4948 = vld [vmem:[%s4944 + $0xc] sm:$0xf]
        %v4953 = vunpack.c.l.b16 %v4945
        %v4954 = vunpack.c.l.b16 %v4946
        %v4955 = vunpack.c.l.b16 %v4947
        %v4956 = vunpack.c.l.b16 %v4948
        %v4957 = vpack.c.b16 %v4954, %v4953
        %v4958 = vpack.c.b16 %v4956, %v4955
        %v4962 = vsel %vm588, %v4757, 0
        %v4965 = vsel %vm588, %v4768, 0
        %v4968 = vsel %vm588, %v4779, 0
        %v4971 = vsel %vm588, %v4790, 0
        %v4974 = vsel %vm588, %v4801, 0
        %v4977 = vsel %vm588, %v4812, 0
        %v4980 = vsel %vm588, %v4823, 0
        %v4983 = vsel %vm588, %v4834, 0
        %v4986 = vsel %vm588, %v4845, 0
        %v4989 = vsel %vm588, %v4856, 0
        %v4992 = vsel %vm588, %v4867, 0
        %v4995 = vsel %vm588, %v4878, 0
        %v4998 = vsel %vm588, %v4889, 0
        %v5001 = vsel %vm588, %v4900, 0
        %v5004 = vsel %vm588, %v4911, 0
        %5006 = vmatpush.bf16.msra.mxu0 0
        %5007 = vmatpush.bf16.msra.mxu0 0
        %5008 = vmatpush.bf16.msra.mxu0 0
        %5009 = vmatpush.bf16.msra.mxu0 0
        %5010 = vmatpush.bf16.msra.mxu0 0
        %5011 = vmatpush.bf16.msra.mxu0 0
        %5012 = vmatpush.bf16.msra.mxu0 %v4958
        %5013 = vmatpush.bf16.msra.mxu0 %v4957
        %5014 = vmatmul.bf16.gmra.mxu0 %v4962
        %v5015 = vpop.f32.mrf.mxu0
        %v5016 = vadd.f32 0.0, %v5015
        %v5017 = vpop.f32.mrf.mxu0
        %v5018 = vadd.f32 0.0, %v5017
        %5019 = vmatmul.bf16.gmra.mxu0 %v4965
        %v5020 = vpop.f32.mrf.mxu0
        %v5021 = vadd.f32 0.0, %v5020
        %v5022 = vpop.f32.mrf.mxu0
        %v5023 = vadd.f32 0.0, %v5022
        %5024 = vmatmul.bf16.gmra.mxu0 %v4962
        %v5025 = vpop.f32.mrf.mxu0
        %v5026 = vadd.f32 0.0, %v5025
        %v5027 = vpop.f32.mrf.mxu0
        %v5028 = vadd.f32 0.0, %v5027
        %5029 = vmatmul.bf16.gmra.mxu0 %v4968
        %v5030 = vpop.f32.mrf.mxu0
        %v5031 = vadd.f32 0.0, %v5030
        %v5032 = vpop.f32.mrf.mxu0
        %v5033 = vadd.f32 0.0, %v5032
        %5034 = vmatmul.bf16.gmra.mxu0 %v4971
        %v5035 = vpop.f32.mrf.mxu0
        %v5036 = vadd.f32 0.0, %v5035
        %v5037 = vpop.f32.mrf.mxu0
        %v5038 = vadd.f32 0.0, %v5037
        %5039 = vmatmul.bf16.gmra.mxu0 %v4974
        %v5040 = vpop.f32.mrf.mxu0
        %v5041 = vadd.f32 0.0, %v5040
        %v5042 = vpop.f32.mrf.mxu0
        %v5043 = vadd.f32 0.0, %v5042
        %5044 = vmatmul.bf16.gmra.mxu0 %v4977
        %v5045 = vpop.f32.mrf.mxu0
        %v5046 = vadd.f32 0.0, %v5045
        %v5047 = vpop.f32.mrf.mxu0
        %v5048 = vadd.f32 0.0, %v5047
        %5049 = vmatmul.bf16.gmra.mxu0 %v4980
        %v5050 = vpop.f32.mrf.mxu0
        %v5051 = vadd.f32 0.0, %v5050
        %v5052 = vpop.f32.mrf.mxu0
        %v5053 = vadd.f32 0.0, %v5052
        %5054 = vmatmul.bf16.gmra.mxu0 %v4983
        %v5055 = vpop.f32.mrf.mxu0
        %v5056 = vadd.f32 0.0, %v5055
        %v5057 = vpop.f32.mrf.mxu0
        %v5058 = vadd.f32 0.0, %v5057
        %5059 = vmatmul.bf16.gmra.mxu0 %v4986
        %v5060 = vpop.f32.mrf.mxu0
        %v5061 = vadd.f32 0.0, %v5060
        %v5062 = vpop.f32.mrf.mxu0
        %v5063 = vadd.f32 0.0, %v5062
        %5064 = vmatmul.bf16.gmra.mxu0 %v4989
        %v5065 = vpop.f32.mrf.mxu0
        %v5066 = vadd.f32 0.0, %v5065
        %v5067 = vpop.f32.mrf.mxu0
        %v5068 = vadd.f32 0.0, %v5067
        %5069 = vmatmul.bf16.gmra.mxu0 %v4992
        %v5070 = vpop.f32.mrf.mxu0
        %v5071 = vadd.f32 0.0, %v5070
        %v5072 = vpop.f32.mrf.mxu0
        %v5073 = vadd.f32 0.0, %v5072
        %5074 = vmatmul.bf16.gmra.mxu0 %v4995
        %v5075 = vpop.f32.mrf.mxu0
        %v5076 = vadd.f32 0.0, %v5075
        %v5077 = vpop.f32.mrf.mxu0
        %v5078 = vadd.f32 0.0, %v5077
        %5079 = vmatmul.bf16.gmra.mxu0 %v4998
        %v5080 = vpop.f32.mrf.mxu0
        %v5081 = vadd.f32 0.0, %v5080
        %v5082 = vpop.f32.mrf.mxu0
        %v5083 = vadd.f32 0.0, %v5082
        %5084 = vmatmul.bf16.gmra.mxu0 %v5001
        %v5085 = vpop.f32.mrf.mxu0
        %v5086 = vadd.f32 0.0, %v5085
        %v5087 = vpop.f32.mrf.mxu0
        %v5088 = vadd.f32 0.0, %v5087
        %5089 = vmatmul.bf16.gmra.mxu0 %v5004
        %v5090 = vpop.f32.mrf.mxu0
        %v5091 = vadd.f32 0.0, %v5090
        %v5092 = vpop.f32.mrf.mxu0
        %v5093 = vadd.f32 0.0, %v5092
        %5094 = vdwg.mxu0
        %v5095 = vadd.f32 %v4912, %v5016
        %v5096 = vadd.f32 %v4913, %v5018
        %v5097 = vadd.f32 %v4914, %v5021
        %v5098 = vadd.f32 %v4915, %v5023
        %v5099 = vadd.f32 %v4916, %v5026
        %v5100 = vadd.f32 %v4917, %v5028
        %v5101 = vadd.f32 %v4918, %v5031
        %v5102 = vadd.f32 %v4919, %v5033
        %v5103 = vadd.f32 %v4920, %v5036
        %v5104 = vadd.f32 %v4921, %v5038
        %v5105 = vadd.f32 %v4922, %v5041
        %v5106 = vadd.f32 %v4923, %v5043
        %v5107 = vadd.f32 %v4924, %v5046
        %v5108 = vadd.f32 %v4925, %v5048
        %v5109 = vadd.f32 %v4926, %v5051
        %v5110 = vadd.f32 %v4927, %v5053
        %v5111 = vadd.f32 %v4928, %v5056
        %v5112 = vadd.f32 %v4929, %v5058
        %v5113 = vadd.f32 %v4930, %v5061
        %v5114 = vadd.f32 %v4931, %v5063
        %v5115 = vadd.f32 %v4932, %v5066
        %v5116 = vadd.f32 %v4933, %v5068
        %v5117 = vadd.f32 %v4934, %v5071
        %v5118 = vadd.f32 %v4935, %v5073
        %v5119 = vadd.f32 %v4936, %v5076
        %v5120 = vadd.f32 %v4937, %v5078
        %v5121 = vadd.f32 %v4938, %v5081
        %v5122 = vadd.f32 %v4939, %v5083
        %v5123 = vadd.f32 %v4940, %v5086
        %v5124 = vadd.f32 %v4941, %v5088
        %v5125 = vadd.f32 %v4942, %v5091
        %v5126 = vadd.f32 %v4943, %v5093
        %5127 = vst.msk [vmem:[#allocation2] sm:$0xff] %vm588, %v5095
        %5128 = vst.msk [vmem:[#allocation2 + $0x8] sm:$0xff] %vm588, %v5096
        %5129 = vst.msk [vmem:[#allocation2 + $0x10] sm:$0xff] %vm588, %v5097
        %5130 = vst.msk [vmem:[#allocation2 + $0x18] sm:$0xff] %vm588, %v5098
        %5131 = vst.msk [vmem:[#allocation2 + $0x20] sm:$0xff] %vm588, %v5099
        %5132 = vst.msk [vmem:[#allocation2 + $0x28] sm:$0xff] %vm588, %v5100
        %5133 = vst.msk [vmem:[#allocation2 + $0x30] sm:$0xff] %vm588, %v5101
        %5134 = vst.msk [vmem:[#allocation2 + $0x38] sm:$0xff] %vm588, %v5102
        %5135 = vst.msk [vmem:[#allocation2 + $0x40] sm:$0xff] %vm588, %v5103
        %5136 = vst.msk [vmem:[#allocation2 + $0x48] sm:$0xff] %vm588, %v5104
        %5137 = vst.msk [vmem:[#allocation2 + $0x50] sm:$0xff] %vm588, %v5105
        %5138 = vst.msk [vmem:[#allocation2 + $0x58] sm:$0xff] %vm588, %v5106
        %5139 = vst.msk [vmem:[#allocation2 + $0x60] sm:$0xff] %vm588, %v5107
        %5140 = vst.msk [vmem:[#allocation2 + $0x68] sm:$0xff] %vm588, %v5108
        %5141 = vst.msk [vmem:[#allocation2 + $0x70] sm:$0xff] %vm588, %v5109
        %5142 = vst.msk [vmem:[#allocation2 + $0x78] sm:$0xff] %vm588, %v5110
        %5143 = vst.msk [vmem:[#allocation2 + $0x80] sm:$0xff] %vm588, %v5111
        %5144 = vst.msk [vmem:[#allocation2 + $0x88] sm:$0xff] %vm588, %v5112
        %5145 = vst.msk [vmem:[#allocation2 + $0x90] sm:$0xff] %vm588, %v5113
        %5146 = vst.msk [vmem:[#allocation2 + $0x98] sm:$0xff] %vm588, %v5114
        %5147 = vst.msk [vmem:[#allocation2 + $0xa0] sm:$0xff] %vm588, %v5115
        %5148 = vst.msk [vmem:[#allocation2 + $0xa8] sm:$0xff] %vm588, %v5116
        %5149 = vst.msk [vmem:[#allocation2 + $0xb0] sm:$0xff] %vm588, %v5117
        %5150 = vst.msk [vmem:[#allocation2 + $0xb8] sm:$0xff] %vm588, %v5118
        %5151 = vst.msk [vmem:[#allocation2 + $0xc0] sm:$0xff] %vm588, %v5119
        %5152 = vst.msk [vmem:[#allocation2 + $0xc8] sm:$0xff] %vm588, %v5120
        %5153 = vst.msk [vmem:[#allocation2 + $0xd0] sm:$0xff] %vm588, %v5121
        %5154 = vst.msk [vmem:[#allocation2 + $0xd8] sm:$0xff] %vm588, %v5122
        %5155 = vst.msk [vmem:[#allocation2 + $0xe0] sm:$0xff] %vm588, %v5123
        %5156 = vst.msk [vmem:[#allocation2 + $0xe8] sm:$0xff] %vm588, %v5124
        %5157 = vst.msk [vmem:[#allocation2 + $0xf0] sm:$0xff] %vm588, %v5125
        %5158 = vst.msk [vmem:[#allocation2 + $0xf8] sm:$0xff] %vm588, %v5126
        %v5159 = vshrl.u32 %v4040, 16
        %v5161 = vshll.u32 %v4040, 16
        %v5163 = vrot.slane %v5161, 1
        %v5164 = vor.u32 %v5159, %v5163
        %v5166 = vshll.u32 %v4056, 16
        %v5168 = vrot.slane %v5166, 1
        %v5169 = vsel %vm4746, %v5164, %v5168
        %v5170 = vld [vmem:[#allocation2] sm:$0xff]
        %v5171 = vld [vmem:[#allocation2 + $0x8] sm:$0xff]
        %v5172 = vld [vmem:[#allocation2 + $0x10] sm:$0xff]
        %v5173 = vld [vmem:[#allocation2 + $0x18] sm:$0xff]
        %v5174 = vld [vmem:[#allocation2 + $0x20] sm:$0xff]
        %v5175 = vld [vmem:[#allocation2 + $0x28] sm:$0xff]
        %v5176 = vld [vmem:[#allocation2 + $0x30] sm:$0xff]
        %v5177 = vld [vmem:[#allocation2 + $0x38] sm:$0xff]
        %v5178 = vld [vmem:[#allocation2 + $0x40] sm:$0xff]
        %v5179 = vld [vmem:[#allocation2 + $0x48] sm:$0xff]
        %v5180 = vld [vmem:[#allocation2 + $0x50] sm:$0xff]
        %v5181 = vld [vmem:[#allocation2 + $0x58] sm:$0xff]
        %v5182 = vld [vmem:[#allocation2 + $0x60] sm:$0xff]
        %v5183 = vld [vmem:[#allocation2 + $0x68] sm:$0xff]
        %v5184 = vld [vmem:[#allocation2 + $0x70] sm:$0xff]
        %v5185 = vld [vmem:[#allocation2 + $0x78] sm:$0xff]
        %v5186 = vld [vmem:[#allocation2 + $0x80] sm:$0xff]
        %v5187 = vld [vmem:[#allocation2 + $0x88] sm:$0xff]
        %v5188 = vld [vmem:[#allocation2 + $0x90] sm:$0xff]
        %v5189 = vld [vmem:[#allocation2 + $0x98] sm:$0xff]
        %v5190 = vld [vmem:[#allocation2 + $0xa0] sm:$0xff]
        %v5191 = vld [vmem:[#allocation2 + $0xa8] sm:$0xff]
        %v5192 = vld [vmem:[#allocation2 + $0xb0] sm:$0xff]
        %v5193 = vld [vmem:[#allocation2 + $0xb8] sm:$0xff]
        %v5194 = vld [vmem:[#allocation2 + $0xc0] sm:$0xff]
        %v5195 = vld [vmem:[#allocation2 + $0xc8] sm:$0xff]
        %v5196 = vld [vmem:[#allocation2 + $0xd0] sm:$0xff]
        %v5197 = vld [vmem:[#allocation2 + $0xd8] sm:$0xff]
        %v5198 = vld [vmem:[#allocation2 + $0xe0] sm:$0xff]
        %v5199 = vld [vmem:[#allocation2 + $0xe8] sm:$0xff]
        %v5200 = vld [vmem:[#allocation2 + $0xf0] sm:$0xff]
        %v5201 = vld [vmem:[#allocation2 + $0xf8] sm:$0xff]
        %s5202 = scalar_lea.vmem [#allocation8], 64
        %v5203 = vld [vmem:[%s5202] sm:$0xf]
        %v5204 = vld [vmem:[%s5202 + $0x4] sm:$0xf]
        %v5205 = vld [vmem:[%s5202 + $0x8] sm:$0xf]
        %v5206 = vld [vmem:[%s5202 + $0xc] sm:$0xf]
        %v5211 = vunpack.c.l.b16 %v5203
        %v5212 = vunpack.c.l.b16 %v5204
        %v5213 = vunpack.c.l.b16 %v5205
        %v5214 = vunpack.c.l.b16 %v5206
        %v5215 = vpack.c.b16 %v5212, %v5211
        %v5216 = vpack.c.b16 %v5214, %v5213
        %v5220 = vsel %vm588, %v5169, 0
        %5222 = vmatpush.bf16.msra.mxu0 0
        %5223 = vmatpush.bf16.msra.mxu0 0
        %5224 = vmatpush.bf16.msra.mxu0 0
        %5225 = vmatpush.bf16.msra.mxu0 0
        %5226 = vmatpush.bf16.msra.mxu0 0
        %5227 = vmatpush.bf16.msra.mxu0 0
        %5228 = vmatpush.bf16.msra.mxu0 %v5216
        %5229 = vmatpush.bf16.msra.mxu0 %v5215
        %5230 = vmatmul.bf16.gmra.mxu0 %v4965
        %v5231 = vpop.f32.mrf.mxu0
        %v5232 = vadd.f32 0.0, %v5231
        %v5233 = vpop.f32.mrf.mxu0
        %v5234 = vadd.f32 0.0, %v5233
        %5235 = vmatmul.bf16.gmra.mxu0 %v4962
        %v5236 = vpop.f32.mrf.mxu0
        %v5237 = vadd.f32 0.0, %v5236
        %v5238 = vpop.f32.mrf.mxu0
        %v5239 = vadd.f32 0.0, %v5238
        %5240 = vmatmul.bf16.gmra.mxu0 %v4968
        %v5241 = vpop.f32.mrf.mxu0
        %v5242 = vadd.f32 0.0, %v5241
        %v5243 = vpop.f32.mrf.mxu0
        %v5244 = vadd.f32 0.0, %v5243
        %5245 = vmatmul.bf16.gmra.mxu0 %v4971
        %v5246 = vpop.f32.mrf.mxu0
        %v5247 = vadd.f32 0.0, %v5246
        %v5248 = vpop.f32.mrf.mxu0
        %v5249 = vadd.f32 0.0, %v5248
        %5250 = vmatmul.bf16.gmra.mxu0 %v4974
        %v5251 = vpop.f32.mrf.mxu0
        %v5252 = vadd.f32 0.0, %v5251
        %v5253 = vpop.f32.mrf.mxu0
        %v5254 = vadd.f32 0.0, %v5253
        %5255 = vmatmul.bf16.gmra.mxu0 %v4977
        %v5256 = vpop.f32.mrf.mxu0
        %v5257 = vadd.f32 0.0, %v5256
        %v5258 = vpop.f32.mrf.mxu0
        %v5259 = vadd.f32 0.0, %v5258
        %5260 = vmatmul.bf16.gmra.mxu0 %v4980
        %v5261 = vpop.f32.mrf.mxu0
        %v5262 = vadd.f32 0.0, %v5261
        %v5263 = vpop.f32.mrf.mxu0
        %v5264 = vadd.f32 0.0, %v5263
        %5265 = vmatmul.bf16.gmra.mxu0 %v4983
        %v5266 = vpop.f32.mrf.mxu0
        %v5267 = vadd.f32 0.0, %v5266
        %v5268 = vpop.f32.mrf.mxu0
        %v5269 = vadd.f32 0.0, %v5268
        %5270 = vmatmul.bf16.gmra.mxu0 %v4986
        %v5271 = vpop.f32.mrf.mxu0
        %v5272 = vadd.f32 0.0, %v5271
        %v5273 = vpop.f32.mrf.mxu0
        %v5274 = vadd.f32 0.0, %v5273
        %5275 = vmatmul.bf16.gmra.mxu0 %v4989
        %v5276 = vpop.f32.mrf.mxu0
        %v5277 = vadd.f32 0.0, %v5276
        %v5278 = vpop.f32.mrf.mxu0
        %v5279 = vadd.f32 0.0, %v5278
        %5280 = vmatmul.bf16.gmra.mxu0 %v4992
        %v5281 = vpop.f32.mrf.mxu0
        %v5282 = vadd.f32 0.0, %v5281
        %v5283 = vpop.f32.mrf.mxu0
        %v5284 = vadd.f32 0.0, %v5283
        %5285 = vmatmul.bf16.gmra.mxu0 %v4995
        %v5286 = vpop.f32.mrf.mxu0
        %v5287 = vadd.f32 0.0, %v5286
        %v5288 = vpop.f32.mrf.mxu0
        %v5289 = vadd.f32 0.0, %v5288
        %5290 = vmatmul.bf16.gmra.mxu0 %v4998
        %v5291 = vpop.f32.mrf.mxu0
        %v5292 = vadd.f32 0.0, %v5291
        %v5293 = vpop.f32.mrf.mxu0
        %v5294 = vadd.f32 0.0, %v5293
        %5295 = vmatmul.bf16.gmra.mxu0 %v5001
        %v5296 = vpop.f32.mrf.mxu0
        %v5297 = vadd.f32 0.0, %v5296
        %v5298 = vpop.f32.mrf.mxu0
        %v5299 = vadd.f32 0.0, %v5298
        %5300 = vmatmul.bf16.gmra.mxu0 %v5004
        %v5301 = vpop.f32.mrf.mxu0
        %v5302 = vadd.f32 0.0, %v5301
        %v5303 = vpop.f32.mrf.mxu0
        %v5304 = vadd.f32 0.0, %v5303
        %5305 = vmatmul.bf16.gmra.mxu0 %v5220
        %v5306 = vpop.f32.mrf.mxu0
        %v5307 = vadd.f32 0.0, %v5306
        %v5308 = vpop.f32.mrf.mxu0
        %v5309 = vadd.f32 0.0, %v5308
        %5310 = vdwg.mxu0
        %v5311 = vadd.f32 %v5170, %v5232
        %v5312 = vadd.f32 %v5171, %v5234
        %v5313 = vadd.f32 %v5172, %v5237
        %v5314 = vadd.f32 %v5173, %v5239
        %v5315 = vadd.f32 %v5174, %v5242
        %v5316 = vadd.f32 %v5175, %v5244
        %v5317 = vadd.f32 %v5176, %v5247
        %v5318 = vadd.f32 %v5177, %v5249
        %v5319 = vadd.f32 %v5178, %v5252
        %v5320 = vadd.f32 %v5179, %v5254
        %v5321 = vadd.f32 %v5180, %v5257
        %v5322 = vadd.f32 %v5181, %v5259
        %v5323 = vadd.f32 %v5182, %v5262
        %v5324 = vadd.f32 %v5183, %v5264
        %v5325 = vadd.f32 %v5184, %v5267
        %v5326 = vadd.f32 %v5185, %v5269
        %v5327 = vadd.f32 %v5186, %v5272
        %v5328 = vadd.f32 %v5187, %v5274
        %v5329 = vadd.f32 %v5188, %v5277
        %v5330 = vadd.f32 %v5189, %v5279
        %v5331 = vadd.f32 %v5190, %v5282
        %v5332 = vadd.f32 %v5191, %v5284
        %v5333 = vadd.f32 %v5192, %v5287
        %v5334 = vadd.f32 %v5193, %v5289
        %v5335 = vadd.f32 %v5194, %v5292
        %v5336 = vadd.f32 %v5195, %v5294
        %v5337 = vadd.f32 %v5196, %v5297
        %v5338 = vadd.f32 %v5197, %v5299
        %v5339 = vadd.f32 %v5198, %v5302
        %v5340 = vadd.f32 %v5199, %v5304
        %v5341 = vadd.f32 %v5200, %v5307
        %v5342 = vadd.f32 %v5201, %v5309
        %5343 = vst.msk [vmem:[#allocation2] sm:$0xff] %vm588, %v5311
        %5344 = vst.msk [vmem:[#allocation2 + $0x8] sm:$0xff] %vm588, %v5312
        %5345 = vst.msk [vmem:[#allocation2 + $0x10] sm:$0xff] %vm588, %v5313
        %5346 = vst.msk [vmem:[#allocation2 + $0x18] sm:$0xff] %vm588, %v5314
        %5347 = vst.msk [vmem:[#allocation2 + $0x20] sm:$0xff] %vm588, %v5315
        %5348 = vst.msk [vmem:[#allocation2 + $0x28] sm:$0xff] %vm588, %v5316
        %5349 = vst.msk [vmem:[#allocation2 + $0x30] sm:$0xff] %vm588, %v5317
        %5350 = vst.msk [vmem:[#allocation2 + $0x38] sm:$0xff] %vm588, %v5318
        %5351 = vst.msk [vmem:[#allocation2 + $0x40] sm:$0xff] %vm588, %v5319
        %5352 = vst.msk [vmem:[#allocation2 + $0x48] sm:$0xff] %vm588, %v5320
        %5353 = vst.msk [vmem:[#allocation2 + $0x50] sm:$0xff] %vm588, %v5321
        %5354 = vst.msk [vmem:[#allocation2 + $0x58] sm:$0xff] %vm588, %v5322
        %5355 = vst.msk [vmem:[#allocation2 + $0x60] sm:$0xff] %vm588, %v5323
        %5356 = vst.msk [vmem:[#allocation2 + $0x68] sm:$0xff] %vm588, %v5324
        %5357 = vst.msk [vmem:[#allocation2 + $0x70] sm:$0xff] %vm588, %v5325
        %5358 = vst.msk [vmem:[#allocation2 + $0x78] sm:$0xff] %vm588, %v5326
        %5359 = vst.msk [vmem:[#allocation2 + $0x80] sm:$0xff] %vm588, %v5327
        %5360 = vst.msk [vmem:[#allocation2 + $0x88] sm:$0xff] %vm588, %v5328
        %5361 = vst.msk [vmem:[#allocation2 + $0x90] sm:$0xff] %vm588, %v5329
        %5362 = vst.msk [vmem:[#allocation2 + $0x98] sm:$0xff] %vm588, %v5330
        %5363 = vst.msk [vmem:[#allocation2 + $0xa0] sm:$0xff] %vm588, %v5331
        %5364 = vst.msk [vmem:[#allocation2 + $0xa8] sm:$0xff] %vm588, %v5332
        %5365 = vst.msk [vmem:[#allocation2 + $0xb0] sm:$0xff] %vm588, %v5333
        %5366 = vst.msk [vmem:[#allocation2 + $0xb8] sm:$0xff] %vm588, %v5334
        %5367 = vst.msk [vmem:[#allocation2 + $0xc0] sm:$0xff] %vm588, %v5335
        %5368 = vst.msk [vmem:[#allocation2 + $0xc8] sm:$0xff] %vm588, %v5336
        %5369 = vst.msk [vmem:[#allocation2 + $0xd0] sm:$0xff] %vm588, %v5337
        %5370 = vst.msk [vmem:[#allocation2 + $0xd8] sm:$0xff] %vm588, %v5338
        %5371 = vst.msk [vmem:[#allocation2 + $0xe0] sm:$0xff] %vm588, %v5339
        %5372 = vst.msk [vmem:[#allocation2 + $0xe8] sm:$0xff] %vm588, %v5340
        %5373 = vst.msk [vmem:[#allocation2 + $0xf0] sm:$0xff] %vm588, %v5341
        %5374 = vst.msk [vmem:[#allocation2 + $0xf8] sm:$0xff] %vm588, %v5342
        %v5375 = vld [vmem:[#allocation2] sm:$0xff]
        %v5376 = vld [vmem:[#allocation2 + $0x8] sm:$0xff]
        %v5377 = vld [vmem:[#allocation2 + $0x10] sm:$0xff]
        %v5378 = vld [vmem:[#allocation2 + $0x18] sm:$0xff]
        %v5379 = vld [vmem:[#allocation2 + $0x20] sm:$0xff]
        %v5380 = vld [vmem:[#allocation2 + $0x28] sm:$0xff]
        %v5381 = vld [vmem:[#allocation2 + $0x30] sm:$0xff]
        %v5382 = vld [vmem:[#allocation2 + $0x38] sm:$0xff]
        %v5383 = vld [vmem:[#allocation2 + $0x40] sm:$0xff]
        %v5384 = vld [vmem:[#allocation2 + $0x48] sm:$0xff]
        %v5385 = vld [vmem:[#allocation2 + $0x50] sm:$0xff]
        %v5386 = vld [vmem:[#allocation2 + $0x58] sm:$0xff]
        %v5387 = vld [vmem:[#allocation2 + $0x60] sm:$0xff]
        %v5388 = vld [vmem:[#allocation2 + $0x68] sm:$0xff]
        %v5389 = vld [vmem:[#allocation2 + $0x70] sm:$0xff]
        %v5390 = vld [vmem:[#allocation2 + $0x78] sm:$0xff]
        %v5391 = vld [vmem:[#allocation2 + $0x80] sm:$0xff]
        %v5392 = vld [vmem:[#allocation2 + $0x88] sm:$0xff]
        %v5393 = vld [vmem:[#allocation2 + $0x90] sm:$0xff]
        %v5394 = vld [vmem:[#allocation2 + $0x98] sm:$0xff]
        %v5395 = vld [vmem:[#allocation2 + $0xa0] sm:$0xff]
        %v5396 = vld [vmem:[#allocation2 + $0xa8] sm:$0xff]
        %v5397 = vld [vmem:[#allocation2 + $0xb0] sm:$0xff]
        %v5398 = vld [vmem:[#allocation2 + $0xb8] sm:$0xff]
        %v5399 = vld [vmem:[#allocation2 + $0xc0] sm:$0xff]
        %v5400 = vld [vmem:[#allocation2 + $0xc8] sm:$0xff]
        %v5401 = vld [vmem:[#allocation2 + $0xd0] sm:$0xff]
        %v5402 = vld [vmem:[#allocation2 + $0xd8] sm:$0xff]
        %v5403 = vld [vmem:[#allocation2 + $0xe0] sm:$0xff]
        %v5404 = vld [vmem:[#allocation2 + $0xe8] sm:$0xff]
        %v5405 = vld [vmem:[#allocation2 + $0xf0] sm:$0xff]
        %v5406 = vld [vmem:[#allocation2 + $0xf8] sm:$0xff]
        %s5407 = scalar_lea.vmem [#allocation8], 112
        %v5408 = vld [vmem:[%s5407] sm:$0xf]
        %v5409 = vld [vmem:[%s5407 + $0x4] sm:$0xf]
        %v5410 = vld [vmem:[%s5407 + $0x8] sm:$0xf]
        %v5411 = vld [vmem:[%s5407 + $0xc] sm:$0xf]
        %v5416 = vunpack.c.l.b16 %v5408
        %v5417 = vunpack.c.l.b16 %v5409
        %v5418 = vunpack.c.l.b16 %v5410
        %v5419 = vunpack.c.l.b16 %v5411
        %v5420 = vpack.c.b16 %v5417, %v5416
        %v5421 = vpack.c.b16 %v5419, %v5418
        %5424 = vmatpush.bf16.msra.mxu0 0
        %5425 = vmatpush.bf16.msra.mxu0 0
        %5426 = vmatpush.bf16.msra.mxu0 0
        %5427 = vmatpush.bf16.msra.mxu0 0
        %5428 = vmatpush.bf16.msra.mxu0 0
        %5429 = vmatpush.bf16.msra.mxu0 0
        %5430 = vmatpush.bf16.msra.mxu0 %v5421
        %5431 = vmatpush.bf16.msra.mxu0 %v5420
        %5432 = vmatmul.bf16.gmra.mxu0 %v4962
        %v5433 = vpop.f32.mrf.mxu0
        %v5434 = vadd.f32 0.0, %v5433
        %v5435 = vpop.f32.mrf.mxu0
        %v5436 = vadd.f32 0.0, %v5435
        %5437 = vmatmul.bf16.gmra.mxu0 %v4968
        %v5438 = vpop.f32.mrf.mxu0
        %v5439 = vadd.f32 0.0, %v5438
        %v5440 = vpop.f32.mrf.mxu0
        %v5441 = vadd.f32 0.0, %v5440
        %5442 = vmatmul.bf16.gmra.mxu0 %v4971
        %v5443 = vpop.f32.mrf.mxu0
        %v5444 = vadd.f32 0.0, %v5443
        %v5445 = vpop.f32.mrf.mxu0
        %v5446 = vadd.f32 0.0, %v5445
        %5447 = vmatmul.bf16.gmra.mxu0 %v4974
        %v5448 = vpop.f32.mrf.mxu0
        %v5449 = vadd.f32 0.0, %v5448
        %v5450 = vpop.f32.mrf.mxu0
        %v5451 = vadd.f32 0.0, %v5450
        %5452 = vmatmul.bf16.gmra.mxu0 %v4977
        %v5453 = vpop.f32.mrf.mxu0
        %v5454 = vadd.f32 0.0, %v5453
        %v5455 = vpop.f32.mrf.mxu0
        %v5456 = vadd.f32 0.0, %v5455
        %5457 = vmatmul.bf16.gmra.mxu0 %v4980
        %v5458 = vpop.f32.mrf.mxu0
        %v5459 = vadd.f32 0.0, %v5458
        %v5460 = vpop.f32.mrf.mxu0
        %v5461 = vadd.f32 0.0, %v5460
        %5462 = vmatmul.bf16.gmra.mxu0 %v4983
        %v5463 = vpop.f32.mrf.mxu0
        %v5464 = vadd.f32 0.0, %v5463
        %v5465 = vpop.f32.mrf.mxu0
        %v5466 = vadd.f32 0.0, %v5465
        %5467 = vmatmul.bf16.gmra.mxu0 %v4986
        %v5468 = vpop.f32.mrf.mxu0
        %v5469 = vadd.f32 0.0, %v5468
        %v5470 = vpop.f32.mrf.mxu0
        %v5471 = vadd.f32 0.0, %v5470
        %5472 = vmatmul.bf16.gmra.mxu0 %v4989
        %v5473 = vpop.f32.mrf.mxu0
        %v5474 = vadd.f32 0.0, %v5473
        %v5475 = vpop.f32.mrf.mxu0
        %v5476 = vadd.f32 0.0, %v5475
        %5477 = vmatmul.bf16.gmra.mxu0 %v4992
        %v5478 = vpop.f32.mrf.mxu0
        %v5479 = vadd.f32 0.0, %v5478
        %v5480 = vpop.f32.mrf.mxu0
        %v5481 = vadd.f32 0.0, %v5480
        %5482 = vmatmul.bf16.gmra.mxu0 %v4995
        %v5483 = vpop.f32.mrf.mxu0
        %v5484 = vadd.f32 0.0, %v5483
        %v5485 = vpop.f32.mrf.mxu0
        %v5486 = vadd.f32 0.0, %v5485
        %5487 = vmatmul.bf16.gmra.mxu0 %v4998
        %v5488 = vpop.f32.mrf.mxu0
        %v5489 = vadd.f32 0.0, %v5488
        %v5490 = vpop.f32.mrf.mxu0
        %v5491 = vadd.f32 0.0, %v5490
        %5492 = vmatmul.bf16.gmra.mxu0 %v5001
        %v5493 = vpop.f32.mrf.mxu0
        %v5494 = vadd.f32 0.0, %v5493
        %v5495 = vpop.f32.mrf.mxu0
        %v5496 = vadd.f32 0.0, %v5495
        %5497 = vmatmul.bf16.gmra.mxu0 %v5004
        %v5498 = vpop.f32.mrf.mxu0
        %v5499 = vadd.f32 0.0, %v5498
        %v5500 = vpop.f32.mrf.mxu0
        %v5501 = vadd.f32 0.0, %v5500
        %5502 = vmatmul.bf16.gmra.mxu0 %v5220
        %v5503 = vpop.f32.mrf.mxu0
        %v5504 = vadd.f32 0.0, %v5503
        %v5505 = vpop.f32.mrf.mxu0
        %v5506 = vadd.f32 0.0, %v5505
        %5507 = vmatmul.bf16.gmra.mxu0 %v5004
        %v5508 = vpop.f32.mrf.mxu0
        %v5509 = vadd.f32 0.0, %v5508
        %v5510 = vpop.f32.mrf.mxu0
        %v5511 = vadd.f32 0.0, %v5510
        %5512 = vdwg.mxu0
        %v5513 = vadd.f32 %v5375, %v5434
        %v5514 = vadd.f32 %v5376, %v5436
        %v5515 = vadd.f32 %v5377, %v5439
        %v5516 = vadd.f32 %v5378, %v5441
        %v5517 = vadd.f32 %v5379, %v5444
        %v5518 = vadd.f32 %v5380, %v5446
        %v5519 = vadd.f32 %v5381, %v5449
        %v5520 = vadd.f32 %v5382, %v5451
        %v5521 = vadd.f32 %v5383, %v5454
        %v5522 = vadd.f32 %v5384, %v5456
        %v5523 = vadd.f32 %v5385, %v5459
        %v5524 = vadd.f32 %v5386, %v5461
        %v5525 = vadd.f32 %v5387, %v5464
        %v5526 = vadd.f32 %v5388, %v5466
        %v5527 = vadd.f32 %v5389, %v5469
        %v5528 = vadd.f32 %v5390, %v5471
        %v5529 = vadd.f32 %v5391, %v5474
        %v5530 = vadd.f32 %v5392, %v5476
        %v5531 = vadd.f32 %v5393, %v5479
        %v5532 = vadd.f32 %v5394, %v5481
        %v5533 = vadd.f32 %v5395, %v5484
        %v5534 = vadd.f32 %v5396, %v5486
        %v5535 = vadd.f32 %v5397, %v5489
        %v5536 = vadd.f32 %v5398, %v5491
        %v5537 = vadd.f32 %v5399, %v5494
        %v5538 = vadd.f32 %v5400, %v5496
        %v5539 = vadd.f32 %v5401, %v5499
        %v5540 = vadd.f32 %v5402, %v5501
        %v5541 = vadd.f32 %v5403, %v5504
        %v5542 = vadd.f32 %v5404, %v5506
        %v5543 = vadd.f32 %v5405, %v5509
        %v5544 = vadd.f32 %v5406, %v5511
        %5545 = vst.msk [vmem:[#allocation2] sm:$0xff] %vm588, %v5513
        %5546 = vst.msk [vmem:[#allocation2 + $0x8] sm:$0xff] %vm588, %v5514
        %5547 = vst.msk [vmem:[#allocation2 + $0x10] sm:$0xff] %vm588, %v5515
        %5548 = vst.msk [vmem:[#allocation2 + $0x18] sm:$0xff] %vm588, %v5516
        %5549 = vst.msk [vmem:[#allocation2 + $0x20] sm:$0xff] %vm588, %v5517
        %5550 = vst.msk [vmem:[#allocation2 + $0x28] sm:$0xff] %vm588, %v5518
        %5551 = vst.msk [vmem:[#allocation2 + $0x30] sm:$0xff] %vm588, %v5519
        %5552 = vst.msk [vmem:[#allocation2 + $0x38] sm:$0xff] %vm588, %v5520
        %5553 = vst.msk [vmem:[#allocation2 + $0x40] sm:$0xff] %vm588, %v5521
        %5554 = vst.msk [vmem:[#allocation2 + $0x48] sm:$0xff] %vm588, %v5522
        %5555 = vst.msk [vmem:[#allocation2 + $0x50] sm:$0xff] %vm588, %v5523
        %5556 = vst.msk [vmem:[#allocation2 + $0x58] sm:$0xff] %vm588, %v5524
        %5557 = vst.msk [vmem:[#allocation2 + $0x60] sm:$0xff] %vm588, %v5525
        %5558 = vst.msk [vmem:[#allocation2 + $0x68] sm:$0xff] %vm588, %v5526
        %5559 = vst.msk [vmem:[#allocation2 + $0x70] sm:$0xff] %vm588, %v5527
        %5560 = vst.msk [vmem:[#allocation2 + $0x78] sm:$0xff] %vm588, %v5528
        %5561 = vst.msk [vmem:[#allocation2 + $0x80] sm:$0xff] %vm588, %v5529
        %5562 = vst.msk [vmem:[#allocation2 + $0x88] sm:$0xff] %vm588, %v5530
        %5563 = vst.msk [vmem:[#allocation2 + $0x90] sm:$0xff] %vm588, %v5531
        %5564 = vst.msk [vmem:[#allocation2 + $0x98] sm:$0xff] %vm588, %v5532
        %5565 = vst.msk [vmem:[#allocation2 + $0xa0] sm:$0xff] %vm588, %v5533
        %5566 = vst.msk [vmem:[#allocation2 + $0xa8] sm:$0xff] %vm588, %v5534
        %5567 = vst.msk [vmem:[#allocation2 + $0xb0] sm:$0xff] %vm588, %v5535
        %5568 = vst.msk [vmem:[#allocation2 + $0xb8] sm:$0xff] %vm588, %v5536
        %5569 = vst.msk [vmem:[#allocation2 + $0xc0] sm:$0xff] %vm588, %v5537
        %5570 = vst.msk [vmem:[#allocation2 + $0xc8] sm:$0xff] %vm588, %v5538
        %5571 = vst.msk [vmem:[#allocation2 + $0xd0] sm:$0xff] %vm588, %v5539
        %5572 = vst.msk [vmem:[#allocation2 + $0xd8] sm:$0xff] %vm588, %v5540
        %5573 = vst.msk [vmem:[#allocation2 + $0xe0] sm:$0xff] %vm588, %v5541
        %5574 = vst.msk [vmem:[#allocation2 + $0xe8] sm:$0xff] %vm588, %v5542
        %5575 = vst.msk [vmem:[#allocation2 + $0xf0] sm:$0xff] %vm588, %v5543
        %5576 = vst.msk [vmem:[#allocation2 + $0xf8] sm:$0xff] %vm588, %v5544
        %vm5607 = vcmask 1046528
        %v5608 = vrot.slane %v4025, 1
        %v5609 = vrot.slane %v4041, 1
        %v5610 = vsel %vm5607, %v5608, %v5609
        %v5611 = vrot.slane %v4026, 1
        %v5612 = vrot.slane %v4042, 1
        %v5613 = vsel %vm5607, %v5611, %v5612
        %v5614 = vrot.slane %v4027, 1
        %v5615 = vrot.slane %v4043, 1
        %v5616 = vsel %vm5607, %v5614, %v5615
        %v5617 = vrot.slane %v4028, 1
        %v5618 = vrot.slane %v4044, 1
        %v5619 = vsel %vm5607, %v5617, %v5618
        %v5620 = vrot.slane %v4029, 1
        %v5621 = vrot.slane %v4045, 1
        %v5622 = vsel %vm5607, %v5620, %v5621
        %v5623 = vrot.slane %v4030, 1
        %v5624 = vrot.slane %v4046, 1
        %v5625 = vsel %vm5607, %v5623, %v5624
        %v5626 = vrot.slane %v4031, 1
        %v5627 = vrot.slane %v4047, 1
        %v5628 = vsel %vm5607, %v5626, %v5627
        %v5629 = vrot.slane %v4032, 1
        %v5630 = vrot.slane %v4048, 1
        %v5631 = vsel %vm5607, %v5629, %v5630
        %v5632 = vrot.slane %v4033, 1
        %v5633 = vrot.slane %v4049, 1
        %v5634 = vsel %vm5607, %v5632, %v5633
        %v5635 = vrot.slane %v4034, 1
        %v5636 = vrot.slane %v4050, 1
        %v5637 = vsel %vm5607, %v5635, %v5636
        %v5638 = vrot.slane %v4035, 1
        %v5639 = vrot.slane %v4051, 1
        %v5640 = vsel %vm5607, %v5638, %v5639
        %v5641 = vrot.slane %v4036, 1
        %v5642 = vrot.slane %v4052, 1
        %v5643 = vsel %vm5607, %v5641, %v5642
        %v5644 = vrot.slane %v4037, 1
        %v5645 = vrot.slane %v4053, 1
        %v5646 = vsel %vm5607, %v5644, %v5645
        %v5647 = vrot.slane %v4038, 1
        %v5648 = vrot.slane %v4054, 1
        %v5649 = vsel %vm5607, %v5647, %v5648
        %v5650 = vrot.slane %v4039, 1
        %v5651 = vrot.slane %v4055, 1
        %v5652 = vsel %vm5607, %v5650, %v5651
        %v5653 = vld [vmem:[#allocation2] sm:$0xff]
        %v5654 = vld [vmem:[#allocation2 + $0x8] sm:$0xff]
        %v5655 = vld [vmem:[#allocation2 + $0x10] sm:$0xff]
        %v5656 = vld [vmem:[#allocation2 + $0x18] sm:$0xff]
        %v5657 = vld [vmem:[#allocation2 + $0x20] sm:$0xff]
        %v5658 = vld [vmem:[#allocation2 + $0x28] sm:$0xff]
        %v5659 = vld [vmem:[#allocation2 + $0x30] sm:$0xff]
        %v5660 = vld [vmem:[#allocation2 + $0x38] sm:$0xff]
        %v5661 = vld [vmem:[#allocation2 + $0x40] sm:$0xff]
        %v5662 = vld [vmem:[#allocation2 + $0x48] sm:$0xff]
        %v5663 = vld [vmem:[#allocation2 + $0x50] sm:$0xff]
        %v5664 = vld [vmem:[#allocation2 + $0x58] sm:$0xff]
        %v5665 = vld [vmem:[#allocation2 + $0x60] sm:$0xff]
        %v5666 = vld [vmem:[#allocation2 + $0x68] sm:$0xff]
        %v5667 = vld [vmem:[#allocation2 + $0x70] sm:$0xff]
        %v5668 = vld [vmem:[#allocation2 + $0x78] sm:$0xff]
        %v5669 = vld [vmem:[#allocation2 + $0x80] sm:$0xff]
        %v5670 = vld [vmem:[#allocation2 + $0x88] sm:$0xff]
        %v5671 = vld [vmem:[#allocation2 + $0x90] sm:$0xff]
        %v5672 = vld [vmem:[#allocation2 + $0x98] sm:$0xff]
        %v5673 = vld [vmem:[#allocation2 + $0xa0] sm:$0xff]
        %v5674 = vld [vmem:[#allocation2 + $0xa8] sm:$0xff]
        %v5675 = vld [vmem:[#allocation2 + $0xb0] sm:$0xff]
        %v5676 = vld [vmem:[#allocation2 + $0xb8] sm:$0xff]
        %v5677 = vld [vmem:[#allocation2 + $0xc0] sm:$0xff]
        %v5678 = vld [vmem:[#allocation2 + $0xc8] sm:$0xff]
        %v5679 = vld [vmem:[#allocation2 + $0xd0] sm:$0xff]
        %v5680 = vld [vmem:[#allocation2 + $0xd8] sm:$0xff]
        %v5681 = vld [vmem:[#allocation2 + $0xe0] sm:$0xff]
        %v5682 = vld [vmem:[#allocation2 + $0xe8] sm:$0xff]
        %v5683 = vld [vmem:[#allocation2 + $0xf0] sm:$0xff]
        %v5684 = vld [vmem:[#allocation2 + $0xf8] sm:$0xff]
        %s5685 = scalar_lea.vmem [#allocation8], 32
        %v5686 = vld [vmem:[%s5685] sm:$0xf]
        %v5687 = vld [vmem:[%s5685 + $0x4] sm:$0xf]
        %v5688 = vld [vmem:[%s5685 + $0x8] sm:$0xf]
        %v5689 = vld [vmem:[%s5685 + $0xc] sm:$0xf]
        %v5694 = vunpack.c.l.b16 %v5686
        %v5695 = vunpack.c.l.b16 %v5687
        %v5696 = vunpack.c.l.b16 %v5688
        %v5697 = vunpack.c.l.b16 %v5689
        %v5698 = vpack.c.b16 %v5695, %v5694
        %v5699 = vpack.c.b16 %v5697, %v5696
        %v5703 = vsel %vm588, %v5610, 0
        %v5706 = vsel %vm588, %v5613, 0
        %v5709 = vsel %vm588, %v5616, 0
        %v5712 = vsel %vm588, %v5619, 0
        %v5715 = vsel %vm588, %v5622, 0
        %v5718 = vsel %vm588, %v5625, 0
        %v5721 = vsel %vm588, %v5628, 0
        %v5724 = vsel %vm588, %v5631, 0
        %v5727 = vsel %vm588, %v5634, 0
        %v5730 = vsel %vm588, %v5637, 0
        %v5733 = vsel %vm588, %v5640, 0
        %v5736 = vsel %vm588, %v5643, 0
        %v5739 = vsel %vm588, %v5646, 0
        %v5742 = vsel %vm588, %v5649, 0
        %v5745 = vsel %vm588, %v5652, 0
        %5747 = vmatpush.bf16.msra.mxu0 0
        %5748 = vmatpush.bf16.msra.mxu0 0
        %5749 = vmatpush.bf16.msra.mxu0 0
        %5750 = vmatpush.bf16.msra.mxu0 0
        %5751 = vmatpush.bf16.msra.mxu0 0
        %5752 = vmatpush.bf16.msra.mxu0 0
        %5753 = vmatpush.bf16.msra.mxu0 %v5699
        %5754 = vmatpush.bf16.msra.mxu0 %v5698
        %5755 = vmatmul.bf16.gmra.mxu0 %v5703
        %v5756 = vpop.f32.mrf.mxu0
        %v5757 = vadd.f32 0.0, %v5756
        %v5758 = vpop.f32.mrf.mxu0
        %v5759 = vadd.f32 0.0, %v5758
        %5760 = vmatmul.bf16.gmra.mxu0 %v5706
        %v5761 = vpop.f32.mrf.mxu0
        %v5762 = vadd.f32 0.0, %v5761
        %v5763 = vpop.f32.mrf.mxu0
        %v5764 = vadd.f32 0.0, %v5763
        %5765 = vmatmul.bf16.gmra.mxu0 %v5703
        %v5766 = vpop.f32.mrf.mxu0
        %v5767 = vadd.f32 0.0, %v5766
        %v5768 = vpop.f32.mrf.mxu0
        %v5769 = vadd.f32 0.0, %v5768
        %5770 = vmatmul.bf16.gmra.mxu0 %v5709
        %v5771 = vpop.f32.mrf.mxu0
        %v5772 = vadd.f32 0.0, %v5771
        %v5773 = vpop.f32.mrf.mxu0
        %v5774 = vadd.f32 0.0, %v5773
        %5775 = vmatmul.bf16.gmra.mxu0 %v5712
        %v5776 = vpop.f32.mrf.mxu0
        %v5777 = vadd.f32 0.0, %v5776
        %v5778 = vpop.f32.mrf.mxu0
        %v5779 = vadd.f32 0.0, %v5778
        %5780 = vmatmul.bf16.gmra.mxu0 %v5715
        %v5781 = vpop.f32.mrf.mxu0
        %v5782 = vadd.f32 0.0, %v5781
        %v5783 = vpop.f32.mrf.mxu0
        %v5784 = vadd.f32 0.0, %v5783
        %5785 = vmatmul.bf16.gmra.mxu0 %v5718
        %v5786 = vpop.f32.mrf.mxu0
        %v5787 = vadd.f32 0.0, %v5786
        %v5788 = vpop.f32.mrf.mxu0
        %v5789 = vadd.f32 0.0, %v5788
        %5790 = vmatmul.bf16.gmra.mxu0 %v5721
        %v5791 = vpop.f32.mrf.mxu0
        %v5792 = vadd.f32 0.0, %v5791
        %v5793 = vpop.f32.mrf.mxu0
        %v5794 = vadd.f32 0.0, %v5793
        %5795 = vmatmul.bf16.gmra.mxu0 %v5724
        %v5796 = vpop.f32.mrf.mxu0
        %v5797 = vadd.f32 0.0, %v5796
        %v5798 = vpop.f32.mrf.mxu0
        %v5799 = vadd.f32 0.0, %v5798
        %5800 = vmatmul.bf16.gmra.mxu0 %v5727
        %v5801 = vpop.f32.mrf.mxu0
        %v5802 = vadd.f32 0.0, %v5801
        %v5803 = vpop.f32.mrf.mxu0
        %v5804 = vadd.f32 0.0, %v5803
        %5805 = vmatmul.bf16.gmra.mxu0 %v5730
        %v5806 = vpop.f32.mrf.mxu0
        %v5807 = vadd.f32 0.0, %v5806
        %v5808 = vpop.f32.mrf.mxu0
        %v5809 = vadd.f32 0.0, %v5808
        %5810 = vmatmul.bf16.gmra.mxu0 %v5733
        %v5811 = vpop.f32.mrf.mxu0
        %v5812 = vadd.f32 0.0, %v5811
        %v5813 = vpop.f32.mrf.mxu0
        %v5814 = vadd.f32 0.0, %v5813
        %5815 = vmatmul.bf16.gmra.mxu0 %v5736
        %v5816 = vpop.f32.mrf.mxu0
        %v5817 = vadd.f32 0.0, %v5816
        %v5818 = vpop.f32.mrf.mxu0
        %v5819 = vadd.f32 0.0, %v5818
        %5820 = vmatmul.bf16.gmra.mxu0 %v5739
        %v5821 = vpop.f32.mrf.mxu0
        %v5822 = vadd.f32 0.0, %v5821
        %v5823 = vpop.f32.mrf.mxu0
        %v5824 = vadd.f32 0.0, %v5823
        %5825 = vmatmul.bf16.gmra.mxu0 %v5742
        %v5826 = vpop.f32.mrf.mxu0
        %v5827 = vadd.f32 0.0, %v5826
        %v5828 = vpop.f32.mrf.mxu0
        %v5829 = vadd.f32 0.0, %v5828
        %5830 = vmatmul.bf16.gmra.mxu0 %v5745
        %v5831 = vpop.f32.mrf.mxu0
        %v5832 = vadd.f32 0.0, %v5831
        %v5833 = vpop.f32.mrf.mxu0
        %v5834 = vadd.f32 0.0, %v5833
        %5835 = vdwg.mxu0
        %v5836 = vadd.f32 %v5653, %v5757
        %v5837 = vadd.f32 %v5654, %v5759
        %v5838 = vadd.f32 %v5655, %v5762
        %v5839 = vadd.f32 %v5656, %v5764
        %v5840 = vadd.f32 %v5657, %v5767
        %v5841 = vadd.f32 %v5658, %v5769
        %v5842 = vadd.f32 %v5659, %v5772
        %v5843 = vadd.f32 %v5660, %v5774
        %v5844 = vadd.f32 %v5661, %v5777
        %v5845 = vadd.f32 %v5662, %v5779
        %v5846 = vadd.f32 %v5663, %v5782
        %v5847 = vadd.f32 %v5664, %v5784
        %v5848 = vadd.f32 %v5665, %v5787
        %v5849 = vadd.f32 %v5666, %v5789
        %v5850 = vadd.f32 %v5667, %v5792
        %v5851 = vadd.f32 %v5668, %v5794
        %v5852 = vadd.f32 %v5669, %v5797
        %v5853 = vadd.f32 %v5670, %v5799
        %v5854 = vadd.f32 %v5671, %v5802
        %v5855 = vadd.f32 %v5672, %v5804
        %v5856 = vadd.f32 %v5673, %v5807
        %v5857 = vadd.f32 %v5674, %v5809
        %v5858 = vadd.f32 %v5675, %v5812
        %v5859 = vadd.f32 %v5676, %v5814
        %v5860 = vadd.f32 %v5677, %v5817
        %v5861 = vadd.f32 %v5678, %v5819
        %v5862 = vadd.f32 %v5679, %v5822
        %v5863 = vadd.f32 %v5680, %v5824
        %v5864 = vadd.f32 %v5681, %v5827
        %v5865 = vadd.f32 %v5682, %v5829
        %v5866 = vadd.f32 %v5683, %v5832
        %v5867 = vadd.f32 %v5684, %v5834
        %5868 = vst.msk [vmem:[#allocation2] sm:$0xff] %vm588, %v5836
        %5869 = vst.msk [vmem:[#allocation2 + $0x8] sm:$0xff] %vm588, %v5837
        %5870 = vst.msk [vmem:[#allocation2 + $0x10] sm:$0xff] %vm588, %v5838
        %5871 = vst.msk [vmem:[#allocation2 + $0x18] sm:$0xff] %vm588, %v5839
        %5872 = vst.msk [vmem:[#allocation2 + $0x20] sm:$0xff] %vm588, %v5840
        %5873 = vst.msk [vmem:[#allocation2 + $0x28] sm:$0xff] %vm588, %v5841
        %5874 = vst.msk [vmem:[#allocation2 + $0x30] sm:$0xff] %vm588, %v5842
        %5875 = vst.msk [vmem:[#allocation2 + $0x38] sm:$0xff] %vm588, %v5843
        %5876 = vst.msk [vmem:[#allocation2 + $0x40] sm:$0xff] %vm588, %v5844
        %5877 = vst.msk [vmem:[#allocation2 + $0x48] sm:$0xff] %vm588, %v5845
        %5878 = vst.msk [vmem:[#allocation2 + $0x50] sm:$0xff] %vm588, %v5846
        %5879 = vst.msk [vmem:[#allocation2 + $0x58] sm:$0xff] %vm588, %v5847
        %5880 = vst.msk [vmem:[#allocation2 + $0x60] sm:$0xff] %vm588, %v5848
        %5881 = vst.msk [vmem:[#allocation2 + $0x68] sm:$0xff] %vm588, %v5849
        %5882 = vst.msk [vmem:[#allocation2 + $0x70] sm:$0xff] %vm588, %v5850
        %5883 = vst.msk [vmem:[#allocation2 + $0x78] sm:$0xff] %vm588, %v5851
        %5884 = vst.msk [vmem:[#allocation2 + $0x80] sm:$0xff] %vm588, %v5852
        %5885 = vst.msk [vmem:[#allocation2 + $0x88] sm:$0xff] %vm588, %v5853
        %5886 = vst.msk [vmem:[#allocation2 + $0x90] sm:$0xff] %vm588, %v5854
        %5887 = vst.msk [vmem:[#allocation2 + $0x98] sm:$0xff] %vm588, %v5855
        %5888 = vst.msk [vmem:[#allocation2 + $0xa0] sm:$0xff] %vm588, %v5856
        %5889 = vst.msk [vmem:[#allocation2 + $0xa8] sm:$0xff] %vm588, %v5857
        %5890 = vst.msk [vmem:[#allocation2 + $0xb0] sm:$0xff] %vm588, %v5858
        %5891 = vst.msk [vmem:[#allocation2 + $0xb8] sm:$0xff] %vm588, %v5859
        %5892 = vst.msk [vmem:[#allocation2 + $0xc0] sm:$0xff] %vm588, %v5860
        %5893 = vst.msk [vmem:[#allocation2 + $0xc8] sm:$0xff] %vm588, %v5861
        %5894 = vst.msk [vmem:[#allocation2 + $0xd0] sm:$0xff] %vm588, %v5862
        %5895 = vst.msk [vmem:[#allocation2 + $0xd8] sm:$0xff] %vm588, %v5863
        %5896 = vst.msk [vmem:[#allocation2 + $0xe0] sm:$0xff] %vm588, %v5864
        %5897 = vst.msk [vmem:[#allocation2 + $0xe8] sm:$0xff] %vm588, %v5865
        %5898 = vst.msk [vmem:[#allocation2 + $0xf0] sm:$0xff] %vm588, %v5866
        %5899 = vst.msk [vmem:[#allocation2 + $0xf8] sm:$0xff] %vm588, %v5867
        %v5902 = vrot.slane %v4040, 1
        %v5903 = vrot.slane %v4056, 1
        %v5904 = vsel %vm5607, %v5902, %v5903
        %v5905 = vld [vmem:[#allocation2] sm:$0xff]
        %v5906 = vld [vmem:[#allocation2 + $0x8] sm:$0xff]
        %v5907 = vld [vmem:[#allocation2 + $0x10] sm:$0xff]
        %v5908 = vld [vmem:[#allocation2 + $0x18] sm:$0xff]
        %v5909 = vld [vmem:[#allocation2 + $0x20] sm:$0xff]
        %v5910 = vld [vmem:[#allocation2 + $0x28] sm:$0xff]
        %v5911 = vld [vmem:[#allocation2 + $0x30] sm:$0xff]
        %v5912 = vld [vmem:[#allocation2 + $0x38] sm:$0xff]
        %v5913 = vld [vmem:[#allocation2 + $0x40] sm:$0xff]
        %v5914 = vld [vmem:[#allocation2 + $0x48] sm:$0xff]
        %v5915 = vld [vmem:[#allocation2 + $0x50] sm:$0xff]
        %v5916 = vld [vmem:[#allocation2 + $0x58] sm:$0xff]
        %v5917 = vld [vmem:[#allocation2 + $0x60] sm:$0xff]
        %v5918 = vld [vmem:[#allocation2 + $0x68] sm:$0xff]
        %v5919 = vld [vmem:[#allocation2 + $0x70] sm:$0xff]
        %v5920 = vld [vmem:[#allocation2 + $0x78] sm:$0xff]
        %v5921 = vld [vmem:[#allocation2 + $0x80] sm:$0xff]
        %v5922 = vld [vmem:[#allocation2 + $0x88] sm:$0xff]
        %v5923 = vld [vmem:[#allocation2 + $0x90] sm:$0xff]
        %v5924 = vld [vmem:[#allocation2 + $0x98] sm:$0xff]
        %v5925 = vld [vmem:[#allocation2 + $0xa0] sm:$0xff]
        %v5926 = vld [vmem:[#allocation2 + $0xa8] sm:$0xff]
        %v5927 = vld [vmem:[#allocation2 + $0xb0] sm:$0xff]
        %v5928 = vld [vmem:[#allocation2 + $0xb8] sm:$0xff]
        %v5929 = vld [vmem:[#allocation2 + $0xc0] sm:$0xff]
        %v5930 = vld [vmem:[#allocation2 + $0xc8] sm:$0xff]
        %v5931 = vld [vmem:[#allocation2 + $0xd0] sm:$0xff]
        %v5932 = vld [vmem:[#allocation2 + $0xd8] sm:$0xff]
        %v5933 = vld [vmem:[#allocation2 + $0xe0] sm:$0xff]
        %v5934 = vld [vmem:[#allocation2 + $0xe8] sm:$0xff]
        %v5935 = vld [vmem:[#allocation2 + $0xf0] sm:$0xff]
        %v5936 = vld [vmem:[#allocation2 + $0xf8] sm:$0xff]
        %s5937 = scalar_lea.vmem [#allocation8], 80
        %v5938 = vld [vmem:[%s5937] sm:$0xf]
        %v5939 = vld [vmem:[%s5937 + $0x4] sm:$0xf]
        %v5940 = vld [vmem:[%s5937 + $0x8] sm:$0xf]
        %v5941 = vld [vmem:[%s5937 + $0xc] sm:$0xf]
        %v5946 = vunpack.c.l.b16 %v5938
        %v5947 = vunpack.c.l.b16 %v5939
        %v5948 = vunpack.c.l.b16 %v5940
        %v5949 = vunpack.c.l.b16 %v5941
        %v5950 = vpack.c.b16 %v5947, %v5946
        %v5951 = vpack.c.b16 %v5949, %v5948
        %v5955 = vsel %vm588, %v5904, 0
        %5957 = vmatpush.bf16.msra.mxu0 0
        %5958 = vmatpush.bf16.msra.mxu0 0
        %5959 = vmatpush.bf16.msra.mxu0 0
        %5960 = vmatpush.bf16.msra.mxu0 0
        %5961 = vmatpush.bf16.msra.mxu0 0
        %5962 = vmatpush.bf16.msra.mxu0 0
        %5963 = vmatpush.bf16.msra.mxu0 %v5951
        %5964 = vmatpush.bf16.msra.mxu0 %v5950
        %5965 = vmatmul.bf16.gmra.mxu0 %v5706
        %v5966 = vpop.f32.mrf.mxu0
        %v5967 = vadd.f32 0.0, %v5966
        %v5968 = vpop.f32.mrf.mxu0
        %v5969 = vadd.f32 0.0, %v5968
        %5970 = vmatmul.bf16.gmra.mxu0 %v5703
        %v5971 = vpop.f32.mrf.mxu0
        %v5972 = vadd.f32 0.0, %v5971
        %v5973 = vpop.f32.mrf.mxu0
        %v5974 = vadd.f32 0.0, %v5973
        %5975 = vmatmul.bf16.gmra.mxu0 %v5709
        %v5976 = vpop.f32.mrf.mxu0
        %v5977 = vadd.f32 0.0, %v5976
        %v5978 = vpop.f32.mrf.mxu0
        %v5979 = vadd.f32 0.0, %v5978
        %5980 = vmatmul.bf16.gmra.mxu0 %v5712
        %v5981 = vpop.f32.mrf.mxu0
        %v5982 = vadd.f32 0.0, %v5981
        %v5983 = vpop.f32.mrf.mxu0
        %v5984 = vadd.f32 0.0, %v5983
        %5985 = vmatmul.bf16.gmra.mxu0 %v5715
        %v5986 = vpop.f32.mrf.mxu0
        %v5987 = vadd.f32 0.0, %v5986
        %v5988 = vpop.f32.mrf.mxu0
        %v5989 = vadd.f32 0.0, %v5988
        %5990 = vmatmul.bf16.gmra.mxu0 %v5718
        %v5991 = vpop.f32.mrf.mxu0
        %v5992 = vadd.f32 0.0, %v5991
        %v5993 = vpop.f32.mrf.mxu0
        %v5994 = vadd.f32 0.0, %v5993
        %5995 = vmatmul.bf16.gmra.mxu0 %v5721
        %v5996 = vpop.f32.mrf.mxu0
        %v5997 = vadd.f32 0.0, %v5996
        %v5998 = vpop.f32.mrf.mxu0
        %v5999 = vadd.f32 0.0, %v5998
        %6000 = vmatmul.bf16.gmra.mxu0 %v5724
        %v6001 = vpop.f32.mrf.mxu0
        %v6002 = vadd.f32 0.0, %v6001
        %v6003 = vpop.f32.mrf.mxu0
        %v6004 = vadd.f32 0.0, %v6003
        %6005 = vmatmul.bf16.gmra.mxu0 %v5727
        %v6006 = vpop.f32.mrf.mxu0
        %v6007 = vadd.f32 0.0, %v6006
        %v6008 = vpop.f32.mrf.mxu0
        %v6009 = vadd.f32 0.0, %v6008
        %6010 = vmatmul.bf16.gmra.mxu0 %v5730
        %v6011 = vpop.f32.mrf.mxu0
        %v6012 = vadd.f32 0.0, %v6011
        %v6013 = vpop.f32.mrf.mxu0
        %v6014 = vadd.f32 0.0, %v6013
        %6015 = vmatmul.bf16.gmra.mxu0 %v5733
        %v6016 = vpop.f32.mrf.mxu0
        %v6017 = vadd.f32 0.0, %v6016
        %v6018 = vpop.f32.mrf.mxu0
        %v6019 = vadd.f32 0.0, %v6018
        %6020 = vmatmul.bf16.gmra.mxu0 %v5736
        %v6021 = vpop.f32.mrf.mxu0
        %v6022 = vadd.f32 0.0, %v6021
        %v6023 = vpop.f32.mrf.mxu0
        %v6024 = vadd.f32 0.0, %v6023
        %6025 = vmatmul.bf16.gmra.mxu0 %v5739
        %v6026 = vpop.f32.mrf.mxu0
        %v6027 = vadd.f32 0.0, %v6026
        %v6028 = vpop.f32.mrf.mxu0
        %v6029 = vadd.f32 0.0, %v6028
        %6030 = vmatmul.bf16.gmra.mxu0 %v5742
        %v6031 = vpop.f32.mrf.mxu0
        %v6032 = vadd.f32 0.0, %v6031
        %v6033 = vpop.f32.mrf.mxu0
        %v6034 = vadd.f32 0.0, %v6033
        %6035 = vmatmul.bf16.gmra.mxu0 %v5745
        %v6036 = vpop.f32.mrf.mxu0
        %v6037 = vadd.f32 0.0, %v6036
        %v6038 = vpop.f32.mrf.mxu0
        %v6039 = vadd.f32 0.0, %v6038
        %6040 = vmatmul.bf16.gmra.mxu0 %v5955
        %v6041 = vpop.f32.mrf.mxu0
        %v6042 = vadd.f32 0.0, %v6041
        %v6043 = vpop.f32.mrf.mxu0
        %v6044 = vadd.f32 0.0, %v6043
        %6045 = vdwg.mxu0
        %v6046 = vadd.f32 %v5905, %v5967
        %v6047 = vadd.f32 %v5906, %v5969
        %v6048 = vadd.f32 %v5907, %v5972
        %v6049 = vadd.f32 %v5908, %v5974
        %v6050 = vadd.f32 %v5909, %v5977
        %v6051 = vadd.f32 %v5910, %v5979
        %v6052 = vadd.f32 %v5911, %v5982
        %v6053 = vadd.f32 %v5912, %v5984
        %v6054 = vadd.f32 %v5913, %v5987
        %v6055 = vadd.f32 %v5914, %v5989
        %v6056 = vadd.f32 %v5915, %v5992
        %v6057 = vadd.f32 %v5916, %v5994
        %v6058 = vadd.f32 %v5917, %v5997
        %v6059 = vadd.f32 %v5918, %v5999
        %v6060 = vadd.f32 %v5919, %v6002
        %v6061 = vadd.f32 %v5920, %v6004
        %v6062 = vadd.f32 %v5921, %v6007
        %v6063 = vadd.f32 %v5922, %v6009
        %v6064 = vadd.f32 %v5923, %v6012
        %v6065 = vadd.f32 %v5924, %v6014
        %v6066 = vadd.f32 %v5925, %v6017
        %v6067 = vadd.f32 %v5926, %v6019
        %v6068 = vadd.f32 %v5927, %v6022
        %v6069 = vadd.f32 %v5928, %v6024
        %v6070 = vadd.f32 %v5929, %v6027
        %v6071 = vadd.f32 %v5930, %v6029
        %v6072 = vadd.f32 %v5931, %v6032
        %v6073 = vadd.f32 %v5932, %v6034
        %v6074 = vadd.f32 %v5933, %v6037
        %v6075 = vadd.f32 %v5934, %v6039
        %v6076 = vadd.f32 %v5935, %v6042
        %v6077 = vadd.f32 %v5936, %v6044
        %6078 = vst.msk [vmem:[#allocation2] sm:$0xff] %vm588, %v6046
        %6079 = vst.msk [vmem:[#allocation2 + $0x8] sm:$0xff] %vm588, %v6047
        %6080 = vst.msk [vmem:[#allocation2 + $0x10] sm:$0xff] %vm588, %v6048
        %6081 = vst.msk [vmem:[#allocation2 + $0x18] sm:$0xff] %vm588, %v6049
        %6082 = vst.msk [vmem:[#allocation2 + $0x20] sm:$0xff] %vm588, %v6050
        %6083 = vst.msk [vmem:[#allocation2 + $0x28] sm:$0xff] %vm588, %v6051
        %6084 = vst.msk [vmem:[#allocation2 + $0x30] sm:$0xff] %vm588, %v6052
        %6085 = vst.msk [vmem:[#allocation2 + $0x38] sm:$0xff] %vm588, %v6053
        %6086 = vst.msk [vmem:[#allocation2 + $0x40] sm:$0xff] %vm588, %v6054
        %6087 = vst.msk [vmem:[#allocation2 + $0x48] sm:$0xff] %vm588, %v6055
        %6088 = vst.msk [vmem:[#allocation2 + $0x50] sm:$0xff] %vm588, %v6056
        %6089 = vst.msk [vmem:[#allocation2 + $0x58] sm:$0xff] %vm588, %v6057
        %6090 = vst.msk [vmem:[#allocation2 + $0x60] sm:$0xff] %vm588, %v6058
        %6091 = vst.msk [vmem:[#allocation2 + $0x68] sm:$0xff] %vm588, %v6059
        %6092 = vst.msk [vmem:[#allocation2 + $0x70] sm:$0xff] %vm588, %v6060
        %6093 = vst.msk [vmem:[#allocation2 + $0x78] sm:$0xff] %vm588, %v6061
        %6094 = vst.msk [vmem:[#allocation2 + $0x80] sm:$0xff] %vm588, %v6062
        %6095 = vst.msk [vmem:[#allocation2 + $0x88] sm:$0xff] %vm588, %v6063
        %6096 = vst.msk [vmem:[#allocation2 + $0x90] sm:$0xff] %vm588, %v6064
        %6097 = vst.msk [vmem:[#allocation2 + $0x98] sm:$0xff] %vm588, %v6065
        %6098 = vst.msk [vmem:[#allocation2 + $0xa0] sm:$0xff] %vm588, %v6066
        %6099 = vst.msk [vmem:[#allocation2 + $0xa8] sm:$0xff] %vm588, %v6067
        %6100 = vst.msk [vmem:[#allocation2 + $0xb0] sm:$0xff] %vm588, %v6068
        %6101 = vst.msk [vmem:[#allocation2 + $0xb8] sm:$0xff] %vm588, %v6069
        %6102 = vst.msk [vmem:[#allocation2 + $0xc0] sm:$0xff] %vm588, %v6070
        %6103 = vst.msk [vmem:[#allocation2 + $0xc8] sm:$0xff] %vm588, %v6071
        %6104 = vst.msk [vmem:[#allocation2 + $0xd0] sm:$0xff] %vm588, %v6072
        %6105 = vst.msk [vmem:[#allocation2 + $0xd8] sm:$0xff] %vm588, %v6073
        %6106 = vst.msk [vmem:[#allocation2 + $0xe0] sm:$0xff] %vm588, %v6074
        %6107 = vst.msk [vmem:[#allocation2 + $0xe8] sm:$0xff] %vm588, %v6075
        %6108 = vst.msk [vmem:[#allocation2 + $0xf0] sm:$0xff] %vm588, %v6076
        %6109 = vst.msk [vmem:[#allocation2 + $0xf8] sm:$0xff] %vm588, %v6077
        %v6110 = vld [vmem:[#allocation2] sm:$0xff]
        %v6111 = vld [vmem:[#allocation2 + $0x8] sm:$0xff]
        %v6112 = vld [vmem:[#allocation2 + $0x10] sm:$0xff]
        %v6113 = vld [vmem:[#allocation2 + $0x18] sm:$0xff]
        %v6114 = vld [vmem:[#allocation2 + $0x20] sm:$0xff]
        %v6115 = vld [vmem:[#allocation2 + $0x28] sm:$0xff]
        %v6116 = vld [vmem:[#allocation2 + $0x30] sm:$0xff]
        %v6117 = vld [vmem:[#allocation2 + $0x38] sm:$0xff]
        %v6118 = vld [vmem:[#allocation2 + $0x40] sm:$0xff]
        %v6119 = vld [vmem:[#allocation2 + $0x48] sm:$0xff]
        %v6120 = vld [vmem:[#allocation2 + $0x50] sm:$0xff]
        %v6121 = vld [vmem:[#allocation2 + $0x58] sm:$0xff]
        %v6122 = vld [vmem:[#allocation2 + $0x60] sm:$0xff]
        %v6123 = vld [vmem:[#allocation2 + $0x68] sm:$0xff]
        %v6124 = vld [vmem:[#allocation2 + $0x70] sm:$0xff]
        %v6125 = vld [vmem:[#allocation2 + $0x78] sm:$0xff]
        %v6126 = vld [vmem:[#allocation2 + $0x80] sm:$0xff]
        %v6127 = vld [vmem:[#allocation2 + $0x88] sm:$0xff]
        %v6128 = vld [vmem:[#allocation2 + $0x90] sm:$0xff]
        %v6129 = vld [vmem:[#allocation2 + $0x98] sm:$0xff]
        %v6130 = vld [vmem:[#allocation2 + $0xa0] sm:$0xff]
        %v6131 = vld [vmem:[#allocation2 + $0xa8] sm:$0xff]
        %v6132 = vld [vmem:[#allocation2 + $0xb0] sm:$0xff]
        %v6133 = vld [vmem:[#allocation2 + $0xb8] sm:$0xff]
        %v6134 = vld [vmem:[#allocation2 + $0xc0] sm:$0xff]
        %v6135 = vld [vmem:[#allocation2 + $0xc8] sm:$0xff]
        %v6136 = vld [vmem:[#allocation2 + $0xd0] sm:$0xff]
        %v6137 = vld [vmem:[#allocation2 + $0xd8] sm:$0xff]
        %v6138 = vld [vmem:[#allocation2 + $0xe0] sm:$0xff]
        %v6139 = vld [vmem:[#allocation2 + $0xe8] sm:$0xff]
        %v6140 = vld [vmem:[#allocation2 + $0xf0] sm:$0xff]
        %v6141 = vld [vmem:[#allocation2 + $0xf8] sm:$0xff]
        %s6142 = scalar_lea.vmem [#allocation8], 128
        %v6143 = vld [vmem:[%s6142] sm:$0xf]
        %v6144 = vld [vmem:[%s6142 + $0x4] sm:$0xf]
        %v6145 = vld [vmem:[%s6142 + $0x8] sm:$0xf]
        %v6146 = vld [vmem:[%s6142 + $0xc] sm:$0xf]
        %v6151 = vunpack.c.l.b16 %v6143
        %v6152 = vunpack.c.l.b16 %v6144
        %v6153 = vunpack.c.l.b16 %v6145
        %v6154 = vunpack.c.l.b16 %v6146
        %v6155 = vpack.c.b16 %v6152, %v6151
        %v6156 = vpack.c.b16 %v6154, %v6153
        %6159 = vmatpush.bf16.msra.mxu0 0
        %6160 = vmatpush.bf16.msra.mxu0 0
        %6161 = vmatpush.bf16.msra.mxu0 0
        %6162 = vmatpush.bf16.msra.mxu0 0
        %6163 = vmatpush.bf16.msra.mxu0 0
        %6164 = vmatpush.bf16.msra.mxu0 0
        %6165 = vmatpush.bf16.msra.mxu0 %v6156
        %6166 = vmatpush.bf16.msra.mxu0 %v6155
        %6167 = vmatmul.bf16.gmra.mxu0 %v5703
        %v6168 = vpop.f32.mrf.mxu0
        %v6169 = vadd.f32 0.0, %v6168
        %v6170 = vpop.f32.mrf.mxu0
        %v6171 = vadd.f32 0.0, %v6170
        %6172 = vmatmul.bf16.gmra.mxu0 %v5709
        %v6173 = vpop.f32.mrf.mxu0
        %v6174 = vadd.f32 0.0, %v6173
        %v6175 = vpop.f32.mrf.mxu0
        %v6176 = vadd.f32 0.0, %v6175
        %6177 = vmatmul.bf16.gmra.mxu0 %v5712
        %v6178 = vpop.f32.mrf.mxu0
        %v6179 = vadd.f32 0.0, %v6178
        %v6180 = vpop.f32.mrf.mxu0
        %v6181 = vadd.f32 0.0, %v6180
        %6182 = vmatmul.bf16.gmra.mxu0 %v5715
        %v6183 = vpop.f32.mrf.mxu0
        %v6184 = vadd.f32 0.0, %v6183
        %v6185 = vpop.f32.mrf.mxu0
        %v6186 = vadd.f32 0.0, %v6185
        %6187 = vmatmul.bf16.gmra.mxu0 %v5718
        %v6188 = vpop.f32.mrf.mxu0
        %v6189 = vadd.f32 0.0, %v6188
        %v6190 = vpop.f32.mrf.mxu0
        %v6191 = vadd.f32 0.0, %v6190
        %6192 = vmatmul.bf16.gmra.mxu0 %v5721
        %v6193 = vpop.f32.mrf.mxu0
        %v6194 = vadd.f32 0.0, %v6193
        %v6195 = vpop.f32.mrf.mxu0
        %v6196 = vadd.f32 0.0, %v6195
        %6197 = vmatmul.bf16.gmra.mxu0 %v5724
        %v6198 = vpop.f32.mrf.mxu0
        %v6199 = vadd.f32 0.0, %v6198
        %v6200 = vpop.f32.mrf.mxu0
        %v6201 = vadd.f32 0.0, %v6200
        %6202 = vmatmul.bf16.gmra.mxu0 %v5727
        %v6203 = vpop.f32.mrf.mxu0
        %v6204 = vadd.f32 0.0, %v6203
        %v6205 = vpop.f32.mrf.mxu0
        %v6206 = vadd.f32 0.0, %v6205
        %6207 = vmatmul.bf16.gmra.mxu0 %v5730
        %v6208 = vpop.f32.mrf.mxu0
        %v6209 = vadd.f32 0.0, %v6208
        %v6210 = vpop.f32.mrf.mxu0
        %v6211 = vadd.f32 0.0, %v6210
        %6212 = vmatmul.bf16.gmra.mxu0 %v5733
        %v6213 = vpop.f32.mrf.mxu0
        %v6214 = vadd.f32 0.0, %v6213
        %v6215 = vpop.f32.mrf.mxu0
        %v6216 = vadd.f32 0.0, %v6215
        %6217 = vmatmul.bf16.gmra.mxu0 %v5736
        %v6218 = vpop.f32.mrf.mxu0
        %v6219 = vadd.f32 0.0, %v6218
        %v6220 = vpop.f32.mrf.mxu0
        %v6221 = vadd.f32 0.0, %v6220
        %6222 = vmatmul.bf16.gmra.mxu0 %v5739
        %v6223 = vpop.f32.mrf.mxu0
        %v6224 = vadd.f32 0.0, %v6223
        %v6225 = vpop.f32.mrf.mxu0
        %v6226 = vadd.f32 0.0, %v6225
        %6227 = vmatmul.bf16.gmra.mxu0 %v5742
        %v6228 = vpop.f32.mrf.mxu0
        %v6229 = vadd.f32 0.0, %v6228
        %v6230 = vpop.f32.mrf.mxu0
        %v6231 = vadd.f32 0.0, %v6230
        %6232 = vmatmul.bf16.gmra.mxu0 %v5745
        %v6233 = vpop.f32.mrf.mxu0
        %v6234 = vadd.f32 0.0, %v6233
        %v6235 = vpop.f32.mrf.mxu0
        %v6236 = vadd.f32 0.0, %v6235
        %6237 = vmatmul.bf16.gmra.mxu0 %v5955
        %v6238 = vpop.f32.mrf.mxu0
        %v6239 = vadd.f32 0.0, %v6238
        %v6240 = vpop.f32.mrf.mxu0
        %v6241 = vadd.f32 0.0, %v6240
        %6242 = vmatmul.bf16.gmra.mxu0 %v5745
        %v6243 = vpop.f32.mrf.mxu0
        %v6244 = vadd.f32 0.0, %v6243
        %v6245 = vpop.f32.mrf.mxu0
        %v6246 = vadd.f32 0.0, %v6245
        %6247 = vdwg.mxu0
        %v6248 = vadd.f32 %v6110, %v6169
        %v6249 = vadd.f32 %v6111, %v6171
        %v6250 = vadd.f32 %v6112, %v6174
        %v6251 = vadd.f32 %v6113, %v6176
        %v6252 = vadd.f32 %v6114, %v6179
        %v6253 = vadd.f32 %v6115, %v6181
        %v6254 = vadd.f32 %v6116, %v6184
        %v6255 = vadd.f32 %v6117, %v6186
        %v6256 = vadd.f32 %v6118, %v6189
        %v6257 = vadd.f32 %v6119, %v6191
        %v6258 = vadd.f32 %v6120, %v6194
        %v6259 = vadd.f32 %v6121, %v6196
        %v6260 = vadd.f32 %v6122, %v6199
        %v6261 = vadd.f32 %v6123, %v6201
        %v6262 = vadd.f32 %v6124, %v6204
        %v6263 = vadd.f32 %v6125, %v6206
        %v6264 = vadd.f32 %v6126, %v6209
        %v6265 = vadd.f32 %v6127, %v6211
        %v6266 = vadd.f32 %v6128, %v6214
        %v6267 = vadd.f32 %v6129, %v6216
        %v6268 = vadd.f32 %v6130, %v6219
        %v6269 = vadd.f32 %v6131, %v6221
        %v6270 = vadd.f32 %v6132, %v6224
        %v6271 = vadd.f32 %v6133, %v6226
        %v6272 = vadd.f32 %v6134, %v6229
        %v6273 = vadd.f32 %v6135, %v6231
        %v6274 = vadd.f32 %v6136, %v6234
        %v6275 = vadd.f32 %v6137, %v6236
        %v6276 = vadd.f32 %v6138, %v6239
        %v6277 = vadd.f32 %v6139, %v6241
        %v6278 = vadd.f32 %v6140, %v6244
        %v6279 = vadd.f32 %v6141, %v6246
        %6280 = vst.msk [vmem:[#allocation2] sm:$0xff] %vm588, %v6248
        %6281 = vst.msk [vmem:[#allocation2 + $0x8] sm:$0xff] %vm588, %v6249
        %6282 = vst.msk [vmem:[#allocation2 + $0x10] sm:$0xff] %vm588, %v6250
        %6283 = vst.msk [vmem:[#allocation2 + $0x18] sm:$0xff] %vm588, %v6251
        %6284 = vst.msk [vmem:[#allocation2 + $0x20] sm:$0xff] %vm588, %v6252
        %6285 = vst.msk [vmem:[#allocation2 + $0x28] sm:$0xff] %vm588, %v6253
        %6286 = vst.msk [vmem:[#allocation2 + $0x30] sm:$0xff] %vm588, %v6254
        %6287 = vst.msk [vmem:[#allocation2 + $0x38] sm:$0xff] %vm588, %v6255
        %6288 = vst.msk [vmem:[#allocation2 + $0x40] sm:$0xff] %vm588, %v6256
        %6289 = vst.msk [vmem:[#allocation2 + $0x48] sm:$0xff] %vm588, %v6257
        %6290 = vst.msk [vmem:[#allocation2 + $0x50] sm:$0xff] %vm588, %v6258
        %6291 = vst.msk [vmem:[#allocation2 + $0x58] sm:$0xff] %vm588, %v6259
        %6292 = vst.msk [vmem:[#allocation2 + $0x60] sm:$0xff] %vm588, %v6260
        %6293 = vst.msk [vmem:[#allocation2 + $0x68] sm:$0xff] %vm588, %v6261
        %6294 = vst.msk [vmem:[#allocation2 + $0x70] sm:$0xff] %vm588, %v6262
        %6295 = vst.msk [vmem:[#allocation2 + $0x78] sm:$0xff] %vm588, %v6263
        %6296 = vst.msk [vmem:[#allocation2 + $0x80] sm:$0xff] %vm588, %v6264
        %6297 = vst.msk [vmem:[#allocation2 + $0x88] sm:$0xff] %vm588, %v6265
        %6298 = vst.msk [vmem:[#allocation2 + $0x90] sm:$0xff] %vm588, %v6266
        %6299 = vst.msk [vmem:[#allocation2 + $0x98] sm:$0xff] %vm588, %v6267
        %6300 = vst.msk [vmem:[#allocation2 + $0xa0] sm:$0xff] %vm588, %v6268
        %6301 = vst.msk [vmem:[#allocation2 + $0xa8] sm:$0xff] %vm588, %v6269
        %6302 = vst.msk [vmem:[#allocation2 + $0xb0] sm:$0xff] %vm588, %v6270
        %6303 = vst.msk [vmem:[#allocation2 + $0xb8] sm:$0xff] %vm588, %v6271
        %6304 = vst.msk [vmem:[#allocation2 + $0xc0] sm:$0xff] %vm588, %v6272
        %6305 = vst.msk [vmem:[#allocation2 + $0xc8] sm:$0xff] %vm588, %v6273
        %6306 = vst.msk [vmem:[#allocation2 + $0xd0] sm:$0xff] %vm588, %v6274
        %6307 = vst.msk [vmem:[#allocation2 + $0xd8] sm:$0xff] %vm588, %v6275
        %6308 = vst.msk [vmem:[#allocation2 + $0xe0] sm:$0xff] %vm588, %v6276
        %6309 = vst.msk [vmem:[#allocation2 + $0xe8] sm:$0xff] %vm588, %v6277
        %6310 = vst.msk [vmem:[#allocation2 + $0xf0] sm:$0xff] %vm588, %v6278
        %6311 = vst.msk [vmem:[#allocation2 + $0xf8] sm:$0xff] %vm588, %v6279
        %v6312 = vld [vmem:[#allocation2] sm:$0xff]
        %v6313 = vld [vmem:[#allocation2 + $0x8] sm:$0xff]
        %v6314 = vld [vmem:[#allocation2 + $0x10] sm:$0xff]
        %v6315 = vld [vmem:[#allocation2 + $0x18] sm:$0xff]
        %v6316 = vld [vmem:[#allocation2 + $0x20] sm:$0xff]
        %v6317 = vld [vmem:[#allocation2 + $0x28] sm:$0xff]
        %v6318 = vld [vmem:[#allocation2 + $0x30] sm:$0xff]
        %v6319 = vld [vmem:[#allocation2 + $0x38] sm:$0xff]
        %v6320 = vld [vmem:[#allocation2 + $0x40] sm:$0xff]
        %v6321 = vld [vmem:[#allocation2 + $0x48] sm:$0xff]
        %v6322 = vld [vmem:[#allocation2 + $0x50] sm:$0xff]
        %v6323 = vld [vmem:[#allocation2 + $0x58] sm:$0xff]
        %v6324 = vld [vmem:[#allocation2 + $0x60] sm:$0xff]
        %v6325 = vld [vmem:[#allocation2 + $0x68] sm:$0xff]
        %v6326 = vld [vmem:[#allocation2 + $0x70] sm:$0xff]
        %v6327 = vld [vmem:[#allocation2 + $0x78] sm:$0xff]
        %v6328 = vld [vmem:[#allocation2 + $0x80] sm:$0xff]
        %v6329 = vld [vmem:[#allocation2 + $0x88] sm:$0xff]
        %v6330 = vld [vmem:[#allocation2 + $0x90] sm:$0xff]
        %v6331 = vld [vmem:[#allocation2 + $0x98] sm:$0xff]
        %v6332 = vld [vmem:[#allocation2 + $0xa0] sm:$0xff]
        %v6333 = vld [vmem:[#allocation2 + $0xa8] sm:$0xff]
        %v6334 = vld [vmem:[#allocation2 + $0xb0] sm:$0xff]
        %v6335 = vld [vmem:[#allocation2 + $0xb8] sm:$0xff]
        %v6336 = vld [vmem:[#allocation2 + $0xc0] sm:$0xff]
        %v6337 = vld [vmem:[#allocation2 + $0xc8] sm:$0xff]
        %v6338 = vld [vmem:[#allocation2 + $0xd0] sm:$0xff]
        %v6339 = vld [vmem:[#allocation2 + $0xd8] sm:$0xff]
        %v6340 = vld [vmem:[#allocation2 + $0xe0] sm:$0xff]
        %v6341 = vld [vmem:[#allocation2 + $0xe8] sm:$0xff]
        %v6342 = vld [vmem:[#allocation2 + $0xf0] sm:$0xff]
        %v6343 = vld [vmem:[#allocation2 + $0xf8] sm:$0xff]
        %v6344 = vsel %vm588, %v6312, 0.0
        %v6345 = vsel %vm588, %v6313, 0.0
        %v6346 = vadd.f32 %v6344, %v6345
        %v6347 = vsel %vm588, %v6314, 0.0
        %v6348 = vadd.f32 %v6346, %v6347
        %v6349 = vsel %vm588, %v6315, 0.0
        %v6350 = vadd.f32 %v6348, %v6349
        %v6351 = vsel %vm588, %v6316, 0.0
        %v6352 = vadd.f32 %v6350, %v6351
        %v6353 = vsel %vm588, %v6317, 0.0
        %v6354 = vadd.f32 %v6352, %v6353
        %v6355 = vsel %vm588, %v6318, 0.0
        %v6356 = vadd.f32 %v6354, %v6355
        %v6357 = vsel %vm588, %v6319, 0.0
        %v6358 = vadd.f32 %v6356, %v6357
        %v6359 = vsel %vm588, %v6320, 0.0
        %v6360 = vadd.f32 %v6358, %v6359
        %v6361 = vsel %vm588, %v6321, 0.0
        %v6362 = vadd.f32 %v6360, %v6361
        %v6363 = vsel %vm588, %v6322, 0.0
        %v6364 = vadd.f32 %v6362, %v6363
        %v6365 = vsel %vm588, %v6323, 0.0
        %v6366 = vadd.f32 %v6364, %v6365
        %v6367 = vsel %vm588, %v6324, 0.0
        %v6368 = vadd.f32 %v6366, %v6367
        %v6369 = vsel %vm588, %v6325, 0.0
        %v6370 = vadd.f32 %v6368, %v6369
        %v6371 = vsel %vm588, %v6326, 0.0
        %v6372 = vadd.f32 %v6370, %v6371
        %v6373 = vsel %vm588, %v6327, 0.0
        %v6374 = vadd.f32 %v6372, %v6373
        %v6375 = vsel %vm588, %v6328, 0.0
        %v6376 = vadd.f32 %v6374, %v6375
        %v6377 = vsel %vm588, %v6329, 0.0
        %v6378 = vadd.f32 %v6376, %v6377
        %v6379 = vsel %vm588, %v6330, 0.0
        %v6380 = vadd.f32 %v6378, %v6379
        %v6381 = vsel %vm588, %v6331, 0.0
        %v6382 = vadd.f32 %v6380, %v6381
        %v6383 = vsel %vm588, %v6332, 0.0
        %v6384 = vadd.f32 %v6382, %v6383
        %v6385 = vsel %vm588, %v6333, 0.0
        %v6386 = vadd.f32 %v6384, %v6385
        %v6387 = vsel %vm588, %v6334, 0.0
        %v6388 = vadd.f32 %v6386, %v6387
        %v6389 = vsel %vm588, %v6335, 0.0
        %v6390 = vadd.f32 %v6388, %v6389
        %v6391 = vsel %vm588, %v6336, 0.0
        %v6392 = vadd.f32 %v6390, %v6391
        %v6393 = vsel %vm588, %v6337, 0.0
        %v6394 = vadd.f32 %v6392, %v6393
        %v6395 = vsel %vm588, %v6338, 0.0
        %v6396 = vadd.f32 %v6394, %v6395
        %v6397 = vsel %vm588, %v6339, 0.0
        %v6398 = vadd.f32 %v6396, %v6397
        %v6399 = vsel %vm588, %v6340, 0.0
        %v6400 = vadd.f32 %v6398, %v6399
        %v6401 = vsel %vm588, %v6341, 0.0
        %v6402 = vadd.f32 %v6400, %v6401
        %v6403 = vsel %vm588, %v6342, 0.0
        %v6404 = vadd.f32 %v6402, %v6403
        %v6405 = vsel %vm588, %v6343, 0.0
        %v6406 = vadd.f32 %v6404, %v6405
        %v6407 = vrot.slane %v6406, 4
        %v6408 = vadd.f32 %v6406, %v6407
        %v6409 = vrot.slane %v6408, 2
        %v6410 = vadd.f32 %v6408, %v6409
        %v6411 = vrot.slane %v6410, 1
        %v6412 = vadd.f32 %v6410, %v6411
        %v6413 = vmul.f32 %v6312, %v6312
        %v6414 = vmul.f32 %v6313, %v6313
        %v6415 = vmul.f32 %v6314, %v6314
        %v6416 = vmul.f32 %v6315, %v6315
        %v6417 = vmul.f32 %v6316, %v6316
        %v6418 = vmul.f32 %v6317, %v6317
        %v6419 = vmul.f32 %v6318, %v6318
        %v6420 = vmul.f32 %v6319, %v6319
        %v6421 = vmul.f32 %v6320, %v6320
        %v6422 = vmul.f32 %v6321, %v6321
        %v6423 = vmul.f32 %v6322, %v6322
        %v6424 = vmul.f32 %v6323, %v6323
        %v6425 = vmul.f32 %v6324, %v6324
        %v6426 = vmul.f32 %v6325, %v6325
        %v6427 = vmul.f32 %v6326, %v6326
        %v6428 = vmul.f32 %v6327, %v6327
        %v6429 = vmul.f32 %v6328, %v6328
        %v6430 = vmul.f32 %v6329, %v6329
        %v6431 = vmul.f32 %v6330, %v6330
        %v6432 = vmul.f32 %v6331, %v6331
        %v6433 = vmul.f32 %v6332, %v6332
        %v6434 = vmul.f32 %v6333, %v6333
        %v6435 = vmul.f32 %v6334, %v6334
        %v6436 = vmul.f32 %v6335, %v6335
        %v6437 = vmul.f32 %v6336, %v6336
        %v6438 = vmul.f32 %v6337, %v6337
        %v6439 = vmul.f32 %v6338, %v6338
        %v6440 = vmul.f32 %v6339, %v6339
        %v6441 = vmul.f32 %v6340, %v6340
        %v6442 = vmul.f32 %v6341, %v6341
        %v6443 = vmul.f32 %v6342, %v6342
        %v6444 = vmul.f32 %v6343, %v6343
        %v6445 = vsel %vm588, %v6413, 0.0
        %v6446 = vsel %vm588, %v6414, 0.0
        %v6447 = vadd.f32 %v6445, %v6446
        %v6448 = vsel %vm588, %v6415, 0.0
        %v6449 = vadd.f32 %v6447, %v6448
        %v6450 = vsel %vm588, %v6416, 0.0
        %v6451 = vadd.f32 %v6449, %v6450
        %v6452 = vsel %vm588, %v6417, 0.0
        %v6453 = vadd.f32 %v6451, %v6452
        %v6454 = vsel %vm588, %v6418, 0.0
        %v6455 = vadd.f32 %v6453, %v6454
        %v6456 = vsel %vm588, %v6419, 0.0
        %v6457 = vadd.f32 %v6455, %v6456
        %v6458 = vsel %vm588, %v6420, 0.0
        %v6459 = vadd.f32 %v6457, %v6458
        %v6460 = vsel %vm588, %v6421, 0.0
        %v6461 = vadd.f32 %v6459, %v6460
        %v6462 = vsel %vm588, %v6422, 0.0
        %v6463 = vadd.f32 %v6461, %v6462
        %v6464 = vsel %vm588, %v6423, 0.0
        %v6465 = vadd.f32 %v6463, %v6464
        %v6466 = vsel %vm588, %v6424, 0.0
        %v6467 = vadd.f32 %v6465, %v6466
        %v6468 = vsel %vm588, %v6425, 0.0
        %v6469 = vadd.f32 %v6467, %v6468
        %v6470 = vsel %vm588, %v6426, 0.0
        %v6471 = vadd.f32 %v6469, %v6470
        %v6472 = vsel %vm588, %v6427, 0.0
        %v6473 = vadd.f32 %v6471, %v6472
        %v6474 = vsel %vm588, %v6428, 0.0
        %v6475 = vadd.f32 %v6473, %v6474
        %v6476 = vsel %vm588, %v6429, 0.0
        %v6477 = vadd.f32 %v6475, %v6476
        %v6478 = vsel %vm588, %v6430, 0.0
        %v6479 = vadd.f32 %v6477, %v6478
        %v6480 = vsel %vm588, %v6431, 0.0
        %v6481 = vadd.f32 %v6479, %v6480
        %v6482 = vsel %vm588, %v6432, 0.0
        %v6483 = vadd.f32 %v6481, %v6482
        %v6484 = vsel %vm588, %v6433, 0.0
        %v6485 = vadd.f32 %v6483, %v6484
        %v6486 = vsel %vm588, %v6434, 0.0
        %v6487 = vadd.f32 %v6485, %v6486
        %v6488 = vsel %vm588, %v6435, 0.0
        %v6489 = vadd.f32 %v6487, %v6488
        %v6490 = vsel %vm588, %v6436, 0.0
        %v6491 = vadd.f32 %v6489, %v6490
        %v6492 = vsel %vm588, %v6437, 0.0
        %v6493 = vadd.f32 %v6491, %v6492
        %v6494 = vsel %vm588, %v6438, 0.0
        %v6495 = vadd.f32 %v6493, %v6494
        %v6496 = vsel %vm588, %v6439, 0.0
        %v6497 = vadd.f32 %v6495, %v6496
        %v6498 = vsel %vm588, %v6440, 0.0
        %v6499 = vadd.f32 %v6497, %v6498
        %v6500 = vsel %vm588, %v6441, 0.0
        %v6501 = vadd.f32 %v6499, %v6500
        %v6502 = vsel %vm588, %v6442, 0.0
        %v6503 = vadd.f32 %v6501, %v6502
        %v6504 = vsel %vm588, %v6443, 0.0
        %v6505 = vadd.f32 %v6503, %v6504
        %v6506 = vsel %vm588, %v6444, 0.0
        %v6507 = vadd.f32 %v6505, %v6506
        %v6508 = vrot.slane %v6507, 4
        %v6509 = vadd.f32 %v6507, %v6508
        %v6510 = vrot.slane %v6509, 2
        %v6511 = vadd.f32 %v6509, %v6510
        %v6512 = vrot.slane %v6511, 1
        %v6513 = vadd.f32 %v6511, %v6512
        %v6514 = vmul.f32 %v6412, 0.00390625
        %v6515 = vmul.f32 %v6513, 0.00390625
        %v6516 = vmul.f32 %v6514, %v6514
        %v6517 = vsub.f32 %v6515, %v6516
        %v6518 = vmax.f32 %v6517, 0.0
        %v6519 = vsub.f32 %v6312, %v6514
        %v6520 = vsub.f32 %v6313, %v6514
        %v6521 = vsub.f32 %v6314, %v6514
        %v6522 = vsub.f32 %v6315, %v6514
        %v6523 = vsub.f32 %v6316, %v6514
        %v6524 = vsub.f32 %v6317, %v6514
        %v6525 = vsub.f32 %v6318, %v6514
        %v6526 = vsub.f32 %v6319, %v6514
        %v6527 = vsub.f32 %v6320, %v6514
        %v6528 = vsub.f32 %v6321, %v6514
        %v6529 = vsub.f32 %v6322, %v6514
        %v6530 = vsub.f32 %v6323, %v6514
        %v6531 = vsub.f32 %v6324, %v6514
        %v6532 = vsub.f32 %v6325, %v6514
        %v6533 = vsub.f32 %v6326, %v6514
        %v6534 = vsub.f32 %v6327, %v6514
        %v6535 = vsub.f32 %v6328, %v6514
        %v6536 = vsub.f32 %v6329, %v6514
        %v6537 = vsub.f32 %v6330, %v6514
        %v6538 = vsub.f32 %v6331, %v6514
        %v6539 = vsub.f32 %v6332, %v6514
        %v6540 = vsub.f32 %v6333, %v6514
        %v6541 = vsub.f32 %v6334, %v6514
        %v6542 = vsub.f32 %v6335, %v6514
        %v6543 = vsub.f32 %v6336, %v6514
        %v6544 = vsub.f32 %v6337, %v6514
        %v6545 = vsub.f32 %v6338, %v6514
        %v6546 = vsub.f32 %v6339, %v6514
        %v6547 = vsub.f32 %v6340, %v6514
        %v6548 = vsub.f32 %v6341, %v6514
        %v6549 = vsub.f32 %v6342, %v6514
        %v6550 = vsub.f32 %v6343, %v6514
        %v6551 = vadd.f32 %v6518, 1e-05
        %v6552 = vrsqrt.pop %v6551
        %v6553 = vmul.f32 %v6552, %v6551
        %v6554 = vmul.f32 %v6553, %v6552
        %v6555 = vmul.f32 0.5, %v6554
        %v6556 = vsub.f32 1.5, %v6555
        %v6557 = vmul.f32 %v6552, %v6556
        %vm6558 = vweird.f32 %v6551
        %vm6559 = vweird.f32 %v6552
        %vm6560 = vmor %vm6558, %vm6559
        %v6561 = vsel %vm6560, %v6552, %v6557
        %v6562 = vmul.f32 %v6519, %v6561
        %v6563 = vmul.f32 %v6520, %v6561
        %v6564 = vmul.f32 %v6521, %v6561
        %v6565 = vmul.f32 %v6522, %v6561
        %v6566 = vmul.f32 %v6523, %v6561
        %v6567 = vmul.f32 %v6524, %v6561
        %v6568 = vmul.f32 %v6525, %v6561
        %v6569 = vmul.f32 %v6526, %v6561
        %v6570 = vmul.f32 %v6527, %v6561
        %v6571 = vmul.f32 %v6528, %v6561
        %v6572 = vmul.f32 %v6529, %v6561
        %v6573 = vmul.f32 %v6530, %v6561
        %v6574 = vmul.f32 %v6531, %v6561
        %v6575 = vmul.f32 %v6532, %v6561
        %v6576 = vmul.f32 %v6533, %v6561
        %v6577 = vmul.f32 %v6534, %v6561
        %v6578 = vmul.f32 %v6535, %v6561
        %v6579 = vmul.f32 %v6536, %v6561
        %v6580 = vmul.f32 %v6537, %v6561
        %v6581 = vmul.f32 %v6538, %v6561
        %v6582 = vmul.f32 %v6539, %v6561
        %v6583 = vmul.f32 %v6540, %v6561
        %v6584 = vmul.f32 %v6541, %v6561
        %v6585 = vmul.f32 %v6542, %v6561
        %v6586 = vmul.f32 %v6543, %v6561
        %v6587 = vmul.f32 %v6544, %v6561
        %v6588 = vmul.f32 %v6545, %v6561
        %v6589 = vmul.f32 %v6546, %v6561
        %v6590 = vmul.f32 %v6547, %v6561
        %v6591 = vmul.f32 %v6548, %v6561
        %v6592 = vmul.f32 %v6549, %v6561
        %v6593 = vmul.f32 %v6550, %v6561
        %v6594 = vadd.f32 %v279, %v6562
        %v6595 = vadd.f32 %v280, %v6563
        %v6596 = vadd.f32 %v281, %v6564
        %v6597 = vadd.f32 %v282, %v6565
        %v6598 = vadd.f32 %v283, %v6566
        %v6599 = vadd.f32 %v284, %v6567
        %v6600 = vadd.f32 %v285, %v6568
        %v6601 = vadd.f32 %v286, %v6569
        %v6602 = vadd.f32 %v287, %v6570
        %v6603 = vadd.f32 %v288, %v6571
        %v6604 = vadd.f32 %v289, %v6572
        %v6605 = vadd.f32 %v290, %v6573
        %v6606 = vadd.f32 %v291, %v6574
        %v6607 = vadd.f32 %v292, %v6575
        %v6608 = vadd.f32 %v293, %v6576
        %v6609 = vadd.f32 %v294, %v6577
        %v6610 = vadd.f32 %v295, %v6578
        %v6611 = vadd.f32 %v296, %v6579
        %v6612 = vadd.f32 %v297, %v6580
        %v6613 = vadd.f32 %v298, %v6581
        %v6614 = vadd.f32 %v299, %v6582
        %v6615 = vadd.f32 %v300, %v6583
        %v6616 = vadd.f32 %v301, %v6584
        %v6617 = vadd.f32 %v302, %v6585
        %v6618 = vadd.f32 %v303, %v6586
        %v6619 = vadd.f32 %v304, %v6587
        %v6620 = vadd.f32 %v305, %v6588
        %v6621 = vadd.f32 %v306, %v6589
        %v6622 = vadd.f32 %v307, %v6590
        %v6623 = vadd.f32 %v308, %v6591
        %v6624 = vadd.f32 %v309, %v6592
        %v6625 = vadd.f32 %v310, %v6593
        %6626 = vst.msk [vmem:[%s277] sm:$0xff] %vm588, %v6594
        %6627 = vst.msk [vmem:[%s277 + $0x8] sm:$0xff] %vm588, %v6595
        %6628 = vst.msk [vmem:[%s277 + $0x10] sm:$0xff] %vm588, %v6596
        %6629 = vst.msk [vmem:[%s277 + $0x18] sm:$0xff] %vm588, %v6597
        %6630 = vst.msk [vmem:[%s277 + $0x20] sm:$0xff] %vm588, %v6598
        %6631 = vst.msk [vmem:[%s277 + $0x28] sm:$0xff] %vm588, %v6599
        %6632 = vst.msk [vmem:[%s277 + $0x30] sm:$0xff] %vm588, %v6600
        %6633 = vst.msk [vmem:[%s277 + $0x38] sm:$0xff] %vm588, %v6601
        %6634 = vst.msk [vmem:[%s277 + $0x40] sm:$0xff] %vm588, %v6602
        %6635 = vst.msk [vmem:[%s277 + $0x48] sm:$0xff] %vm588, %v6603
        %6636 = vst.msk [vmem:[%s277 + $0x50] sm:$0xff] %vm588, %v6604
        %6637 = vst.msk [vmem:[%s277 + $0x58] sm:$0xff] %vm588, %v6605
        %6638 = vst.msk [vmem:[%s277 + $0x60] sm:$0xff] %vm588, %v6606
        %6639 = vst.msk [vmem:[%s277 + $0x68] sm:$0xff] %vm588, %v6607
        %6640 = vst.msk [vmem:[%s277 + $0x70] sm:$0xff] %vm588, %v6608
        %6641 = vst.msk [vmem:[%s277 + $0x78] sm:$0xff] %vm588, %v6609
        %6642 = vst.msk [vmem:[%s277 + $0x80] sm:$0xff] %vm588, %v6610
        %6643 = vst.msk [vmem:[%s277 + $0x88] sm:$0xff] %vm588, %v6611
        %6644 = vst.msk [vmem:[%s277 + $0x90] sm:$0xff] %vm588, %v6612
        %6645 = vst.msk [vmem:[%s277 + $0x98] sm:$0xff] %vm588, %v6613
        %6646 = vst.msk [vmem:[%s277 + $0xa0] sm:$0xff] %vm588, %v6614
        %6647 = vst.msk [vmem:[%s277 + $0xa8] sm:$0xff] %vm588, %v6615
        %6648 = vst.msk [vmem:[%s277 + $0xb0] sm:$0xff] %vm588, %v6616
        %6649 = vst.msk [vmem:[%s277 + $0xb8] sm:$0xff] %vm588, %v6617
        %6650 = vst.msk [vmem:[%s277 + $0xc0] sm:$0xff] %vm588, %v6618
        %6651 = vst.msk [vmem:[%s277 + $0xc8] sm:$0xff] %vm588, %v6619
        %6652 = vst.msk [vmem:[%s277 + $0xd0] sm:$0xff] %vm588, %v6620
        %6653 = vst.msk [vmem:[%s277 + $0xd8] sm:$0xff] %vm588, %v6621
        %6654 = vst.msk [vmem:[%s277 + $0xe0] sm:$0xff] %vm588, %v6622
        %6655 = vst.msk [vmem:[%s277 + $0xe8] sm:$0xff] %vm588, %v6623
        %6656 = vst.msk [vmem:[%s277 + $0xf0] sm:$0xff] %vm588, %v6624
        %6657 = vst.msk [vmem:[%s277 + $0xf8] sm:$0xff] %vm588, %v6625
        %s6658 = sand.u32 %s141, 1
        %s6659 = scalar_lea.sflag [#allocation5], %s6658
        %s6660 = sand.u32 %s141, 1
        %s6661 = smul.addr %s6660, 256
        %s6662 = scalar_lea.vmem [#allocation9], %s6661
        // Predicated region
        $region53: #{tpu_custom_call.1} parent=39 // pred_check
          %p6663 = pneg %p151
        $region54: #{tpu_custom_call.1} parent=39 // pred_check_branch
          %6665 = sbr.rel (%p6663) target = $region56
        $region55: #{tpu_custom_call.1} parent=39 // pred_region
          %6667 = vsyncadd %s6659, 0
          %s6668 = smul.addr %s23, 32
          %s6669 = smul.addr %s6668, 8
          %s6670 = scalar_lea.hbm %s5, %s6669
          %s6671 = sshll.u32 %s6662, 4
          %s6672 = int_to_ptr.vmem [resolvable:$true] %s6671
          %s6673 = sshll.u32 %s6670, 4
          %s6674 = int_to_ptr.hbm [resolvable:$true] %s6673
          %6679 = dma.vmem_to_hbm [thread:$0]  %s6672, 4096, %s6674, %s6659, 128, 128, 8
        $region56: #{tpu_custom_call.1} parent=39 // pred_fallthru
          _
      $region40: #{tpu_custom_call.1} parent=5 // pred_fallthru
        _
      %p6680 = scmp.le.s32.totalorder 2, %s18
      // Predicated region
      $region57: #{tpu_custom_call.1} parent=5 // pred_check
        %p6681 = pneg %p6680
      $region58: #{tpu_custom_call.1} parent=5 // pred_check_branch
        %6683 = sbr.rel (%p6681) target = $region60
      $region59: #{tpu_custom_call.1} parent=5 // pred_region
        %s6684 = ssub.s32 %s18, 2
        // Predicated region
        $region61: #{tpu_custom_call.1} parent=59 // pred_check
          %p6685 = pneg %p157
        $region62: #{tpu_custom_call.1} parent=59 // pred_check_branch
          %6687 = sbr.rel (%p6685) target = $region64
        $region63: #{tpu_custom_call.1} parent=59 // pred_region
          %s6688 = sand.u32 %s142, 1
          %s6689 = scalar_lea.sflag [#allocation5], %s6688
          %s6690 = sand.u32 %s142, 1
          %s6691 = smul.addr %s6690, 256
          %s6692 = scalar_lea.vmem [#allocation9], %s6691
          %6694 = dma.done %s6689, 4096
        $region64: #{tpu_custom_call.1} parent=59 // pred_fallthru
          _
      $region60: #{tpu_custom_call.1} parent=5 // pred_fallthru
        _
    $region6: #{tpu_custom_call.1} parent=1 // loop_footer
      %s22 = sadd.s32 1, %s18
    $region7: #{tpu_custom_call.1} parent=1 // loop_footer_branch
      %17 = sbr.rel target = $region3
    $region8: #{tpu_custom_call.1} parent=1 // loop_exit
      _
    %6695 = vsyncpa [#allocation4], 1
    %s6696 = scalar_lea.sflag [#allocation4], 1
    %6697 = vsyncpa %s6696, 1
    %6698 = vsyncpa [#allocation7], 1
    %6699 = vsyncpa [#allocation5], 1
    %s6700 = scalar_lea.sflag [#allocation5], 1
    %6701 = vsyncpa %s6700, 1

</llo_original>
